<compile_context>
chip_gen: v6e
topology: v6e:2x2x1
jax: 0.10.0
libtpu: 0.0.40
codegen_flags: <defaults>
</compile_context>

<pallas_src>
import functools

import jax
import jax.numpy as jnp
from jax.experimental import pallas as pl
from jax.experimental.pallas import tpu as pltpu

_EPS = 1e-5          # nn.GroupNorm default eps
_LANES = 128
_LEFT = 8            # sublane-aligned start of the h1 interior inside the scratch


def _round_up(x, m):
    return (x + m - 1) // m * m


# ------------------------------ Pallas kernel -------------------------------

def _up_kernel(x_ref, temb_ref, w1_ref, b1_ref, g1_ref, be1_ref,
               w2_ref, b2_ref, g2_ref, be2_ref,
               o_ref, h1_ref, acc_ref, *, hh, ww, real_cout, eps):
    """One sample: conv3x3+GN+ReLU, conv3x3+GN+ReLU, + precomputed temb row."""
    cp = o_ref.shape[-1]                    # padded channel count (multiple of 128)
    m = hh * ww
    inv_cnt = 1.0 / float(m * real_cout)    # GN(1,C) normalizes over real elems only

    def conv3x3(src_ref, col0, w_ref):
        # 3 dx-shifted full-height slabs (one relayout copy each), contiguous
        # row-window slices per dy, 9 bf16 MXU matmuls accumulated into acc_ref.
        first = True
        for dx in range(3):
            slab = src_ref[0:hh + 2, col0 + dx:col0 + dx + ww, :]
            slab = slab.reshape((hh + 2) * ww, slab.shape[-1])
            for dy in range(3):
                tap = slab[dy * ww:dy * ww + m]
                prod = jnp.dot(tap, w_ref[3 * dy + dx],
                               preferred_element_type=jnp.float32)
                if first:
                    acc_ref[...] = prod
                    first = False
                else:
                    acc_ref[...] += prod

    def gn_relu(b_row, g_row, be_row):
        # GroupNorm(1, C) over the whole sample, conv bias folded into the
        # scale/shift.  Padded channels are exact zeros end-to-end, so plain sums
        # over the padded slab are correct; divide by the real element count.
        acc = acc_ref[...]
        s1 = jnp.sum(acc, axis=0, keepdims=True)               # (1, Cp)
        s2 = jnp.sum(acc * acc, axis=0, keepdims=True)         # (1, Cp)
        s1b = s1 + float(m) * b_row                            # stats of (acc + bias)
        s2b = s2 + 2.0 * b_row * s1 + float(m) * b_row * b_row
        mean = jnp.sum(s1b, axis=1, keepdims=True) * inv_cnt   # (1, 1)
        ex2 = jnp.sum(s2b, axis=1, keepdims=True) * inv_cnt
        var = jnp.maximum(ex2 - mean * mean, 0.0)               # biased variance
        scale = g_row * jax.lax.rsqrt(var + eps)                # 0 on padded lanes
        shift = (b_row - mean) * scale + be_row                 # 0 on padded lanes
        return jnp.maximum(acc * scale + shift, 0.0)

    # ---- conv1 + GN1 + ReLU --------------------------------------------------
    conv3x3(x_ref, 0, w1_ref)
    h1 = gn_relu(b1_ref[...], g1_ref[...], be1_ref[...])

    # Stage h1 (bf16) into the haloed scratch; interior starts at sublane _LEFT so
    # the big store is 8-aligned.  Only the halo ring is zeroed (thin strips).
    zrow = jnp.zeros((1, h1_ref.shape[1], cp), h1_ref.dtype)
    h1_ref[0:1] = zrow
    h1_ref[hh + 1:hh + 2] = zrow
    zcol = jnp.zeros((hh + 2, 1, cp), h1_ref.dtype)
    h1_ref[:, _LEFT - 1:_LEFT, :] = zcol
    h1_ref[:, _LEFT + ww:_LEFT + ww + 1, :] = zcol
    h1_ref[1:hh + 1, _LEFT:_LEFT + ww, :] = h1.reshape(hh, ww, cp).astype(h1_ref.dtype)

    # ---- conv2 + GN2 + ReLU --------------------------------------------------
    conv3x3(h1_ref, _LEFT - 1, w2_ref)
    h2 = gn_relu(b2_ref[...], g2_ref[...], be2_ref[...])

    # ---- + time embedding row (SiLU+Linear precomputed in the wrapper) --------
    o_ref[...] = h2 + temb_ref[...]                             # lane-dense full store


# ------------------------------- JAX wrapper --------------------------------

def _interp_matrix_ac(n_in, n_out):
    """1-D linear interpolation matrix for Upsample(mode='bilinear', align_corners=True)."""
    if n_in == 1:
        return jnp.ones((n_out, 1), jnp.float32)
    src = jnp.arange(n_out, dtype=jnp.float32) * ((n_in - 1) / (n_out - 1))
    lo = jnp.clip(jnp.floor(src).astype(jnp.int32), 0, n_in - 2)
    frac = src - lo.astype(jnp.float32)
    rows = jnp.arange(n_out)
    mat = jnp.zeros((n_out, n_in), jnp.float32)
    mat = mat.at[rows, lo].add(1.0 - frac)
    mat = mat.at[rows, lo + 1].add(frac)
    return mat


def up_forward(x_nchw, skip_nchw, t, params):
    """Up.forward.  x:(N,Cx,H,W), skip:(N,Cs,2H,2W), t:(N,emb_dim) -> (N,out_c,2H,2W)."""
    (w1, b1, g1, be1, w2, b2, g2, be2, wemb, bemb) = params

    x = jnp.transpose(x_nchw, (0, 2, 3, 1)).astype(jnp.float32)      # NHWC
    skip = jnp.transpose(skip_nchw, (0, 2, 3, 1)).astype(jnp.float32)
    n, h_in, w_in, cx = x.shape
    _, ho, wo, cs = skip.shape            # output spatial = skip spatial = (2H, 2W)
    in_c = cs + cx
    out_c = w1.shape[-1]

    # Bilinear x2 upsample (align_corners=True) as two small interpolation matmuls,
    # then channel concat ([skip, x] like torch.cat(dim=1)).  The concatenated
    # slab is materialized in bf16 (half the HBM bytes the kernel has to read).
    ah = _interp_matrix_ac(h_in, ho)                  # (2H, H)
    aw = _interp_matrix_ac(w_in, wo)                  # (2W, W)
    xu = jnp.einsum('oh,nhwc->nowc', ah, x)
    xu = jnp.einsum('pw,nowc->nopc', aw, xu)
    xcat = jnp.concatenate([skip, xu], axis=-1)       # (N, 2H, 2W, in_c)

    # Pad: +1 spatial halo for the 3x3 convs, channels up to a lane multiple.
    cin_p = _round_up(in_c, _LANES)
    cout_p = _round_up(out_c, _LANES)
    xpad = jnp.pad(xcat, ((0, 0), (1, 1), (1, 1), (0, cin_p - in_c))
                   ).astype(jnp.bfloat16)

    def pad_w(wk, ci, cip):                           # (3,3,ci,co) -> (9, cip, cout_p) bf16
        wp = jnp.pad(wk, ((0, 0), (0, 0), (0, cip - ci), (0, cout_p - out_c)))
        return wp.reshape(9, cip, cout_p).astype(jnp.bfloat16)

    def pad_c(v):                                     # (co,) -> (1, cout_p), zero padded
        return jnp.pad(v, (0, cout_p - out_c)).reshape(1, cout_p).astype(jnp.float32)

    w1p = pad_w(w1, in_c, cin_p)
    w2p = pad_w(w2, out_c, cout_p)
    b1p, g1p, be1p = pad_c(b1), pad_c(g1), pad_c(be1)
    b2p, g2p, be2p = pad_c(b2), pad_c(g2), pad_c(be2)

    # Time embedding hoisted out of the kernel: one XLA matmul for all samples.
    tf = t.astype(jnp.float32)
    temb = (tf * jax.nn.sigmoid(tf)) @ wemb.astype(jnp.float32) + bemb.astype(jnp.float32)
    tembp = jnp.pad(temb, ((0, 0), (0, cout_p - out_c))).reshape(n, 1, cout_p)
    tembp = tembp.astype(jnp.float32)

    m = ho * wo
    scratch_w = _round_up(_LEFT + wo + 1, 8)
    kern = functools.partial(_up_kernel, hh=ho, ww=wo, real_cout=out_c, eps=_EPS)

    def const_spec(arr):                              # whole-array block, constant index
        zeros = (0,) * arr.ndim
        return pl.BlockSpec(arr.shape, lambda i, _z=zeros: _z)

    # Per-step VMEM working set: double-buffered in/out/temb blocks, (double-
    # buffered) weights, staging + accumulator scratch, GN value temporaries.
    blk_in = (ho + 2) * (wo + 2) * cin_p * 2          # bf16 input block
    blk_out = m * cout_p * 4
    blk_temb = cout_p * 4
    wbytes = 2 * (w1p.size + w2p.size) + 4 * 6 * cout_p
    scratch_bytes = (ho + 2) * scratch_w * cout_p * 2 + m * cout_p * 4
    tmp_bytes = 4 * m * cout_p * 4
    need = 2 * (blk_in + blk_out + blk_temb) + 2 * wbytes + scratch_bytes + tmp_bytes
    vmem_limit = int(min(max(int(1.3 * need), 32 << 20), 60 << 20))

    flops = 2 * n * m * 9 * (cin_p + cout_p) * cout_p
    bytes_accessed = (xpad.size * 2 + (w1p.size + w2p.size) * 2
                      + tembp.size * 4 + n * m * cout_p * 4)

    out_flat = pl.pallas_call(
        kern,
        out_shape=jax.ShapeDtypeStruct((n, m, cout_p), jnp.float32),
        grid=(n,),
        in_specs=[
            pl.BlockSpec((None, ho + 2, wo + 2, cin_p), lambda i: (i, 0, 0, 0)),
            pl.BlockSpec((None, 1, cout_p), lambda i: (i, 0, 0)),
            const_spec(w1p), const_spec(b1p), const_spec(g1p), const_spec(be1p),
            const_spec(w2p), const_spec(b2p), const_spec(g2p), const_spec(be2p),
        ],
        out_specs=pl.BlockSpec((None, m, cout_p), lambda i: (i, 0, 0)),
        scratch_shapes=[pltpu.VMEM((ho + 2, scratch_w, cout_p), jnp.bfloat16),
                        pltpu.VMEM((m, cout_p), jnp.float32)],
        compiler_params=pltpu.CompilerParams(
            dimension_semantics=("parallel",),        # samples shard across TCs (v7x)
            vmem_limit_bytes=vmem_limit),
        cost_estimate=pl.CostEstimate(flops=flops, transcendentals=2 * n,
                                      bytes_accessed=bytes_accessed),
    )(xpad, tembp, w1p, b1p, g1p, be1p, w2p, b2p, g2p, be2p)

    # f32/NCHW kept to match the PyTorch module; a bf16/NHWC consumer could skip this.
    out = out_flat[:, :, :out_c].reshape(n, ho, wo, out_c)
    return jnp.transpose(out, (0, 3, 1, 2))


# ---------------------------- pure-JAX reference -----------------------------

def _ref_bilinear_up2_ac(x):                          # NCHW, scale 2, align_corners=True
    nb, c, hh, ww = x.shape
    hout, wout = 2 * hh, 2 * ww
    ys = jnp.arange(hout, dtype=jnp.float32) * (hh - 1) / (hout - 1)
    xs = jnp.arange(wout, dtype=jnp.float32) * (ww - 1) / (wout - 1)
    y0 = jnp.clip(jnp.floor(ys).astype(jnp.int32), 0, hh - 2)
    x0 = jnp.clip(jnp.floor(xs).astype(jnp.int32), 0, ww - 2)
    wy = (ys - y0)[None, None, :, None]
    wx = (xs - x0)[None, None, None, :]
    g00 = x[:, :, y0, :][:, :, :, x0]
    g01 = x[:, :, y0, :][:, :, :, x0 + 1]
    g10 = x[:, :, y0 + 1, :][:, :, :, x0]
    g11 = x[:, :, y0 + 1, :][:, :, :, x0 + 1]
    return g00 * (1 - wy) * (1 - wx) + g01 * (1 - wy) * wx \
        + g10 * wy * (1 - wx) + g11 * wy * wx


def _reference(x, skip, t, params):
    (w1, b1, g1, be1, w2, b2, g2, be2, wemb, bemb) = params
    h = jnp.concatenate([skip, _ref_bilinear_up2_ac(x)], axis=1)

    def conv(a, wk, bk):
        y = jax.lax.conv_general_dilated(a, wk, (1, 1), ((1, 1), (1, 1)),
                                         dimension_numbers=("NCHW", "HWIO", "NCHW"))
        return y + bk[None, :, None, None]

    def gn_relu(y, g, be):
        mu = jnp.mean(y, axis=(1, 2, 3), keepdims=True)
        var = jnp.mean((y - mu) ** 2, axis=(1, 2, 3), keepdims=True)
        yn = (y - mu) * jax.lax.rsqrt(var + _EPS)
        return jnp.maximum(yn * g[None, :, None, None] + be[None, :, None, None], 0.0)

    h = gn_relu(conv(h, w1, b1), g1, be1)
    h = gn_relu(conv(h, w2, b2), g2, be2)
    temb = (t * jax.nn.sigmoid(t)) @ wemb + bemb[None, :]
    return h + temb[:, :, None, None]


# ------------------------------------ main -----------------------------------

if __name__ == "__main__":
    N = 2
    Cx, Cs = 8, 8          # decoder / skip channels -> in_c = 16
    in_c, out_c = Cx + Cs, 8
    emb_dim = 128          # Up default
    H = W = 8              # low-res spatial; upsampled to 16x16

    key = jax.random.PRNGKey(0)
    ks = jax.random.split(key, 13)
    x = jax.random.normal(ks[0], (N, Cx, H, W), jnp.float32)
    skip = jax.random.normal(ks[1], (N, Cs, 2 * H, 2 * W), jnp.float32)
    t = jax.random.normal(ks[2], (N, emb_dim), jnp.float32)
    w1 = jax.random.normal(ks[3], (3, 3, in_c, out_c), jnp.float32) / jnp.sqrt(9.0 * in_c)
    b1 = 0.1 * jax.random.normal(ks[4], (out_c,), jnp.float32)
    g1 = 1.0 + 0.1 * jax.random.normal(ks[5], (out_c,), jnp.float32)
    be1 = 0.1 * jax.random.normal(ks[6], (out_c,), jnp.float32)
    w2 = jax.random.normal(ks[7], (3, 3, out_c, out_c), jnp.float32) / jnp.sqrt(9.0 * out_c)
    b2 = 0.1 * jax.random.normal(ks[8], (out_c,), jnp.float32)
    g2 = 1.0 + 0.1 * jax.random.normal(ks[9], (out_c,), jnp.float32)
    be2 = 0.1 * jax.random.normal(ks[10], (out_c,), jnp.float32)
    wemb = jax.random.normal(ks[11], (emb_dim, out_c), jnp.float32) / jnp.sqrt(1.0 * emb_dim)
    bemb = 0.1 * jax.random.normal(ks[12], (out_c,), jnp.float32)

    params = (w1, b1, g1, be1, w2, b2, g2, be2, wemb, bemb)

    out = jax.jit(up_forward)(x, skip, t, params)
    out = jax.block_until_ready(out)

    ref = _reference(x, skip, t, params)
    assert out.shape == (N, out_c, 2 * H, 2 * W), f"shape {out.shape}"
    err = float(jnp.max(jnp.abs(out - ref)))
    # bf16 MXU operands through two convs + GroupNorm rescaling vs. an all-f32
    # reference (output ~unit-scale after GN) -> expected max err ~2e-2.
    assert err < 5e-2, f"max abs err {err}"
    print("KERNEL_OK")
</pallas_src>

<mosaic_0001>
module attributes {stable_mosaic.version = 11 : i64} {
  func.func private @main(%arg0: i32) attributes {dimension_semantics = [#tpu.dimension_semantics<core_parallel>], iteration_bounds = array<i64: 2>, tpu.core_type = #tpu.core_type<sc_scalar_subcore>, window_params = []} {
    return
  }
}

module attributes {stable_mosaic.version = 11 : i64} {
  func.func private @main(%arg0: i32) attributes {dimension_semantics = [#tpu.dimension_semantics<core_parallel>], iteration_bounds = array<i64: 2>, tpu.core_type = #tpu.core_type<sc_scalar_subcore>, window_params = []} {
    return
  }
}

module attributes {stable_mosaic.version = 11 : i64} {
  func.func @_up_kernel(%arg0: i32, %arg1: memref<1x18x18x128xbf16, #tpu.memory_space<vmem>>, %arg2: memref<1x1x128xf32, #tpu.memory_space<vmem>>, %arg3: memref<9x128x128xbf16, #tpu.memory_space<vmem>>, %arg4: memref<1x128xf32, #tpu.memory_space<vmem>>, %arg5: memref<1x128xf32, #tpu.memory_space<vmem>>, %arg6: memref<1x128xf32, #tpu.memory_space<vmem>>, %arg7: memref<9x128x128xbf16, #tpu.memory_space<vmem>>, %arg8: memref<1x128xf32, #tpu.memory_space<vmem>>, %arg9: memref<1x128xf32, #tpu.memory_space<vmem>>, %arg10: memref<1x128xf32, #tpu.memory_space<vmem>>, %arg11: memref<1x256x128xf32, #tpu.memory_space<vmem>>, %arg12: memref<18x32x128xbf16, #tpu.memory_space<vmem>>, %arg13: memref<256x128xf32, #tpu.memory_space<vmem>>) attributes {dimension_semantics = [#tpu.dimension_semantics<parallel>], iteration_bounds = array<i64: 2>, scalar_prefetch = 0 : i64, scratch_operands = 2 : i64, tpu.core_type = #tpu.core_type<tc>, window_params = [{transform_indices = @transform_0, window_bounds = array<i64: 1, 18, 18, 128>}, {transform_indices = @transform_1, window_bounds = array<i64: 1, 1, 128>}, {pipeline_mode = #tpu.pipeline_mode<synchronous>, transform_indices = @transform_2, window_bounds = array<i64: 9, 128, 128>}, {pipeline_mode = #tpu.pipeline_mode<synchronous>, transform_indices = @transform_3, window_bounds = array<i64: 1, 128>}, {pipeline_mode = #tpu.pipeline_mode<synchronous>, transform_indices = @transform_4, window_bounds = array<i64: 1, 128>}, {pipeline_mode = #tpu.pipeline_mode<synchronous>, transform_indices = @transform_5, window_bounds = array<i64: 1, 128>}, {pipeline_mode = #tpu.pipeline_mode<synchronous>, transform_indices = @transform_6, window_bounds = array<i64: 9, 128, 128>}, {pipeline_mode = #tpu.pipeline_mode<synchronous>, transform_indices = @transform_7, window_bounds = array<i64: 1, 128>}, {pipeline_mode = #tpu.pipeline_mode<synchronous>, transform_indices = @transform_8, window_bounds = array<i64: 1, 128>}, {pipeline_mode = #tpu.pipeline_mode<synchronous>, transform_indices = @transform_9, window_bounds = array<i64: 1, 128>}, {transform_indices = @transform_10, window_bounds = array<i64: 1, 256, 128>}]} {
    %c0 = arith.constant 0 : index
    %c0_0 = arith.constant 0 : index
    %c0_1 = arith.constant 0 : index
    %c0_2 = arith.constant 0 : index
    %0 = vector.load %arg1[%c0, %c0_0, %c0_1, %c0_2] : memref<1x18x18x128xbf16, #tpu.memory_space<vmem>>, vector<1x18x16x128xbf16>
    %1 = vector.shape_cast %0 : vector<1x18x16x128xbf16> to vector<18x16x128xbf16>
    %2 = vector.shape_cast %1 : vector<18x16x128xbf16> to vector<288x128xbf16>
    %3 = vector.extract_strided_slice %2 {offsets = [0, 0], sizes = [256, 128], strides = [1, 1]} : vector<288x128xbf16> to vector<256x128xbf16>
    %c0_3 = arith.constant 0 : index
    %c0_4 = arith.constant 0 : index
    %c0_5 = arith.constant 0 : index
    %4 = vector.load %arg3[%c0_3, %c0_4, %c0_5] : memref<9x128x128xbf16, #tpu.memory_space<vmem>>, vector<1x128x128xbf16>
    %5 = vector.shape_cast %4 : vector<1x128x128xbf16> to vector<128x128xbf16>
    %cst = arith.constant dense<0.000000e+00> : vector<256x128xf32>
    %6 = tpu.matmul %3, %5, %cst {dimension_numbers = #tpu.dot_dimension_numbers<[1], [0], [0], [1], [0, 0, 1, 1], [], []>} : vector<256x128xbf16>, vector<128x128xbf16>, vector<256x128xf32> -> vector<256x128xf32>
    %c0_6 = arith.constant 0 : index
    %c0_7 = arith.constant 0 : index
    %7 = vector.load %arg13[%c0_6, %c0_7] : memref<256x128xf32, #tpu.memory_space<vmem>>, vector<256x128xf32>
    tpu.vector_store %arg13[%c0_6, %c0_7], %6 {strides = array<i32>} : memref<256x128xf32, #tpu.memory_space<vmem>>, vector<256x128xf32>,
    %8 = vector.extract_strided_slice %2 {offsets = [16, 0], sizes = [256, 128], strides = [1, 1]} : vector<288x128xbf16> to vector<256x128xbf16>
    %c3 = arith.constant 3 : index
    %c0_8 = arith.constant 0 : index
    %c0_9 = arith.constant 0 : index
    %9 = vector.load %arg3[%c3, %c0_8, %c0_9] : memref<9x128x128xbf16, #tpu.memory_space<vmem>>, vector<1x128x128xbf16>
    %10 = vector.shape_cast %9 : vector<1x128x128xbf16> to vector<128x128xbf16>
    %cst_10 = arith.constant dense<0.000000e+00> : vector<256x128xf32>
    %11 = tpu.matmul %8, %10, %cst_10 {dimension_numbers = #tpu.dot_dimension_numbers<[1], [0], [0], [1], [0, 0, 1, 1], [], []>} : vector<256x128xbf16>, vector<128x128xbf16>, vector<256x128xf32> -> vector<256x128xf32>
    %c0_11 = arith.constant 0 : index
    %c0_12 = arith.constant 0 : index
    %12 = vector.load %arg13[%c0_11, %c0_12] : memref<256x128xf32, #tpu.memory_space<vmem>>, vector<256x128xf32>
    %13 = arith.addf %12, %11 : vector<256x128xf32>
    %c0_13 = arith.constant 0 : index
    %c0_14 = arith.constant 0 : index
    %14 = vector.load %arg13[%c0_13, %c0_14] : memref<256x128xf32, #tpu.memory_space<vmem>>, vector<256x128xf32>
    tpu.vector_store %arg13[%c0_13, %c0_14], %13 {strides = array<i32>} : memref<256x128xf32, #tpu.memory_space<vmem>>, vector<256x128xf32>,
    %15 = vector.extract_strided_slice %2 {offsets = [32, 0], sizes = [256, 128], strides = [1, 1]} : vector<288x128xbf16> to vector<256x128xbf16>
    %c6 = arith.constant 6 : index
    %c0_15 = arith.constant 0 : index
    %c0_16 = arith.constant 0 : index
    %16 = vector.load %arg3[%c6, %c0_15, %c0_16] : memref<9x128x128xbf16, #tpu.memory_space<vmem>>, vector<1x128x128xbf16>
    %17 = vector.shape_cast %16 : vector<1x128x128xbf16> to vector<128x128xbf16>
    %cst_17 = arith.constant dense<0.000000e+00> : vector<256x128xf32>
    %18 = tpu.matmul %15, %17, %cst_17 {dimension_numbers = #tpu.dot_dimension_numbers<[1], [0], [0], [1], [0, 0, 1, 1], [], []>} : vector<256x128xbf16>, vector<128x128xbf16>, vector<256x128xf32> -> vector<256x128xf32>
    %c0_18 = arith.constant 0 : index
    %c0_19 = arith.constant 0 : index
    %19 = vector.load %arg13[%c0_18, %c0_19] : memref<256x128xf32, #tpu.memory_space<vmem>>, vector<256x128xf32>
    %20 = arith.addf %19, %18 : vector<256x128xf32>
    %c0_20 = arith.constant 0 : index
    %c0_21 = arith.constant 0 : index
    %21 = vector.load %arg13[%c0_20, %c0_21] : memref<256x128xf32, #tpu.memory_space<vmem>>, vector<256x128xf32>
    tpu.vector_store %arg13[%c0_20, %c0_21], %20 {strides = array<i32>} : memref<256x128xf32, #tpu.memory_space<vmem>>, vector<256x128xf32>,
    %c0_22 = arith.constant 0 : index
    %c0_23 = arith.constant 0 : index
    %c1 = arith.constant 1 : index
    %c0_24 = arith.constant 0 : index
    %22 = vector.load %arg1[%c0_22, %c0_23, %c1, %c0_24] : memref<1x18x18x128xbf16, #tpu.memory_space<vmem>>, vector<1x18x16x128xbf16>
    %23 = vector.shape_cast %22 : vector<1x18x16x128xbf16> to vector<18x16x128xbf16>
    %24 = vector.shape_cast %23 : vector<18x16x128xbf16> to vector<288x128xbf16>
    %25 = vector.extract_strided_slice %24 {offsets = [0, 0], sizes = [256, 128], strides = [1, 1]} : vector<288x128xbf16> to vector<256x128xbf16>
    %c1_25 = arith.constant 1 : index
    %c0_26 = arith.constant 0 : index
    %c0_27 = arith.constant 0 : index
    %26 = vector.load %arg3[%c1_25, %c0_26, %c0_27] : memref<9x128x128xbf16, #tpu.memory_space<vmem>>, vector<1x128x128xbf16>
    %27 = vector.shape_cast %26 : vector<1x128x128xbf16> to vector<128x128xbf16>
    %cst_28 = arith.constant dense<0.000000e+00> : vector<256x128xf32>
    %28 = tpu.matmul %25, %27, %cst_28 {dimension_numbers = #tpu.dot_dimension_numbers<[1], [0], [0], [1], [0, 0, 1, 1], [], []>} : vector<256x128xbf16>, vector<128x128xbf16>, vector<256x128xf32> -> vector<256x128xf32>
    %c0_29 = arith.constant 0 : index
    %c0_30 = arith.constant 0 : index
    %29 = vector.load %arg13[%c0_29, %c0_30] : memref<256x128xf32, #tpu.memory_space<vmem>>, vector<256x128xf32>
    %30 = arith.addf %29, %28 : vector<256x128xf32>
    %c0_31 = arith.constant 0 : index
    %c0_32 = arith.constant 0 : index
    %31 = vector.load %arg13[%c0_31, %c0_32] : memref<256x128xf32, #tpu.memory_space<vmem>>, vector<256x128xf32>
    tpu.vector_store %arg13[%c0_31, %c0_32], %30 {strides = array<i32>} : memref<256x128xf32, #tpu.memory_space<vmem>>, vector<256x128xf32>,
    %32 = vector.extract_strided_slice %24 {offsets = [16, 0], sizes = [256, 128], strides = [1, 1]} : vector<288x128xbf16> to vector<256x128xbf16>
    %c4 = arith.constant 4 : index
    %c0_33 = arith.constant 0 : index
    %c0_34 = arith.constant 0 : index
    %33 = vector.load %arg3[%c4, %c0_33, %c0_34] : memref<9x128x128xbf16, #tpu.memory_space<vmem>>, vector<1x128x128xbf16>
    %34 = vector.shape_cast %33 : vector<1x128x128xbf16> to vector<128x128xbf16>
    %cst_35 = arith.constant dense<0.000000e+00> : vector<256x128xf32>
    %35 = tpu.matmul %32, %34, %cst_35 {dimension_numbers = #tpu.dot_dimension_numbers<[1], [0], [0], [1], [0, 0, 1, 1], [], []>} : vector<256x128xbf16>, vector<128x128xbf16>, vector<256x128xf32> -> vector<256x128xf32>
    %c0_36 = arith.constant 0 : index
    %c0_37 = arith.constant 0 : index
    %36 = vector.load %arg13[%c0_36, %c0_37] : memref<256x128xf32, #tpu.memory_space<vmem>>, vector<256x128xf32>
    %37 = arith.addf %36, %35 : vector<256x128xf32>
    %c0_38 = arith.constant 0 : index
    %c0_39 = arith.constant 0 : index
    %38 = vector.load %arg13[%c0_38, %c0_39] : memref<256x128xf32, #tpu.memory_space<vmem>>, vector<256x128xf32>
    tpu.vector_store %arg13[%c0_38, %c0_39], %37 {strides = array<i32>} : memref<256x128xf32, #tpu.memory_space<vmem>>, vector<256x128xf32>,
    %39 = vector.extract_strided_slice %24 {offsets = [32, 0], sizes = [256, 128], strides = [1, 1]} : vector<288x128xbf16> to vector<256x128xbf16>
    %c7 = arith.constant 7 : index
    %c0_40 = arith.constant 0 : index
    %c0_41 = arith.constant 0 : index
    %40 = vector.load %arg3[%c7, %c0_40, %c0_41] : memref<9x128x128xbf16, #tpu.memory_space<vmem>>, vector<1x128x128xbf16>
    %41 = vector.shape_cast %40 : vector<1x128x128xbf16> to vector<128x128xbf16>
    %cst_42 = arith.constant dense<0.000000e+00> : vector<256x128xf32>
    %42 = tpu.matmul %39, %41, %cst_42 {dimension_numbers = #tpu.dot_dimension_numbers<[1], [0], [0], [1], [0, 0, 1, 1], [], []>} : vector<256x128xbf16>, vector<128x128xbf16>, vector<256x128xf32> -> vector<256x128xf32>
    %c0_43 = arith.constant 0 : index
    %c0_44 = arith.constant 0 : index
    %43 = vector.load %arg13[%c0_43, %c0_44] : memref<256x128xf32, #tpu.memory_space<vmem>>, vector<256x128xf32>
    %44 = arith.addf %43, %42 : vector<256x128xf32>
    %c0_45 = arith.constant 0 : index
    %c0_46 = arith.constant 0 : index
    %45 = vector.load %arg13[%c0_45, %c0_46] : memref<256x128xf32, #tpu.memory_space<vmem>>, vector<256x128xf32>
    tpu.vector_store %arg13[%c0_45, %c0_46], %44 {strides = array<i32>} : memref<256x128xf32, #tpu.memory_space<vmem>>, vector<256x128xf32>,
    %c0_47 = arith.constant 0 : index
    %c0_48 = arith.constant 0 : index
    %c2 = arith.constant 2 : index
    %c0_49 = arith.constant 0 : index
    %46 = vector.load %arg1[%c0_47, %c0_48, %c2, %c0_49] : memref<1x18x18x128xbf16, #tpu.memory_space<vmem>>, vector<1x18x16x128xbf16>
    %47 = vector.shape_cast %46 : vector<1x18x16x128xbf16> to vector<18x16x128xbf16>
    %48 = vector.shape_cast %47 : vector<18x16x128xbf16> to vector<288x128xbf16>
    %49 = vector.extract_strided_slice %48 {offsets = [0, 0], sizes = [256, 128], strides = [1, 1]} : vector<288x128xbf16> to vector<256x128xbf16>
    %c2_50 = arith.constant 2 : index
    %c0_51 = arith.constant 0 : index
    %c0_52 = arith.constant 0 : index
    %50 = vector.load %arg3[%c2_50, %c0_51, %c0_52] : memref<9x128x128xbf16, #tpu.memory_space<vmem>>, vector<1x128x128xbf16>
    %51 = vector.shape_cast %50 : vector<1x128x128xbf16> to vector<128x128xbf16>
    %cst_53 = arith.constant dense<0.000000e+00> : vector<256x128xf32>
    %52 = tpu.matmul %49, %51, %cst_53 {dimension_numbers = #tpu.dot_dimension_numbers<[1], [0], [0], [1], [0, 0, 1, 1], [], []>} : vector<256x128xbf16>, vector<128x128xbf16>, vector<256x128xf32> -> vector<256x128xf32>
    %c0_54 = arith.constant 0 : index
    %c0_55 = arith.constant 0 : index
    %53 = vector.load %arg13[%c0_54, %c0_55] : memref<256x128xf32, #tpu.memory_space<vmem>>, vector<256x128xf32>
    %54 = arith.addf %53, %52 : vector<256x128xf32>
    %c0_56 = arith.constant 0 : index
    %c0_57 = arith.constant 0 : index
    %55 = vector.load %arg13[%c0_56, %c0_57] : memref<256x128xf32, #tpu.memory_space<vmem>>, vector<256x128xf32>
    tpu.vector_store %arg13[%c0_56, %c0_57], %54 {strides = array<i32>} : memref<256x128xf32, #tpu.memory_space<vmem>>, vector<256x128xf32>,
    %56 = vector.extract_strided_slice %48 {offsets = [16, 0], sizes = [256, 128], strides = [1, 1]} : vector<288x128xbf16> to vector<256x128xbf16>
    %c5 = arith.constant 5 : index
    %c0_58 = arith.constant 0 : index
    %c0_59 = arith.constant 0 : index
    %57 = vector.load %arg3[%c5, %c0_58, %c0_59] : memref<9x128x128xbf16, #tpu.memory_space<vmem>>, vector<1x128x128xbf16>
    %58 = vector.shape_cast %57 : vector<1x128x128xbf16> to vector<128x128xbf16>
    %cst_60 = arith.constant dense<0.000000e+00> : vector<256x128xf32>
    %59 = tpu.matmul %56, %58, %cst_60 {dimension_numbers = #tpu.dot_dimension_numbers<[1], [0], [0], [1], [0, 0, 1, 1], [], []>} : vector<256x128xbf16>, vector<128x128xbf16>, vector<256x128xf32> -> vector<256x128xf32>
    %c0_61 = arith.constant 0 : index
    %c0_62 = arith.constant 0 : index
    %60 = vector.load %arg13[%c0_61, %c0_62] : memref<256x128xf32, #tpu.memory_space<vmem>>, vector<256x128xf32>
    %61 = arith.addf %60, %59 : vector<256x128xf32>
    %c0_63 = arith.constant 0 : index
    %c0_64 = arith.constant 0 : index
    %62 = vector.load %arg13[%c0_63, %c0_64] : memref<256x128xf32, #tpu.memory_space<vmem>>, vector<256x128xf32>
    tpu.vector_store %arg13[%c0_63, %c0_64], %61 {strides = array<i32>} : memref<256x128xf32, #tpu.memory_space<vmem>>, vector<256x128xf32>,
    %63 = vector.extract_strided_slice %48 {offsets = [32, 0], sizes = [256, 128], strides = [1, 1]} : vector<288x128xbf16> to vector<256x128xbf16>
    %c8 = arith.constant 8 : index
    %c0_65 = arith.constant 0 : index
    %c0_66 = arith.constant 0 : index
    %64 = vector.load %arg3[%c8, %c0_65, %c0_66] : memref<9x128x128xbf16, #tpu.memory_space<vmem>>, vector<1x128x128xbf16>
    %65 = vector.shape_cast %64 : vector<1x128x128xbf16> to vector<128x128xbf16>
    %cst_67 = arith.constant dense<0.000000e+00> : vector<256x128xf32>
    %66 = tpu.matmul %63, %65, %cst_67 {dimension_numbers = #tpu.dot_dimension_numbers<[1], [0], [0], [1], [0, 0, 1, 1], [], []>} : vector<256x128xbf16>, vector<128x128xbf16>, vector<256x128xf32> -> vector<256x128xf32>
    %c0_68 = arith.constant 0 : index
    %c0_69 = arith.constant 0 : index
    %67 = vector.load %arg13[%c0_68, %c0_69] : memref<256x128xf32, #tpu.memory_space<vmem>>, vector<256x128xf32>
    %68 = arith.addf %67, %66 : vector<256x128xf32>
    %c0_70 = arith.constant 0 : index
    %c0_71 = arith.constant 0 : index
    %69 = vector.load %arg13[%c0_70, %c0_71] : memref<256x128xf32, #tpu.memory_space<vmem>>, vector<256x128xf32>
    tpu.vector_store %arg13[%c0_70, %c0_71], %68 {strides = array<i32>} : memref<256x128xf32, #tpu.memory_space<vmem>>, vector<256x128xf32>,
    %c0_72 = arith.constant 0 : index
    %c0_73 = arith.constant 0 : index
    %70 = vector.load %arg4[%c0_72, %c0_73] : memref<1x128xf32, #tpu.memory_space<vmem>>, vector<1x128xf32>
    %c0_74 = arith.constant 0 : index
    %c0_75 = arith.constant 0 : index
    %71 = vector.load %arg5[%c0_74, %c0_75] : memref<1x128xf32, #tpu.memory_space<vmem>>, vector<1x128xf32>
    %c0_76 = arith.constant 0 : index
    %c0_77 = arith.constant 0 : index
    %72 = vector.load %arg6[%c0_76, %c0_77] : memref<1x128xf32, #tpu.memory_space<vmem>>, vector<1x128xf32>
    %c0_78 = arith.constant 0 : index
    %c0_79 = arith.constant 0 : index
    %73 = vector.load %arg13[%c0_78, %c0_79] : memref<256x128xf32, #tpu.memory_space<vmem>>, vector<256x128xf32>
    %cst_80 = arith.constant dense<0.000000e+00> : vector<128xf32>
    %74 = vector.multi_reduction <add>, %73, %cst_80 [0] : vector<256x128xf32> to vector<128xf32>
    %75 = vector.shape_cast %74 : vector<128xf32> to vector<1x128xf32>
    %76 = arith.mulf %73, %73 : vector<256x128xf32>
    %cst_81 = arith.constant dense<0.000000e+00> : vector<128xf32>
    %77 = vector.multi_reduction <add>, %76, %cst_81 [0] : vector<256x128xf32> to vector<128xf32>
    %78 = vector.shape_cast %77 : vector<128xf32> to vector<1x128xf32>
    %cst_82 = arith.constant 2.560000e+02 : f32
    %79 = vector.broadcast %cst_82 : f32 to vector<1x128xf32>
    %80 = arith.mulf %79, %70 : vector<1x128xf32>
    %81 = arith.addf %75, %80 : vector<1x128xf32>
    %cst_83 = arith.constant 2.000000e+00 : f32
    %82 = vector.broadcast %cst_83 : f32 to vector<1x128xf32>
    %83 = arith.mulf %82, %70 : vector<1x128xf32>
    %84 = arith.mulf %83, %75 : vector<1x128xf32>
    %85 = arith.addf %78, %84 : vector<1x128xf32>
    %cst_84 = arith.constant 2.560000e+02 : f32
    %86 = vector.broadcast %cst_84 : f32 to vector<1x128xf32>
    %87 = arith.mulf %86, %70 : vector<1x128xf32>
    %88 = arith.mulf %87, %70 : vector<1x128xf32>
    %89 = arith.addf %85, %88 : vector<1x128xf32>
    %cst_85 = arith.constant dense<0.000000e+00> : vector<1xf32>
    %90 = vector.multi_reduction <add>, %81, %cst_85 [1] : vector<1x128xf32> to vector<1xf32>
    %91 = vector.shape_cast %90 : vector<1xf32> to vector<1x1xf32>
    %cst_86 = arith.constant 4.8828125E-4 : f32
    %92 = vector.broadcast %cst_86 : f32 to vector<1x1xf32>
    %93 = arith.mulf %91, %92 : vector<1x1xf32>
    %cst_87 = arith.constant dense<0.000000e+00> : vector<1xf32>
    %94 = vector.multi_reduction <add>, %89, %cst_87 [1] : vector<1x128xf32> to vector<1xf32>
    %95 = vector.shape_cast %94 : vector<1xf32> to vector<1x1xf32>
    %cst_88 = arith.constant 4.8828125E-4 : f32
    %96 = vector.broadcast %cst_88 : f32 to vector<1x1xf32>
    %97 = arith.mulf %95, %96 : vector<1x1xf32>
    %98 = arith.mulf %93, %93 : vector<1x1xf32>
    %99 = arith.subf %97, %98 : vector<1x1xf32>
    %cst_89 = arith.constant 0.000000e+00 : f32
    %100 = vector.broadcast %cst_89 : f32 to vector<1x1xf32>
    %101 = arith.maximumf %99, %100 : vector<1x1xf32>
    %cst_90 = arith.constant 9.99999974E-6 : f32
    %102 = vector.broadcast %cst_90 : f32 to vector<1x1xf32>
    %103 = arith.addf %101, %102 : vector<1x1xf32>
    %104 = math.rsqrt %103 : vector<1x1xf32>
    %105 = vector.broadcast %104 : vector<1x1xf32> to vector<1x128xf32>
    %106 = arith.mulf %71, %105 : vector<1x128xf32>
    %107 = vector.broadcast %93 : vector<1x1xf32> to vector<1x128xf32>
    %108 = arith.subf %70, %107 : vector<1x128xf32>
    %109 = arith.mulf %108, %106 : vector<1x128xf32>
    %110 = arith.addf %109, %72 : vector<1x128xf32>
    %111 = vector.broadcast %106 : vector<1x128xf32> to vector<256x128xf32>
    %112 = arith.mulf %73, %111 : vector<256x128xf32>
    %113 = vector.broadcast %110 : vector<1x128xf32> to vector<256x128xf32>
    %114 = arith.addf %112, %113 : vector<256x128xf32>
    %cst_91 = arith.constant 0.000000e+00 : f32
    %115 = vector.broadcast %cst_91 : f32 to vector<256x128xf32>
    %116 = arith.maximumf %114, %115 : vector<256x128xf32>
    %cst_92 = arith.constant 0.000000e+00 : bf16
    %117 = vector.broadcast %cst_92 : bf16 to vector<1x32x128xbf16>
    %c0_93 = arith.constant 0 : index
    %c0_94 = arith.constant 0 : index
    %c0_95 = arith.constant 0 : index
    %118 = vector.load %arg12[%c0_93, %c0_94, %c0_95] : memref<18x32x128xbf16, #tpu.memory_space<vmem>>, vector<1x32x128xbf16>
    tpu.vector_store %arg12[%c0_93, %c0_94, %c0_95], %117 {strides = array<i32>} : memref<18x32x128xbf16, #tpu.memory_space<vmem>>, vector<1x32x128xbf16>,
    %c17 = arith.constant 17 : index
    %c0_96 = arith.constant 0 : index
    %c0_97 = arith.constant 0 : index
    %119 = vector.load %arg12[%c17, %c0_96, %c0_97] : memref<18x32x128xbf16, #tpu.memory_space<vmem>>, vector<1x32x128xbf16>
    tpu.vector_store %arg12[%c17, %c0_96, %c0_97], %117 {strides = array<i32>} : memref<18x32x128xbf16, #tpu.memory_space<vmem>>, vector<1x32x128xbf16>,
    %cst_98 = arith.constant 0.000000e+00 : bf16
    %120 = vector.broadcast %cst_98 : bf16 to vector<18x1x128xbf16>
    %c0_99 = arith.constant 0 : index
    %c7_100 = arith.constant 7 : index
    %c0_101 = arith.constant 0 : index
    %121 = vector.load %arg12[%c0_99, %c7_100, %c0_101] : memref<18x32x128xbf16, #tpu.memory_space<vmem>>, vector<18x1x128xbf16>
    tpu.vector_store %arg12[%c0_99, %c7_100, %c0_101], %120 {strides = array<i32>} : memref<18x32x128xbf16, #tpu.memory_space<vmem>>, vector<18x1x128xbf16>,
    %c0_102 = arith.constant 0 : index
    %c24 = arith.constant 24 : index
    %c0_103 = arith.constant 0 : index
    %122 = vector.load %arg12[%c0_102, %c24, %c0_103] : memref<18x32x128xbf16, #tpu.memory_space<vmem>>, vector<18x1x128xbf16>
    tpu.vector_store %arg12[%c0_102, %c24, %c0_103], %120 {strides = array<i32>} : memref<18x32x128xbf16, #tpu.memory_space<vmem>>, vector<18x1x128xbf16>,
    %123 = vector.shape_cast %116 : vector<256x128xf32> to vector<16x16x128xf32>
    %124 = arith.truncf %123 : vector<16x16x128xf32> to vector<16x16x128xbf16>
    %c1_104 = arith.constant 1 : index
    %c8_105 = arith.constant 8 : index
    %c0_106 = arith.constant 0 : index
    %125 = vector.load %arg12[%c1_104, %c8_105, %c0_106] : memref<18x32x128xbf16, #tpu.memory_space<vmem>>, vector<16x16x128xbf16>
    tpu.vector_store %arg12[%c1_104, %c8_105, %c0_106], %124 {strides = array<i32>} : memref<18x32x128xbf16, #tpu.memory_space<vmem>>, vector<16x16x128xbf16>,
    %c0_107 = arith.constant 0 : index
    %c7_108 = arith.constant 7 : index
    %c0_109 = arith.constant 0 : index
    %126 = vector.load %arg12[%c0_107, %c7_108, %c0_109] : memref<18x32x128xbf16, #tpu.memory_space<vmem>>, vector<18x16x128xbf16>
    %127 = vector.shape_cast %126 : vector<18x16x128xbf16> to vector<288x128xbf16>
    %128 = vector.extract_strided_slice %127 {offsets = [0, 0], sizes = [256, 128], strides = [1, 1]} : vector<288x128xbf16> to vector<256x128xbf16>
    %c0_110 = arith.constant 0 : index
    %c0_111 = arith.constant 0 : index
    %c0_112 = arith.constant 0 : index
    %129 = vector.load %arg7[%c0_110, %c0_111, %c0_112] : memref<9x128x128xbf16, #tpu.memory_space<vmem>>, vector<1x128x128xbf16>
    %130 = vector.shape_cast %129 : vector<1x128x128xbf16> to vector<128x128xbf16>
    %cst_113 = arith.constant dense<0.000000e+00> : vector<256x128xf32>
    %131 = tpu.matmul %128, %130, %cst_113 {dimension_numbers = #tpu.dot_dimension_numbers<[1], [0], [0], [1], [0, 0, 1, 1], [], []>} : vector<256x128xbf16>, vector<128x128xbf16>, vector<256x128xf32> -> vector<256x128xf32>
    %c0_114 = arith.constant 0 : index
    %c0_115 = arith.constant 0 : index
    %132 = vector.load %arg13[%c0_114, %c0_115] : memref<256x128xf32, #tpu.memory_space<vmem>>, vector<256x128xf32>
    tpu.vector_store %arg13[%c0_114, %c0_115], %131 {strides = array<i32>} : memref<256x128xf32, #tpu.memory_space<vmem>>, vector<256x128xf32>,
    %133 = vector.extract_strided_slice %127 {offsets = [16, 0], sizes = [256, 128], strides = [1, 1]} : vector<288x128xbf16> to vector<256x128xbf16>
    %c3_116 = arith.constant 3 : index
    %c0_117 = arith.constant 0 : index
    %c0_118 = arith.constant 0 : index
    %134 = vector.load %arg7[%c3_116, %c0_117, %c0_118] : memref<9x128x128xbf16, #tpu.memory_space<vmem>>, vector<1x128x128xbf16>
    %135 = vector.shape_cast %134 : vector<1x128x128xbf16> to vector<128x128xbf16>
    %cst_119 = arith.constant dense<0.000000e+00> : vector<256x128xf32>
    %136 = tpu.matmul %133, %135, %cst_119 {dimension_numbers = #tpu.dot_dimension_numbers<[1], [0], [0], [1], [0, 0, 1, 1], [], []>} : vector<256x128xbf16>, vector<128x128xbf16>, vector<256x128xf32> -> vector<256x128xf32>
    %c0_120 = arith.constant 0 : index
    %c0_121 = arith.constant 0 : index
    %137 = vector.load %arg13[%c0_120, %c0_121] : memref<256x128xf32, #tpu.memory_space<vmem>>, vector<256x128xf32>
    %138 = arith.addf %137, %136 : vector<256x128xf32>
    %c0_122 = arith.constant 0 : index
    %c0_123 = arith.constant 0 : index
    %139 = vector.load %arg13[%c0_122, %c0_123] : memref<256x128xf32, #tpu.memory_space<vmem>>, vector<256x128xf32>
    tpu.vector_store %arg13[%c0_122, %c0_123], %138 {strides = array<i32>} : memref<256x128xf32, #tpu.memory_space<vmem>>, vector<256x128xf32>,
    %140 = vector.extract_strided_slice %127 {offsets = [32, 0], sizes = [256, 128], strides = [1, 1]} : vector<288x128xbf16> to vector<256x128xbf16>
    %c6_124 = arith.constant 6 : index
    %c0_125 = arith.constant 0 : index
    %c0_126 = arith.constant 0 : index
    %141 = vector.load %arg7[%c6_124, %c0_125, %c0_126] : memref<9x128x128xbf16, #tpu.memory_space<vmem>>, vector<1x128x128xbf16>
    %142 = vector.shape_cast %141 : vector<1x128x128xbf16> to vector<128x128xbf16>
    %cst_127 = arith.constant dense<0.000000e+00> : vector<256x128xf32>
    %143 = tpu.matmul %140, %142, %cst_127 {dimension_numbers = #tpu.dot_dimension_numbers<[1], [0], [0], [1], [0, 0, 1, 1], [], []>} : vector<256x128xbf16>, vector<128x128xbf16>, vector<256x128xf32> -> vector<256x128xf32>
    %c0_128 = arith.constant 0 : index
    %c0_129 = arith.constant 0 : index
    %144 = vector.load %arg13[%c0_128, %c0_129] : memref<256x128xf32, #tpu.memory_space<vmem>>, vector<256x128xf32>
    %145 = arith.addf %144, %143 : vector<256x128xf32>
    %c0_130 = arith.constant 0 : index
    %c0_131 = arith.constant 0 : index
    %146 = vector.load %arg13[%c0_130, %c0_131] : memref<256x128xf32, #tpu.memory_space<vmem>>, vector<256x128xf32>
    tpu.vector_store %arg13[%c0_130, %c0_131], %145 {strides = array<i32>} : memref<256x128xf32, #tpu.memory_space<vmem>>, vector<256x128xf32>,
    %c0_132 = arith.constant 0 : index
    %c8_133 = arith.constant 8 : index
    %c0_134 = arith.constant 0 : index
    %147 = vector.load %arg12[%c0_132, %c8_133, %c0_134] : memref<18x32x128xbf16, #tpu.memory_space<vmem>>, vector<18x16x128xbf16>
    %148 = vector.shape_cast %147 : vector<18x16x128xbf16> to vector<288x128xbf16>
    %149 = vector.extract_strided_slice %148 {offsets = [0, 0], sizes = [256, 128], strides = [1, 1]} : vector<288x128xbf16> to vector<256x128xbf16>
    %c1_135 = arith.constant 1 : index
    %c0_136 = arith.constant 0 : index
    %c0_137 = arith.constant 0 : index
    %150 = vector.load %arg7[%c1_135, %c0_136, %c0_137] : memref<9x128x128xbf16, #tpu.memory_space<vmem>>, vector<1x128x128xbf16>
    %151 = vector.shape_cast %150 : vector<1x128x128xbf16> to vector<128x128xbf16>
    %cst_138 = arith.constant dense<0.000000e+00> : vector<256x128xf32>
    %152 = tpu.matmul %149, %151, %cst_138 {dimension_numbers = #tpu.dot_dimension_numbers<[1], [0], [0], [1], [0, 0, 1, 1], [], []>} : vector<256x128xbf16>, vector<128x128xbf16>, vector<256x128xf32> -> vector<256x128xf32>
    %c0_139 = arith.constant 0 : index
    %c0_140 = arith.constant 0 : index
    %153 = vector.load %arg13[%c0_139, %c0_140] : memref<256x128xf32, #tpu.memory_space<vmem>>, vector<256x128xf32>
    %154 = arith.addf %153, %152 : vector<256x128xf32>
    %c0_141 = arith.constant 0 : index
    %c0_142 = arith.constant 0 : index
    %155 = vector.load %arg13[%c0_141, %c0_142] : memref<256x128xf32, #tpu.memory_space<vmem>>, vector<256x128xf32>
    tpu.vector_store %arg13[%c0_141, %c0_142], %154 {strides = array<i32>} : memref<256x128xf32, #tpu.memory_space<vmem>>, vector<256x128xf32>,
    %156 = vector.extract_strided_slice %148 {offsets = [16, 0], sizes = [256, 128], strides = [1, 1]} : vector<288x128xbf16> to vector<256x128xbf16>
    %c4_143 = arith.constant 4 : index
    %c0_144 = arith.constant 0 : index
    %c0_145 = arith.constant 0 : index
    %157 = vector.load %arg7[%c4_143, %c0_144, %c0_145] : memref<9x128x128xbf16, #tpu.memory_space<vmem>>, vector<1x128x128xbf16>
    %158 = vector.shape_cast %157 : vector<1x128x128xbf16> to vector<128x128xbf16>
    %cst_146 = arith.constant dense<0.000000e+00> : vector<256x128xf32>
    %159 = tpu.matmul %156, %158, %cst_146 {dimension_numbers = #tpu.dot_dimension_numbers<[1], [0], [0], [1], [0, 0, 1, 1], [], []>} : vector<256x128xbf16>, vector<128x128xbf16>, vector<256x128xf32> -> vector<256x128xf32>
    %c0_147 = arith.constant 0 : index
    %c0_148 = arith.constant 0 : index
    %160 = vector.load %arg13[%c0_147, %c0_148] : memref<256x128xf32, #tpu.memory_space<vmem>>, vector<256x128xf32>
    %161 = arith.addf %160, %159 : vector<256x128xf32>
    %c0_149 = arith.constant 0 : index
    %c0_150 = arith.constant 0 : index
    %162 = vector.load %arg13[%c0_149, %c0_150] : memref<256x128xf32, #tpu.memory_space<vmem>>, vector<256x128xf32>
    tpu.vector_store %arg13[%c0_149, %c0_150], %161 {strides = array<i32>} : memref<256x128xf32, #tpu.memory_space<vmem>>, vector<256x128xf32>,
    %163 = vector.extract_strided_slice %148 {offsets = [32, 0], sizes = [256, 128], strides = [1, 1]} : vector<288x128xbf16> to vector<256x128xbf16>
    %c7_151 = arith.constant 7 : index
    %c0_152 = arith.constant 0 : index
    %c0_153 = arith.constant 0 : index
    %164 = vector.load %arg7[%c7_151, %c0_152, %c0_153] : memref<9x128x128xbf16, #tpu.memory_space<vmem>>, vector<1x128x128xbf16>
    %165 = vector.shape_cast %164 : vector<1x128x128xbf16> to vector<128x128xbf16>
    %cst_154 = arith.constant dense<0.000000e+00> : vector<256x128xf32>
    %166 = tpu.matmul %163, %165, %cst_154 {dimension_numbers = #tpu.dot_dimension_numbers<[1], [0], [0], [1], [0, 0, 1, 1], [], []>} : vector<256x128xbf16>, vector<128x128xbf16>, vector<256x128xf32> -> vector<256x128xf32>
    %c0_155 = arith.constant 0 : index
    %c0_156 = arith.constant 0 : index
    %167 = vector.load %arg13[%c0_155, %c0_156] : memref<256x128xf32, #tpu.memory_space<vmem>>, vector<256x128xf32>
    %168 = arith.addf %167, %166 : vector<256x128xf32>
    %c0_157 = arith.constant 0 : index
    %c0_158 = arith.constant 0 : index
    %169 = vector.load %arg13[%c0_157, %c0_158] : memref<256x128xf32, #tpu.memory_space<vmem>>, vector<256x128xf32>
    tpu.vector_store %arg13[%c0_157, %c0_158], %168 {strides = array<i32>} : memref<256x128xf32, #tpu.memory_space<vmem>>, vector<256x128xf32>,
    %c0_159 = arith.constant 0 : index
    %c9 = arith.constant 9 : index
    %c0_160 = arith.constant 0 : index
    %170 = vector.load %arg12[%c0_159, %c9, %c0_160] : memref<18x32x128xbf16, #tpu.memory_space<vmem>>, vector<18x16x128xbf16>
    %171 = vector.shape_cast %170 : vector<18x16x128xbf16> to vector<288x128xbf16>
    %172 = vector.extract_strided_slice %171 {offsets = [0, 0], sizes = [256, 128], strides = [1, 1]} : vector<288x128xbf16> to vector<256x128xbf16>
    %c2_161 = arith.constant 2 : index
    %c0_162 = arith.constant 0 : index
    %c0_163 = arith.constant 0 : index
    %173 = vector.load %arg7[%c2_161, %c0_162, %c0_163] : memref<9x128x128xbf16, #tpu.memory_space<vmem>>, vector<1x128x128xbf16>
    %174 = vector.shape_cast %173 : vector<1x128x128xbf16> to vector<128x128xbf16>
    %cst_164 = arith.constant dense<0.000000e+00> : vector<256x128xf32>
    %175 = tpu.matmul %172, %174, %cst_164 {dimension_numbers = #tpu.dot_dimension_numbers<[1], [0], [0], [1], [0, 0, 1, 1], [], []>} : vector<256x128xbf16>, vector<128x128xbf16>, vector<256x128xf32> -> vector<256x128xf32>
    %c0_165 = arith.constant 0 : index
    %c0_166 = arith.constant 0 : index
    %176 = vector.load %arg13[%c0_165, %c0_166] : memref<256x128xf32, #tpu.memory_space<vmem>>, vector<256x128xf32>
    %177 = arith.addf %176, %175 : vector<256x128xf32>
    %c0_167 = arith.constant 0 : index
    %c0_168 = arith.constant 0 : index
    %178 = vector.load %arg13[%c0_167, %c0_168] : memref<256x128xf32, #tpu.memory_space<vmem>>, vector<256x128xf32>
    tpu.vector_store %arg13[%c0_167, %c0_168], %177 {strides = array<i32>} : memref<256x128xf32, #tpu.memory_space<vmem>>, vector<256x128xf32>,
    %179 = vector.extract_strided_slice %171 {offsets = [16, 0], sizes = [256, 128], strides = [1, 1]} : vector<288x128xbf16> to vector<256x128xbf16>
    %c5_169 = arith.constant 5 : index
    %c0_170 = arith.constant 0 : index
    %c0_171 = arith.constant 0 : index
    %180 = vector.load %arg7[%c5_169, %c0_170, %c0_171] : memref<9x128x128xbf16, #tpu.memory_space<vmem>>, vector<1x128x128xbf16>
    %181 = vector.shape_cast %180 : vector<1x128x128xbf16> to vector<128x128xbf16>
    %cst_172 = arith.constant dense<0.000000e+00> : vector<256x128xf32>
    %182 = tpu.matmul %179, %181, %cst_172 {dimension_numbers = #tpu.dot_dimension_numbers<[1], [0], [0], [1], [0, 0, 1, 1], [], []>} : vector<256x128xbf16>, vector<128x128xbf16>, vector<256x128xf32> -> vector<256x128xf32>
    %c0_173 = arith.constant 0 : index
    %c0_174 = arith.constant 0 : index
    %183 = vector.load %arg13[%c0_173, %c0_174] : memref<256x128xf32, #tpu.memory_space<vmem>>, vector<256x128xf32>
    %184 = arith.addf %183, %182 : vector<256x128xf32>
    %c0_175 = arith.constant 0 : index
    %c0_176 = arith.constant 0 : index
    %185 = vector.load %arg13[%c0_175, %c0_176] : memref<256x128xf32, #tpu.memory_space<vmem>>, vector<256x128xf32>
    tpu.vector_store %arg13[%c0_175, %c0_176], %184 {strides = array<i32>} : memref<256x128xf32, #tpu.memory_space<vmem>>, vector<256x128xf32>,
    %186 = vector.extract_strided_slice %171 {offsets = [32, 0], sizes = [256, 128], strides = [1, 1]} : vector<288x128xbf16> to vector<256x128xbf16>
    %c8_177 = arith.constant 8 : index
    %c0_178 = arith.constant 0 : index
    %c0_179 = arith.constant 0 : index
    %187 = vector.load %arg7[%c8_177, %c0_178, %c0_179] : memref<9x128x128xbf16, #tpu.memory_space<vmem>>, vector<1x128x128xbf16>
    %188 = vector.shape_cast %187 : vector<1x128x128xbf16> to vector<128x128xbf16>
    %cst_180 = arith.constant dense<0.000000e+00> : vector<256x128xf32>
    %189 = tpu.matmul %186, %188, %cst_180 {dimension_numbers = #tpu.dot_dimension_numbers<[1], [0], [0], [1], [0, 0, 1, 1], [], []>} : vector<256x128xbf16>, vector<128x128xbf16>, vector<256x128xf32> -> vector<256x128xf32>
    %c0_181 = arith.constant 0 : index
    %c0_182 = arith.constant 0 : index
    %190 = vector.load %arg13[%c0_181, %c0_182] : memref<256x128xf32, #tpu.memory_space<vmem>>, vector<256x128xf32>
    %191 = arith.addf %190, %189 : vector<256x128xf32>
    %c0_183 = arith.constant 0 : index
    %c0_184 = arith.constant 0 : index
    %192 = vector.load %arg13[%c0_183, %c0_184] : memref<256x128xf32, #tpu.memory_space<vmem>>, vector<256x128xf32>
    tpu.vector_store %arg13[%c0_183, %c0_184], %191 {strides = array<i32>} : memref<256x128xf32, #tpu.memory_space<vmem>>, vector<256x128xf32>,
    %c0_185 = arith.constant 0 : index
    %c0_186 = arith.constant 0 : index
    %193 = vector.load %arg8[%c0_185, %c0_186] : memref<1x128xf32, #tpu.memory_space<vmem>>, vector<1x128xf32>
    %c0_187 = arith.constant 0 : index
    %c0_188 = arith.constant 0 : index
    %194 = vector.load %arg9[%c0_187, %c0_188] : memref<1x128xf32, #tpu.memory_space<vmem>>, vector<1x128xf32>
    %c0_189 = arith.constant 0 : index
    %c0_190 = arith.constant 0 : index
    %195 = vector.load %arg10[%c0_189, %c0_190] : memref<1x128xf32, #tpu.memory_space<vmem>>, vector<1x128xf32>
    %c0_191 = arith.constant 0 : index
    %c0_192 = arith.constant 0 : index
    %196 = vector.load %arg13[%c0_191, %c0_192] : memref<256x128xf32, #tpu.memory_space<vmem>>, vector<256x128xf32>
    %cst_193 = arith.constant dense<0.000000e+00> : vector<128xf32>
    %197 = vector.multi_reduction <add>, %196, %cst_193 [0] : vector<256x128xf32> to vector<128xf32>
    %198 = vector.shape_cast %197 : vector<128xf32> to vector<1x128xf32>
    %199 = arith.mulf %196, %196 : vector<256x128xf32>
    %cst_194 = arith.constant dense<0.000000e+00> : vector<128xf32>
    %200 = vector.multi_reduction <add>, %199, %cst_194 [0] : vector<256x128xf32> to vector<128xf32>
    %201 = vector.shape_cast %200 : vector<128xf32> to vector<1x128xf32>
    %cst_195 = arith.constant 2.560000e+02 : f32
    %202 = vector.broadcast %cst_195 : f32 to vector<1x128xf32>
    %203 = arith.mulf %202, %193 : vector<1x128xf32>
    %204 = arith.addf %198, %203 : vector<1x128xf32>
    %cst_196 = arith.constant 2.000000e+00 : f32
    %205 = vector.broadcast %cst_196 : f32 to vector<1x128xf32>
    %206 = arith.mulf %205, %193 : vector<1x128xf32>
    %207 = arith.mulf %206, %198 : vector<1x128xf32>
    %208 = arith.addf %201, %207 : vector<1x128xf32>
    %cst_197 = arith.constant 2.560000e+02 : f32
    %209 = vector.broadcast %cst_197 : f32 to vector<1x128xf32>
    %210 = arith.mulf %209, %193 : vector<1x128xf32>
    %211 = arith.mulf %210, %193 : vector<1x128xf32>
    %212 = arith.addf %208, %211 : vector<1x128xf32>
    %cst_198 = arith.constant dense<0.000000e+00> : vector<1xf32>
    %213 = vector.multi_reduction <add>, %204, %cst_198 [1] : vector<1x128xf32> to vector<1xf32>
    %214 = vector.shape_cast %213 : vector<1xf32> to vector<1x1xf32>
    %cst_199 = arith.constant 4.8828125E-4 : f32
    %215 = vector.broadcast %cst_199 : f32 to vector<1x1xf32>
    %216 = arith.mulf %214, %215 : vector<1x1xf32>
    %cst_200 = arith.constant dense<0.000000e+00> : vector<1xf32>
    %217 = vector.multi_reduction <add>, %212, %cst_200 [1] : vector<1x128xf32> to vector<1xf32>
    %218 = vector.shape_cast %217 : vector<1xf32> to vector<1x1xf32>
    %cst_201 = arith.constant 4.8828125E-4 : f32
    %219 = vector.broadcast %cst_201 : f32 to vector<1x1xf32>
    %220 = arith.mulf %218, %219 : vector<1x1xf32>
    %221 = arith.mulf %216, %216 : vector<1x1xf32>
    %222 = arith.subf %220, %221 : vector<1x1xf32>
    %cst_202 = arith.constant 0.000000e+00 : f32
    %223 = vector.broadcast %cst_202 : f32 to vector<1x1xf32>
    %224 = arith.maximumf %222, %223 : vector<1x1xf32>
    %cst_203 = arith.constant 9.99999974E-6 : f32
    %225 = vector.broadcast %cst_203 : f32 to vector<1x1xf32>
    %226 = arith.addf %224, %225 : vector<1x1xf32>
    %227 = math.rsqrt %226 : vector<1x1xf32>
    %228 = vector.broadcast %227 : vector<1x1xf32> to vector<1x128xf32>
    %229 = arith.mulf %194, %228 : vector<1x128xf32>
    %230 = vector.broadcast %216 : vector<1x1xf32> to vector<1x128xf32>
    %231 = arith.subf %193, %230 : vector<1x128xf32>
    %232 = arith.mulf %231, %229 : vector<1x128xf32>
    %233 = arith.addf %232, %195 : vector<1x128xf32>
    %234 = vector.broadcast %229 : vector<1x128xf32> to vector<256x128xf32>
    %235 = arith.mulf %196, %234 : vector<256x128xf32>
    %236 = vector.broadcast %233 : vector<1x128xf32> to vector<256x128xf32>
    %237 = arith.addf %235, %236 : vector<256x128xf32>
    %cst_204 = arith.constant 0.000000e+00 : f32
    %238 = vector.broadcast %cst_204 : f32 to vector<256x128xf32>
    %239 = arith.maximumf %237, %238 : vector<256x128xf32>
    %c0_205 = arith.constant 0 : index
    %c0_206 = arith.constant 0 : index
    %c0_207 = arith.constant 0 : index
    %240 = vector.load %arg2[%c0_205, %c0_206, %c0_207] : memref<1x1x128xf32, #tpu.memory_space<vmem>>, vector<1x1x128xf32>
    %241 = vector.shape_cast %240 : vector<1x1x128xf32> to vector<1x128xf32>
    %242 = vector.broadcast %241 : vector<1x128xf32> to vector<256x128xf32>
    %243 = arith.addf %239, %242 : vector<256x128xf32>
    %c0_208 = arith.constant 0 : index
    %c0_209 = arith.constant 0 : index
    %c0_210 = arith.constant 0 : index
    %244 = vector.load %arg11[%c0_208, %c0_209, %c0_210] : memref<1x256x128xf32, #tpu.memory_space<vmem>>, vector<1x256x128xf32>
    %245 = vector.shape_cast %244 : vector<1x256x128xf32> to vector<256x128xf32>
    %246 = vector.shape_cast %243 : vector<256x128xf32> to vector<1x256x128xf32>
    tpu.vector_store %arg11[%c0_208, %c0_209, %c0_210], %246 {strides = array<i32>} : memref<1x256x128xf32, #tpu.memory_space<vmem>>, vector<1x256x128xf32>,
    return
  }
  func.func @transform_0(%arg0: i32) -> (i32, i32, i32, i32) {
    %c0_i32 = arith.constant 0 : i32
    %c0_i32_0 = arith.constant 0 : i32
    %c0_i32_1 = arith.constant 0 : i32
    %c0_i32_2 = arith.constant 0 : i32
    return %arg0, %c0_i32, %c0_i32_0, %c0_i32_1 : i32, i32, i32, i32
  }
  func.func @transform_1(%arg0: i32) -> (i32, i32, i32) {
    %c0_i32 = arith.constant 0 : i32
    %c0_i32_0 = arith.constant 0 : i32
    %c0_i32_1 = arith.constant 0 : i32
    return %arg0, %c0_i32, %c0_i32_0 : i32, i32, i32
  }
  func.func @transform_2(%arg0: i32) -> (i32, i32, i32) {
    %c0_i32 = arith.constant 0 : i32
    %c0_i32_0 = arith.constant 0 : i32
    %c0_i32_1 = arith.constant 0 : i32
    %c0_i32_2 = arith.constant 0 : i32
    return %c0_i32, %c0_i32_0, %c0_i32_1 : i32, i32, i32
  }
  func.func @transform_3(%arg0: i32) -> (i32, i32) {
    %c0_i32 = arith.constant 0 : i32
    %c0_i32_0 = arith.constant 0 : i32
    %c0_i32_1 = arith.constant 0 : i32
    return %c0_i32, %c0_i32_0 : i32, i32
  }
  func.func @transform_4(%arg0: i32) -> (i32, i32) {
    %c0_i32 = arith.constant 0 : i32
    %c0_i32_0 = arith.constant 0 : i32
    %c0_i32_1 = arith.constant 0 : i32
    return %c0_i32, %c0_i32_0 : i32, i32
  }
  func.func @transform_5(%arg0: i32) -> (i32, i32) {
    %c0_i32 = arith.constant 0 : i32
    %c0_i32_0 = arith.constant 0 : i32
    %c0_i32_1 = arith.constant 0 : i32
    return %c0_i32, %c0_i32_0 : i32, i32
  }
  func.func @transform_6(%arg0: i32) -> (i32, i32, i32) {
    %c0_i32 = arith.constant 0 : i32
    %c0_i32_0 = arith.constant 0 : i32
    %c0_i32_1 = arith.constant 0 : i32
    %c0_i32_2 = arith.constant 0 : i32
    return %c0_i32, %c0_i32_0, %c0_i32_1 : i32, i32, i32
  }
  func.func @transform_7(%arg0: i32) -> (i32, i32) {
    %c0_i32 = arith.constant 0 : i32
    %c0_i32_0 = arith.constant 0 : i32
    %c0_i32_1 = arith.constant 0 : i32
    return %c0_i32, %c0_i32_0 : i32, i32
  }
  func.func @transform_8(%arg0: i32) -> (i32, i32) {
    %c0_i32 = arith.constant 0 : i32
    %c0_i32_0 = arith.constant 0 : i32
    %c0_i32_1 = arith.constant 0 : i32
    return %c0_i32, %c0_i32_0 : i32, i32
  }
  func.func @transform_9(%arg0: i32) -> (i32, i32) {
    %c0_i32 = arith.constant 0 : i32
    %c0_i32_0 = arith.constant 0 : i32
    %c0_i32_1 = arith.constant 0 : i32
    return %c0_i32, %c0_i32_0 : i32, i32
  }
  func.func @transform_10(%arg0: i32) -> (i32, i32, i32) {
    %c0_i32 = arith.constant 0 : i32
    %c0_i32_0 = arith.constant 0 : i32
    %c0_i32_1 = arith.constant 0 : i32
    return %arg0, %c0_i32, %c0_i32_0 : i32, i32, i32
  }
}

</mosaic_0001>

<llo_original>
// kernel: up_forward.1
$region0: #{up_forward.1}
  #allocation0 [shape = 'u32[]', space=smem, size = 0x4, offset = 0x4, fixed_abs, tag = 'smem constant byte address 0x4 - core index']
  #allocation1 [shape = 'u32[144,128]{1,0:T(1,128)}', space=vmem, size = 0x12000, scoped, tag = 'internal scratch']
  #allocation2 [shape = 'bf16[18,32,128]{2,1,0:T(8,128)(2,1)}', space=vmem, size = 0x24000, scoped, tag = 'scratch operand']
  #allocation3 [shape = 'f32[256,128]{1,0:T(8,128)}', space=vmem, size = 0x20000, scoped, tag = 'scratch operand']
  %s0 = inlined_call_operand.vmem [shape: bf16[2,18,18,128], index: 0, kind: input, shape index: {}]
  %s1 = inlined_call_operand.vmem [shape: f32[2,1,128], index: 1, kind: input, shape index: {}]
  %s2 = inlined_call_operand.vmem [shape: bf16[9,128,128], index: 2, kind: input, shape index: {}]
  %s3 = inlined_call_operand.vmem [shape: f32[1,128], index: 3, kind: input, shape index: {}]
  %s4 = inlined_call_operand.vmem [shape: f32[1,128], index: 4, kind: input, shape index: {}]
  %s5 = inlined_call_operand.vmem [shape: f32[1,128], index: 5, kind: input, shape index: {}]
  %s6 = inlined_call_operand.vmem [shape: bf16[9,128,128], index: 6, kind: input, shape index: {}]
  %s7 = inlined_call_operand.vmem [shape: f32[1,128], index: 7, kind: input, shape index: {}]
  %s8 = inlined_call_operand.vmem [shape: f32[1,128], index: 8, kind: input, shape index: {}]
  %s9 = inlined_call_operand.vmem [shape: f32[1,128], index: 9, kind: input, shape index: {}]
  %s10 = inlined_call_operand.vmem [shape: f32[2,256,128], index: 10, kind: output, shape index: {}]
  %s11 = sld [smem:[#allocation0]]
  $region73: #{up_forward.1} parent=0
    _
  %s13 = ssub.s32 1, %s11
  %s14 = scalar_select 0, %s13, %s11
  loop: start=0, step=1, limit=4
  $region2: #{up_forward.1} parent=0 // loop_pre_header
    _
  $region3: #{up_forward.1} parent=0 // loop_header
    %s16 = sphi 0, %s20
    %p17 = scmp.ge.s32.totalorder %s16, 4
    %s26 = sphi 0, %s28
    %s29 = sphi 0, %s26
    %s30 = sphi 0, %s29
    %s46 = sphi 0, %s30
    %s52 = sphi 0, %s54
    %s55 = sphi 0, %s52
    %s56 = sphi 0, %s55
    %s72 = sphi 0, %s56
    %s76 = sphi 0, %s76
    %s78 = sphi 0, %s76
    %s79 = sphi 0, %s78
    %s93 = sphi 0, %s79
    %s97 = sphi 0, %s97
    %s99 = sphi 0, %s97
    %s100 = sphi 0, %s99
    %s114 = sphi 0, %s100
    %s118 = sphi 0, %s118
    %s120 = sphi 0, %s118
    %s121 = sphi 0, %s120
    %s135 = sphi 0, %s121
    %s139 = sphi 0, %s139
    %s141 = sphi 0, %s139
    %s142 = sphi 0, %s141
    %s156 = sphi 0, %s142
    %s160 = sphi 0, %s160
    %s162 = sphi 0, %s160
    %s163 = sphi 0, %s162
    %s177 = sphi 0, %s163
    %s181 = sphi 0, %s181
    %s183 = sphi 0, %s181
    %s184 = sphi 0, %s183
    %s198 = sphi 0, %s184
    %s202 = sphi 0, %s202
    %s204 = sphi 0, %s202
    %s205 = sphi 0, %s204
    %s219 = sphi 0, %s205
    %s223 = sphi 0, %s223
    %s225 = sphi 0, %s223
    %s226 = sphi 0, %s225
    %s240 = sphi 0, %s226
    %s246 = sphi 0, %s248
    %s249 = sphi 0, %s246
    %s250 = sphi 0, %s249
    %s266 = sphi 0, %s250
  $region4: #{up_forward.1} parent=0 // loop_header_branch
    %19 = sbr.rel (%p17) target = $region8
  $region5: #{up_forward.1} parent=0 // loop_body
    %s21 = ssub.s32 %s16, 1
    %s22 = ssub.s32 %s16, 2
    %s23 = sadd.s32 %s16, 1
    %s24 = ssub.s32 %s16, %s23
    %p25 = scmp.eq.s32.totalorder %s24, 0
    %s27 = sadd.s32 %s26, 1
    %s28 = scalar_select %p25, %s26, %s27
    %p31 = pneg %p25
    %p32 = scmp.eq.s32.totalorder %s16, 1
    %p33 = por %p31, %p32
    %p34 = scmp.ne.s32.totalorder %s26, %s29
    %p35 = scmp.eq.s32.totalorder %s16, 0
    %p36 = por %p34, %p35
    %p37 = scmp.ne.s32.totalorder %s26, %s29
    %p38 = scmp.eq.s32.totalorder %s21, 1
    %p39 = por %p37, %p38
    %p40 = scmp.ne.s32.totalorder %s29, %s30
    %p41 = scmp.eq.s32.totalorder %s21, 0
    %p42 = por %p40, %p41
    %p43 = scmp.ne.s32.totalorder %s29, %s30
    %p44 = scmp.eq.s32.totalorder %s22, 1
    %p45 = por %p43, %p44
    %p47 = scmp.ne.s32.totalorder %s30, %s46
    %p48 = scmp.eq.s32.totalorder %s22, 0
    %p49 = por %p47, %p48
    %s50 = ssub.s32 %s16, %s23
    %p51 = scmp.eq.s32.totalorder %s50, 0
    %s53 = sadd.s32 %s52, 1
    %s54 = scalar_select %p51, %s52, %s53
    %p57 = pneg %p51
    %p58 = scmp.eq.s32.totalorder %s16, 1
    %p59 = por %p57, %p58
    %p60 = scmp.ne.s32.totalorder %s52, %s55
    %p61 = scmp.eq.s32.totalorder %s16, 0
    %p62 = por %p60, %p61
    %p63 = scmp.ne.s32.totalorder %s52, %s55
    %p64 = scmp.eq.s32.totalorder %s21, 1
    %p65 = por %p63, %p64
    %p66 = scmp.ne.s32.totalorder %s55, %s56
    %p67 = scmp.eq.s32.totalorder %s21, 0
    %p68 = por %p66, %p67
    %p69 = scmp.ne.s32.totalorder %s55, %s56
    %p70 = scmp.eq.s32.totalorder %s22, 1
    %p71 = por %p69, %p70
    %p73 = scmp.ne.s32.totalorder %s56, %s72
    %p74 = scmp.eq.s32.totalorder %s22, 0
    %p75 = por %p73, %p74
    %s77 = sadd.s32 %s76, 1
    %p80 = scmp.eq.s32.totalorder %s16, 1
    %p81 = scmp.ne.s32.totalorder %s76, %s78
    %p82 = scmp.eq.s32.totalorder %s16, 0
    %p83 = por %p81, %p82
    %p84 = scmp.ne.s32.totalorder %s76, %s78
    %p85 = scmp.eq.s32.totalorder %s21, 1
    %p86 = por %p84, %p85
    %p87 = scmp.ne.s32.totalorder %s78, %s79
    %p88 = scmp.eq.s32.totalorder %s21, 0
    %p89 = por %p87, %p88
    %p90 = scmp.ne.s32.totalorder %s78, %s79
    %p91 = scmp.eq.s32.totalorder %s22, 1
    %p92 = por %p90, %p91
    %p94 = scmp.ne.s32.totalorder %s79, %s93
    %p95 = scmp.eq.s32.totalorder %s22, 0
    %p96 = por %p94, %p95
    %s98 = sadd.s32 %s97, 1
    %p101 = scmp.eq.s32.totalorder %s16, 1
    %p102 = scmp.ne.s32.totalorder %s97, %s99
    %p103 = scmp.eq.s32.totalorder %s16, 0
    %p104 = por %p102, %p103
    %p105 = scmp.ne.s32.totalorder %s97, %s99
    %p106 = scmp.eq.s32.totalorder %s21, 1
    %p107 = por %p105, %p106
    %p108 = scmp.ne.s32.totalorder %s99, %s100
    %p109 = scmp.eq.s32.totalorder %s21, 0
    %p110 = por %p108, %p109
    %p111 = scmp.ne.s32.totalorder %s99, %s100
    %p112 = scmp.eq.s32.totalorder %s22, 1
    %p113 = por %p111, %p112
    %p115 = scmp.ne.s32.totalorder %s100, %s114
    %p116 = scmp.eq.s32.totalorder %s22, 0
    %p117 = por %p115, %p116
    %s119 = sadd.s32 %s118, 1
    %p122 = scmp.eq.s32.totalorder %s16, 1
    %p123 = scmp.ne.s32.totalorder %s118, %s120
    %p124 = scmp.eq.s32.totalorder %s16, 0
    %p125 = por %p123, %p124
    %p126 = scmp.ne.s32.totalorder %s118, %s120
    %p127 = scmp.eq.s32.totalorder %s21, 1
    %p128 = por %p126, %p127
    %p129 = scmp.ne.s32.totalorder %s120, %s121
    %p130 = scmp.eq.s32.totalorder %s21, 0
    %p131 = por %p129, %p130
    %p132 = scmp.ne.s32.totalorder %s120, %s121
    %p133 = scmp.eq.s32.totalorder %s22, 1
    %p134 = por %p132, %p133
    %p136 = scmp.ne.s32.totalorder %s121, %s135
    %p137 = scmp.eq.s32.totalorder %s22, 0
    %p138 = por %p136, %p137
    %s140 = sadd.s32 %s139, 1
    %p143 = scmp.eq.s32.totalorder %s16, 1
    %p144 = scmp.ne.s32.totalorder %s139, %s141
    %p145 = scmp.eq.s32.totalorder %s16, 0
    %p146 = por %p144, %p145
    %p147 = scmp.ne.s32.totalorder %s139, %s141
    %p148 = scmp.eq.s32.totalorder %s21, 1
    %p149 = por %p147, %p148
    %p150 = scmp.ne.s32.totalorder %s141, %s142
    %p151 = scmp.eq.s32.totalorder %s21, 0
    %p152 = por %p150, %p151
    %p153 = scmp.ne.s32.totalorder %s141, %s142
    %p154 = scmp.eq.s32.totalorder %s22, 1
    %p155 = por %p153, %p154
    %p157 = scmp.ne.s32.totalorder %s142, %s156
    %p158 = scmp.eq.s32.totalorder %s22, 0
    %p159 = por %p157, %p158
    %s161 = sadd.s32 %s160, 1
    %p164 = scmp.eq.s32.totalorder %s16, 1
    %p165 = scmp.ne.s32.totalorder %s160, %s162
    %p166 = scmp.eq.s32.totalorder %s16, 0
    %p167 = por %p165, %p166
    %p168 = scmp.ne.s32.totalorder %s160, %s162
    %p169 = scmp.eq.s32.totalorder %s21, 1
    %p170 = por %p168, %p169
    %p171 = scmp.ne.s32.totalorder %s162, %s163
    %p172 = scmp.eq.s32.totalorder %s21, 0
    %p173 = por %p171, %p172
    %p174 = scmp.ne.s32.totalorder %s162, %s163
    %p175 = scmp.eq.s32.totalorder %s22, 1
    %p176 = por %p174, %p175
    %p178 = scmp.ne.s32.totalorder %s163, %s177
    %p179 = scmp.eq.s32.totalorder %s22, 0
    %p180 = por %p178, %p179
    %s182 = sadd.s32 %s181, 1
    %p185 = scmp.eq.s32.totalorder %s16, 1
    %p186 = scmp.ne.s32.totalorder %s181, %s183
    %p187 = scmp.eq.s32.totalorder %s16, 0
    %p188 = por %p186, %p187
    %p189 = scmp.ne.s32.totalorder %s181, %s183
    %p190 = scmp.eq.s32.totalorder %s21, 1
    %p191 = por %p189, %p190
    %p192 = scmp.ne.s32.totalorder %s183, %s184
    %p193 = scmp.eq.s32.totalorder %s21, 0
    %p194 = por %p192, %p193
    %p195 = scmp.ne.s32.totalorder %s183, %s184
    %p196 = scmp.eq.s32.totalorder %s22, 1
    %p197 = por %p195, %p196
    %p199 = scmp.ne.s32.totalorder %s184, %s198
    %p200 = scmp.eq.s32.totalorder %s22, 0
    %p201 = por %p199, %p200
    %s203 = sadd.s32 %s202, 1
    %p206 = scmp.eq.s32.totalorder %s16, 1
    %p207 = scmp.ne.s32.totalorder %s202, %s204
    %p208 = scmp.eq.s32.totalorder %s16, 0
    %p209 = por %p207, %p208
    %p210 = scmp.ne.s32.totalorder %s202, %s204
    %p211 = scmp.eq.s32.totalorder %s21, 1
    %p212 = por %p210, %p211
    %p213 = scmp.ne.s32.totalorder %s204, %s205
    %p214 = scmp.eq.s32.totalorder %s21, 0
    %p215 = por %p213, %p214
    %p216 = scmp.ne.s32.totalorder %s204, %s205
    %p217 = scmp.eq.s32.totalorder %s22, 1
    %p218 = por %p216, %p217
    %p220 = scmp.ne.s32.totalorder %s205, %s219
    %p221 = scmp.eq.s32.totalorder %s22, 0
    %p222 = por %p220, %p221
    %s224 = sadd.s32 %s223, 1
    %p227 = scmp.eq.s32.totalorder %s16, 1
    %p228 = scmp.ne.s32.totalorder %s223, %s225
    %p229 = scmp.eq.s32.totalorder %s16, 0
    %p230 = por %p228, %p229
    %p231 = scmp.ne.s32.totalorder %s223, %s225
    %p232 = scmp.eq.s32.totalorder %s21, 1
    %p233 = por %p231, %p232
    %p234 = scmp.ne.s32.totalorder %s225, %s226
    %p235 = scmp.eq.s32.totalorder %s21, 0
    %p236 = por %p234, %p235
    %p237 = scmp.ne.s32.totalorder %s225, %s226
    %p238 = scmp.eq.s32.totalorder %s22, 1
    %p239 = por %p237, %p238
    %p241 = scmp.ne.s32.totalorder %s226, %s240
    %p242 = scmp.eq.s32.totalorder %s22, 0
    %p243 = por %p241, %p242
    %s244 = ssub.s32 %s16, %s23
    %p245 = scmp.eq.s32.totalorder %s244, 0
    %s247 = sadd.s32 %s246, 1
    %s248 = scalar_select %p245, %s246, %s247
    %p251 = pneg %p245
    %p252 = scmp.eq.s32.totalorder %s16, 1
    %p253 = por %p251, %p252
    %p254 = scmp.ne.s32.totalorder %s246, %s249
    %p255 = scmp.eq.s32.totalorder %s16, 0
    %p256 = por %p254, %p255
    %p257 = scmp.ne.s32.totalorder %s246, %s249
    %p258 = scmp.eq.s32.totalorder %s21, 1
    %p259 = por %p257, %p258
    %p260 = scmp.ne.s32.totalorder %s249, %s250
    %p261 = scmp.eq.s32.totalorder %s21, 0
    %p262 = por %p260, %p261
    %p263 = scmp.ne.s32.totalorder %s249, %s250
    %p264 = scmp.eq.s32.totalorder %s22, 1
    %p265 = por %p263, %p264
    %p267 = scmp.ne.s32.totalorder %s250, %s266
    %p268 = scmp.eq.s32.totalorder %s22, 0
    %p269 = por %p267, %p268
    %p270 = scmp.le.s32.totalorder 1, %s16
    %p271 = scmp.lt.s32.totalorder %s16, 3
    %p272 = pnand %p270, %p271
    %p273 = pneg %p272
    // Predicated region
    $region9: #{up_forward.1} parent=5 // pred_check
      _
    $region10: #{up_forward.1} parent=5 // pred_check_branch
      %275 = sbr.rel (%p272) target = $region12
    $region11: #{up_forward.1} parent=5 // pred_region
      %s276 = ssub.s32 %s16, 1
      // Predicated region
      $region13: #{up_forward.1} parent=11 // pred_check
        %p277 = pneg %p89
      $region14: #{up_forward.1} parent=11 // pred_check_branch
        %279 = sbr.rel (%p277) target = $region16
      $region15: #{up_forward.1} parent=11 // pred_region
        _
      $region16: #{up_forward.1} parent=11 // pred_fallthru
        _
      // Predicated region
      $region17: #{up_forward.1} parent=11 // pred_check
        %p280 = pneg %p110
      $region18: #{up_forward.1} parent=11 // pred_check_branch
        %282 = sbr.rel (%p280) target = $region20
      $region19: #{up_forward.1} parent=11 // pred_region
        _
      $region20: #{up_forward.1} parent=11 // pred_fallthru
        _
      // Predicated region
      $region21: #{up_forward.1} parent=11 // pred_check
        %p283 = pneg %p131
      $region22: #{up_forward.1} parent=11 // pred_check_branch
        %285 = sbr.rel (%p283) target = $region24
      $region23: #{up_forward.1} parent=11 // pred_region
        _
      $region24: #{up_forward.1} parent=11 // pred_fallthru
        _
      // Predicated region
      $region25: #{up_forward.1} parent=11 // pred_check
        %p286 = pneg %p152
      $region26: #{up_forward.1} parent=11 // pred_check_branch
        %288 = sbr.rel (%p286) target = $region28
      $region27: #{up_forward.1} parent=11 // pred_region
        _
      $region28: #{up_forward.1} parent=11 // pred_fallthru
        _
      // Predicated region
      $region29: #{up_forward.1} parent=11 // pred_check
        %p289 = pneg %p173
      $region30: #{up_forward.1} parent=11 // pred_check_branch
        %291 = sbr.rel (%p289) target = $region32
      $region31: #{up_forward.1} parent=11 // pred_region
        _
      $region32: #{up_forward.1} parent=11 // pred_fallthru
        _
      // Predicated region
      $region33: #{up_forward.1} parent=11 // pred_check
        %p292 = pneg %p194
      $region34: #{up_forward.1} parent=11 // pred_check_branch
        %294 = sbr.rel (%p292) target = $region36
      $region35: #{up_forward.1} parent=11 // pred_region
        _
      $region36: #{up_forward.1} parent=11 // pred_fallthru
        _
      // Predicated region
      $region37: #{up_forward.1} parent=11 // pred_check
        %p295 = pneg %p215
      $region38: #{up_forward.1} parent=11 // pred_check_branch
        %297 = sbr.rel (%p295) target = $region40
      $region39: #{up_forward.1} parent=11 // pred_region
        _
      $region40: #{up_forward.1} parent=11 // pred_fallthru
        _
      // Predicated region
      $region41: #{up_forward.1} parent=11 // pred_check
        %p298 = pneg %p236
      $region42: #{up_forward.1} parent=11 // pred_check_branch
        %300 = sbr.rel (%p298) target = $region44
      $region43: #{up_forward.1} parent=11 // pred_region
        _
      $region44: #{up_forward.1} parent=11 // pred_fallthru
        _
    $region12: #{up_forward.1} parent=5 // pred_fallthru
      _
    %p301 = scmp.lt.s32.totalorder %s16, 2
    // Predicated region
    $region45: #{up_forward.1} parent=5 // pred_check
      %p302 = pneg %p301
    $region46: #{up_forward.1} parent=5 // pred_check_branch
      %304 = sbr.rel (%p302) target = $region48
    $region47: #{up_forward.1} parent=5 // pred_region
      // Predicated region
      $region49: #{up_forward.1} parent=47 // pred_check
        %p305 = pneg %p36
      $region50: #{up_forward.1} parent=47 // pred_check_branch
        %307 = sbr.rel (%p305) target = $region52
      $region51: #{up_forward.1} parent=47 // pred_region
        %p308 = scmp.lt.s32.totalorder %s16, 1
        %s309 = scalar_select %p308, %s16, 1
        %s310 = smul.addr %s309, 54
        %s311 = smul.addr %s310, 4
        %s312 = scalar_lea.vmem %s0, %s311
      $region52: #{up_forward.1} parent=47 // pred_fallthru
        _
      // Predicated region
      $region53: #{up_forward.1} parent=47 // pred_check
        %p313 = pneg %p62
      $region54: #{up_forward.1} parent=47 // pred_check_branch
        %315 = sbr.rel (%p313) target = $region56
      $region55: #{up_forward.1} parent=47 // pred_region
        %p316 = scmp.lt.s32.totalorder %s16, 1
        %s317 = scalar_select %p316, %s16, 1
        %s318 = scalar_lea.vmem %s1, %s317
      $region56: #{up_forward.1} parent=47 // pred_fallthru
        _
    $region48: #{up_forward.1} parent=5 // pred_fallthru
      _
    %p319 = scmp.le.s32.totalorder 1, %s16
    %p320 = scmp.lt.s32.totalorder %s16, 3
    %p321 = pnand %p319, %p320
    %p322 = pneg %p321
    // Predicated region
    $region57: #{up_forward.1} parent=5 // pred_check
      _
    $region58: #{up_forward.1} parent=5 // pred_check_branch
      %324 = sbr.rel (%p321) target = $region60
    $region59: #{up_forward.1} parent=5 // pred_region
      %s325 = ssub.s32 %s16, 1
      %p326 = scmp.lt.s32.totalorder %s21, 1
      %s327 = scalar_select %p326, %s21, 1
      %s328 = smul.addr %s327, 54
      %s329 = smul.addr %s328, 4
      %s330 = scalar_lea.vmem %s0, %s329
      %p331 = pneg %p42
      %p332 = pneg %p39
      %p333 = scmp.lt.s32.totalorder %s21, 1
      %s334 = scalar_select %p333, %s21, 1
      %s335 = scalar_lea.vmem %s1, %s334
      %p336 = pneg %p68
      %p337 = pneg %p65
      %p338 = pneg %p89
      %p339 = pneg %p86
      %p340 = pneg %p110
      %p341 = pneg %p107
      %p342 = pneg %p131
      %p343 = pneg %p128
      %p344 = pneg %p152
      %p345 = pneg %p149
      %p346 = pneg %p173
      %p347 = pneg %p170
      %p348 = pneg %p194
      %p349 = pneg %p191
      %p350 = pneg %p215
      %p351 = pneg %p212
      %p352 = pneg %p236
      %p353 = pneg %p233
      %p354 = pneg %p262
      %p355 = pneg %p259
      %p356 = scmp.lt.s32.totalorder %s21, 1
      %s357 = scalar_select %p356, %s21, 1
      %s358 = smul.addr %s357, 32
      %s359 = smul.addr %s358, 8
      %s360 = scalar_lea.vmem %s10, %s359
      %p361 = scmp.lt.s32.totalorder %s21, 1
      %s362 = scalar_select %p361, %s21, 1
      %s363 = smul.addr %s362, 54
      %s364 = smul.addr %s363, 4
      %s365 = scalar_lea.vmem %s0, %s364
      %p366 = scmp.lt.s32.totalorder %s21, 1
      %s367 = scalar_select %p366, %s21, 1
      %s368 = scalar_lea.vmem %s1, %s367
      %p369 = scmp.lt.s32.totalorder %s21, 1
      %s370 = scalar_select %p369, %s21, 1
      %s371 = smul.addr %s370, 32
      %s372 = smul.addr %s371, 8
      %s373 = scalar_lea.vmem %s10, %s372
      %v375 = vld [vmem:[%s365] sm:$0xf]
      %v376 = vld [vmem:[%s365 + $0x4] sm:$0xf]
      %v377 = vld [vmem:[%s365 + $0xc] sm:$0xf]
      %v378 = vld [vmem:[%s365 + $0x10] sm:$0xf]
      %v379 = vld [vmem:[%s365 + $0x18] sm:$0xf]
      %v380 = vld [vmem:[%s365 + $0x1c] sm:$0xf]
      %v381 = vld [vmem:[%s365 + $0x24] sm:$0xf]
      %v382 = vld [vmem:[%s365 + $0x28] sm:$0xf]
      %v383 = vld [vmem:[%s365 + $0x30] sm:$0xf]
      %v384 = vld [vmem:[%s365 + $0x34] sm:$0xf]
      %v385 = vld [vmem:[%s365 + $0x3c] sm:$0xf]
      %v386 = vld [vmem:[%s365 + $0x40] sm:$0xf]
      %v387 = vld [vmem:[%s365 + $0x48] sm:$0xf]
      %v388 = vld [vmem:[%s365 + $0x4c] sm:$0xf]
      %v389 = vld [vmem:[%s365 + $0x54] sm:$0xf]
      %v390 = vld [vmem:[%s365 + $0x58] sm:$0xf]
      %v391 = vld [vmem:[%s365 + $0x60] sm:$0xf]
      %v392 = vld [vmem:[%s365 + $0x64] sm:$0xf]
      %v393 = vld [vmem:[%s365 + $0x6c] sm:$0xf]
      %v394 = vld [vmem:[%s365 + $0x70] sm:$0xf]
      %v395 = vld [vmem:[%s365 + $0x78] sm:$0xf]
      %v396 = vld [vmem:[%s365 + $0x7c] sm:$0xf]
      %v397 = vld [vmem:[%s365 + $0x84] sm:$0xf]
      %v398 = vld [vmem:[%s365 + $0x88] sm:$0xf]
      %v399 = vld [vmem:[%s365 + $0x90] sm:$0xf]
      %v400 = vld [vmem:[%s365 + $0x94] sm:$0xf]
      %v401 = vld [vmem:[%s365 + $0x9c] sm:$0xf]
      %v402 = vld [vmem:[%s365 + $0xa0] sm:$0xf]
      %v403 = vld [vmem:[%s365 + $0xa8] sm:$0xf]
      %v404 = vld [vmem:[%s365 + $0xac] sm:$0xf]
      %v405 = vld [vmem:[%s365 + $0xb4] sm:$0xf]
      %v406 = vld [vmem:[%s365 + $0xb8] sm:$0xf]
      %v407 = vld [vmem:[%s365 + $0xc0] sm:$0xf]
      %v408 = vld [vmem:[%s365 + $0xc4] sm:$0xf]
      %v409 = vld [vmem:[%s365 + $0xcc] sm:$0xf]
      %v410 = vld [vmem:[%s365 + $0xd0] sm:$0xf]
      %v411 = vld [vmem:[%s2] sm:$0xf]
      %v412 = vld [vmem:[%s2 + $0x4] sm:$0xf]
      %v413 = vld [vmem:[%s2 + $0x8] sm:$0xf]
      %v414 = vld [vmem:[%s2 + $0xc] sm:$0xf]
      %v415 = vld [vmem:[%s2 + $0x10] sm:$0xf]
      %v416 = vld [vmem:[%s2 + $0x14] sm:$0xf]
      %v417 = vld [vmem:[%s2 + $0x18] sm:$0xf]
      %v418 = vld [vmem:[%s2 + $0x1c] sm:$0xf]
      %v419 = vld [vmem:[%s2 + $0x20] sm:$0xf]
      %v420 = vld [vmem:[%s2 + $0x24] sm:$0xf]
      %v421 = vld [vmem:[%s2 + $0x28] sm:$0xf]
      %v422 = vld [vmem:[%s2 + $0x2c] sm:$0xf]
      %v423 = vld [vmem:[%s2 + $0x30] sm:$0xf]
      %v424 = vld [vmem:[%s2 + $0x34] sm:$0xf]
      %v425 = vld [vmem:[%s2 + $0x38] sm:$0xf]
      %v426 = vld [vmem:[%s2 + $0x3c] sm:$0xf]
      %v459 = vunpack.c.l.b16 %v375
      %v460 = vunpack.c.l.b16 %v376
      %v461 = vunpack.c.l.b16 %v377
      %v462 = vunpack.c.l.b16 %v378
      %v463 = vunpack.c.l.b16 %v379
      %v464 = vunpack.c.l.b16 %v380
      %v465 = vunpack.c.l.b16 %v381
      %v466 = vunpack.c.l.b16 %v382
      %v467 = vunpack.c.l.b16 %v383
      %v468 = vunpack.c.l.b16 %v384
      %v469 = vunpack.c.l.b16 %v385
      %v470 = vunpack.c.l.b16 %v386
      %v471 = vunpack.c.l.b16 %v387
      %v472 = vunpack.c.l.b16 %v388
      %v473 = vunpack.c.l.b16 %v389
      %v474 = vunpack.c.l.b16 %v390
      %v475 = vunpack.c.l.b16 %v391
      %v476 = vunpack.c.l.b16 %v392
      %v477 = vunpack.c.l.b16 %v393
      %v478 = vunpack.c.l.b16 %v394
      %v479 = vunpack.c.l.b16 %v395
      %v480 = vunpack.c.l.b16 %v396
      %v481 = vunpack.c.l.b16 %v397
      %v482 = vunpack.c.l.b16 %v398
      %v483 = vunpack.c.l.b16 %v399
      %v484 = vunpack.c.l.b16 %v400
      %v485 = vunpack.c.l.b16 %v401
      %v486 = vunpack.c.l.b16 %v402
      %v487 = vunpack.c.l.b16 %v403
      %v488 = vunpack.c.l.b16 %v404
      %v489 = vunpack.c.l.b16 %v405
      %v490 = vunpack.c.l.b16 %v406
      %v491 = vpack.c.b16 %v460, %v459
      %v492 = vpack.c.b16 %v462, %v461
      %v493 = vpack.c.b16 %v464, %v463
      %v494 = vpack.c.b16 %v466, %v465
      %v495 = vpack.c.b16 %v468, %v467
      %v496 = vpack.c.b16 %v470, %v469
      %v497 = vpack.c.b16 %v472, %v471
      %v498 = vpack.c.b16 %v474, %v473
      %v499 = vpack.c.b16 %v476, %v475
      %v500 = vpack.c.b16 %v478, %v477
      %v501 = vpack.c.b16 %v480, %v479
      %v502 = vpack.c.b16 %v482, %v481
      %v503 = vpack.c.b16 %v484, %v483
      %v504 = vpack.c.b16 %v486, %v485
      %v505 = vpack.c.b16 %v488, %v487
      %v506 = vpack.c.b16 %v490, %v489
      %v539 = vunpack.c.l.b16 %v411
      %v540 = vunpack.c.l.b16 %v412
      %v541 = vunpack.c.l.b16 %v413
      %v542 = vunpack.c.l.b16 %v414
      %v543 = vunpack.c.l.b16 %v415
      %v544 = vunpack.c.l.b16 %v416
      %v545 = vunpack.c.l.b16 %v417
      %v546 = vunpack.c.l.b16 %v418
      %v547 = vunpack.c.l.b16 %v419
      %v548 = vunpack.c.l.b16 %v420
      %v549 = vunpack.c.l.b16 %v421
      %v550 = vunpack.c.l.b16 %v422
      %v551 = vunpack.c.l.b16 %v423
      %v552 = vunpack.c.l.b16 %v424
      %v553 = vunpack.c.l.b16 %v425
      %v554 = vunpack.c.l.b16 %v426
      %v555 = vpack.c.b16 %v540, %v539
      %v556 = vpack.c.b16 %v542, %v541
      %v557 = vpack.c.b16 %v544, %v543
      %v558 = vpack.c.b16 %v546, %v545
      %v559 = vpack.c.b16 %v548, %v547
      %v560 = vpack.c.b16 %v550, %v549
      %v561 = vpack.c.b16 %v552, %v551
      %v562 = vpack.c.b16 %v554, %v553
      %571 = vmatprep.subr.bf16.mxu0 0
      %572 = vmatpush1.bf16.msra.mxu0 %v562
      %573 = vmatprep.subr.bf16.mxu0 0
      %574 = vmatpush1.bf16.msra.mxu0 %v561
      %575 = vmatprep.subr.bf16.mxu0 0
      %576 = vmatpush1.bf16.msra.mxu0 %v560
      %577 = vmatprep.subr.bf16.mxu0 0
      %578 = vmatpush1.bf16.msra.mxu0 %v559
      %579 = vmatprep.subr.bf16.mxu0 0
      %580 = vmatpush1.bf16.msra.mxu0 %v558
      %581 = vmatprep.subr.bf16.mxu0 0
      %582 = vmatpush1.bf16.msra.mxu0 %v557
      %583 = vmatprep.subr.bf16.mxu0 0
      %584 = vmatpush1.bf16.msra.mxu0 %v556
      %585 = vmatprep.subr.bf16.mxu0 0
      %586 = vmatpush1.bf16.msra.mxu0 %v555
      %587 = vmatprep.subr.bf16.mxu0 0
      %588 = vmatpush2.bf16.msra.mxu0 0
      %589 = vmatprep.subr.bf16.mxu0 0
      %590 = vmatpush2.bf16.msra.mxu0 0
      %591 = vmatprep.subr.bf16.mxu0 0
      %592 = vmatpush2.bf16.msra.mxu0 0
      %593 = vmatprep.subr.bf16.mxu0 0
      %594 = vmatpush2.bf16.msra.mxu0 0
      %595 = vmatprep.subr.bf16.mxu0 0
      %596 = vmatpush2.bf16.msra.mxu0 0
      %597 = vmatprep.subr.bf16.mxu0 0
      %598 = vmatpush2.bf16.msra.mxu0 0
      %599 = vmatprep.subr.bf16.mxu0 0
      %600 = vmatpush2.bf16.msra.mxu0 0
      %601 = vmatprep.subr.bf16.mxu0 0
      %602 = vmatpush2.bf16.msra.mxu0 0
      %603 = vmatprep.mubr.bf16.mxu0 0
      %604 = vmatmul.mubr.bf16.gmra.mxu0 %v491
      %v605 = vpop.f32.mrf.mxu0
      %v606 = vadd.f32 0.0, %v605
      %v607 = vpop.f32.mrf.mxu0
      %v608 = vpop.f32.mrf.mxu0
      %v609 = vadd.f32 0.0, %v608
      %v610 = vpop.f32.mrf.mxu0
      %611 = vmatprep.mubr.bf16.mxu0 0
      %612 = vmatmul.mubr.bf16.gmra.mxu0 %v492
      %v613 = vpop.f32.mrf.mxu0
      %v614 = vadd.f32 0.0, %v613
      %v615 = vpop.f32.mrf.mxu0
      %v616 = vpop.f32.mrf.mxu0
      %v617 = vadd.f32 0.0, %v616
      %v618 = vpop.f32.mrf.mxu0
      %619 = vmatprep.mubr.bf16.mxu0 0
      %620 = vmatmul.mubr.bf16.gmra.mxu0 %v493
      %v621 = vpop.f32.mrf.mxu0
      %v622 = vadd.f32 0.0, %v621
      %v623 = vpop.f32.mrf.mxu0
      %v624 = vpop.f32.mrf.mxu0
      %v625 = vadd.f32 0.0, %v624
      %v626 = vpop.f32.mrf.mxu0
      %627 = vmatprep.mubr.bf16.mxu0 0
      %628 = vmatmul.mubr.bf16.gmra.mxu0 %v494
      %v629 = vpop.f32.mrf.mxu0
      %v630 = vadd.f32 0.0, %v629
      %v631 = vpop.f32.mrf.mxu0
      %v632 = vpop.f32.mrf.mxu0
      %v633 = vadd.f32 0.0, %v632
      %v634 = vpop.f32.mrf.mxu0
      %635 = vmatprep.mubr.bf16.mxu0 0
      %636 = vmatmul.mubr.bf16.gmra.mxu0 %v495
      %v637 = vpop.f32.mrf.mxu0
      %v638 = vadd.f32 0.0, %v637
      %v639 = vpop.f32.mrf.mxu0
      %v640 = vpop.f32.mrf.mxu0
      %v641 = vadd.f32 0.0, %v640
      %v642 = vpop.f32.mrf.mxu0
      %643 = vmatprep.mubr.bf16.mxu0 0
      %644 = vmatmul.mubr.bf16.gmra.mxu0 %v496
      %v645 = vpop.f32.mrf.mxu0
      %v646 = vadd.f32 0.0, %v645
      %v647 = vpop.f32.mrf.mxu0
      %v648 = vpop.f32.mrf.mxu0
      %v649 = vadd.f32 0.0, %v648
      %v650 = vpop.f32.mrf.mxu0
      %651 = vmatprep.mubr.bf16.mxu0 0
      %652 = vmatmul.mubr.bf16.gmra.mxu0 %v497
      %v653 = vpop.f32.mrf.mxu0
      %v654 = vadd.f32 0.0, %v653
      %v655 = vpop.f32.mrf.mxu0
      %v656 = vpop.f32.mrf.mxu0
      %v657 = vadd.f32 0.0, %v656
      %v658 = vpop.f32.mrf.mxu0
      %659 = vmatprep.mubr.bf16.mxu0 0
      %660 = vmatmul.mubr.bf16.gmra.mxu0 %v498
      %v661 = vpop.f32.mrf.mxu0
      %v662 = vadd.f32 0.0, %v661
      %v663 = vpop.f32.mrf.mxu0
      %v664 = vpop.f32.mrf.mxu0
      %v665 = vadd.f32 0.0, %v664
      %v666 = vpop.f32.mrf.mxu0
      %667 = vmatprep.mubr.bf16.mxu0 0
      %668 = vmatmul.mubr.bf16.gmra.mxu0 %v499
      %v669 = vpop.f32.mrf.mxu0
      %v670 = vadd.f32 0.0, %v669
      %v671 = vpop.f32.mrf.mxu0
      %v672 = vpop.f32.mrf.mxu0
      %v673 = vadd.f32 0.0, %v672
      %v674 = vpop.f32.mrf.mxu0
      %675 = vmatprep.mubr.bf16.mxu0 0
      %676 = vmatmul.mubr.bf16.gmra.mxu0 %v500
      %v677 = vpop.f32.mrf.mxu0
      %v678 = vadd.f32 0.0, %v677
      %v679 = vpop.f32.mrf.mxu0
      %v680 = vpop.f32.mrf.mxu0
      %v681 = vadd.f32 0.0, %v680
      %v682 = vpop.f32.mrf.mxu0
      %683 = vmatprep.mubr.bf16.mxu0 0
      %684 = vmatmul.mubr.bf16.gmra.mxu0 %v501
      %v685 = vpop.f32.mrf.mxu0
      %v686 = vadd.f32 0.0, %v685
      %v687 = vpop.f32.mrf.mxu0
      %v688 = vpop.f32.mrf.mxu0
      %v689 = vadd.f32 0.0, %v688
      %v690 = vpop.f32.mrf.mxu0
      %691 = vmatprep.mubr.bf16.mxu0 0
      %692 = vmatmul.mubr.bf16.gmra.mxu0 %v502
      %v693 = vpop.f32.mrf.mxu0
      %v694 = vadd.f32 0.0, %v693
      %v695 = vpop.f32.mrf.mxu0
      %v696 = vpop.f32.mrf.mxu0
      %v697 = vadd.f32 0.0, %v696
      %v698 = vpop.f32.mrf.mxu0
      %699 = vmatprep.mubr.bf16.mxu0 0
      %700 = vmatmul.mubr.bf16.gmra.mxu0 %v503
      %v701 = vpop.f32.mrf.mxu0
      %v702 = vadd.f32 0.0, %v701
      %v703 = vpop.f32.mrf.mxu0
      %v704 = vpop.f32.mrf.mxu0
      %v705 = vadd.f32 0.0, %v704
      %v706 = vpop.f32.mrf.mxu0
      %707 = vmatprep.mubr.bf16.mxu0 0
      %708 = vmatmul.mubr.bf16.gmra.mxu0 %v504
      %v709 = vpop.f32.mrf.mxu0
      %v710 = vadd.f32 0.0, %v709
      %v711 = vpop.f32.mrf.mxu0
      %v712 = vpop.f32.mrf.mxu0
      %v713 = vadd.f32 0.0, %v712
      %v714 = vpop.f32.mrf.mxu0
      %715 = vmatprep.mubr.bf16.mxu0 0
      %716 = vmatmul.mubr.bf16.gmra.mxu0 %v505
      %v717 = vpop.f32.mrf.mxu0
      %v718 = vadd.f32 0.0, %v717
      %v719 = vpop.f32.mrf.mxu0
      %v720 = vpop.f32.mrf.mxu0
      %v721 = vadd.f32 0.0, %v720
      %v722 = vpop.f32.mrf.mxu0
      %723 = vmatprep.mubr.bf16.mxu0 0
      %724 = vmatmul.mubr.bf16.gmra.mxu0 %v506
      %v725 = vpop.f32.mrf.mxu0
      %v726 = vadd.f32 0.0, %v725
      %v727 = vpop.f32.mrf.mxu0
      %v728 = vpop.f32.mrf.mxu0
      %v729 = vadd.f32 0.0, %v728
      %v730 = vpop.f32.mrf.mxu0
      %731 = vdwg.mxu0
      %732 = vst [vmem:[#allocation3] sm:$0xff] %v606
      %733 = vst [vmem:[#allocation3 + $0x8] sm:$0xff] %v609
      %734 = vst [vmem:[#allocation3 + $0x10] sm:$0xff] %v614
      %735 = vst [vmem:[#allocation3 + $0x18] sm:$0xff] %v617
      %736 = vst [vmem:[#allocation3 + $0x20] sm:$0xff] %v622
      %737 = vst [vmem:[#allocation3 + $0x28] sm:$0xff] %v625
      %738 = vst [vmem:[#allocation3 + $0x30] sm:$0xff] %v630
      %739 = vst [vmem:[#allocation3 + $0x38] sm:$0xff] %v633
      %740 = vst [vmem:[#allocation3 + $0x40] sm:$0xff] %v638
      %741 = vst [vmem:[#allocation3 + $0x48] sm:$0xff] %v641
      %742 = vst [vmem:[#allocation3 + $0x50] sm:$0xff] %v646
      %743 = vst [vmem:[#allocation3 + $0x58] sm:$0xff] %v649
      %744 = vst [vmem:[#allocation3 + $0x60] sm:$0xff] %v654
      %745 = vst [vmem:[#allocation3 + $0x68] sm:$0xff] %v657
      %746 = vst [vmem:[#allocation3 + $0x70] sm:$0xff] %v662
      %747 = vst [vmem:[#allocation3 + $0x78] sm:$0xff] %v665
      %748 = vst [vmem:[#allocation3 + $0x80] sm:$0xff] %v670
      %749 = vst [vmem:[#allocation3 + $0x88] sm:$0xff] %v673
      %750 = vst [vmem:[#allocation3 + $0x90] sm:$0xff] %v678
      %751 = vst [vmem:[#allocation3 + $0x98] sm:$0xff] %v681
      %752 = vst [vmem:[#allocation3 + $0xa0] sm:$0xff] %v686
      %753 = vst [vmem:[#allocation3 + $0xa8] sm:$0xff] %v689
      %754 = vst [vmem:[#allocation3 + $0xb0] sm:$0xff] %v694
      %755 = vst [vmem:[#allocation3 + $0xb8] sm:$0xff] %v697
      %756 = vst [vmem:[#allocation3 + $0xc0] sm:$0xff] %v702
      %757 = vst [vmem:[#allocation3 + $0xc8] sm:$0xff] %v705
      %758 = vst [vmem:[#allocation3 + $0xd0] sm:$0xff] %v710
      %759 = vst [vmem:[#allocation3 + $0xd8] sm:$0xff] %v713
      %760 = vst [vmem:[#allocation3 + $0xe0] sm:$0xff] %v718
      %761 = vst [vmem:[#allocation3 + $0xe8] sm:$0xff] %v721
      %762 = vst [vmem:[#allocation3 + $0xf0] sm:$0xff] %v726
      %763 = vst [vmem:[#allocation3 + $0xf8] sm:$0xff] %v729
      %s764 = scalar_lea.vmem %s2, 192
      %v765 = vld [vmem:[%s764] sm:$0xf]
      %v766 = vld [vmem:[%s764 + $0x4] sm:$0xf]
      %v767 = vld [vmem:[%s764 + $0x8] sm:$0xf]
      %v768 = vld [vmem:[%s764 + $0xc] sm:$0xf]
      %v769 = vld [vmem:[%s764 + $0x10] sm:$0xf]
      %v770 = vld [vmem:[%s764 + $0x14] sm:$0xf]
      %v771 = vld [vmem:[%s764 + $0x18] sm:$0xf]
      %v772 = vld [vmem:[%s764 + $0x1c] sm:$0xf]
      %v773 = vld [vmem:[%s764 + $0x20] sm:$0xf]
      %v774 = vld [vmem:[%s764 + $0x24] sm:$0xf]
      %v775 = vld [vmem:[%s764 + $0x28] sm:$0xf]
      %v776 = vld [vmem:[%s764 + $0x2c] sm:$0xf]
      %v777 = vld [vmem:[%s764 + $0x30] sm:$0xf]
      %v778 = vld [vmem:[%s764 + $0x34] sm:$0xf]
      %v779 = vld [vmem:[%s764 + $0x38] sm:$0xf]
      %v780 = vld [vmem:[%s764 + $0x3c] sm:$0xf]
      %v783 = vunpack.c.l.b16 %v407
      %v784 = vunpack.c.l.b16 %v408
      %v785 = vpack.c.b16 %v784, %v783
      %v803 = vunpack.c.l.b16 %v765
      %v804 = vunpack.c.l.b16 %v766
      %v805 = vunpack.c.l.b16 %v767
      %v806 = vunpack.c.l.b16 %v768
      %v807 = vunpack.c.l.b16 %v769
      %v808 = vunpack.c.l.b16 %v770
      %v809 = vunpack.c.l.b16 %v771
      %v810 = vunpack.c.l.b16 %v772
      %v811 = vunpack.c.l.b16 %v773
      %v812 = vunpack.c.l.b16 %v774
      %v813 = vunpack.c.l.b16 %v775
      %v814 = vunpack.c.l.b16 %v776
      %v815 = vunpack.c.l.b16 %v777
      %v816 = vunpack.c.l.b16 %v778
      %v817 = vunpack.c.l.b16 %v779
      %v818 = vunpack.c.l.b16 %v780
      %v819 = vpack.c.b16 %v804, %v803
      %v820 = vpack.c.b16 %v806, %v805
      %v821 = vpack.c.b16 %v808, %v807
      %v822 = vpack.c.b16 %v810, %v809
      %v823 = vpack.c.b16 %v812, %v811
      %v824 = vpack.c.b16 %v814, %v813
      %v825 = vpack.c.b16 %v816, %v815
      %v826 = vpack.c.b16 %v818, %v817
      %835 = vmatprep.subr.bf16.mxu0 0
      %836 = vmatpush1.bf16.msra.mxu0 %v826
      %837 = vmatprep.subr.bf16.mxu0 0
      %838 = vmatpush1.bf16.msra.mxu0 %v825
      %839 = vmatprep.subr.bf16.mxu0 0
      %840 = vmatpush1.bf16.msra.mxu0 %v824
      %841 = vmatprep.subr.bf16.mxu0 0
      %842 = vmatpush1.bf16.msra.mxu0 %v823
      %843 = vmatprep.subr.bf16.mxu0 0
      %844 = vmatpush1.bf16.msra.mxu0 %v822
      %845 = vmatprep.subr.bf16.mxu0 0
      %846 = vmatpush1.bf16.msra.mxu0 %v821
      %847 = vmatprep.subr.bf16.mxu0 0
      %848 = vmatpush1.bf16.msra.mxu0 %v820
      %849 = vmatprep.subr.bf16.mxu0 0
      %850 = vmatpush1.bf16.msra.mxu0 %v819
      %851 = vmatprep.subr.bf16.mxu0 0
      %852 = vmatpush2.bf16.msra.mxu0 0
      %853 = vmatprep.subr.bf16.mxu0 0
      %854 = vmatpush2.bf16.msra.mxu0 0
      %855 = vmatprep.subr.bf16.mxu0 0
      %856 = vmatpush2.bf16.msra.mxu0 0
      %857 = vmatprep.subr.bf16.mxu0 0
      %858 = vmatpush2.bf16.msra.mxu0 0
      %859 = vmatprep.subr.bf16.mxu0 0
      %860 = vmatpush2.bf16.msra.mxu0 0
      %861 = vmatprep.subr.bf16.mxu0 0
      %862 = vmatpush2.bf16.msra.mxu0 0
      %863 = vmatprep.subr.bf16.mxu0 0
      %864 = vmatpush2.bf16.msra.mxu0 0
      %865 = vmatprep.subr.bf16.mxu0 0
      %866 = vmatpush2.bf16.msra.mxu0 0
      %867 = vmatprep.mubr.bf16.mxu0 0
      %868 = vmatmul.mubr.bf16.gmra.mxu0 %v492
      %v869 = vpop.f32.mrf.mxu0
      %v870 = vadd.f32 0.0, %v869
      %v871 = vpop.f32.mrf.mxu0
      %v872 = vpop.f32.mrf.mxu0
      %v873 = vadd.f32 0.0, %v872
      %v874 = vpop.f32.mrf.mxu0
      %875 = vmatprep.mubr.bf16.mxu0 0
      %876 = vmatmul.mubr.bf16.gmra.mxu0 %v493
      %v877 = vpop.f32.mrf.mxu0
      %v878 = vadd.f32 0.0, %v877
      %v879 = vpop.f32.mrf.mxu0
      %v880 = vpop.f32.mrf.mxu0
      %v881 = vadd.f32 0.0, %v880
      %v882 = vpop.f32.mrf.mxu0
      %883 = vmatprep.mubr.bf16.mxu0 0
      %884 = vmatmul.mubr.bf16.gmra.mxu0 %v494
      %v885 = vpop.f32.mrf.mxu0
      %v886 = vadd.f32 0.0, %v885
      %v887 = vpop.f32.mrf.mxu0
      %v888 = vpop.f32.mrf.mxu0
      %v889 = vadd.f32 0.0, %v888
      %v890 = vpop.f32.mrf.mxu0
      %891 = vmatprep.mubr.bf16.mxu0 0
      %892 = vmatmul.mubr.bf16.gmra.mxu0 %v495
      %v893 = vpop.f32.mrf.mxu0
      %v894 = vadd.f32 0.0, %v893
      %v895 = vpop.f32.mrf.mxu0
      %v896 = vpop.f32.mrf.mxu0
      %v897 = vadd.f32 0.0, %v896
      %v898 = vpop.f32.mrf.mxu0
      %899 = vmatprep.mubr.bf16.mxu0 0
      %900 = vmatmul.mubr.bf16.gmra.mxu0 %v496
      %v901 = vpop.f32.mrf.mxu0
      %v902 = vadd.f32 0.0, %v901
      %v903 = vpop.f32.mrf.mxu0
      %v904 = vpop.f32.mrf.mxu0
      %v905 = vadd.f32 0.0, %v904
      %v906 = vpop.f32.mrf.mxu0
      %907 = vmatprep.mubr.bf16.mxu0 0
      %908 = vmatmul.mubr.bf16.gmra.mxu0 %v497
      %v909 = vpop.f32.mrf.mxu0
      %v910 = vadd.f32 0.0, %v909
      %v911 = vpop.f32.mrf.mxu0
      %v912 = vpop.f32.mrf.mxu0
      %v913 = vadd.f32 0.0, %v912
      %v914 = vpop.f32.mrf.mxu0
      %915 = vmatprep.mubr.bf16.mxu0 0
      %916 = vmatmul.mubr.bf16.gmra.mxu0 %v498
      %v917 = vpop.f32.mrf.mxu0
      %v918 = vadd.f32 0.0, %v917
      %v919 = vpop.f32.mrf.mxu0
      %v920 = vpop.f32.mrf.mxu0
      %v921 = vadd.f32 0.0, %v920
      %v922 = vpop.f32.mrf.mxu0
      %923 = vmatprep.mubr.bf16.mxu0 0
      %924 = vmatmul.mubr.bf16.gmra.mxu0 %v499
      %v925 = vpop.f32.mrf.mxu0
      %v926 = vadd.f32 0.0, %v925
      %v927 = vpop.f32.mrf.mxu0
      %v928 = vpop.f32.mrf.mxu0
      %v929 = vadd.f32 0.0, %v928
      %v930 = vpop.f32.mrf.mxu0
      %931 = vmatprep.mubr.bf16.mxu0 0
      %932 = vmatmul.mubr.bf16.gmra.mxu0 %v500
      %v933 = vpop.f32.mrf.mxu0
      %v934 = vadd.f32 0.0, %v933
      %v935 = vpop.f32.mrf.mxu0
      %v936 = vpop.f32.mrf.mxu0
      %v937 = vadd.f32 0.0, %v936
      %v938 = vpop.f32.mrf.mxu0
      %939 = vmatprep.mubr.bf16.mxu0 0
      %940 = vmatmul.mubr.bf16.gmra.mxu0 %v501
      %v941 = vpop.f32.mrf.mxu0
      %v942 = vadd.f32 0.0, %v941
      %v943 = vpop.f32.mrf.mxu0
      %v944 = vpop.f32.mrf.mxu0
      %v945 = vadd.f32 0.0, %v944
      %v946 = vpop.f32.mrf.mxu0
      %947 = vmatprep.mubr.bf16.mxu0 0
      %948 = vmatmul.mubr.bf16.gmra.mxu0 %v502
      %v949 = vpop.f32.mrf.mxu0
      %v950 = vadd.f32 0.0, %v949
      %v951 = vpop.f32.mrf.mxu0
      %v952 = vpop.f32.mrf.mxu0
      %v953 = vadd.f32 0.0, %v952
      %v954 = vpop.f32.mrf.mxu0
      %955 = vmatprep.mubr.bf16.mxu0 0
      %956 = vmatmul.mubr.bf16.gmra.mxu0 %v503
      %v957 = vpop.f32.mrf.mxu0
      %v958 = vadd.f32 0.0, %v957
      %v959 = vpop.f32.mrf.mxu0
      %v960 = vpop.f32.mrf.mxu0
      %v961 = vadd.f32 0.0, %v960
      %v962 = vpop.f32.mrf.mxu0
      %963 = vmatprep.mubr.bf16.mxu0 0
      %964 = vmatmul.mubr.bf16.gmra.mxu0 %v504
      %v965 = vpop.f32.mrf.mxu0
      %v966 = vadd.f32 0.0, %v965
      %v967 = vpop.f32.mrf.mxu0
      %v968 = vpop.f32.mrf.mxu0
      %v969 = vadd.f32 0.0, %v968
      %v970 = vpop.f32.mrf.mxu0
      %971 = vmatprep.mubr.bf16.mxu0 0
      %972 = vmatmul.mubr.bf16.gmra.mxu0 %v505
      %v973 = vpop.f32.mrf.mxu0
      %v974 = vadd.f32 0.0, %v973
      %v975 = vpop.f32.mrf.mxu0
      %v976 = vpop.f32.mrf.mxu0
      %v977 = vadd.f32 0.0, %v976
      %v978 = vpop.f32.mrf.mxu0
      %979 = vmatprep.mubr.bf16.mxu0 0
      %980 = vmatmul.mubr.bf16.gmra.mxu0 %v506
      %v981 = vpop.f32.mrf.mxu0
      %v982 = vadd.f32 0.0, %v981
      %v983 = vpop.f32.mrf.mxu0
      %v984 = vpop.f32.mrf.mxu0
      %v985 = vadd.f32 0.0, %v984
      %v986 = vpop.f32.mrf.mxu0
      %987 = vmatprep.mubr.bf16.mxu0 0
      %988 = vmatmul.mubr.bf16.gmra.mxu0 %v785
      %v989 = vpop.f32.mrf.mxu0
      %v990 = vadd.f32 0.0, %v989
      %v991 = vpop.f32.mrf.mxu0
      %v992 = vpop.f32.mrf.mxu0
      %v993 = vadd.f32 0.0, %v992
      %v994 = vpop.f32.mrf.mxu0
      %995 = vdwg.mxu0
      %v996 = vld [vmem:[#allocation3] sm:$0xff]
      %v997 = vld [vmem:[#allocation3 + $0x8] sm:$0xff]
      %v998 = vld [vmem:[#allocation3 + $0x10] sm:$0xff]
      %v999 = vld [vmem:[#allocation3 + $0x18] sm:$0xff]
      %v1000 = vld [vmem:[#allocation3 + $0x20] sm:$0xff]
      %v1001 = vld [vmem:[#allocation3 + $0x28] sm:$0xff]
      %v1002 = vld [vmem:[#allocation3 + $0x30] sm:$0xff]
      %v1003 = vld [vmem:[#allocation3 + $0x38] sm:$0xff]
      %v1004 = vld [vmem:[#allocation3 + $0x40] sm:$0xff]
      %v1005 = vld [vmem:[#allocation3 + $0x48] sm:$0xff]
      %v1006 = vld [vmem:[#allocation3 + $0x50] sm:$0xff]
      %v1007 = vld [vmem:[#allocation3 + $0x58] sm:$0xff]
      %v1008 = vld [vmem:[#allocation3 + $0x60] sm:$0xff]
      %v1009 = vld [vmem:[#allocation3 + $0x68] sm:$0xff]
      %v1010 = vld [vmem:[#allocation3 + $0x70] sm:$0xff]
      %v1011 = vld [vmem:[#allocation3 + $0x78] sm:$0xff]
      %v1012 = vld [vmem:[#allocation3 + $0x80] sm:$0xff]
      %v1013 = vld [vmem:[#allocation3 + $0x88] sm:$0xff]
      %v1014 = vld [vmem:[#allocation3 + $0x90] sm:$0xff]
      %v1015 = vld [vmem:[#allocation3 + $0x98] sm:$0xff]
      %v1016 = vld [vmem:[#allocation3 + $0xa0] sm:$0xff]
      %v1017 = vld [vmem:[#allocation3 + $0xa8] sm:$0xff]
      %v1018 = vld [vmem:[#allocation3 + $0xb0] sm:$0xff]
      %v1019 = vld [vmem:[#allocation3 + $0xb8] sm:$0xff]
      %v1020 = vld [vmem:[#allocation3 + $0xc0] sm:$0xff]
      %v1021 = vld [vmem:[#allocation3 + $0xc8] sm:$0xff]
      %v1022 = vld [vmem:[#allocation3 + $0xd0] sm:$0xff]
      %v1023 = vld [vmem:[#allocation3 + $0xd8] sm:$0xff]
      %v1024 = vld [vmem:[#allocation3 + $0xe0] sm:$0xff]
      %v1025 = vld [vmem:[#allocation3 + $0xe8] sm:$0xff]
      %v1026 = vld [vmem:[#allocation3 + $0xf0] sm:$0xff]
      %v1027 = vld [vmem:[#allocation3 + $0xf8] sm:$0xff]
      %v1028 = vadd.f32 %v996, %v870
      %v1029 = vadd.f32 %v997, %v873
      %v1030 = vadd.f32 %v998, %v878
      %v1031 = vadd.f32 %v999, %v881
      %v1032 = vadd.f32 %v1000, %v886
      %v1033 = vadd.f32 %v1001, %v889
      %v1034 = vadd.f32 %v1002, %v894
      %v1035 = vadd.f32 %v1003, %v897
      %v1036 = vadd.f32 %v1004, %v902
      %v1037 = vadd.f32 %v1005, %v905
      %v1038 = vadd.f32 %v1006, %v910
      %v1039 = vadd.f32 %v1007, %v913
      %v1040 = vadd.f32 %v1008, %v918
      %v1041 = vadd.f32 %v1009, %v921
      %v1042 = vadd.f32 %v1010, %v926
      %v1043 = vadd.f32 %v1011, %v929
      %v1044 = vadd.f32 %v1012, %v934
      %v1045 = vadd.f32 %v1013, %v937
      %v1046 = vadd.f32 %v1014, %v942
      %v1047 = vadd.f32 %v1015, %v945
      %v1048 = vadd.f32 %v1016, %v950
      %v1049 = vadd.f32 %v1017, %v953
      %v1050 = vadd.f32 %v1018, %v958
      %v1051 = vadd.f32 %v1019, %v961
      %v1052 = vadd.f32 %v1020, %v966
      %v1053 = vadd.f32 %v1021, %v969
      %v1054 = vadd.f32 %v1022, %v974
      %v1055 = vadd.f32 %v1023, %v977
      %v1056 = vadd.f32 %v1024, %v982
      %v1057 = vadd.f32 %v1025, %v985
      %v1058 = vadd.f32 %v1026, %v990
      %v1059 = vadd.f32 %v1027, %v993
      %1060 = vst [vmem:[#allocation3] sm:$0xff] %v1028
      %1061 = vst [vmem:[#allocation3 + $0x8] sm:$0xff] %v1029
      %1062 = vst [vmem:[#allocation3 + $0x10] sm:$0xff] %v1030
      %1063 = vst [vmem:[#allocation3 + $0x18] sm:$0xff] %v1031
      %1064 = vst [vmem:[#allocation3 + $0x20] sm:$0xff] %v1032
      %1065 = vst [vmem:[#allocation3 + $0x28] sm:$0xff] %v1033
      %1066 = vst [vmem:[#allocation3 + $0x30] sm:$0xff] %v1034
      %1067 = vst [vmem:[#allocation3 + $0x38] sm:$0xff] %v1035
      %1068 = vst [vmem:[#allocation3 + $0x40] sm:$0xff] %v1036
      %1069 = vst [vmem:[#allocation3 + $0x48] sm:$0xff] %v1037
      %1070 = vst [vmem:[#allocation3 + $0x50] sm:$0xff] %v1038
      %1071 = vst [vmem:[#allocation3 + $0x58] sm:$0xff] %v1039
      %1072 = vst [vmem:[#allocation3 + $0x60] sm:$0xff] %v1040
      %1073 = vst [vmem:[#allocation3 + $0x68] sm:$0xff] %v1041
      %1074 = vst [vmem:[#allocation3 + $0x70] sm:$0xff] %v1042
      %1075 = vst [vmem:[#allocation3 + $0x78] sm:$0xff] %v1043
      %1076 = vst [vmem:[#allocation3 + $0x80] sm:$0xff] %v1044
      %1077 = vst [vmem:[#allocation3 + $0x88] sm:$0xff] %v1045
      %1078 = vst [vmem:[#allocation3 + $0x90] sm:$0xff] %v1046
      %1079 = vst [vmem:[#allocation3 + $0x98] sm:$0xff] %v1047
      %1080 = vst [vmem:[#allocation3 + $0xa0] sm:$0xff] %v1048
      %1081 = vst [vmem:[#allocation3 + $0xa8] sm:$0xff] %v1049
      %1082 = vst [vmem:[#allocation3 + $0xb0] sm:$0xff] %v1050
      %1083 = vst [vmem:[#allocation3 + $0xb8] sm:$0xff] %v1051
      %1084 = vst [vmem:[#allocation3 + $0xc0] sm:$0xff] %v1052
      %1085 = vst [vmem:[#allocation3 + $0xc8] sm:$0xff] %v1053
      %1086 = vst [vmem:[#allocation3 + $0xd0] sm:$0xff] %v1054
      %1087 = vst [vmem:[#allocation3 + $0xd8] sm:$0xff] %v1055
      %1088 = vst [vmem:[#allocation3 + $0xe0] sm:$0xff] %v1056
      %1089 = vst [vmem:[#allocation3 + $0xe8] sm:$0xff] %v1057
      %1090 = vst [vmem:[#allocation3 + $0xf0] sm:$0xff] %v1058
      %1091 = vst [vmem:[#allocation3 + $0xf8] sm:$0xff] %v1059
      %s1092 = scalar_lea.vmem %s2, 384
      %v1093 = vld [vmem:[%s1092] sm:$0xf]
      %v1094 = vld [vmem:[%s1092 + $0x4] sm:$0xf]
      %v1095 = vld [vmem:[%s1092 + $0x8] sm:$0xf]
      %v1096 = vld [vmem:[%s1092 + $0xc] sm:$0xf]
      %v1097 = vld [vmem:[%s1092 + $0x10] sm:$0xf]
      %v1098 = vld [vmem:[%s1092 + $0x14] sm:$0xf]
      %v1099 = vld [vmem:[%s1092 + $0x18] sm:$0xf]
      %v1100 = vld [vmem:[%s1092 + $0x1c] sm:$0xf]
      %v1101 = vld [vmem:[%s1092 + $0x20] sm:$0xf]
      %v1102 = vld [vmem:[%s1092 + $0x24] sm:$0xf]
      %v1103 = vld [vmem:[%s1092 + $0x28] sm:$0xf]
      %v1104 = vld [vmem:[%s1092 + $0x2c] sm:$0xf]
      %v1105 = vld [vmem:[%s1092 + $0x30] sm:$0xf]
      %v1106 = vld [vmem:[%s1092 + $0x34] sm:$0xf]
      %v1107 = vld [vmem:[%s1092 + $0x38] sm:$0xf]
      %v1108 = vld [vmem:[%s1092 + $0x3c] sm:$0xf]
      %v1111 = vunpack.c.l.b16 %v409
      %v1112 = vunpack.c.l.b16 %v410
      %v1113 = vpack.c.b16 %v1112, %v1111
      %v1131 = vunpack.c.l.b16 %v1093
      %v1132 = vunpack.c.l.b16 %v1094
      %v1133 = vunpack.c.l.b16 %v1095
      %v1134 = vunpack.c.l.b16 %v1096
      %v1135 = vunpack.c.l.b16 %v1097
      %v1136 = vunpack.c.l.b16 %v1098
      %v1137 = vunpack.c.l.b16 %v1099
      %v1138 = vunpack.c.l.b16 %v1100
      %v1139 = vunpack.c.l.b16 %v1101
      %v1140 = vunpack.c.l.b16 %v1102
      %v1141 = vunpack.c.l.b16 %v1103
      %v1142 = vunpack.c.l.b16 %v1104
      %v1143 = vunpack.c.l.b16 %v1105
      %v1144 = vunpack.c.l.b16 %v1106
      %v1145 = vunpack.c.l.b16 %v1107
      %v1146 = vunpack.c.l.b16 %v1108
      %v1147 = vpack.c.b16 %v1132, %v1131
      %v1148 = vpack.c.b16 %v1134, %v1133
      %v1149 = vpack.c.b16 %v1136, %v1135
      %v1150 = vpack.c.b16 %v1138, %v1137
      %v1151 = vpack.c.b16 %v1140, %v1139
      %v1152 = vpack.c.b16 %v1142, %v1141
      %v1153 = vpack.c.b16 %v1144, %v1143
      %v1154 = vpack.c.b16 %v1146, %v1145
      %1163 = vmatprep.subr.bf16.mxu0 0
      %1164 = vmatpush1.bf16.msra.mxu0 %v1154
      %1165 = vmatprep.subr.bf16.mxu0 0
      %1166 = vmatpush1.bf16.msra.mxu0 %v1153
      %1167 = vmatprep.subr.bf16.mxu0 0
      %1168 = vmatpush1.bf16.msra.mxu0 %v1152
      %1169 = vmatprep.subr.bf16.mxu0 0
      %1170 = vmatpush1.bf16.msra.mxu0 %v1151
      %1171 = vmatprep.subr.bf16.mxu0 0
      %1172 = vmatpush1.bf16.msra.mxu0 %v1150
      %1173 = vmatprep.subr.bf16.mxu0 0
      %1174 = vmatpush1.bf16.msra.mxu0 %v1149
      %1175 = vmatprep.subr.bf16.mxu0 0
      %1176 = vmatpush1.bf16.msra.mxu0 %v1148
      %1177 = vmatprep.subr.bf16.mxu0 0
      %1178 = vmatpush1.bf16.msra.mxu0 %v1147
      %1179 = vmatprep.subr.bf16.mxu0 0
      %1180 = vmatpush2.bf16.msra.mxu0 0
      %1181 = vmatprep.subr.bf16.mxu0 0
      %1182 = vmatpush2.bf16.msra.mxu0 0
      %1183 = vmatprep.subr.bf16.mxu0 0
      %1184 = vmatpush2.bf16.msra.mxu0 0
      %1185 = vmatprep.subr.bf16.mxu0 0
      %1186 = vmatpush2.bf16.msra.mxu0 0
      %1187 = vmatprep.subr.bf16.mxu0 0
      %1188 = vmatpush2.bf16.msra.mxu0 0
      %1189 = vmatprep.subr.bf16.mxu0 0
      %1190 = vmatpush2.bf16.msra.mxu0 0
      %1191 = vmatprep.subr.bf16.mxu0 0
      %1192 = vmatpush2.bf16.msra.mxu0 0
      %1193 = vmatprep.subr.bf16.mxu0 0
      %1194 = vmatpush2.bf16.msra.mxu0 0
      %1195 = vmatprep.mubr.bf16.mxu0 0
      %1196 = vmatmul.mubr.bf16.gmra.mxu0 %v493
      %v1197 = vpop.f32.mrf.mxu0
      %v1198 = vadd.f32 0.0, %v1197
      %v1199 = vpop.f32.mrf.mxu0
      %v1200 = vpop.f32.mrf.mxu0
      %v1201 = vadd.f32 0.0, %v1200
      %v1202 = vpop.f32.mrf.mxu0
      %1203 = vmatprep.mubr.bf16.mxu0 0
      %1204 = vmatmul.mubr.bf16.gmra.mxu0 %v494
      %v1205 = vpop.f32.mrf.mxu0
      %v1206 = vadd.f32 0.0, %v1205
      %v1207 = vpop.f32.mrf.mxu0
      %v1208 = vpop.f32.mrf.mxu0
      %v1209 = vadd.f32 0.0, %v1208
      %v1210 = vpop.f32.mrf.mxu0
      %1211 = vmatprep.mubr.bf16.mxu0 0
      %1212 = vmatmul.mubr.bf16.gmra.mxu0 %v495
      %v1213 = vpop.f32.mrf.mxu0
      %v1214 = vadd.f32 0.0, %v1213
      %v1215 = vpop.f32.mrf.mxu0
      %v1216 = vpop.f32.mrf.mxu0
      %v1217 = vadd.f32 0.0, %v1216
      %v1218 = vpop.f32.mrf.mxu0
      %1219 = vmatprep.mubr.bf16.mxu0 0
      %1220 = vmatmul.mubr.bf16.gmra.mxu0 %v496
      %v1221 = vpop.f32.mrf.mxu0
      %v1222 = vadd.f32 0.0, %v1221
      %v1223 = vpop.f32.mrf.mxu0
      %v1224 = vpop.f32.mrf.mxu0
      %v1225 = vadd.f32 0.0, %v1224
      %v1226 = vpop.f32.mrf.mxu0
      %1227 = vmatprep.mubr.bf16.mxu0 0
      %1228 = vmatmul.mubr.bf16.gmra.mxu0 %v497
      %v1229 = vpop.f32.mrf.mxu0
      %v1230 = vadd.f32 0.0, %v1229
      %v1231 = vpop.f32.mrf.mxu0
      %v1232 = vpop.f32.mrf.mxu0
      %v1233 = vadd.f32 0.0, %v1232
      %v1234 = vpop.f32.mrf.mxu0
      %1235 = vmatprep.mubr.bf16.mxu0 0
      %1236 = vmatmul.mubr.bf16.gmra.mxu0 %v498
      %v1237 = vpop.f32.mrf.mxu0
      %v1238 = vadd.f32 0.0, %v1237
      %v1239 = vpop.f32.mrf.mxu0
      %v1240 = vpop.f32.mrf.mxu0
      %v1241 = vadd.f32 0.0, %v1240
      %v1242 = vpop.f32.mrf.mxu0
      %1243 = vmatprep.mubr.bf16.mxu0 0
      %1244 = vmatmul.mubr.bf16.gmra.mxu0 %v499
      %v1245 = vpop.f32.mrf.mxu0
      %v1246 = vadd.f32 0.0, %v1245
      %v1247 = vpop.f32.mrf.mxu0
      %v1248 = vpop.f32.mrf.mxu0
      %v1249 = vadd.f32 0.0, %v1248
      %v1250 = vpop.f32.mrf.mxu0
      %1251 = vmatprep.mubr.bf16.mxu0 0
      %1252 = vmatmul.mubr.bf16.gmra.mxu0 %v500
      %v1253 = vpop.f32.mrf.mxu0
      %v1254 = vadd.f32 0.0, %v1253
      %v1255 = vpop.f32.mrf.mxu0
      %v1256 = vpop.f32.mrf.mxu0
      %v1257 = vadd.f32 0.0, %v1256
      %v1258 = vpop.f32.mrf.mxu0
      %1259 = vmatprep.mubr.bf16.mxu0 0
      %1260 = vmatmul.mubr.bf16.gmra.mxu0 %v501
      %v1261 = vpop.f32.mrf.mxu0
      %v1262 = vadd.f32 0.0, %v1261
      %v1263 = vpop.f32.mrf.mxu0
      %v1264 = vpop.f32.mrf.mxu0
      %v1265 = vadd.f32 0.0, %v1264
      %v1266 = vpop.f32.mrf.mxu0
      %1267 = vmatprep.mubr.bf16.mxu0 0
      %1268 = vmatmul.mubr.bf16.gmra.mxu0 %v502
      %v1269 = vpop.f32.mrf.mxu0
      %v1270 = vadd.f32 0.0, %v1269
      %v1271 = vpop.f32.mrf.mxu0
      %v1272 = vpop.f32.mrf.mxu0
      %v1273 = vadd.f32 0.0, %v1272
      %v1274 = vpop.f32.mrf.mxu0
      %1275 = vmatprep.mubr.bf16.mxu0 0
      %1276 = vmatmul.mubr.bf16.gmra.mxu0 %v503
      %v1277 = vpop.f32.mrf.mxu0
      %v1278 = vadd.f32 0.0, %v1277
      %v1279 = vpop.f32.mrf.mxu0
      %v1280 = vpop.f32.mrf.mxu0
      %v1281 = vadd.f32 0.0, %v1280
      %v1282 = vpop.f32.mrf.mxu0
      %1283 = vmatprep.mubr.bf16.mxu0 0
      %1284 = vmatmul.mubr.bf16.gmra.mxu0 %v504
      %v1285 = vpop.f32.mrf.mxu0
      %v1286 = vadd.f32 0.0, %v1285
      %v1287 = vpop.f32.mrf.mxu0
      %v1288 = vpop.f32.mrf.mxu0
      %v1289 = vadd.f32 0.0, %v1288
      %v1290 = vpop.f32.mrf.mxu0
      %1291 = vmatprep.mubr.bf16.mxu0 0
      %1292 = vmatmul.mubr.bf16.gmra.mxu0 %v505
      %v1293 = vpop.f32.mrf.mxu0
      %v1294 = vadd.f32 0.0, %v1293
      %v1295 = vpop.f32.mrf.mxu0
      %v1296 = vpop.f32.mrf.mxu0
      %v1297 = vadd.f32 0.0, %v1296
      %v1298 = vpop.f32.mrf.mxu0
      %1299 = vmatprep.mubr.bf16.mxu0 0
      %1300 = vmatmul.mubr.bf16.gmra.mxu0 %v506
      %v1301 = vpop.f32.mrf.mxu0
      %v1302 = vadd.f32 0.0, %v1301
      %v1303 = vpop.f32.mrf.mxu0
      %v1304 = vpop.f32.mrf.mxu0
      %v1305 = vadd.f32 0.0, %v1304
      %v1306 = vpop.f32.mrf.mxu0
      %1307 = vmatprep.mubr.bf16.mxu0 0
      %1308 = vmatmul.mubr.bf16.gmra.mxu0 %v785
      %v1309 = vpop.f32.mrf.mxu0
      %v1310 = vadd.f32 0.0, %v1309
      %v1311 = vpop.f32.mrf.mxu0
      %v1312 = vpop.f32.mrf.mxu0
      %v1313 = vadd.f32 0.0, %v1312
      %v1314 = vpop.f32.mrf.mxu0
      %1315 = vmatprep.mubr.bf16.mxu0 0
      %1316 = vmatmul.mubr.bf16.gmra.mxu0 %v1113
      %v1317 = vpop.f32.mrf.mxu0
      %v1318 = vadd.f32 0.0, %v1317
      %v1319 = vpop.f32.mrf.mxu0
      %v1320 = vpop.f32.mrf.mxu0
      %v1321 = vadd.f32 0.0, %v1320
      %v1322 = vpop.f32.mrf.mxu0
      %1323 = vdwg.mxu0
      %v1324 = vld [vmem:[#allocation3] sm:$0xff]
      %v1325 = vld [vmem:[#allocation3 + $0x8] sm:$0xff]
      %v1326 = vld [vmem:[#allocation3 + $0x10] sm:$0xff]
      %v1327 = vld [vmem:[#allocation3 + $0x18] sm:$0xff]
      %v1328 = vld [vmem:[#allocation3 + $0x20] sm:$0xff]
      %v1329 = vld [vmem:[#allocation3 + $0x28] sm:$0xff]
      %v1330 = vld [vmem:[#allocation3 + $0x30] sm:$0xff]
      %v1331 = vld [vmem:[#allocation3 + $0x38] sm:$0xff]
      %v1332 = vld [vmem:[#allocation3 + $0x40] sm:$0xff]
      %v1333 = vld [vmem:[#allocation3 + $0x48] sm:$0xff]
      %v1334 = vld [vmem:[#allocation3 + $0x50] sm:$0xff]
      %v1335 = vld [vmem:[#allocation3 + $0x58] sm:$0xff]
      %v1336 = vld [vmem:[#allocation3 + $0x60] sm:$0xff]
      %v1337 = vld [vmem:[#allocation3 + $0x68] sm:$0xff]
      %v1338 = vld [vmem:[#allocation3 + $0x70] sm:$0xff]
      %v1339 = vld [vmem:[#allocation3 + $0x78] sm:$0xff]
      %v1340 = vld [vmem:[#allocation3 + $0x80] sm:$0xff]
      %v1341 = vld [vmem:[#allocation3 + $0x88] sm:$0xff]
      %v1342 = vld [vmem:[#allocation3 + $0x90] sm:$0xff]
      %v1343 = vld [vmem:[#allocation3 + $0x98] sm:$0xff]
      %v1344 = vld [vmem:[#allocation3 + $0xa0] sm:$0xff]
      %v1345 = vld [vmem:[#allocation3 + $0xa8] sm:$0xff]
      %v1346 = vld [vmem:[#allocation3 + $0xb0] sm:$0xff]
      %v1347 = vld [vmem:[#allocation3 + $0xb8] sm:$0xff]
      %v1348 = vld [vmem:[#allocation3 + $0xc0] sm:$0xff]
      %v1349 = vld [vmem:[#allocation3 + $0xc8] sm:$0xff]
      %v1350 = vld [vmem:[#allocation3 + $0xd0] sm:$0xff]
      %v1351 = vld [vmem:[#allocation3 + $0xd8] sm:$0xff]
      %v1352 = vld [vmem:[#allocation3 + $0xe0] sm:$0xff]
      %v1353 = vld [vmem:[#allocation3 + $0xe8] sm:$0xff]
      %v1354 = vld [vmem:[#allocation3 + $0xf0] sm:$0xff]
      %v1355 = vld [vmem:[#allocation3 + $0xf8] sm:$0xff]
      %v1356 = vadd.f32 %v1324, %v1198
      %v1357 = vadd.f32 %v1325, %v1201
      %v1358 = vadd.f32 %v1326, %v1206
      %v1359 = vadd.f32 %v1327, %v1209
      %v1360 = vadd.f32 %v1328, %v1214
      %v1361 = vadd.f32 %v1329, %v1217
      %v1362 = vadd.f32 %v1330, %v1222
      %v1363 = vadd.f32 %v1331, %v1225
      %v1364 = vadd.f32 %v1332, %v1230
      %v1365 = vadd.f32 %v1333, %v1233
      %v1366 = vadd.f32 %v1334, %v1238
      %v1367 = vadd.f32 %v1335, %v1241
      %v1368 = vadd.f32 %v1336, %v1246
      %v1369 = vadd.f32 %v1337, %v1249
      %v1370 = vadd.f32 %v1338, %v1254
      %v1371 = vadd.f32 %v1339, %v1257
      %v1372 = vadd.f32 %v1340, %v1262
      %v1373 = vadd.f32 %v1341, %v1265
      %v1374 = vadd.f32 %v1342, %v1270
      %v1375 = vadd.f32 %v1343, %v1273
      %v1376 = vadd.f32 %v1344, %v1278
      %v1377 = vadd.f32 %v1345, %v1281
      %v1378 = vadd.f32 %v1346, %v1286
      %v1379 = vadd.f32 %v1347, %v1289
      %v1380 = vadd.f32 %v1348, %v1294
      %v1381 = vadd.f32 %v1349, %v1297
      %v1382 = vadd.f32 %v1350, %v1302
      %v1383 = vadd.f32 %v1351, %v1305
      %v1384 = vadd.f32 %v1352, %v1310
      %v1385 = vadd.f32 %v1353, %v1313
      %v1386 = vadd.f32 %v1354, %v1318
      %v1387 = vadd.f32 %v1355, %v1321
      %1388 = vst [vmem:[#allocation3] sm:$0xff] %v1356
      %1389 = vst [vmem:[#allocation3 + $0x8] sm:$0xff] %v1357
      %1390 = vst [vmem:[#allocation3 + $0x10] sm:$0xff] %v1358
      %1391 = vst [vmem:[#allocation3 + $0x18] sm:$0xff] %v1359
      %1392 = vst [vmem:[#allocation3 + $0x20] sm:$0xff] %v1360
      %1393 = vst [vmem:[#allocation3 + $0x28] sm:$0xff] %v1361
      %1394 = vst [vmem:[#allocation3 + $0x30] sm:$0xff] %v1362
      %1395 = vst [vmem:[#allocation3 + $0x38] sm:$0xff] %v1363
      %1396 = vst [vmem:[#allocation3 + $0x40] sm:$0xff] %v1364
      %1397 = vst [vmem:[#allocation3 + $0x48] sm:$0xff] %v1365
      %1398 = vst [vmem:[#allocation3 + $0x50] sm:$0xff] %v1366
      %1399 = vst [vmem:[#allocation3 + $0x58] sm:$0xff] %v1367
      %1400 = vst [vmem:[#allocation3 + $0x60] sm:$0xff] %v1368
      %1401 = vst [vmem:[#allocation3 + $0x68] sm:$0xff] %v1369
      %1402 = vst [vmem:[#allocation3 + $0x70] sm:$0xff] %v1370
      %1403 = vst [vmem:[#allocation3 + $0x78] sm:$0xff] %v1371
      %1404 = vst [vmem:[#allocation3 + $0x80] sm:$0xff] %v1372
      %1405 = vst [vmem:[#allocation3 + $0x88] sm:$0xff] %v1373
      %1406 = vst [vmem:[#allocation3 + $0x90] sm:$0xff] %v1374
      %1407 = vst [vmem:[#allocation3 + $0x98] sm:$0xff] %v1375
      %1408 = vst [vmem:[#allocation3 + $0xa0] sm:$0xff] %v1376
      %1409 = vst [vmem:[#allocation3 + $0xa8] sm:$0xff] %v1377
      %1410 = vst [vmem:[#allocation3 + $0xb0] sm:$0xff] %v1378
      %1411 = vst [vmem:[#allocation3 + $0xb8] sm:$0xff] %v1379
      %1412 = vst [vmem:[#allocation3 + $0xc0] sm:$0xff] %v1380
      %1413 = vst [vmem:[#allocation3 + $0xc8] sm:$0xff] %v1381
      %1414 = vst [vmem:[#allocation3 + $0xd0] sm:$0xff] %v1382
      %1415 = vst [vmem:[#allocation3 + $0xd8] sm:$0xff] %v1383
      %1416 = vst [vmem:[#allocation3 + $0xe0] sm:$0xff] %v1384
      %1417 = vst [vmem:[#allocation3 + $0xe8] sm:$0xff] %v1385
      %1418 = vst [vmem:[#allocation3 + $0xf0] sm:$0xff] %v1386
      %1419 = vst [vmem:[#allocation3 + $0xf8] sm:$0xff] %v1387
      %v1420 = vld [vmem:[%s365] sm:$0xf]
      %v1421 = vld [vmem:[%s365 + $0x4] sm:$0xf]
      %v1422 = vld [vmem:[%s365 + $0x8] sm:$0x1]
      %v1423 = vld [vmem:[%s365 + $0xc] sm:$0xf]
      %v1424 = vld [vmem:[%s365 + $0x10] sm:$0xf]
      %v1425 = vld [vmem:[%s365 + $0x14] sm:$0x1]
      %v1426 = vld [vmem:[%s365 + $0x18] sm:$0xf]
      %v1427 = vld [vmem:[%s365 + $0x1c] sm:$0xf]
      %v1428 = vld [vmem:[%s365 + $0x20] sm:$0x1]
      %v1429 = vld [vmem:[%s365 + $0x24] sm:$0xf]
      %v1430 = vld [vmem:[%s365 + $0x28] sm:$0xf]
      %v1431 = vld [vmem:[%s365 + $0x2c] sm:$0x1]
      %v1432 = vld [vmem:[%s365 + $0x30] sm:$0xf]
      %v1433 = vld [vmem:[%s365 + $0x34] sm:$0xf]
      %v1434 = vld [vmem:[%s365 + $0x38] sm:$0x1]
      %v1435 = vld [vmem:[%s365 + $0x3c] sm:$0xf]
      %v1436 = vld [vmem:[%s365 + $0x40] sm:$0xf]
      %v1437 = vld [vmem:[%s365 + $0x44] sm:$0x1]
      %v1438 = vld [vmem:[%s365 + $0x48] sm:$0xf]
      %v1439 = vld [vmem:[%s365 + $0x4c] sm:$0xf]
      %v1440 = vld [vmem:[%s365 + $0x50] sm:$0x1]
      %v1441 = vld [vmem:[%s365 + $0x54] sm:$0xf]
      %v1442 = vld [vmem:[%s365 + $0x58] sm:$0xf]
      %v1443 = vld [vmem:[%s365 + $0x5c] sm:$0x1]
      %v1444 = vld [vmem:[%s365 + $0x60] sm:$0xf]
      %v1445 = vld [vmem:[%s365 + $0x64] sm:$0xf]
      %v1446 = vld [vmem:[%s365 + $0x68] sm:$0x1]
      %v1447 = vld [vmem:[%s365 + $0x6c] sm:$0xf]
      %v1448 = vld [vmem:[%s365 + $0x70] sm:$0xf]
      %v1449 = vld [vmem:[%s365 + $0x74] sm:$0x1]
      %v1450 = vld [vmem:[%s365 + $0x78] sm:$0xf]
      %v1451 = vld [vmem:[%s365 + $0x7c] sm:$0xf]
      %v1452 = vld [vmem:[%s365 + $0x80] sm:$0x1]
      %v1453 = vld [vmem:[%s365 + $0x84] sm:$0xf]
      %v1454 = vld [vmem:[%s365 + $0x88] sm:$0xf]
      %v1455 = vld [vmem:[%s365 + $0x8c] sm:$0x1]
      %v1456 = vld [vmem:[%s365 + $0x90] sm:$0xf]
      %v1457 = vld [vmem:[%s365 + $0x94] sm:$0xf]
      %v1458 = vld [vmem:[%s365 + $0x98] sm:$0x1]
      %v1459 = vld [vmem:[%s365 + $0x9c] sm:$0xf]
      %v1460 = vld [vmem:[%s365 + $0xa0] sm:$0xf]
      %v1461 = vld [vmem:[%s365 + $0xa4] sm:$0x1]
      %v1462 = vld [vmem:[%s365 + $0xa8] sm:$0xf]
      %v1463 = vld [vmem:[%s365 + $0xac] sm:$0xf]
      %v1464 = vld [vmem:[%s365 + $0xb0] sm:$0x1]
      %v1465 = vld [vmem:[%s365 + $0xb4] sm:$0xf]
      %v1466 = vld [vmem:[%s365 + $0xb8] sm:$0xf]
      %v1467 = vld [vmem:[%s365 + $0xbc] sm:$0x1]
      %v1468 = vld [vmem:[%s365 + $0xc0] sm:$0xf]
      %v1469 = vld [vmem:[%s365 + $0xc4] sm:$0xf]
      %v1470 = vld [vmem:[%s365 + $0xc8] sm:$0x1]
      %v1471 = vld [vmem:[%s365 + $0xcc] sm:$0xf]
      %v1472 = vld [vmem:[%s365 + $0xd0] sm:$0xf]
      %v1473 = vld [vmem:[%s365 + $0xd4] sm:$0x1]
      %vm1474 = vsmask.f32 3328
      %vm1475 = vsmask.f32 7440
      %vm1476 = vmor %vm1474, %vm1475
      %v1478 = vshrl.u32 %v1420, 16
      %v1480 = vrot.slane %v1478, 4
      %v1481 = vshll.u32 %v1420, 16
      %v1483 = vrot.slane %v1481, 5
      %v1484 = vor.u32 %v1480, %v1483
      %v1485 = vrot.slane %v1484, 4
      %v1487 = vshll.u32 %v1421, 16
      %v1489 = vrot.slane %v1487, 5
      %v1490 = vsel %vm1476, %v1485, %v1489
      %v1491 = vshrl.u32 %v1421, 16
      %v1493 = vrot.slane %v1491, 4
      %v1494 = vor.u32 %v1493, %v1489
      %v1495 = vrot.slane %v1494, 4
      %v1497 = vshll.u32 %v1422, 16
      %v1499 = vrot.slane %v1497, 5
      %v1500 = vsel %vm1476, %v1495, %v1499
      %v1502 = vshrl.u32 %v1423, 16
      %v1504 = vrot.slane %v1502, 4
      %v1505 = vshll.u32 %v1423, 16
      %v1507 = vrot.slane %v1505, 5
      %v1508 = vor.u32 %v1504, %v1507
      %v1509 = vrot.slane %v1508, 4
      %v1511 = vshll.u32 %v1424, 16
      %v1513 = vrot.slane %v1511, 5
      %v1514 = vsel %vm1476, %v1509, %v1513
      %v1515 = vshrl.u32 %v1424, 16
      %v1517 = vrot.slane %v1515, 4
      %v1518 = vor.u32 %v1517, %v1513
      %v1519 = vrot.slane %v1518, 4
      %v1521 = vshll.u32 %v1425, 16
      %v1523 = vrot.slane %v1521, 5
      %v1524 = vsel %vm1476, %v1519, %v1523
      %v1526 = vshrl.u32 %v1426, 16
      %v1528 = vrot.slane %v1526, 4
      %v1529 = vshll.u32 %v1426, 16
      %v1531 = vrot.slane %v1529, 5
      %v1532 = vor.u32 %v1528, %v1531
      %v1533 = vrot.slane %v1532, 4
      %v1535 = vshll.u32 %v1427, 16
      %v1537 = vrot.slane %v1535, 5
      %v1538 = vsel %vm1476, %v1533, %v1537
      %v1539 = vshrl.u32 %v1427, 16
      %v1541 = vrot.slane %v1539, 4
      %v1542 = vor.u32 %v1541, %v1537
      %v1543 = vrot.slane %v1542, 4
      %v1545 = vshll.u32 %v1428, 16
      %v1547 = vrot.slane %v1545, 5
      %v1548 = vsel %vm1476, %v1543, %v1547
      %v1550 = vshrl.u32 %v1429, 16
      %v1552 = vrot.slane %v1550, 4
      %v1553 = vshll.u32 %v1429, 16
      %v1555 = vrot.slane %v1553, 5
      %v1556 = vor.u32 %v1552, %v1555
      %v1557 = vrot.slane %v1556, 4
      %v1559 = vshll.u32 %v1430, 16
      %v1561 = vrot.slane %v1559, 5
      %v1562 = vsel %vm1476, %v1557, %v1561
      %v1563 = vshrl.u32 %v1430, 16
      %v1565 = vrot.slane %v1563, 4
      %v1566 = vor.u32 %v1565, %v1561
      %v1567 = vrot.slane %v1566, 4
      %v1569 = vshll.u32 %v1431, 16
      %v1571 = vrot.slane %v1569, 5
      %v1572 = vsel %vm1476, %v1567, %v1571
      %v1574 = vshrl.u32 %v1432, 16
      %v1576 = vrot.slane %v1574, 4
      %v1577 = vshll.u32 %v1432, 16
      %v1579 = vrot.slane %v1577, 5
      %v1580 = vor.u32 %v1576, %v1579
      %v1581 = vrot.slane %v1580, 4
      %v1583 = vshll.u32 %v1433, 16
      %v1585 = vrot.slane %v1583, 5
      %v1586 = vsel %vm1476, %v1581, %v1585
      %v1587 = vshrl.u32 %v1433, 16
      %v1589 = vrot.slane %v1587, 4
      %v1590 = vor.u32 %v1589, %v1585
      %v1591 = vrot.slane %v1590, 4
      %v1593 = vshll.u32 %v1434, 16
      %v1595 = vrot.slane %v1593, 5
      %v1596 = vsel %vm1476, %v1591, %v1595
      %v1598 = vshrl.u32 %v1435, 16
      %v1600 = vrot.slane %v1598, 4
      %v1601 = vshll.u32 %v1435, 16
      %v1603 = vrot.slane %v1601, 5
      %v1604 = vor.u32 %v1600, %v1603
      %v1605 = vrot.slane %v1604, 4
      %v1607 = vshll.u32 %v1436, 16
      %v1609 = vrot.slane %v1607, 5
      %v1610 = vsel %vm1476, %v1605, %v1609
      %v1611 = vshrl.u32 %v1436, 16
      %v1613 = vrot.slane %v1611, 4
      %v1614 = vor.u32 %v1613, %v1609
      %v1615 = vrot.slane %v1614, 4
      %v1617 = vshll.u32 %v1437, 16
      %v1619 = vrot.slane %v1617, 5
      %v1620 = vsel %vm1476, %v1615, %v1619
      %v1622 = vshrl.u32 %v1438, 16
      %v1624 = vrot.slane %v1622, 4
      %v1625 = vshll.u32 %v1438, 16
      %v1627 = vrot.slane %v1625, 5
      %v1628 = vor.u32 %v1624, %v1627
      %v1629 = vrot.slane %v1628, 4
      %v1631 = vshll.u32 %v1439, 16
      %v1633 = vrot.slane %v1631, 5
      %v1634 = vsel %vm1476, %v1629, %v1633
      %v1635 = vshrl.u32 %v1439, 16
      %v1637 = vrot.slane %v1635, 4
      %v1638 = vor.u32 %v1637, %v1633
      %v1639 = vrot.slane %v1638, 4
      %v1641 = vshll.u32 %v1440, 16
      %v1643 = vrot.slane %v1641, 5
      %v1644 = vsel %vm1476, %v1639, %v1643
      %v1646 = vshrl.u32 %v1441, 16
      %v1648 = vrot.slane %v1646, 4
      %v1649 = vshll.u32 %v1441, 16
      %v1651 = vrot.slane %v1649, 5
      %v1652 = vor.u32 %v1648, %v1651
      %v1653 = vrot.slane %v1652, 4
      %v1655 = vshll.u32 %v1442, 16
      %v1657 = vrot.slane %v1655, 5
      %v1658 = vsel %vm1476, %v1653, %v1657
      %v1659 = vshrl.u32 %v1442, 16
      %v1661 = vrot.slane %v1659, 4
      %v1662 = vor.u32 %v1661, %v1657
      %v1663 = vrot.slane %v1662, 4
      %v1665 = vshll.u32 %v1443, 16
      %v1667 = vrot.slane %v1665, 5
      %v1668 = vsel %vm1476, %v1663, %v1667
      %v1670 = vshrl.u32 %v1444, 16
      %v1672 = vrot.slane %v1670, 4
      %v1673 = vshll.u32 %v1444, 16
      %v1675 = vrot.slane %v1673, 5
      %v1676 = vor.u32 %v1672, %v1675
      %v1677 = vrot.slane %v1676, 4
      %v1679 = vshll.u32 %v1445, 16
      %v1681 = vrot.slane %v1679, 5
      %v1682 = vsel %vm1476, %v1677, %v1681
      %v1683 = vshrl.u32 %v1445, 16
      %v1685 = vrot.slane %v1683, 4
      %v1686 = vor.u32 %v1685, %v1681
      %v1687 = vrot.slane %v1686, 4
      %v1689 = vshll.u32 %v1446, 16
      %v1691 = vrot.slane %v1689, 5
      %v1692 = vsel %vm1476, %v1687, %v1691
      %v1694 = vshrl.u32 %v1447, 16
      %v1696 = vrot.slane %v1694, 4
      %v1697 = vshll.u32 %v1447, 16
      %v1699 = vrot.slane %v1697, 5
      %v1700 = vor.u32 %v1696, %v1699
      %v1701 = vrot.slane %v1700, 4
      %v1703 = vshll.u32 %v1448, 16
      %v1705 = vrot.slane %v1703, 5
      %v1706 = vsel %vm1476, %v1701, %v1705
      %v1707 = vshrl.u32 %v1448, 16
      %v1709 = vrot.slane %v1707, 4
      %v1710 = vor.u32 %v1709, %v1705
      %v1711 = vrot.slane %v1710, 4
      %v1713 = vshll.u32 %v1449, 16
      %v1715 = vrot.slane %v1713, 5
      %v1716 = vsel %vm1476, %v1711, %v1715
      %v1718 = vshrl.u32 %v1450, 16
      %v1720 = vrot.slane %v1718, 4
      %v1721 = vshll.u32 %v1450, 16
      %v1723 = vrot.slane %v1721, 5
      %v1724 = vor.u32 %v1720, %v1723
      %v1725 = vrot.slane %v1724, 4
      %v1727 = vshll.u32 %v1451, 16
      %v1729 = vrot.slane %v1727, 5
      %v1730 = vsel %vm1476, %v1725, %v1729
      %v1731 = vshrl.u32 %v1451, 16
      %v1733 = vrot.slane %v1731, 4
      %v1734 = vor.u32 %v1733, %v1729
      %v1735 = vrot.slane %v1734, 4
      %v1737 = vshll.u32 %v1452, 16
      %v1739 = vrot.slane %v1737, 5
      %v1740 = vsel %vm1476, %v1735, %v1739
      %v1742 = vshrl.u32 %v1453, 16
      %v1744 = vrot.slane %v1742, 4
      %v1745 = vshll.u32 %v1453, 16
      %v1747 = vrot.slane %v1745, 5
      %v1748 = vor.u32 %v1744, %v1747
      %v1749 = vrot.slane %v1748, 4
      %v1751 = vshll.u32 %v1454, 16
      %v1753 = vrot.slane %v1751, 5
      %v1754 = vsel %vm1476, %v1749, %v1753
      %v1755 = vshrl.u32 %v1454, 16
      %v1757 = vrot.slane %v1755, 4
      %v1758 = vor.u32 %v1757, %v1753
      %v1759 = vrot.slane %v1758, 4
      %v1761 = vshll.u32 %v1455, 16
      %v1763 = vrot.slane %v1761, 5
      %v1764 = vsel %vm1476, %v1759, %v1763
      %v1766 = vshrl.u32 %v1456, 16
      %v1768 = vrot.slane %v1766, 4
      %v1769 = vshll.u32 %v1456, 16
      %v1771 = vrot.slane %v1769, 5
      %v1772 = vor.u32 %v1768, %v1771
      %v1773 = vrot.slane %v1772, 4
      %v1775 = vshll.u32 %v1457, 16
      %v1777 = vrot.slane %v1775, 5
      %v1778 = vsel %vm1476, %v1773, %v1777
      %v1779 = vshrl.u32 %v1457, 16
      %v1781 = vrot.slane %v1779, 4
      %v1782 = vor.u32 %v1781, %v1777
      %v1783 = vrot.slane %v1782, 4
      %v1785 = vshll.u32 %v1458, 16
      %v1787 = vrot.slane %v1785, 5
      %v1788 = vsel %vm1476, %v1783, %v1787
      %v1790 = vshrl.u32 %v1459, 16
      %v1792 = vrot.slane %v1790, 4
      %v1793 = vshll.u32 %v1459, 16
      %v1795 = vrot.slane %v1793, 5
      %v1796 = vor.u32 %v1792, %v1795
      %v1797 = vrot.slane %v1796, 4
      %v1799 = vshll.u32 %v1460, 16
      %v1801 = vrot.slane %v1799, 5
      %v1802 = vsel %vm1476, %v1797, %v1801
      %v1803 = vshrl.u32 %v1460, 16
      %v1805 = vrot.slane %v1803, 4
      %v1806 = vor.u32 %v1805, %v1801
      %v1807 = vrot.slane %v1806, 4
      %v1809 = vshll.u32 %v1461, 16
      %v1811 = vrot.slane %v1809, 5
      %v1812 = vsel %vm1476, %v1807, %v1811
      %v1814 = vshrl.u32 %v1462, 16
      %v1816 = vrot.slane %v1814, 4
      %v1817 = vshll.u32 %v1462, 16
      %v1819 = vrot.slane %v1817, 5
      %v1820 = vor.u32 %v1816, %v1819
      %v1821 = vrot.slane %v1820, 4
      %v1823 = vshll.u32 %v1463, 16
      %v1825 = vrot.slane %v1823, 5
      %v1826 = vsel %vm1476, %v1821, %v1825
      %v1827 = vshrl.u32 %v1463, 16
      %v1829 = vrot.slane %v1827, 4
      %v1830 = vor.u32 %v1829, %v1825
      %v1831 = vrot.slane %v1830, 4
      %v1833 = vshll.u32 %v1464, 16
      %v1835 = vrot.slane %v1833, 5
      %v1836 = vsel %vm1476, %v1831, %v1835
      %v1838 = vshrl.u32 %v1465, 16
      %v1840 = vrot.slane %v1838, 4
      %v1841 = vshll.u32 %v1465, 16
      %v1843 = vrot.slane %v1841, 5
      %v1844 = vor.u32 %v1840, %v1843
      %v1845 = vrot.slane %v1844, 4
      %v1847 = vshll.u32 %v1466, 16
      %v1849 = vrot.slane %v1847, 5
      %v1850 = vsel %vm1476, %v1845, %v1849
      %v1851 = vshrl.u32 %v1466, 16
      %v1853 = vrot.slane %v1851, 4
      %v1854 = vor.u32 %v1853, %v1849
      %v1855 = vrot.slane %v1854, 4
      %v1857 = vshll.u32 %v1467, 16
      %v1859 = vrot.slane %v1857, 5
      %v1860 = vsel %vm1476, %v1855, %v1859
      %v1862 = vshrl.u32 %v1468, 16
      %v1864 = vrot.slane %v1862, 4
      %v1865 = vshll.u32 %v1468, 16
      %v1867 = vrot.slane %v1865, 5
      %v1868 = vor.u32 %v1864, %v1867
      %v1869 = vrot.slane %v1868, 4
      %v1871 = vshll.u32 %v1469, 16
      %v1873 = vrot.slane %v1871, 5
      %v1874 = vsel %vm1476, %v1869, %v1873
      %v1875 = vshrl.u32 %v1469, 16
      %v1877 = vrot.slane %v1875, 4
      %v1878 = vor.u32 %v1877, %v1873
      %v1879 = vrot.slane %v1878, 4
      %v1881 = vshll.u32 %v1470, 16
      %v1883 = vrot.slane %v1881, 5
      %v1884 = vsel %vm1476, %v1879, %v1883
      %v1886 = vshrl.u32 %v1471, 16
      %v1888 = vrot.slane %v1886, 4
      %v1889 = vshll.u32 %v1471, 16
      %v1891 = vrot.slane %v1889, 5
      %v1892 = vor.u32 %v1888, %v1891
      %v1893 = vrot.slane %v1892, 4
      %v1895 = vshll.u32 %v1472, 16
      %v1897 = vrot.slane %v1895, 5
      %v1898 = vsel %vm1476, %v1893, %v1897
      %v1899 = vshrl.u32 %v1472, 16
      %v1901 = vrot.slane %v1899, 4
      %v1902 = vor.u32 %v1901, %v1897
      %v1903 = vrot.slane %v1902, 4
      %v1905 = vshll.u32 %v1473, 16
      %v1907 = vrot.slane %v1905, 5
      %v1908 = vsel %vm1476, %v1903, %v1907
      %s1909 = scalar_lea.vmem %s2, 64
      %v1910 = vld [vmem:[%s1909] sm:$0xf]
      %v1911 = vld [vmem:[%s1909 + $0x4] sm:$0xf]
      %v1912 = vld [vmem:[%s1909 + $0x8] sm:$0xf]
      %v1913 = vld [vmem:[%s1909 + $0xc] sm:$0xf]
      %v1914 = vld [vmem:[%s1909 + $0x10] sm:$0xf]
      %v1915 = vld [vmem:[%s1909 + $0x14] sm:$0xf]
      %v1916 = vld [vmem:[%s1909 + $0x18] sm:$0xf]
      %v1917 = vld [vmem:[%s1909 + $0x1c] sm:$0xf]
      %v1918 = vld [vmem:[%s1909 + $0x20] sm:$0xf]
      %v1919 = vld [vmem:[%s1909 + $0x24] sm:$0xf]
      %v1920 = vld [vmem:[%s1909 + $0x28] sm:$0xf]
      %v1921 = vld [vmem:[%s1909 + $0x2c] sm:$0xf]
      %v1922 = vld [vmem:[%s1909 + $0x30] sm:$0xf]
      %v1923 = vld [vmem:[%s1909 + $0x34] sm:$0xf]
      %v1924 = vld [vmem:[%s1909 + $0x38] sm:$0xf]
      %v1925 = vld [vmem:[%s1909 + $0x3c] sm:$0xf]
      %v1926 = vunpack.c.l.b16 %v1490
      %v1927 = vunpack.c.l.b16 %v1500
      %v1928 = vunpack.c.l.b16 %v1514
      %v1929 = vunpack.c.l.b16 %v1524
      %v1930 = vunpack.c.l.b16 %v1538
      %v1931 = vunpack.c.l.b16 %v1548
      %v1932 = vunpack.c.l.b16 %v1562
      %v1933 = vunpack.c.l.b16 %v1572
      %v1934 = vunpack.c.l.b16 %v1586
      %v1935 = vunpack.c.l.b16 %v1596
      %v1936 = vunpack.c.l.b16 %v1610
      %v1937 = vunpack.c.l.b16 %v1620
      %v1938 = vunpack.c.l.b16 %v1634
      %v1939 = vunpack.c.l.b16 %v1644
      %v1940 = vunpack.c.l.b16 %v1658
      %v1941 = vunpack.c.l.b16 %v1668
      %v1942 = vunpack.c.l.b16 %v1682
      %v1943 = vunpack.c.l.b16 %v1692
      %v1944 = vunpack.c.l.b16 %v1706
      %v1945 = vunpack.c.l.b16 %v1716
      %v1946 = vunpack.c.l.b16 %v1730
      %v1947 = vunpack.c.l.b16 %v1740
      %v1948 = vunpack.c.l.b16 %v1754
      %v1949 = vunpack.c.l.b16 %v1764
      %v1950 = vunpack.c.l.b16 %v1778
      %v1951 = vunpack.c.l.b16 %v1788
      %v1952 = vunpack.c.l.b16 %v1802
      %v1953 = vunpack.c.l.b16 %v1812
      %v1954 = vunpack.c.l.b16 %v1826
      %v1955 = vunpack.c.l.b16 %v1836
      %v1956 = vunpack.c.l.b16 %v1850
      %v1957 = vunpack.c.l.b16 %v1860
      %v1958 = vpack.c.b16 %v1927, %v1926
      %v1959 = vpack.c.b16 %v1929, %v1928
      %v1960 = vpack.c.b16 %v1931, %v1930
      %v1961 = vpack.c.b16 %v1933, %v1932
      %v1962 = vpack.c.b16 %v1935, %v1934
      %v1963 = vpack.c.b16 %v1937, %v1936
      %v1964 = vpack.c.b16 %v1939, %v1938
      %v1965 = vpack.c.b16 %v1941, %v1940
      %v1966 = vpack.c.b16 %v1943, %v1942
      %v1967 = vpack.c.b16 %v1945, %v1944
      %v1968 = vpack.c.b16 %v1947, %v1946
      %v1969 = vpack.c.b16 %v1949, %v1948
      %v1970 = vpack.c.b16 %v1951, %v1950
      %v1971 = vpack.c.b16 %v1953, %v1952
      %v1972 = vpack.c.b16 %v1955, %v1954
      %v1973 = vpack.c.b16 %v1957, %v1956
      %v2006 = vunpack.c.l.b16 %v1910
      %v2007 = vunpack.c.l.b16 %v1911
      %v2008 = vunpack.c.l.b16 %v1912
      %v2009 = vunpack.c.l.b16 %v1913
      %v2010 = vunpack.c.l.b16 %v1914
      %v2011 = vunpack.c.l.b16 %v1915
      %v2012 = vunpack.c.l.b16 %v1916
      %v2013 = vunpack.c.l.b16 %v1917
      %v2014 = vunpack.c.l.b16 %v1918
      %v2015 = vunpack.c.l.b16 %v1919
      %v2016 = vunpack.c.l.b16 %v1920
      %v2017 = vunpack.c.l.b16 %v1921
      %v2018 = vunpack.c.l.b16 %v1922
      %v2019 = vunpack.c.l.b16 %v1923
      %v2020 = vunpack.c.l.b16 %v1924
      %v2021 = vunpack.c.l.b16 %v1925
      %v2022 = vpack.c.b16 %v2007, %v2006
      %v2023 = vpack.c.b16 %v2009, %v2008
      %v2024 = vpack.c.b16 %v2011, %v2010
      %v2025 = vpack.c.b16 %v2013, %v2012
      %v2026 = vpack.c.b16 %v2015, %v2014
      %v2027 = vpack.c.b16 %v2017, %v2016
      %v2028 = vpack.c.b16 %v2019, %v2018
      %v2029 = vpack.c.b16 %v2021, %v2020
      %2038 = vmatprep.subr.bf16.mxu0 0
      %2039 = vmatpush1.bf16.msra.mxu0 %v2029
      %2040 = vmatprep.subr.bf16.mxu0 0
      %2041 = vmatpush1.bf16.msra.mxu0 %v2028
      %2042 = vmatprep.subr.bf16.mxu0 0
      %2043 = vmatpush1.bf16.msra.mxu0 %v2027
      %2044 = vmatprep.subr.bf16.mxu0 0
      %2045 = vmatpush1.bf16.msra.mxu0 %v2026
      %2046 = vmatprep.subr.bf16.mxu0 0
      %2047 = vmatpush1.bf16.msra.mxu0 %v2025
      %2048 = vmatprep.subr.bf16.mxu0 0
      %2049 = vmatpush1.bf16.msra.mxu0 %v2024
      %2050 = vmatprep.subr.bf16.mxu0 0
      %2051 = vmatpush1.bf16.msra.mxu0 %v2023
      %2052 = vmatprep.subr.bf16.mxu0 0
      %2053 = vmatpush1.bf16.msra.mxu0 %v2022
      %2054 = vmatprep.subr.bf16.mxu0 0
      %2055 = vmatpush2.bf16.msra.mxu0 0
      %2056 = vmatprep.subr.bf16.mxu0 0
      %2057 = vmatpush2.bf16.msra.mxu0 0
      %2058 = vmatprep.subr.bf16.mxu0 0
      %2059 = vmatpush2.bf16.msra.mxu0 0
      %2060 = vmatprep.subr.bf16.mxu0 0
      %2061 = vmatpush2.bf16.msra.mxu0 0
      %2062 = vmatprep.subr.bf16.mxu0 0
      %2063 = vmatpush2.bf16.msra.mxu0 0
      %2064 = vmatprep.subr.bf16.mxu0 0
      %2065 = vmatpush2.bf16.msra.mxu0 0
      %2066 = vmatprep.subr.bf16.mxu0 0
      %2067 = vmatpush2.bf16.msra.mxu0 0
      %2068 = vmatprep.subr.bf16.mxu0 0
      %2069 = vmatpush2.bf16.msra.mxu0 0
      %2070 = vmatprep.mubr.bf16.mxu0 0
      %2071 = vmatmul.mubr.bf16.gmra.mxu0 %v1958
      %v2072 = vpop.f32.mrf.mxu0
      %v2073 = vadd.f32 0.0, %v2072
      %v2074 = vpop.f32.mrf.mxu0
      %v2075 = vpop.f32.mrf.mxu0
      %v2076 = vadd.f32 0.0, %v2075
      %v2077 = vpop.f32.mrf.mxu0
      %2078 = vmatprep.mubr.bf16.mxu0 0
      %2079 = vmatmul.mubr.bf16.gmra.mxu0 %v1959
      %v2080 = vpop.f32.mrf.mxu0
      %v2081 = vadd.f32 0.0, %v2080
      %v2082 = vpop.f32.mrf.mxu0
      %v2083 = vpop.f32.mrf.mxu0
      %v2084 = vadd.f32 0.0, %v2083
      %v2085 = vpop.f32.mrf.mxu0
      %2086 = vmatprep.mubr.bf16.mxu0 0
      %2087 = vmatmul.mubr.bf16.gmra.mxu0 %v1960
      %v2088 = vpop.f32.mrf.mxu0
      %v2089 = vadd.f32 0.0, %v2088
      %v2090 = vpop.f32.mrf.mxu0
      %v2091 = vpop.f32.mrf.mxu0
      %v2092 = vadd.f32 0.0, %v2091
      %v2093 = vpop.f32.mrf.mxu0
      %2094 = vmatprep.mubr.bf16.mxu0 0
      %2095 = vmatmul.mubr.bf16.gmra.mxu0 %v1961
      %v2096 = vpop.f32.mrf.mxu0
      %v2097 = vadd.f32 0.0, %v2096
      %v2098 = vpop.f32.mrf.mxu0
      %v2099 = vpop.f32.mrf.mxu0
      %v2100 = vadd.f32 0.0, %v2099
      %v2101 = vpop.f32.mrf.mxu0
      %2102 = vmatprep.mubr.bf16.mxu0 0
      %2103 = vmatmul.mubr.bf16.gmra.mxu0 %v1962
      %v2104 = vpop.f32.mrf.mxu0
      %v2105 = vadd.f32 0.0, %v2104
      %v2106 = vpop.f32.mrf.mxu0
      %v2107 = vpop.f32.mrf.mxu0
      %v2108 = vadd.f32 0.0, %v2107
      %v2109 = vpop.f32.mrf.mxu0
      %2110 = vmatprep.mubr.bf16.mxu0 0
      %2111 = vmatmul.mubr.bf16.gmra.mxu0 %v1963
      %v2112 = vpop.f32.mrf.mxu0
      %v2113 = vadd.f32 0.0, %v2112
      %v2114 = vpop.f32.mrf.mxu0
      %v2115 = vpop.f32.mrf.mxu0
      %v2116 = vadd.f32 0.0, %v2115
      %v2117 = vpop.f32.mrf.mxu0
      %2118 = vmatprep.mubr.bf16.mxu0 0
      %2119 = vmatmul.mubr.bf16.gmra.mxu0 %v1964
      %v2120 = vpop.f32.mrf.mxu0
      %v2121 = vadd.f32 0.0, %v2120
      %v2122 = vpop.f32.mrf.mxu0
      %v2123 = vpop.f32.mrf.mxu0
      %v2124 = vadd.f32 0.0, %v2123
      %v2125 = vpop.f32.mrf.mxu0
      %2126 = vmatprep.mubr.bf16.mxu0 0
      %2127 = vmatmul.mubr.bf16.gmra.mxu0 %v1965
      %v2128 = vpop.f32.mrf.mxu0
      %v2129 = vadd.f32 0.0, %v2128
      %v2130 = vpop.f32.mrf.mxu0
      %v2131 = vpop.f32.mrf.mxu0
      %v2132 = vadd.f32 0.0, %v2131
      %v2133 = vpop.f32.mrf.mxu0
      %2134 = vmatprep.mubr.bf16.mxu0 0
      %2135 = vmatmul.mubr.bf16.gmra.mxu0 %v1966
      %v2136 = vpop.f32.mrf.mxu0
      %v2137 = vadd.f32 0.0, %v2136
      %v2138 = vpop.f32.mrf.mxu0
      %v2139 = vpop.f32.mrf.mxu0
      %v2140 = vadd.f32 0.0, %v2139
      %v2141 = vpop.f32.mrf.mxu0
      %2142 = vmatprep.mubr.bf16.mxu0 0
      %2143 = vmatmul.mubr.bf16.gmra.mxu0 %v1967
      %v2144 = vpop.f32.mrf.mxu0
      %v2145 = vadd.f32 0.0, %v2144
      %v2146 = vpop.f32.mrf.mxu0
      %v2147 = vpop.f32.mrf.mxu0
      %v2148 = vadd.f32 0.0, %v2147
      %v2149 = vpop.f32.mrf.mxu0
      %2150 = vmatprep.mubr.bf16.mxu0 0
      %2151 = vmatmul.mubr.bf16.gmra.mxu0 %v1968
      %v2152 = vpop.f32.mrf.mxu0
      %v2153 = vadd.f32 0.0, %v2152
      %v2154 = vpop.f32.mrf.mxu0
      %v2155 = vpop.f32.mrf.mxu0
      %v2156 = vadd.f32 0.0, %v2155
      %v2157 = vpop.f32.mrf.mxu0
      %2158 = vmatprep.mubr.bf16.mxu0 0
      %2159 = vmatmul.mubr.bf16.gmra.mxu0 %v1969
      %v2160 = vpop.f32.mrf.mxu0
      %v2161 = vadd.f32 0.0, %v2160
      %v2162 = vpop.f32.mrf.mxu0
      %v2163 = vpop.f32.mrf.mxu0
      %v2164 = vadd.f32 0.0, %v2163
      %v2165 = vpop.f32.mrf.mxu0
      %2166 = vmatprep.mubr.bf16.mxu0 0
      %2167 = vmatmul.mubr.bf16.gmra.mxu0 %v1970
      %v2168 = vpop.f32.mrf.mxu0
      %v2169 = vadd.f32 0.0, %v2168
      %v2170 = vpop.f32.mrf.mxu0
      %v2171 = vpop.f32.mrf.mxu0
      %v2172 = vadd.f32 0.0, %v2171
      %v2173 = vpop.f32.mrf.mxu0
      %2174 = vmatprep.mubr.bf16.mxu0 0
      %2175 = vmatmul.mubr.bf16.gmra.mxu0 %v1971
      %v2176 = vpop.f32.mrf.mxu0
      %v2177 = vadd.f32 0.0, %v2176
      %v2178 = vpop.f32.mrf.mxu0
      %v2179 = vpop.f32.mrf.mxu0
      %v2180 = vadd.f32 0.0, %v2179
      %v2181 = vpop.f32.mrf.mxu0
      %2182 = vmatprep.mubr.bf16.mxu0 0
      %2183 = vmatmul.mubr.bf16.gmra.mxu0 %v1972
      %v2184 = vpop.f32.mrf.mxu0
      %v2185 = vadd.f32 0.0, %v2184
      %v2186 = vpop.f32.mrf.mxu0
      %v2187 = vpop.f32.mrf.mxu0
      %v2188 = vadd.f32 0.0, %v2187
      %v2189 = vpop.f32.mrf.mxu0
      %2190 = vmatprep.mubr.bf16.mxu0 0
      %2191 = vmatmul.mubr.bf16.gmra.mxu0 %v1973
      %v2192 = vpop.f32.mrf.mxu0
      %v2193 = vadd.f32 0.0, %v2192
      %v2194 = vpop.f32.mrf.mxu0
      %v2195 = vpop.f32.mrf.mxu0
      %v2196 = vadd.f32 0.0, %v2195
      %v2197 = vpop.f32.mrf.mxu0
      %2198 = vdwg.mxu0
      %v2199 = vld [vmem:[#allocation3] sm:$0xff]
      %v2200 = vld [vmem:[#allocation3 + $0x8] sm:$0xff]
      %v2201 = vld [vmem:[#allocation3 + $0x10] sm:$0xff]
      %v2202 = vld [vmem:[#allocation3 + $0x18] sm:$0xff]
      %v2203 = vld [vmem:[#allocation3 + $0x20] sm:$0xff]
      %v2204 = vld [vmem:[#allocation3 + $0x28] sm:$0xff]
      %v2205 = vld [vmem:[#allocation3 + $0x30] sm:$0xff]
      %v2206 = vld [vmem:[#allocation3 + $0x38] sm:$0xff]
      %v2207 = vld [vmem:[#allocation3 + $0x40] sm:$0xff]
      %v2208 = vld [vmem:[#allocation3 + $0x48] sm:$0xff]
      %v2209 = vld [vmem:[#allocation3 + $0x50] sm:$0xff]
      %v2210 = vld [vmem:[#allocation3 + $0x58] sm:$0xff]
      %v2211 = vld [vmem:[#allocation3 + $0x60] sm:$0xff]
      %v2212 = vld [vmem:[#allocation3 + $0x68] sm:$0xff]
      %v2213 = vld [vmem:[#allocation3 + $0x70] sm:$0xff]
      %v2214 = vld [vmem:[#allocation3 + $0x78] sm:$0xff]
      %v2215 = vld [vmem:[#allocation3 + $0x80] sm:$0xff]
      %v2216 = vld [vmem:[#allocation3 + $0x88] sm:$0xff]
      %v2217 = vld [vmem:[#allocation3 + $0x90] sm:$0xff]
      %v2218 = vld [vmem:[#allocation3 + $0x98] sm:$0xff]
      %v2219 = vld [vmem:[#allocation3 + $0xa0] sm:$0xff]
      %v2220 = vld [vmem:[#allocation3 + $0xa8] sm:$0xff]
      %v2221 = vld [vmem:[#allocation3 + $0xb0] sm:$0xff]
      %v2222 = vld [vmem:[#allocation3 + $0xb8] sm:$0xff]
      %v2223 = vld [vmem:[#allocation3 + $0xc0] sm:$0xff]
      %v2224 = vld [vmem:[#allocation3 + $0xc8] sm:$0xff]
      %v2225 = vld [vmem:[#allocation3 + $0xd0] sm:$0xff]
      %v2226 = vld [vmem:[#allocation3 + $0xd8] sm:$0xff]
      %v2227 = vld [vmem:[#allocation3 + $0xe0] sm:$0xff]
      %v2228 = vld [vmem:[#allocation3 + $0xe8] sm:$0xff]
      %v2229 = vld [vmem:[#allocation3 + $0xf0] sm:$0xff]
      %v2230 = vld [vmem:[#allocation3 + $0xf8] sm:$0xff]
      %v2231 = vadd.f32 %v2199, %v2073
      %v2232 = vadd.f32 %v2200, %v2076
      %v2233 = vadd.f32 %v2201, %v2081
      %v2234 = vadd.f32 %v2202, %v2084
      %v2235 = vadd.f32 %v2203, %v2089
      %v2236 = vadd.f32 %v2204, %v2092
      %v2237 = vadd.f32 %v2205, %v2097
      %v2238 = vadd.f32 %v2206, %v2100
      %v2239 = vadd.f32 %v2207, %v2105
      %v2240 = vadd.f32 %v2208, %v2108
      %v2241 = vadd.f32 %v2209, %v2113
      %v2242 = vadd.f32 %v2210, %v2116
      %v2243 = vadd.f32 %v2211, %v2121
      %v2244 = vadd.f32 %v2212, %v2124
      %v2245 = vadd.f32 %v2213, %v2129
      %v2246 = vadd.f32 %v2214, %v2132
      %v2247 = vadd.f32 %v2215, %v2137
      %v2248 = vadd.f32 %v2216, %v2140
      %v2249 = vadd.f32 %v2217, %v2145
      %v2250 = vadd.f32 %v2218, %v2148
      %v2251 = vadd.f32 %v2219, %v2153
      %v2252 = vadd.f32 %v2220, %v2156
      %v2253 = vadd.f32 %v2221, %v2161
      %v2254 = vadd.f32 %v2222, %v2164
      %v2255 = vadd.f32 %v2223, %v2169
      %v2256 = vadd.f32 %v2224, %v2172
      %v2257 = vadd.f32 %v2225, %v2177
      %v2258 = vadd.f32 %v2226, %v2180
      %v2259 = vadd.f32 %v2227, %v2185
      %v2260 = vadd.f32 %v2228, %v2188
      %v2261 = vadd.f32 %v2229, %v2193
      %v2262 = vadd.f32 %v2230, %v2196
      %2263 = vst [vmem:[#allocation3] sm:$0xff] %v2231
      %2264 = vst [vmem:[#allocation3 + $0x8] sm:$0xff] %v2232
      %2265 = vst [vmem:[#allocation3 + $0x10] sm:$0xff] %v2233
      %2266 = vst [vmem:[#allocation3 + $0x18] sm:$0xff] %v2234
      %2267 = vst [vmem:[#allocation3 + $0x20] sm:$0xff] %v2235
      %2268 = vst [vmem:[#allocation3 + $0x28] sm:$0xff] %v2236
      %2269 = vst [vmem:[#allocation3 + $0x30] sm:$0xff] %v2237
      %2270 = vst [vmem:[#allocation3 + $0x38] sm:$0xff] %v2238
      %2271 = vst [vmem:[#allocation3 + $0x40] sm:$0xff] %v2239
      %2272 = vst [vmem:[#allocation3 + $0x48] sm:$0xff] %v2240
      %2273 = vst [vmem:[#allocation3 + $0x50] sm:$0xff] %v2241
      %2274 = vst [vmem:[#allocation3 + $0x58] sm:$0xff] %v2242
      %2275 = vst [vmem:[#allocation3 + $0x60] sm:$0xff] %v2243
      %2276 = vst [vmem:[#allocation3 + $0x68] sm:$0xff] %v2244
      %2277 = vst [vmem:[#allocation3 + $0x70] sm:$0xff] %v2245
      %2278 = vst [vmem:[#allocation3 + $0x78] sm:$0xff] %v2246
      %2279 = vst [vmem:[#allocation3 + $0x80] sm:$0xff] %v2247
      %2280 = vst [vmem:[#allocation3 + $0x88] sm:$0xff] %v2248
      %2281 = vst [vmem:[#allocation3 + $0x90] sm:$0xff] %v2249
      %2282 = vst [vmem:[#allocation3 + $0x98] sm:$0xff] %v2250
      %2283 = vst [vmem:[#allocation3 + $0xa0] sm:$0xff] %v2251
      %2284 = vst [vmem:[#allocation3 + $0xa8] sm:$0xff] %v2252
      %2285 = vst [vmem:[#allocation3 + $0xb0] sm:$0xff] %v2253
      %2286 = vst [vmem:[#allocation3 + $0xb8] sm:$0xff] %v2254
      %2287 = vst [vmem:[#allocation3 + $0xc0] sm:$0xff] %v2255
      %2288 = vst [vmem:[#allocation3 + $0xc8] sm:$0xff] %v2256
      %2289 = vst [vmem:[#allocation3 + $0xd0] sm:$0xff] %v2257
      %2290 = vst [vmem:[#allocation3 + $0xd8] sm:$0xff] %v2258
      %2291 = vst [vmem:[#allocation3 + $0xe0] sm:$0xff] %v2259
      %2292 = vst [vmem:[#allocation3 + $0xe8] sm:$0xff] %v2260
      %2293 = vst [vmem:[#allocation3 + $0xf0] sm:$0xff] %v2261
      %2294 = vst [vmem:[#allocation3 + $0xf8] sm:$0xff] %v2262
      %s2295 = scalar_lea.vmem %s2, 256
      %v2296 = vld [vmem:[%s2295] sm:$0xf]
      %v2297 = vld [vmem:[%s2295 + $0x4] sm:$0xf]
      %v2298 = vld [vmem:[%s2295 + $0x8] sm:$0xf]
      %v2299 = vld [vmem:[%s2295 + $0xc] sm:$0xf]
      %v2300 = vld [vmem:[%s2295 + $0x10] sm:$0xf]
      %v2301 = vld [vmem:[%s2295 + $0x14] sm:$0xf]
      %v2302 = vld [vmem:[%s2295 + $0x18] sm:$0xf]
      %v2303 = vld [vmem:[%s2295 + $0x1c] sm:$0xf]
      %v2304 = vld [vmem:[%s2295 + $0x20] sm:$0xf]
      %v2305 = vld [vmem:[%s2295 + $0x24] sm:$0xf]
      %v2306 = vld [vmem:[%s2295 + $0x28] sm:$0xf]
      %v2307 = vld [vmem:[%s2295 + $0x2c] sm:$0xf]
      %v2308 = vld [vmem:[%s2295 + $0x30] sm:$0xf]
      %v2309 = vld [vmem:[%s2295 + $0x34] sm:$0xf]
      %v2310 = vld [vmem:[%s2295 + $0x38] sm:$0xf]
      %v2311 = vld [vmem:[%s2295 + $0x3c] sm:$0xf]
      %v2312 = vunpack.c.l.b16 %v1874
      %v2313 = vunpack.c.l.b16 %v1884
      %v2314 = vpack.c.b16 %v2313, %v2312
      %v2332 = vunpack.c.l.b16 %v2296
      %v2333 = vunpack.c.l.b16 %v2297
      %v2334 = vunpack.c.l.b16 %v2298
      %v2335 = vunpack.c.l.b16 %v2299
      %v2336 = vunpack.c.l.b16 %v2300
      %v2337 = vunpack.c.l.b16 %v2301
      %v2338 = vunpack.c.l.b16 %v2302
      %v2339 = vunpack.c.l.b16 %v2303
      %v2340 = vunpack.c.l.b16 %v2304
      %v2341 = vunpack.c.l.b16 %v2305
      %v2342 = vunpack.c.l.b16 %v2306
      %v2343 = vunpack.c.l.b16 %v2307
      %v2344 = vunpack.c.l.b16 %v2308
      %v2345 = vunpack.c.l.b16 %v2309
      %v2346 = vunpack.c.l.b16 %v2310
      %v2347 = vunpack.c.l.b16 %v2311
      %v2348 = vpack.c.b16 %v2333, %v2332
      %v2349 = vpack.c.b16 %v2335, %v2334
      %v2350 = vpack.c.b16 %v2337, %v2336
      %v2351 = vpack.c.b16 %v2339, %v2338
      %v2352 = vpack.c.b16 %v2341, %v2340
      %v2353 = vpack.c.b16 %v2343, %v2342
      %v2354 = vpack.c.b16 %v2345, %v2344
      %v2355 = vpack.c.b16 %v2347, %v2346
      %2364 = vmatprep.subr.bf16.mxu0 0
      %2365 = vmatpush1.bf16.msra.mxu0 %v2355
      %2366 = vmatprep.subr.bf16.mxu0 0
      %2367 = vmatpush1.bf16.msra.mxu0 %v2354
      %2368 = vmatprep.subr.bf16.mxu0 0
      %2369 = vmatpush1.bf16.msra.mxu0 %v2353
      %2370 = vmatprep.subr.bf16.mxu0 0
      %2371 = vmatpush1.bf16.msra.mxu0 %v2352
      %2372 = vmatprep.subr.bf16.mxu0 0
      %2373 = vmatpush1.bf16.msra.mxu0 %v2351
      %2374 = vmatprep.subr.bf16.mxu0 0
      %2375 = vmatpush1.bf16.msra.mxu0 %v2350
      %2376 = vmatprep.subr.bf16.mxu0 0
      %2377 = vmatpush1.bf16.msra.mxu0 %v2349
      %2378 = vmatprep.subr.bf16.mxu0 0
      %2379 = vmatpush1.bf16.msra.mxu0 %v2348
      %2380 = vmatprep.subr.bf16.mxu0 0
      %2381 = vmatpush2.bf16.msra.mxu0 0
      %2382 = vmatprep.subr.bf16.mxu0 0
      %2383 = vmatpush2.bf16.msra.mxu0 0
      %2384 = vmatprep.subr.bf16.mxu0 0
      %2385 = vmatpush2.bf16.msra.mxu0 0
      %2386 = vmatprep.subr.bf16.mxu0 0
      %2387 = vmatpush2.bf16.msra.mxu0 0
      %2388 = vmatprep.subr.bf16.mxu0 0
      %2389 = vmatpush2.bf16.msra.mxu0 0
      %2390 = vmatprep.subr.bf16.mxu0 0
      %2391 = vmatpush2.bf16.msra.mxu0 0
      %2392 = vmatprep.subr.bf16.mxu0 0
      %2393 = vmatpush2.bf16.msra.mxu0 0
      %2394 = vmatprep.subr.bf16.mxu0 0
      %2395 = vmatpush2.bf16.msra.mxu0 0
      %2396 = vmatprep.mubr.bf16.mxu0 0
      %2397 = vmatmul.mubr.bf16.gmra.mxu0 %v1959
      %v2398 = vpop.f32.mrf.mxu0
      %v2399 = vadd.f32 0.0, %v2398
      %v2400 = vpop.f32.mrf.mxu0
      %v2401 = vpop.f32.mrf.mxu0
      %v2402 = vadd.f32 0.0, %v2401
      %v2403 = vpop.f32.mrf.mxu0
      %2404 = vmatprep.mubr.bf16.mxu0 0
      %2405 = vmatmul.mubr.bf16.gmra.mxu0 %v1960
      %v2406 = vpop.f32.mrf.mxu0
      %v2407 = vadd.f32 0.0, %v2406
      %v2408 = vpop.f32.mrf.mxu0
      %v2409 = vpop.f32.mrf.mxu0
      %v2410 = vadd.f32 0.0, %v2409
      %v2411 = vpop.f32.mrf.mxu0
      %2412 = vmatprep.mubr.bf16.mxu0 0
      %2413 = vmatmul.mubr.bf16.gmra.mxu0 %v1961
      %v2414 = vpop.f32.mrf.mxu0
      %v2415 = vadd.f32 0.0, %v2414
      %v2416 = vpop.f32.mrf.mxu0
      %v2417 = vpop.f32.mrf.mxu0
      %v2418 = vadd.f32 0.0, %v2417
      %v2419 = vpop.f32.mrf.mxu0
      %2420 = vmatprep.mubr.bf16.mxu0 0
      %2421 = vmatmul.mubr.bf16.gmra.mxu0 %v1962
      %v2422 = vpop.f32.mrf.mxu0
      %v2423 = vadd.f32 0.0, %v2422
      %v2424 = vpop.f32.mrf.mxu0
      %v2425 = vpop.f32.mrf.mxu0
      %v2426 = vadd.f32 0.0, %v2425
      %v2427 = vpop.f32.mrf.mxu0
      %2428 = vmatprep.mubr.bf16.mxu0 0
      %2429 = vmatmul.mubr.bf16.gmra.mxu0 %v1963
      %v2430 = vpop.f32.mrf.mxu0
      %v2431 = vadd.f32 0.0, %v2430
      %v2432 = vpop.f32.mrf.mxu0
      %v2433 = vpop.f32.mrf.mxu0
      %v2434 = vadd.f32 0.0, %v2433
      %v2435 = vpop.f32.mrf.mxu0
      %2436 = vmatprep.mubr.bf16.mxu0 0
      %2437 = vmatmul.mubr.bf16.gmra.mxu0 %v1964
      %v2438 = vpop.f32.mrf.mxu0
      %v2439 = vadd.f32 0.0, %v2438
      %v2440 = vpop.f32.mrf.mxu0
      %v2441 = vpop.f32.mrf.mxu0
      %v2442 = vadd.f32 0.0, %v2441
      %v2443 = vpop.f32.mrf.mxu0
      %2444 = vmatprep.mubr.bf16.mxu0 0
      %2445 = vmatmul.mubr.bf16.gmra.mxu0 %v1965
      %v2446 = vpop.f32.mrf.mxu0
      %v2447 = vadd.f32 0.0, %v2446
      %v2448 = vpop.f32.mrf.mxu0
      %v2449 = vpop.f32.mrf.mxu0
      %v2450 = vadd.f32 0.0, %v2449
      %v2451 = vpop.f32.mrf.mxu0
      %2452 = vmatprep.mubr.bf16.mxu0 0
      %2453 = vmatmul.mubr.bf16.gmra.mxu0 %v1966
      %v2454 = vpop.f32.mrf.mxu0
      %v2455 = vadd.f32 0.0, %v2454
      %v2456 = vpop.f32.mrf.mxu0
      %v2457 = vpop.f32.mrf.mxu0
      %v2458 = vadd.f32 0.0, %v2457
      %v2459 = vpop.f32.mrf.mxu0
      %2460 = vmatprep.mubr.bf16.mxu0 0
      %2461 = vmatmul.mubr.bf16.gmra.mxu0 %v1967
      %v2462 = vpop.f32.mrf.mxu0
      %v2463 = vadd.f32 0.0, %v2462
      %v2464 = vpop.f32.mrf.mxu0
      %v2465 = vpop.f32.mrf.mxu0
      %v2466 = vadd.f32 0.0, %v2465
      %v2467 = vpop.f32.mrf.mxu0
      %2468 = vmatprep.mubr.bf16.mxu0 0
      %2469 = vmatmul.mubr.bf16.gmra.mxu0 %v1968
      %v2470 = vpop.f32.mrf.mxu0
      %v2471 = vadd.f32 0.0, %v2470
      %v2472 = vpop.f32.mrf.mxu0
      %v2473 = vpop.f32.mrf.mxu0
      %v2474 = vadd.f32 0.0, %v2473
      %v2475 = vpop.f32.mrf.mxu0
      %2476 = vmatprep.mubr.bf16.mxu0 0
      %2477 = vmatmul.mubr.bf16.gmra.mxu0 %v1969
      %v2478 = vpop.f32.mrf.mxu0
      %v2479 = vadd.f32 0.0, %v2478
      %v2480 = vpop.f32.mrf.mxu0
      %v2481 = vpop.f32.mrf.mxu0
      %v2482 = vadd.f32 0.0, %v2481
      %v2483 = vpop.f32.mrf.mxu0
      %2484 = vmatprep.mubr.bf16.mxu0 0
      %2485 = vmatmul.mubr.bf16.gmra.mxu0 %v1970
      %v2486 = vpop.f32.mrf.mxu0
      %v2487 = vadd.f32 0.0, %v2486
      %v2488 = vpop.f32.mrf.mxu0
      %v2489 = vpop.f32.mrf.mxu0
      %v2490 = vadd.f32 0.0, %v2489
      %v2491 = vpop.f32.mrf.mxu0
      %2492 = vmatprep.mubr.bf16.mxu0 0
      %2493 = vmatmul.mubr.bf16.gmra.mxu0 %v1971
      %v2494 = vpop.f32.mrf.mxu0
      %v2495 = vadd.f32 0.0, %v2494
      %v2496 = vpop.f32.mrf.mxu0
      %v2497 = vpop.f32.mrf.mxu0
      %v2498 = vadd.f32 0.0, %v2497
      %v2499 = vpop.f32.mrf.mxu0
      %2500 = vmatprep.mubr.bf16.mxu0 0
      %2501 = vmatmul.mubr.bf16.gmra.mxu0 %v1972
      %v2502 = vpop.f32.mrf.mxu0
      %v2503 = vadd.f32 0.0, %v2502
      %v2504 = vpop.f32.mrf.mxu0
      %v2505 = vpop.f32.mrf.mxu0
      %v2506 = vadd.f32 0.0, %v2505
      %v2507 = vpop.f32.mrf.mxu0
      %2508 = vmatprep.mubr.bf16.mxu0 0
      %2509 = vmatmul.mubr.bf16.gmra.mxu0 %v1973
      %v2510 = vpop.f32.mrf.mxu0
      %v2511 = vadd.f32 0.0, %v2510
      %v2512 = vpop.f32.mrf.mxu0
      %v2513 = vpop.f32.mrf.mxu0
      %v2514 = vadd.f32 0.0, %v2513
      %v2515 = vpop.f32.mrf.mxu0
      %2516 = vmatprep.mubr.bf16.mxu0 0
      %2517 = vmatmul.mubr.bf16.gmra.mxu0 %v2314
      %v2518 = vpop.f32.mrf.mxu0
      %v2519 = vadd.f32 0.0, %v2518
      %v2520 = vpop.f32.mrf.mxu0
      %v2521 = vpop.f32.mrf.mxu0
      %v2522 = vadd.f32 0.0, %v2521
      %v2523 = vpop.f32.mrf.mxu0
      %2524 = vdwg.mxu0
      %v2525 = vld [vmem:[#allocation3] sm:$0xff]
      %v2526 = vld [vmem:[#allocation3 + $0x8] sm:$0xff]
      %v2527 = vld [vmem:[#allocation3 + $0x10] sm:$0xff]
      %v2528 = vld [vmem:[#allocation3 + $0x18] sm:$0xff]
      %v2529 = vld [vmem:[#allocation3 + $0x20] sm:$0xff]
      %v2530 = vld [vmem:[#allocation3 + $0x28] sm:$0xff]
      %v2531 = vld [vmem:[#allocation3 + $0x30] sm:$0xff]
      %v2532 = vld [vmem:[#allocation3 + $0x38] sm:$0xff]
      %v2533 = vld [vmem:[#allocation3 + $0x40] sm:$0xff]
      %v2534 = vld [vmem:[#allocation3 + $0x48] sm:$0xff]
      %v2535 = vld [vmem:[#allocation3 + $0x50] sm:$0xff]
      %v2536 = vld [vmem:[#allocation3 + $0x58] sm:$0xff]
      %v2537 = vld [vmem:[#allocation3 + $0x60] sm:$0xff]
      %v2538 = vld [vmem:[#allocation3 + $0x68] sm:$0xff]
      %v2539 = vld [vmem:[#allocation3 + $0x70] sm:$0xff]
      %v2540 = vld [vmem:[#allocation3 + $0x78] sm:$0xff]
      %v2541 = vld [vmem:[#allocation3 + $0x80] sm:$0xff]
      %v2542 = vld [vmem:[#allocation3 + $0x88] sm:$0xff]
      %v2543 = vld [vmem:[#allocation3 + $0x90] sm:$0xff]
      %v2544 = vld [vmem:[#allocation3 + $0x98] sm:$0xff]
      %v2545 = vld [vmem:[#allocation3 + $0xa0] sm:$0xff]
      %v2546 = vld [vmem:[#allocation3 + $0xa8] sm:$0xff]
      %v2547 = vld [vmem:[#allocation3 + $0xb0] sm:$0xff]
      %v2548 = vld [vmem:[#allocation3 + $0xb8] sm:$0xff]
      %v2549 = vld [vmem:[#allocation3 + $0xc0] sm:$0xff]
      %v2550 = vld [vmem:[#allocation3 + $0xc8] sm:$0xff]
      %v2551 = vld [vmem:[#allocation3 + $0xd0] sm:$0xff]
      %v2552 = vld [vmem:[#allocation3 + $0xd8] sm:$0xff]
      %v2553 = vld [vmem:[#allocation3 + $0xe0] sm:$0xff]
      %v2554 = vld [vmem:[#allocation3 + $0xe8] sm:$0xff]
      %v2555 = vld [vmem:[#allocation3 + $0xf0] sm:$0xff]
      %v2556 = vld [vmem:[#allocation3 + $0xf8] sm:$0xff]
      %v2557 = vadd.f32 %v2525, %v2399
      %v2558 = vadd.f32 %v2526, %v2402
      %v2559 = vadd.f32 %v2527, %v2407
      %v2560 = vadd.f32 %v2528, %v2410
      %v2561 = vadd.f32 %v2529, %v2415
      %v2562 = vadd.f32 %v2530, %v2418
      %v2563 = vadd.f32 %v2531, %v2423
      %v2564 = vadd.f32 %v2532, %v2426
      %v2565 = vadd.f32 %v2533, %v2431
      %v2566 = vadd.f32 %v2534, %v2434
      %v2567 = vadd.f32 %v2535, %v2439
      %v2568 = vadd.f32 %v2536, %v2442
      %v2569 = vadd.f32 %v2537, %v2447
      %v2570 = vadd.f32 %v2538, %v2450
      %v2571 = vadd.f32 %v2539, %v2455
      %v2572 = vadd.f32 %v2540, %v2458
      %v2573 = vadd.f32 %v2541, %v2463
      %v2574 = vadd.f32 %v2542, %v2466
      %v2575 = vadd.f32 %v2543, %v2471
      %v2576 = vadd.f32 %v2544, %v2474
      %v2577 = vadd.f32 %v2545, %v2479
      %v2578 = vadd.f32 %v2546, %v2482
      %v2579 = vadd.f32 %v2547, %v2487
      %v2580 = vadd.f32 %v2548, %v2490
      %v2581 = vadd.f32 %v2549, %v2495
      %v2582 = vadd.f32 %v2550, %v2498
      %v2583 = vadd.f32 %v2551, %v2503
      %v2584 = vadd.f32 %v2552, %v2506
      %v2585 = vadd.f32 %v2553, %v2511
      %v2586 = vadd.f32 %v2554, %v2514
      %v2587 = vadd.f32 %v2555, %v2519
      %v2588 = vadd.f32 %v2556, %v2522
      %2589 = vst [vmem:[#allocation3] sm:$0xff] %v2557
      %2590 = vst [vmem:[#allocation3 + $0x8] sm:$0xff] %v2558
      %2591 = vst [vmem:[#allocation3 + $0x10] sm:$0xff] %v2559
      %2592 = vst [vmem:[#allocation3 + $0x18] sm:$0xff] %v2560
      %2593 = vst [vmem:[#allocation3 + $0x20] sm:$0xff] %v2561
      %2594 = vst [vmem:[#allocation3 + $0x28] sm:$0xff] %v2562
      %2595 = vst [vmem:[#allocation3 + $0x30] sm:$0xff] %v2563
      %2596 = vst [vmem:[#allocation3 + $0x38] sm:$0xff] %v2564
      %2597 = vst [vmem:[#allocation3 + $0x40] sm:$0xff] %v2565
      %2598 = vst [vmem:[#allocation3 + $0x48] sm:$0xff] %v2566
      %2599 = vst [vmem:[#allocation3 + $0x50] sm:$0xff] %v2567
      %2600 = vst [vmem:[#allocation3 + $0x58] sm:$0xff] %v2568
      %2601 = vst [vmem:[#allocation3 + $0x60] sm:$0xff] %v2569
      %2602 = vst [vmem:[#allocation3 + $0x68] sm:$0xff] %v2570
      %2603 = vst [vmem:[#allocation3 + $0x70] sm:$0xff] %v2571
      %2604 = vst [vmem:[#allocation3 + $0x78] sm:$0xff] %v2572
      %2605 = vst [vmem:[#allocation3 + $0x80] sm:$0xff] %v2573
      %2606 = vst [vmem:[#allocation3 + $0x88] sm:$0xff] %v2574
      %2607 = vst [vmem:[#allocation3 + $0x90] sm:$0xff] %v2575
      %2608 = vst [vmem:[#allocation3 + $0x98] sm:$0xff] %v2576
      %2609 = vst [vmem:[#allocation3 + $0xa0] sm:$0xff] %v2577
      %2610 = vst [vmem:[#allocation3 + $0xa8] sm:$0xff] %v2578
      %2611 = vst [vmem:[#allocation3 + $0xb0] sm:$0xff] %v2579
      %2612 = vst [vmem:[#allocation3 + $0xb8] sm:$0xff] %v2580
      %2613 = vst [vmem:[#allocation3 + $0xc0] sm:$0xff] %v2581
      %2614 = vst [vmem:[#allocation3 + $0xc8] sm:$0xff] %v2582
      %2615 = vst [vmem:[#allocation3 + $0xd0] sm:$0xff] %v2583
      %2616 = vst [vmem:[#allocation3 + $0xd8] sm:$0xff] %v2584
      %2617 = vst [vmem:[#allocation3 + $0xe0] sm:$0xff] %v2585
      %2618 = vst [vmem:[#allocation3 + $0xe8] sm:$0xff] %v2586
      %2619 = vst [vmem:[#allocation3 + $0xf0] sm:$0xff] %v2587
      %2620 = vst [vmem:[#allocation3 + $0xf8] sm:$0xff] %v2588
      %s2621 = scalar_lea.vmem %s2, 448
      %v2622 = vld [vmem:[%s2621] sm:$0xf]
      %v2623 = vld [vmem:[%s2621 + $0x4] sm:$0xf]
      %v2624 = vld [vmem:[%s2621 + $0x8] sm:$0xf]
      %v2625 = vld [vmem:[%s2621 + $0xc] sm:$0xf]
      %v2626 = vld [vmem:[%s2621 + $0x10] sm:$0xf]
      %v2627 = vld [vmem:[%s2621 + $0x14] sm:$0xf]
      %v2628 = vld [vmem:[%s2621 + $0x18] sm:$0xf]
      %v2629 = vld [vmem:[%s2621 + $0x1c] sm:$0xf]
      %v2630 = vld [vmem:[%s2621 + $0x20] sm:$0xf]
      %v2631 = vld [vmem:[%s2621 + $0x24] sm:$0xf]
      %v2632 = vld [vmem:[%s2621 + $0x28] sm:$0xf]
      %v2633 = vld [vmem:[%s2621 + $0x2c] sm:$0xf]
      %v2634 = vld [vmem:[%s2621 + $0x30] sm:$0xf]
      %v2635 = vld [vmem:[%s2621 + $0x34] sm:$0xf]
      %v2636 = vld [vmem:[%s2621 + $0x38] sm:$0xf]
      %v2637 = vld [vmem:[%s2621 + $0x3c] sm:$0xf]
      %v2638 = vunpack.c.l.b16 %v1898
      %v2639 = vunpack.c.l.b16 %v1908
      %v2640 = vpack.c.b16 %v2639, %v2638
      %v2658 = vunpack.c.l.b16 %v2622
      %v2659 = vunpack.c.l.b16 %v2623
      %v2660 = vunpack.c.l.b16 %v2624
      %v2661 = vunpack.c.l.b16 %v2625
      %v2662 = vunpack.c.l.b16 %v2626
      %v2663 = vunpack.c.l.b16 %v2627
      %v2664 = vunpack.c.l.b16 %v2628
      %v2665 = vunpack.c.l.b16 %v2629
      %v2666 = vunpack.c.l.b16 %v2630
      %v2667 = vunpack.c.l.b16 %v2631
      %v2668 = vunpack.c.l.b16 %v2632
      %v2669 = vunpack.c.l.b16 %v2633
      %v2670 = vunpack.c.l.b16 %v2634
      %v2671 = vunpack.c.l.b16 %v2635
      %v2672 = vunpack.c.l.b16 %v2636
      %v2673 = vunpack.c.l.b16 %v2637
      %v2674 = vpack.c.b16 %v2659, %v2658
      %v2675 = vpack.c.b16 %v2661, %v2660
      %v2676 = vpack.c.b16 %v2663, %v2662
      %v2677 = vpack.c.b16 %v2665, %v2664
      %v2678 = vpack.c.b16 %v2667, %v2666
      %v2679 = vpack.c.b16 %v2669, %v2668
      %v2680 = vpack.c.b16 %v2671, %v2670
      %v2681 = vpack.c.b16 %v2673, %v2672
      %2690 = vmatprep.subr.bf16.mxu0 0
      %2691 = vmatpush1.bf16.msra.mxu0 %v2681
      %2692 = vmatprep.subr.bf16.mxu0 0
      %2693 = vmatpush1.bf16.msra.mxu0 %v2680
      %2694 = vmatprep.subr.bf16.mxu0 0
      %2695 = vmatpush1.bf16.msra.mxu0 %v2679
      %2696 = vmatprep.subr.bf16.mxu0 0
      %2697 = vmatpush1.bf16.msra.mxu0 %v2678
      %2698 = vmatprep.subr.bf16.mxu0 0
      %2699 = vmatpush1.bf16.msra.mxu0 %v2677
      %2700 = vmatprep.subr.bf16.mxu0 0
      %2701 = vmatpush1.bf16.msra.mxu0 %v2676
      %2702 = vmatprep.subr.bf16.mxu0 0
      %2703 = vmatpush1.bf16.msra.mxu0 %v2675
      %2704 = vmatprep.subr.bf16.mxu0 0
      %2705 = vmatpush1.bf16.msra.mxu0 %v2674
      %2706 = vmatprep.subr.bf16.mxu0 0
      %2707 = vmatpush2.bf16.msra.mxu0 0
      %2708 = vmatprep.subr.bf16.mxu0 0
      %2709 = vmatpush2.bf16.msra.mxu0 0
      %2710 = vmatprep.subr.bf16.mxu0 0
      %2711 = vmatpush2.bf16.msra.mxu0 0
      %2712 = vmatprep.subr.bf16.mxu0 0
      %2713 = vmatpush2.bf16.msra.mxu0 0
      %2714 = vmatprep.subr.bf16.mxu0 0
      %2715 = vmatpush2.bf16.msra.mxu0 0
      %2716 = vmatprep.subr.bf16.mxu0 0
      %2717 = vmatpush2.bf16.msra.mxu0 0
      %2718 = vmatprep.subr.bf16.mxu0 0
      %2719 = vmatpush2.bf16.msra.mxu0 0
      %2720 = vmatprep.subr.bf16.mxu0 0
      %2721 = vmatpush2.bf16.msra.mxu0 0
      %2722 = vmatprep.mubr.bf16.mxu0 0
      %2723 = vmatmul.mubr.bf16.gmra.mxu0 %v1960
      %v2724 = vpop.f32.mrf.mxu0
      %v2725 = vadd.f32 0.0, %v2724
      %v2726 = vpop.f32.mrf.mxu0
      %v2727 = vpop.f32.mrf.mxu0
      %v2728 = vadd.f32 0.0, %v2727
      %v2729 = vpop.f32.mrf.mxu0
      %2730 = vmatprep.mubr.bf16.mxu0 0
      %2731 = vmatmul.mubr.bf16.gmra.mxu0 %v1961
      %v2732 = vpop.f32.mrf.mxu0
      %v2733 = vadd.f32 0.0, %v2732
      %v2734 = vpop.f32.mrf.mxu0
      %v2735 = vpop.f32.mrf.mxu0
      %v2736 = vadd.f32 0.0, %v2735
      %v2737 = vpop.f32.mrf.mxu0
      %2738 = vmatprep.mubr.bf16.mxu0 0
      %2739 = vmatmul.mubr.bf16.gmra.mxu0 %v1962
      %v2740 = vpop.f32.mrf.mxu0
      %v2741 = vadd.f32 0.0, %v2740
      %v2742 = vpop.f32.mrf.mxu0
      %v2743 = vpop.f32.mrf.mxu0
      %v2744 = vadd.f32 0.0, %v2743
      %v2745 = vpop.f32.mrf.mxu0
      %2746 = vmatprep.mubr.bf16.mxu0 0
      %2747 = vmatmul.mubr.bf16.gmra.mxu0 %v1963
      %v2748 = vpop.f32.mrf.mxu0
      %v2749 = vadd.f32 0.0, %v2748
      %v2750 = vpop.f32.mrf.mxu0
      %v2751 = vpop.f32.mrf.mxu0
      %v2752 = vadd.f32 0.0, %v2751
      %v2753 = vpop.f32.mrf.mxu0
      %2754 = vmatprep.mubr.bf16.mxu0 0
      %2755 = vmatmul.mubr.bf16.gmra.mxu0 %v1964
      %v2756 = vpop.f32.mrf.mxu0
      %v2757 = vadd.f32 0.0, %v2756
      %v2758 = vpop.f32.mrf.mxu0
      %v2759 = vpop.f32.mrf.mxu0
      %v2760 = vadd.f32 0.0, %v2759
      %v2761 = vpop.f32.mrf.mxu0
      %2762 = vmatprep.mubr.bf16.mxu0 0
      %2763 = vmatmul.mubr.bf16.gmra.mxu0 %v1965
      %v2764 = vpop.f32.mrf.mxu0
      %v2765 = vadd.f32 0.0, %v2764
      %v2766 = vpop.f32.mrf.mxu0
      %v2767 = vpop.f32.mrf.mxu0
      %v2768 = vadd.f32 0.0, %v2767
      %v2769 = vpop.f32.mrf.mxu0
      %2770 = vmatprep.mubr.bf16.mxu0 0
      %2771 = vmatmul.mubr.bf16.gmra.mxu0 %v1966
      %v2772 = vpop.f32.mrf.mxu0
      %v2773 = vadd.f32 0.0, %v2772
      %v2774 = vpop.f32.mrf.mxu0
      %v2775 = vpop.f32.mrf.mxu0
      %v2776 = vadd.f32 0.0, %v2775
      %v2777 = vpop.f32.mrf.mxu0
      %2778 = vmatprep.mubr.bf16.mxu0 0
      %2779 = vmatmul.mubr.bf16.gmra.mxu0 %v1967
      %v2780 = vpop.f32.mrf.mxu0
      %v2781 = vadd.f32 0.0, %v2780
      %v2782 = vpop.f32.mrf.mxu0
      %v2783 = vpop.f32.mrf.mxu0
      %v2784 = vadd.f32 0.0, %v2783
      %v2785 = vpop.f32.mrf.mxu0
      %2786 = vmatprep.mubr.bf16.mxu0 0
      %2787 = vmatmul.mubr.bf16.gmra.mxu0 %v1968
      %v2788 = vpop.f32.mrf.mxu0
      %v2789 = vadd.f32 0.0, %v2788
      %v2790 = vpop.f32.mrf.mxu0
      %v2791 = vpop.f32.mrf.mxu0
      %v2792 = vadd.f32 0.0, %v2791
      %v2793 = vpop.f32.mrf.mxu0
      %2794 = vmatprep.mubr.bf16.mxu0 0
      %2795 = vmatmul.mubr.bf16.gmra.mxu0 %v1969
      %v2796 = vpop.f32.mrf.mxu0
      %v2797 = vadd.f32 0.0, %v2796
      %v2798 = vpop.f32.mrf.mxu0
      %v2799 = vpop.f32.mrf.mxu0
      %v2800 = vadd.f32 0.0, %v2799
      %v2801 = vpop.f32.mrf.mxu0
      %2802 = vmatprep.mubr.bf16.mxu0 0
      %2803 = vmatmul.mubr.bf16.gmra.mxu0 %v1970
      %v2804 = vpop.f32.mrf.mxu0
      %v2805 = vadd.f32 0.0, %v2804
      %v2806 = vpop.f32.mrf.mxu0
      %v2807 = vpop.f32.mrf.mxu0
      %v2808 = vadd.f32 0.0, %v2807
      %v2809 = vpop.f32.mrf.mxu0
      %2810 = vmatprep.mubr.bf16.mxu0 0
      %2811 = vmatmul.mubr.bf16.gmra.mxu0 %v1971
      %v2812 = vpop.f32.mrf.mxu0
      %v2813 = vadd.f32 0.0, %v2812
      %v2814 = vpop.f32.mrf.mxu0
      %v2815 = vpop.f32.mrf.mxu0
      %v2816 = vadd.f32 0.0, %v2815
      %v2817 = vpop.f32.mrf.mxu0
      %2818 = vmatprep.mubr.bf16.mxu0 0
      %2819 = vmatmul.mubr.bf16.gmra.mxu0 %v1972
      %v2820 = vpop.f32.mrf.mxu0
      %v2821 = vadd.f32 0.0, %v2820
      %v2822 = vpop.f32.mrf.mxu0
      %v2823 = vpop.f32.mrf.mxu0
      %v2824 = vadd.f32 0.0, %v2823
      %v2825 = vpop.f32.mrf.mxu0
      %2826 = vmatprep.mubr.bf16.mxu0 0
      %2827 = vmatmul.mubr.bf16.gmra.mxu0 %v1973
      %v2828 = vpop.f32.mrf.mxu0
      %v2829 = vadd.f32 0.0, %v2828
      %v2830 = vpop.f32.mrf.mxu0
      %v2831 = vpop.f32.mrf.mxu0
      %v2832 = vadd.f32 0.0, %v2831
      %v2833 = vpop.f32.mrf.mxu0
      %2834 = vmatprep.mubr.bf16.mxu0 0
      %2835 = vmatmul.mubr.bf16.gmra.mxu0 %v2314
      %v2836 = vpop.f32.mrf.mxu0
      %v2837 = vadd.f32 0.0, %v2836
      %v2838 = vpop.f32.mrf.mxu0
      %v2839 = vpop.f32.mrf.mxu0
      %v2840 = vadd.f32 0.0, %v2839
      %v2841 = vpop.f32.mrf.mxu0
      %2842 = vmatprep.mubr.bf16.mxu0 0
      %2843 = vmatmul.mubr.bf16.gmra.mxu0 %v2640
      %v2844 = vpop.f32.mrf.mxu0
      %v2845 = vadd.f32 0.0, %v2844
      %v2846 = vpop.f32.mrf.mxu0
      %v2847 = vpop.f32.mrf.mxu0
      %v2848 = vadd.f32 0.0, %v2847
      %v2849 = vpop.f32.mrf.mxu0
      %2850 = vdwg.mxu0
      %v2851 = vld [vmem:[#allocation3] sm:$0xff]
      %v2852 = vld [vmem:[#allocation3 + $0x8] sm:$0xff]
      %v2853 = vld [vmem:[#allocation3 + $0x10] sm:$0xff]
      %v2854 = vld [vmem:[#allocation3 + $0x18] sm:$0xff]
      %v2855 = vld [vmem:[#allocation3 + $0x20] sm:$0xff]
      %v2856 = vld [vmem:[#allocation3 + $0x28] sm:$0xff]
      %v2857 = vld [vmem:[#allocation3 + $0x30] sm:$0xff]
      %v2858 = vld [vmem:[#allocation3 + $0x38] sm:$0xff]
      %v2859 = vld [vmem:[#allocation3 + $0x40] sm:$0xff]
      %v2860 = vld [vmem:[#allocation3 + $0x48] sm:$0xff]
      %v2861 = vld [vmem:[#allocation3 + $0x50] sm:$0xff]
      %v2862 = vld [vmem:[#allocation3 + $0x58] sm:$0xff]
      %v2863 = vld [vmem:[#allocation3 + $0x60] sm:$0xff]
      %v2864 = vld [vmem:[#allocation3 + $0x68] sm:$0xff]
      %v2865 = vld [vmem:[#allocation3 + $0x70] sm:$0xff]
      %v2866 = vld [vmem:[#allocation3 + $0x78] sm:$0xff]
      %v2867 = vld [vmem:[#allocation3 + $0x80] sm:$0xff]
      %v2868 = vld [vmem:[#allocation3 + $0x88] sm:$0xff]
      %v2869 = vld [vmem:[#allocation3 + $0x90] sm:$0xff]
      %v2870 = vld [vmem:[#allocation3 + $0x98] sm:$0xff]
      %v2871 = vld [vmem:[#allocation3 + $0xa0] sm:$0xff]
      %v2872 = vld [vmem:[#allocation3 + $0xa8] sm:$0xff]
      %v2873 = vld [vmem:[#allocation3 + $0xb0] sm:$0xff]
      %v2874 = vld [vmem:[#allocation3 + $0xb8] sm:$0xff]
      %v2875 = vld [vmem:[#allocation3 + $0xc0] sm:$0xff]
      %v2876 = vld [vmem:[#allocation3 + $0xc8] sm:$0xff]
      %v2877 = vld [vmem:[#allocation3 + $0xd0] sm:$0xff]
      %v2878 = vld [vmem:[#allocation3 + $0xd8] sm:$0xff]
      %v2879 = vld [vmem:[#allocation3 + $0xe0] sm:$0xff]
      %v2880 = vld [vmem:[#allocation3 + $0xe8] sm:$0xff]
      %v2881 = vld [vmem:[#allocation3 + $0xf0] sm:$0xff]
      %v2882 = vld [vmem:[#allocation3 + $0xf8] sm:$0xff]
      %v2883 = vadd.f32 %v2851, %v2725
      %v2884 = vadd.f32 %v2852, %v2728
      %v2885 = vadd.f32 %v2853, %v2733
      %v2886 = vadd.f32 %v2854, %v2736
      %v2887 = vadd.f32 %v2855, %v2741
      %v2888 = vadd.f32 %v2856, %v2744
      %v2889 = vadd.f32 %v2857, %v2749
      %v2890 = vadd.f32 %v2858, %v2752
      %v2891 = vadd.f32 %v2859, %v2757
      %v2892 = vadd.f32 %v2860, %v2760
      %v2893 = vadd.f32 %v2861, %v2765
      %v2894 = vadd.f32 %v2862, %v2768
      %v2895 = vadd.f32 %v2863, %v2773
      %v2896 = vadd.f32 %v2864, %v2776
      %v2897 = vadd.f32 %v2865, %v2781
      %v2898 = vadd.f32 %v2866, %v2784
      %v2899 = vadd.f32 %v2867, %v2789
      %v2900 = vadd.f32 %v2868, %v2792
      %v2901 = vadd.f32 %v2869, %v2797
      %v2902 = vadd.f32 %v2870, %v2800
      %v2903 = vadd.f32 %v2871, %v2805
      %v2904 = vadd.f32 %v2872, %v2808
      %v2905 = vadd.f32 %v2873, %v2813
      %v2906 = vadd.f32 %v2874, %v2816
      %v2907 = vadd.f32 %v2875, %v2821
      %v2908 = vadd.f32 %v2876, %v2824
      %v2909 = vadd.f32 %v2877, %v2829
      %v2910 = vadd.f32 %v2878, %v2832
      %v2911 = vadd.f32 %v2879, %v2837
      %v2912 = vadd.f32 %v2880, %v2840
      %v2913 = vadd.f32 %v2881, %v2845
      %v2914 = vadd.f32 %v2882, %v2848
      %2915 = vst [vmem:[#allocation3] sm:$0xff] %v2883
      %2916 = vst [vmem:[#allocation3 + $0x8] sm:$0xff] %v2884
      %2917 = vst [vmem:[#allocation3 + $0x10] sm:$0xff] %v2885
      %2918 = vst [vmem:[#allocation3 + $0x18] sm:$0xff] %v2886
      %2919 = vst [vmem:[#allocation3 + $0x20] sm:$0xff] %v2887
      %2920 = vst [vmem:[#allocation3 + $0x28] sm:$0xff] %v2888
      %2921 = vst [vmem:[#allocation3 + $0x30] sm:$0xff] %v2889
      %2922 = vst [vmem:[#allocation3 + $0x38] sm:$0xff] %v2890
      %2923 = vst [vmem:[#allocation3 + $0x40] sm:$0xff] %v2891
      %2924 = vst [vmem:[#allocation3 + $0x48] sm:$0xff] %v2892
      %2925 = vst [vmem:[#allocation3 + $0x50] sm:$0xff] %v2893
      %2926 = vst [vmem:[#allocation3 + $0x58] sm:$0xff] %v2894
      %2927 = vst [vmem:[#allocation3 + $0x60] sm:$0xff] %v2895
      %2928 = vst [vmem:[#allocation3 + $0x68] sm:$0xff] %v2896
      %2929 = vst [vmem:[#allocation3 + $0x70] sm:$0xff] %v2897
      %2930 = vst [vmem:[#allocation3 + $0x78] sm:$0xff] %v2898
      %2931 = vst [vmem:[#allocation3 + $0x80] sm:$0xff] %v2899
      %2932 = vst [vmem:[#allocation3 + $0x88] sm:$0xff] %v2900
      %2933 = vst [vmem:[#allocation3 + $0x90] sm:$0xff] %v2901
      %2934 = vst [vmem:[#allocation3 + $0x98] sm:$0xff] %v2902
      %2935 = vst [vmem:[#allocation3 + $0xa0] sm:$0xff] %v2903
      %2936 = vst [vmem:[#allocation3 + $0xa8] sm:$0xff] %v2904
      %2937 = vst [vmem:[#allocation3 + $0xb0] sm:$0xff] %v2905
      %2938 = vst [vmem:[#allocation3 + $0xb8] sm:$0xff] %v2906
      %2939 = vst [vmem:[#allocation3 + $0xc0] sm:$0xff] %v2907
      %2940 = vst [vmem:[#allocation3 + $0xc8] sm:$0xff] %v2908
      %2941 = vst [vmem:[#allocation3 + $0xd0] sm:$0xff] %v2909
      %2942 = vst [vmem:[#allocation3 + $0xd8] sm:$0xff] %v2910
      %2943 = vst [vmem:[#allocation3 + $0xe0] sm:$0xff] %v2911
      %2944 = vst [vmem:[#allocation3 + $0xe8] sm:$0xff] %v2912
      %2945 = vst [vmem:[#allocation3 + $0xf0] sm:$0xff] %v2913
      %2946 = vst [vmem:[#allocation3 + $0xf8] sm:$0xff] %v2914
      %v2947 = vld [vmem:[%s365] sm:$0xe]
      %v2948 = vld [vmem:[%s365 + $0x4] sm:$0xf]
      %v2949 = vld [vmem:[%s365 + $0x8] sm:$0x1]
      %v2950 = vld [vmem:[%s365 + $0xc] sm:$0xe]
      %v2951 = vld [vmem:[%s365 + $0x10] sm:$0xf]
      %v2952 = vld [vmem:[%s365 + $0x14] sm:$0x1]
      %v2953 = vld [vmem:[%s365 + $0x18] sm:$0xe]
      %v2954 = vld [vmem:[%s365 + $0x1c] sm:$0xf]
      %v2955 = vld [vmem:[%s365 + $0x20] sm:$0x1]
      %v2956 = vld [vmem:[%s365 + $0x24] sm:$0xe]
      %v2957 = vld [vmem:[%s365 + $0x28] sm:$0xf]
      %v2958 = vld [vmem:[%s365 + $0x2c] sm:$0x1]
      %v2959 = vld [vmem:[%s365 + $0x30] sm:$0xe]
      %v2960 = vld [vmem:[%s365 + $0x34] sm:$0xf]
      %v2961 = vld [vmem:[%s365 + $0x38] sm:$0x1]
      %v2962 = vld [vmem:[%s365 + $0x3c] sm:$0xe]
      %v2963 = vld [vmem:[%s365 + $0x40] sm:$0xf]
      %v2964 = vld [vmem:[%s365 + $0x44] sm:$0x1]
      %v2965 = vld [vmem:[%s365 + $0x48] sm:$0xe]
      %v2966 = vld [vmem:[%s365 + $0x4c] sm:$0xf]
      %v2967 = vld [vmem:[%s365 + $0x50] sm:$0x1]
      %v2968 = vld [vmem:[%s365 + $0x54] sm:$0xe]
      %v2969 = vld [vmem:[%s365 + $0x58] sm:$0xf]
      %v2970 = vld [vmem:[%s365 + $0x5c] sm:$0x1]
      %v2971 = vld [vmem:[%s365 + $0x60] sm:$0xe]
      %v2972 = vld [vmem:[%s365 + $0x64] sm:$0xf]
      %v2973 = vld [vmem:[%s365 + $0x68] sm:$0x1]
      %v2974 = vld [vmem:[%s365 + $0x6c] sm:$0xe]
      %v2975 = vld [vmem:[%s365 + $0x70] sm:$0xf]
      %v2976 = vld [vmem:[%s365 + $0x74] sm:$0x1]
      %v2977 = vld [vmem:[%s365 + $0x78] sm:$0xe]
      %v2978 = vld [vmem:[%s365 + $0x7c] sm:$0xf]
      %v2979 = vld [vmem:[%s365 + $0x80] sm:$0x1]
      %v2980 = vld [vmem:[%s365 + $0x84] sm:$0xe]
      %v2981 = vld [vmem:[%s365 + $0x88] sm:$0xf]
      %v2982 = vld [vmem:[%s365 + $0x8c] sm:$0x1]
      %v2983 = vld [vmem:[%s365 + $0x90] sm:$0xe]
      %v2984 = vld [vmem:[%s365 + $0x94] sm:$0xf]
      %v2985 = vld [vmem:[%s365 + $0x98] sm:$0x1]
      %v2986 = vld [vmem:[%s365 + $0x9c] sm:$0xe]
      %v2987 = vld [vmem:[%s365 + $0xa0] sm:$0xf]
      %v2988 = vld [vmem:[%s365 + $0xa4] sm:$0x1]
      %v2989 = vld [vmem:[%s365 + $0xa8] sm:$0xe]
      %v2990 = vld [vmem:[%s365 + $0xac] sm:$0xf]
      %v2991 = vld [vmem:[%s365 + $0xb0] sm:$0x1]
      %v2992 = vld [vmem:[%s365 + $0xb4] sm:$0xe]
      %v2993 = vld [vmem:[%s365 + $0xb8] sm:$0xf]
      %v2994 = vld [vmem:[%s365 + $0xbc] sm:$0x1]
      %v2995 = vld [vmem:[%s365 + $0xc0] sm:$0xe]
      %v2996 = vld [vmem:[%s365 + $0xc4] sm:$0xf]
      %v2997 = vld [vmem:[%s365 + $0xc8] sm:$0x1]
      %v2998 = vld [vmem:[%s365 + $0xcc] sm:$0xe]
      %v2999 = vld [vmem:[%s365 + $0xd0] sm:$0xf]
      %v3000 = vld [vmem:[%s365 + $0xd4] sm:$0x1]
      %vm3055 = vcmask 1042432
      %vm3056 = vcmask 1046532
      %vm3057 = vmor %vm3055, %vm3056
      %v3058 = vrot.slane %v2947, 5
      %v3059 = vrot.slane %v3058, 4
      %v3060 = vrot.slane %v2948, 5
      %v3061 = vsel %vm3057, %v3059, %v3060
      %v3062 = vrot.slane %v3060, 4
      %v3063 = vrot.slane %v2949, 5
      %v3064 = vsel %vm3057, %v3062, %v3063
      %v3065 = vrot.slane %v2950, 5
      %v3066 = vrot.slane %v3065, 4
      %v3067 = vrot.slane %v2951, 5
      %v3068 = vsel %vm3057, %v3066, %v3067
      %v3069 = vrot.slane %v3067, 4
      %v3070 = vrot.slane %v2952, 5
      %v3071 = vsel %vm3057, %v3069, %v3070
      %v3072 = vrot.slane %v2953, 5
      %v3073 = vrot.slane %v3072, 4
      %v3074 = vrot.slane %v2954, 5
      %v3075 = vsel %vm3057, %v3073, %v3074
      %v3076 = vrot.slane %v3074, 4
      %v3077 = vrot.slane %v2955, 5
      %v3078 = vsel %vm3057, %v3076, %v3077
      %v3079 = vrot.slane %v2956, 5
      %v3080 = vrot.slane %v3079, 4
      %v3081 = vrot.slane %v2957, 5
      %v3082 = vsel %vm3057, %v3080, %v3081
      %v3083 = vrot.slane %v3081, 4
      %v3084 = vrot.slane %v2958, 5
      %v3085 = vsel %vm3057, %v3083, %v3084
      %v3086 = vrot.slane %v2959, 5
      %v3087 = vrot.slane %v3086, 4
      %v3088 = vrot.slane %v2960, 5
      %v3089 = vsel %vm3057, %v3087, %v3088
      %v3090 = vrot.slane %v3088, 4
      %v3091 = vrot.slane %v2961, 5
      %v3092 = vsel %vm3057, %v3090, %v3091
      %v3093 = vrot.slane %v2962, 5
      %v3094 = vrot.slane %v3093, 4
      %v3095 = vrot.slane %v2963, 5
      %v3096 = vsel %vm3057, %v3094, %v3095
      %v3097 = vrot.slane %v3095, 4
      %v3098 = vrot.slane %v2964, 5
      %v3099 = vsel %vm3057, %v3097, %v3098
      %v3100 = vrot.slane %v2965, 5
      %v3101 = vrot.slane %v3100, 4
      %v3102 = vrot.slane %v2966, 5
      %v3103 = vsel %vm3057, %v3101, %v3102
      %v3104 = vrot.slane %v3102, 4
      %v3105 = vrot.slane %v2967, 5
      %v3106 = vsel %vm3057, %v3104, %v3105
      %v3107 = vrot.slane %v2968, 5
      %v3108 = vrot.slane %v3107, 4
      %v3109 = vrot.slane %v2969, 5
      %v3110 = vsel %vm3057, %v3108, %v3109
      %v3111 = vrot.slane %v3109, 4
      %v3112 = vrot.slane %v2970, 5
      %v3113 = vsel %vm3057, %v3111, %v3112
      %v3114 = vrot.slane %v2971, 5
      %v3115 = vrot.slane %v3114, 4
      %v3116 = vrot.slane %v2972, 5
      %v3117 = vsel %vm3057, %v3115, %v3116
      %v3118 = vrot.slane %v3116, 4
      %v3119 = vrot.slane %v2973, 5
      %v3120 = vsel %vm3057, %v3118, %v3119
      %v3121 = vrot.slane %v2974, 5
      %v3122 = vrot.slane %v3121, 4
      %v3123 = vrot.slane %v2975, 5
      %v3124 = vsel %vm3057, %v3122, %v3123
      %v3125 = vrot.slane %v3123, 4
      %v3126 = vrot.slane %v2976, 5
      %v3127 = vsel %vm3057, %v3125, %v3126
      %v3128 = vrot.slane %v2977, 5
      %v3129 = vrot.slane %v3128, 4
      %v3130 = vrot.slane %v2978, 5
      %v3131 = vsel %vm3057, %v3129, %v3130
      %v3132 = vrot.slane %v3130, 4
      %v3133 = vrot.slane %v2979, 5
      %v3134 = vsel %vm3057, %v3132, %v3133
      %v3135 = vrot.slane %v2980, 5
      %v3136 = vrot.slane %v3135, 4
      %v3137 = vrot.slane %v2981, 5
      %v3138 = vsel %vm3057, %v3136, %v3137
      %v3139 = vrot.slane %v3137, 4
      %v3140 = vrot.slane %v2982, 5
      %v3141 = vsel %vm3057, %v3139, %v3140
      %v3142 = vrot.slane %v2983, 5
      %v3143 = vrot.slane %v3142, 4
      %v3144 = vrot.slane %v2984, 5
      %v3145 = vsel %vm3057, %v3143, %v3144
      %v3146 = vrot.slane %v3144, 4
      %v3147 = vrot.slane %v2985, 5
      %v3148 = vsel %vm3057, %v3146, %v3147
      %v3149 = vrot.slane %v2986, 5
      %v3150 = vrot.slane %v3149, 4
      %v3151 = vrot.slane %v2987, 5
      %v3152 = vsel %vm3057, %v3150, %v3151
      %v3153 = vrot.slane %v3151, 4
      %v3154 = vrot.slane %v2988, 5
      %v3155 = vsel %vm3057, %v3153, %v3154
      %v3156 = vrot.slane %v2989, 5
      %v3157 = vrot.slane %v3156, 4
      %v3158 = vrot.slane %v2990, 5
      %v3159 = vsel %vm3057, %v3157, %v3158
      %v3160 = vrot.slane %v3158, 4
      %v3161 = vrot.slane %v2991, 5
      %v3162 = vsel %vm3057, %v3160, %v3161
      %v3163 = vrot.slane %v2992, 5
      %v3164 = vrot.slane %v3163, 4
      %v3165 = vrot.slane %v2993, 5
      %v3166 = vsel %vm3057, %v3164, %v3165
      %v3167 = vrot.slane %v3165, 4
      %v3168 = vrot.slane %v2994, 5
      %v3169 = vsel %vm3057, %v3167, %v3168
      %v3170 = vrot.slane %v2995, 5
      %v3171 = vrot.slane %v3170, 4
      %v3172 = vrot.slane %v2996, 5
      %v3173 = vsel %vm3057, %v3171, %v3172
      %v3174 = vrot.slane %v3172, 4
      %v3175 = vrot.slane %v2997, 5
      %v3176 = vsel %vm3057, %v3174, %v3175
      %v3177 = vrot.slane %v2998, 5
      %v3178 = vrot.slane %v3177, 4
      %v3179 = vrot.slane %v2999, 5
      %v3180 = vsel %vm3057, %v3178, %v3179
      %v3181 = vrot.slane %v3179, 4
      %v3182 = vrot.slane %v3000, 5
      %v3183 = vsel %vm3057, %v3181, %v3182
      %s3184 = scalar_lea.vmem %s2, 128
      %v3185 = vld [vmem:[%s3184] sm:$0xf]
      %v3186 = vld [vmem:[%s3184 + $0x4] sm:$0xf]
      %v3187 = vld [vmem:[%s3184 + $0x8] sm:$0xf]
      %v3188 = vld [vmem:[%s3184 + $0xc] sm:$0xf]
      %v3189 = vld [vmem:[%s3184 + $0x10] sm:$0xf]
      %v3190 = vld [vmem:[%s3184 + $0x14] sm:$0xf]
      %v3191 = vld [vmem:[%s3184 + $0x18] sm:$0xf]
      %v3192 = vld [vmem:[%s3184 + $0x1c] sm:$0xf]
      %v3193 = vld [vmem:[%s3184 + $0x20] sm:$0xf]
      %v3194 = vld [vmem:[%s3184 + $0x24] sm:$0xf]
      %v3195 = vld [vmem:[%s3184 + $0x28] sm:$0xf]
      %v3196 = vld [vmem:[%s3184 + $0x2c] sm:$0xf]
      %v3197 = vld [vmem:[%s3184 + $0x30] sm:$0xf]
      %v3198 = vld [vmem:[%s3184 + $0x34] sm:$0xf]
      %v3199 = vld [vmem:[%s3184 + $0x38] sm:$0xf]
      %v3200 = vld [vmem:[%s3184 + $0x3c] sm:$0xf]
      %v3201 = vunpack.c.l.b16 %v3061
      %v3202 = vunpack.c.l.b16 %v3064
      %v3203 = vunpack.c.l.b16 %v3068
      %v3204 = vunpack.c.l.b16 %v3071
      %v3205 = vunpack.c.l.b16 %v3075
      %v3206 = vunpack.c.l.b16 %v3078
      %v3207 = vunpack.c.l.b16 %v3082
      %v3208 = vunpack.c.l.b16 %v3085
      %v3209 = vunpack.c.l.b16 %v3089
      %v3210 = vunpack.c.l.b16 %v3092
      %v3211 = vunpack.c.l.b16 %v3096
      %v3212 = vunpack.c.l.b16 %v3099
      %v3213 = vunpack.c.l.b16 %v3103
      %v3214 = vunpack.c.l.b16 %v3106
      %v3215 = vunpack.c.l.b16 %v3110
      %v3216 = vunpack.c.l.b16 %v3113
      %v3217 = vunpack.c.l.b16 %v3117
      %v3218 = vunpack.c.l.b16 %v3120
      %v3219 = vunpack.c.l.b16 %v3124
      %v3220 = vunpack.c.l.b16 %v3127
      %v3221 = vunpack.c.l.b16 %v3131
      %v3222 = vunpack.c.l.b16 %v3134
      %v3223 = vunpack.c.l.b16 %v3138
      %v3224 = vunpack.c.l.b16 %v3141
      %v3225 = vunpack.c.l.b16 %v3145
      %v3226 = vunpack.c.l.b16 %v3148
      %v3227 = vunpack.c.l.b16 %v3152
      %v3228 = vunpack.c.l.b16 %v3155
      %v3229 = vunpack.c.l.b16 %v3159
      %v3230 = vunpack.c.l.b16 %v3162
      %v3231 = vunpack.c.l.b16 %v3166
      %v3232 = vunpack.c.l.b16 %v3169
      %v3233 = vpack.c.b16 %v3202, %v3201
      %v3234 = vpack.c.b16 %v3204, %v3203
      %v3235 = vpack.c.b16 %v3206, %v3205
      %v3236 = vpack.c.b16 %v3208, %v3207
      %v3237 = vpack.c.b16 %v3210, %v3209
      %v3238 = vpack.c.b16 %v3212, %v3211
      %v3239 = vpack.c.b16 %v3214, %v3213
      %v3240 = vpack.c.b16 %v3216, %v3215
      %v3241 = vpack.c.b16 %v3218, %v3217
      %v3242 = vpack.c.b16 %v3220, %v3219
      %v3243 = vpack.c.b16 %v3222, %v3221
      %v3244 = vpack.c.b16 %v3224, %v3223
      %v3245 = vpack.c.b16 %v3226, %v3225
      %v3246 = vpack.c.b16 %v3228, %v3227
      %v3247 = vpack.c.b16 %v3230, %v3229
      %v3248 = vpack.c.b16 %v3232, %v3231
      %v3281 = vunpack.c.l.b16 %v3185
      %v3282 = vunpack.c.l.b16 %v3186
      %v3283 = vunpack.c.l.b16 %v3187
      %v3284 = vunpack.c.l.b16 %v3188
      %v3285 = vunpack.c.l.b16 %v3189
      %v3286 = vunpack.c.l.b16 %v3190
      %v3287 = vunpack.c.l.b16 %v3191
      %v3288 = vunpack.c.l.b16 %v3192
      %v3289 = vunpack.c.l.b16 %v3193
      %v3290 = vunpack.c.l.b16 %v3194
      %v3291 = vunpack.c.l.b16 %v3195
      %v3292 = vunpack.c.l.b16 %v3196
      %v3293 = vunpack.c.l.b16 %v3197
      %v3294 = vunpack.c.l.b16 %v3198
      %v3295 = vunpack.c.l.b16 %v3199
      %v3296 = vunpack.c.l.b16 %v3200
      %v3297 = vpack.c.b16 %v3282, %v3281
      %v3298 = vpack.c.b16 %v3284, %v3283
      %v3299 = vpack.c.b16 %v3286, %v3285
      %v3300 = vpack.c.b16 %v3288, %v3287
      %v3301 = vpack.c.b16 %v3290, %v3289
      %v3302 = vpack.c.b16 %v3292, %v3291
      %v3303 = vpack.c.b16 %v3294, %v3293
      %v3304 = vpack.c.b16 %v3296, %v3295
      %3313 = vmatprep.subr.bf16.mxu0 0
      %3314 = vmatpush1.bf16.msra.mxu0 %v3304
      %3315 = vmatprep.subr.bf16.mxu0 0
      %3316 = vmatpush1.bf16.msra.mxu0 %v3303
      %3317 = vmatprep.subr.bf16.mxu0 0
      %3318 = vmatpush1.bf16.msra.mxu0 %v3302
      %3319 = vmatprep.subr.bf16.mxu0 0
      %3320 = vmatpush1.bf16.msra.mxu0 %v3301
      %3321 = vmatprep.subr.bf16.mxu0 0
      %3322 = vmatpush1.bf16.msra.mxu0 %v3300
      %3323 = vmatprep.subr.bf16.mxu0 0
      %3324 = vmatpush1.bf16.msra.mxu0 %v3299
      %3325 = vmatprep.subr.bf16.mxu0 0
      %3326 = vmatpush1.bf16.msra.mxu0 %v3298
      %3327 = vmatprep.subr.bf16.mxu0 0
      %3328 = vmatpush1.bf16.msra.mxu0 %v3297
      %3329 = vmatprep.subr.bf16.mxu0 0
      %3330 = vmatpush2.bf16.msra.mxu0 0
      %3331 = vmatprep.subr.bf16.mxu0 0
      %3332 = vmatpush2.bf16.msra.mxu0 0
      %3333 = vmatprep.subr.bf16.mxu0 0
      %3334 = vmatpush2.bf16.msra.mxu0 0
      %3335 = vmatprep.subr.bf16.mxu0 0
      %3336 = vmatpush2.bf16.msra.mxu0 0
      %3337 = vmatprep.subr.bf16.mxu0 0
      %3338 = vmatpush2.bf16.msra.mxu0 0
      %3339 = vmatprep.subr.bf16.mxu0 0
      %3340 = vmatpush2.bf16.msra.mxu0 0
      %3341 = vmatprep.subr.bf16.mxu0 0
      %3342 = vmatpush2.bf16.msra.mxu0 0
      %3343 = vmatprep.subr.bf16.mxu0 0
      %3344 = vmatpush2.bf16.msra.mxu0 0
      %3345 = vmatprep.mubr.bf16.mxu0 0
      %3346 = vmatmul.mubr.bf16.gmra.mxu0 %v3233
      %v3347 = vpop.f32.mrf.mxu0
      %v3348 = vadd.f32 0.0, %v3347
      %v3349 = vpop.f32.mrf.mxu0
      %v3350 = vpop.f32.mrf.mxu0
      %v3351 = vadd.f32 0.0, %v3350
      %v3352 = vpop.f32.mrf.mxu0
      %3353 = vmatprep.mubr.bf16.mxu0 0
      %3354 = vmatmul.mubr.bf16.gmra.mxu0 %v3234
      %v3355 = vpop.f32.mrf.mxu0
      %v3356 = vadd.f32 0.0, %v3355
      %v3357 = vpop.f32.mrf.mxu0
      %v3358 = vpop.f32.mrf.mxu0
      %v3359 = vadd.f32 0.0, %v3358
      %v3360 = vpop.f32.mrf.mxu0
      %3361 = vmatprep.mubr.bf16.mxu0 0
      %3362 = vmatmul.mubr.bf16.gmra.mxu0 %v3235
      %v3363 = vpop.f32.mrf.mxu0
      %v3364 = vadd.f32 0.0, %v3363
      %v3365 = vpop.f32.mrf.mxu0
      %v3366 = vpop.f32.mrf.mxu0
      %v3367 = vadd.f32 0.0, %v3366
      %v3368 = vpop.f32.mrf.mxu0
      %3369 = vmatprep.mubr.bf16.mxu0 0
      %3370 = vmatmul.mubr.bf16.gmra.mxu0 %v3236
      %v3371 = vpop.f32.mrf.mxu0
      %v3372 = vadd.f32 0.0, %v3371
      %v3373 = vpop.f32.mrf.mxu0
      %v3374 = vpop.f32.mrf.mxu0
      %v3375 = vadd.f32 0.0, %v3374
      %v3376 = vpop.f32.mrf.mxu0
      %3377 = vmatprep.mubr.bf16.mxu0 0
      %3378 = vmatmul.mubr.bf16.gmra.mxu0 %v3237
      %v3379 = vpop.f32.mrf.mxu0
      %v3380 = vadd.f32 0.0, %v3379
      %v3381 = vpop.f32.mrf.mxu0
      %v3382 = vpop.f32.mrf.mxu0
      %v3383 = vadd.f32 0.0, %v3382
      %v3384 = vpop.f32.mrf.mxu0
      %3385 = vmatprep.mubr.bf16.mxu0 0
      %3386 = vmatmul.mubr.bf16.gmra.mxu0 %v3238
      %v3387 = vpop.f32.mrf.mxu0
      %v3388 = vadd.f32 0.0, %v3387
      %v3389 = vpop.f32.mrf.mxu0
      %v3390 = vpop.f32.mrf.mxu0
      %v3391 = vadd.f32 0.0, %v3390
      %v3392 = vpop.f32.mrf.mxu0
      %3393 = vmatprep.mubr.bf16.mxu0 0
      %3394 = vmatmul.mubr.bf16.gmra.mxu0 %v3239
      %v3395 = vpop.f32.mrf.mxu0
      %v3396 = vadd.f32 0.0, %v3395
      %v3397 = vpop.f32.mrf.mxu0
      %v3398 = vpop.f32.mrf.mxu0
      %v3399 = vadd.f32 0.0, %v3398
      %v3400 = vpop.f32.mrf.mxu0
      %3401 = vmatprep.mubr.bf16.mxu0 0
      %3402 = vmatmul.mubr.bf16.gmra.mxu0 %v3240
      %v3403 = vpop.f32.mrf.mxu0
      %v3404 = vadd.f32 0.0, %v3403
      %v3405 = vpop.f32.mrf.mxu0
      %v3406 = vpop.f32.mrf.mxu0
      %v3407 = vadd.f32 0.0, %v3406
      %v3408 = vpop.f32.mrf.mxu0
      %3409 = vmatprep.mubr.bf16.mxu0 0
      %3410 = vmatmul.mubr.bf16.gmra.mxu0 %v3241
      %v3411 = vpop.f32.mrf.mxu0
      %v3412 = vadd.f32 0.0, %v3411
      %v3413 = vpop.f32.mrf.mxu0
      %v3414 = vpop.f32.mrf.mxu0
      %v3415 = vadd.f32 0.0, %v3414
      %v3416 = vpop.f32.mrf.mxu0
      %3417 = vmatprep.mubr.bf16.mxu0 0
      %3418 = vmatmul.mubr.bf16.gmra.mxu0 %v3242
      %v3419 = vpop.f32.mrf.mxu0
      %v3420 = vadd.f32 0.0, %v3419
      %v3421 = vpop.f32.mrf.mxu0
      %v3422 = vpop.f32.mrf.mxu0
      %v3423 = vadd.f32 0.0, %v3422
      %v3424 = vpop.f32.mrf.mxu0
      %3425 = vmatprep.mubr.bf16.mxu0 0
      %3426 = vmatmul.mubr.bf16.gmra.mxu0 %v3243
      %v3427 = vpop.f32.mrf.mxu0
      %v3428 = vadd.f32 0.0, %v3427
      %v3429 = vpop.f32.mrf.mxu0
      %v3430 = vpop.f32.mrf.mxu0
      %v3431 = vadd.f32 0.0, %v3430
      %v3432 = vpop.f32.mrf.mxu0
      %3433 = vmatprep.mubr.bf16.mxu0 0
      %3434 = vmatmul.mubr.bf16.gmra.mxu0 %v3244
      %v3435 = vpop.f32.mrf.mxu0
      %v3436 = vadd.f32 0.0, %v3435
      %v3437 = vpop.f32.mrf.mxu0
      %v3438 = vpop.f32.mrf.mxu0
      %v3439 = vadd.f32 0.0, %v3438
      %v3440 = vpop.f32.mrf.mxu0
      %3441 = vmatprep.mubr.bf16.mxu0 0
      %3442 = vmatmul.mubr.bf16.gmra.mxu0 %v3245
      %v3443 = vpop.f32.mrf.mxu0
      %v3444 = vadd.f32 0.0, %v3443
      %v3445 = vpop.f32.mrf.mxu0
      %v3446 = vpop.f32.mrf.mxu0
      %v3447 = vadd.f32 0.0, %v3446
      %v3448 = vpop.f32.mrf.mxu0
      %3449 = vmatprep.mubr.bf16.mxu0 0
      %3450 = vmatmul.mubr.bf16.gmra.mxu0 %v3246
      %v3451 = vpop.f32.mrf.mxu0
      %v3452 = vadd.f32 0.0, %v3451
      %v3453 = vpop.f32.mrf.mxu0
      %v3454 = vpop.f32.mrf.mxu0
      %v3455 = vadd.f32 0.0, %v3454
      %v3456 = vpop.f32.mrf.mxu0
      %3457 = vmatprep.mubr.bf16.mxu0 0
      %3458 = vmatmul.mubr.bf16.gmra.mxu0 %v3247
      %v3459 = vpop.f32.mrf.mxu0
      %v3460 = vadd.f32 0.0, %v3459
      %v3461 = vpop.f32.mrf.mxu0
      %v3462 = vpop.f32.mrf.mxu0
      %v3463 = vadd.f32 0.0, %v3462
      %v3464 = vpop.f32.mrf.mxu0
      %3465 = vmatprep.mubr.bf16.mxu0 0
      %3466 = vmatmul.mubr.bf16.gmra.mxu0 %v3248
      %v3467 = vpop.f32.mrf.mxu0
      %v3468 = vadd.f32 0.0, %v3467
      %v3469 = vpop.f32.mrf.mxu0
      %v3470 = vpop.f32.mrf.mxu0
      %v3471 = vadd.f32 0.0, %v3470
      %v3472 = vpop.f32.mrf.mxu0
      %3473 = vdwg.mxu0
      %v3474 = vld [vmem:[#allocation3] sm:$0xff]
      %v3475 = vld [vmem:[#allocation3 + $0x8] sm:$0xff]
      %v3476 = vld [vmem:[#allocation3 + $0x10] sm:$0xff]
      %v3477 = vld [vmem:[#allocation3 + $0x18] sm:$0xff]
      %v3478 = vld [vmem:[#allocation3 + $0x20] sm:$0xff]
      %v3479 = vld [vmem:[#allocation3 + $0x28] sm:$0xff]
      %v3480 = vld [vmem:[#allocation3 + $0x30] sm:$0xff]
      %v3481 = vld [vmem:[#allocation3 + $0x38] sm:$0xff]
      %v3482 = vld [vmem:[#allocation3 + $0x40] sm:$0xff]
      %v3483 = vld [vmem:[#allocation3 + $0x48] sm:$0xff]
      %v3484 = vld [vmem:[#allocation3 + $0x50] sm:$0xff]
      %v3485 = vld [vmem:[#allocation3 + $0x58] sm:$0xff]
      %v3486 = vld [vmem:[#allocation3 + $0x60] sm:$0xff]
      %v3487 = vld [vmem:[#allocation3 + $0x68] sm:$0xff]
      %v3488 = vld [vmem:[#allocation3 + $0x70] sm:$0xff]
      %v3489 = vld [vmem:[#allocation3 + $0x78] sm:$0xff]
      %v3490 = vld [vmem:[#allocation3 + $0x80] sm:$0xff]
      %v3491 = vld [vmem:[#allocation3 + $0x88] sm:$0xff]
      %v3492 = vld [vmem:[#allocation3 + $0x90] sm:$0xff]
      %v3493 = vld [vmem:[#allocation3 + $0x98] sm:$0xff]
      %v3494 = vld [vmem:[#allocation3 + $0xa0] sm:$0xff]
      %v3495 = vld [vmem:[#allocation3 + $0xa8] sm:$0xff]
      %v3496 = vld [vmem:[#allocation3 + $0xb0] sm:$0xff]
      %v3497 = vld [vmem:[#allocation3 + $0xb8] sm:$0xff]
      %v3498 = vld [vmem:[#allocation3 + $0xc0] sm:$0xff]
      %v3499 = vld [vmem:[#allocation3 + $0xc8] sm:$0xff]
      %v3500 = vld [vmem:[#allocation3 + $0xd0] sm:$0xff]
      %v3501 = vld [vmem:[#allocation3 + $0xd8] sm:$0xff]
      %v3502 = vld [vmem:[#allocation3 + $0xe0] sm:$0xff]
      %v3503 = vld [vmem:[#allocation3 + $0xe8] sm:$0xff]
      %v3504 = vld [vmem:[#allocation3 + $0xf0] sm:$0xff]
      %v3505 = vld [vmem:[#allocation3 + $0xf8] sm:$0xff]
      %v3506 = vadd.f32 %v3474, %v3348
      %v3507 = vadd.f32 %v3475, %v3351
      %v3508 = vadd.f32 %v3476, %v3356
      %v3509 = vadd.f32 %v3477, %v3359
      %v3510 = vadd.f32 %v3478, %v3364
      %v3511 = vadd.f32 %v3479, %v3367
      %v3512 = vadd.f32 %v3480, %v3372
      %v3513 = vadd.f32 %v3481, %v3375
      %v3514 = vadd.f32 %v3482, %v3380
      %v3515 = vadd.f32 %v3483, %v3383
      %v3516 = vadd.f32 %v3484, %v3388
      %v3517 = vadd.f32 %v3485, %v3391
      %v3518 = vadd.f32 %v3486, %v3396
      %v3519 = vadd.f32 %v3487, %v3399
      %v3520 = vadd.f32 %v3488, %v3404
      %v3521 = vadd.f32 %v3489, %v3407
      %v3522 = vadd.f32 %v3490, %v3412
      %v3523 = vadd.f32 %v3491, %v3415
      %v3524 = vadd.f32 %v3492, %v3420
      %v3525 = vadd.f32 %v3493, %v3423
      %v3526 = vadd.f32 %v3494, %v3428
      %v3527 = vadd.f32 %v3495, %v3431
      %v3528 = vadd.f32 %v3496, %v3436
      %v3529 = vadd.f32 %v3497, %v3439
      %v3530 = vadd.f32 %v3498, %v3444
      %v3531 = vadd.f32 %v3499, %v3447
      %v3532 = vadd.f32 %v3500, %v3452
      %v3533 = vadd.f32 %v3501, %v3455
      %v3534 = vadd.f32 %v3502, %v3460
      %v3535 = vadd.f32 %v3503, %v3463
      %v3536 = vadd.f32 %v3504, %v3468
      %v3537 = vadd.f32 %v3505, %v3471
      %3538 = vst [vmem:[#allocation3] sm:$0xff] %v3506
      %3539 = vst [vmem:[#allocation3 + $0x8] sm:$0xff] %v3507
      %3540 = vst [vmem:[#allocation3 + $0x10] sm:$0xff] %v3508
      %3541 = vst [vmem:[#allocation3 + $0x18] sm:$0xff] %v3509
      %3542 = vst [vmem:[#allocation3 + $0x20] sm:$0xff] %v3510
      %3543 = vst [vmem:[#allocation3 + $0x28] sm:$0xff] %v3511
      %3544 = vst [vmem:[#allocation3 + $0x30] sm:$0xff] %v3512
      %3545 = vst [vmem:[#allocation3 + $0x38] sm:$0xff] %v3513
      %3546 = vst [vmem:[#allocation3 + $0x40] sm:$0xff] %v3514
      %3547 = vst [vmem:[#allocation3 + $0x48] sm:$0xff] %v3515
      %3548 = vst [vmem:[#allocation3 + $0x50] sm:$0xff] %v3516
      %3549 = vst [vmem:[#allocation3 + $0x58] sm:$0xff] %v3517
      %3550 = vst [vmem:[#allocation3 + $0x60] sm:$0xff] %v3518
      %3551 = vst [vmem:[#allocation3 + $0x68] sm:$0xff] %v3519
      %3552 = vst [vmem:[#allocation3 + $0x70] sm:$0xff] %v3520
      %3553 = vst [vmem:[#allocation3 + $0x78] sm:$0xff] %v3521
      %3554 = vst [vmem:[#allocation3 + $0x80] sm:$0xff] %v3522
      %3555 = vst [vmem:[#allocation3 + $0x88] sm:$0xff] %v3523
      %3556 = vst [vmem:[#allocation3 + $0x90] sm:$0xff] %v3524
      %3557 = vst [vmem:[#allocation3 + $0x98] sm:$0xff] %v3525
      %3558 = vst [vmem:[#allocation3 + $0xa0] sm:$0xff] %v3526
      %3559 = vst [vmem:[#allocation3 + $0xa8] sm:$0xff] %v3527
      %3560 = vst [vmem:[#allocation3 + $0xb0] sm:$0xff] %v3528
      %3561 = vst [vmem:[#allocation3 + $0xb8] sm:$0xff] %v3529
      %3562 = vst [vmem:[#allocation3 + $0xc0] sm:$0xff] %v3530
      %3563 = vst [vmem:[#allocation3 + $0xc8] sm:$0xff] %v3531
      %3564 = vst [vmem:[#allocation3 + $0xd0] sm:$0xff] %v3532
      %3565 = vst [vmem:[#allocation3 + $0xd8] sm:$0xff] %v3533
      %3566 = vst [vmem:[#allocation3 + $0xe0] sm:$0xff] %v3534
      %3567 = vst [vmem:[#allocation3 + $0xe8] sm:$0xff] %v3535
      %3568 = vst [vmem:[#allocation3 + $0xf0] sm:$0xff] %v3536
      %3569 = vst [vmem:[#allocation3 + $0xf8] sm:$0xff] %v3537
      %s3570 = scalar_lea.vmem %s2, 320
      %v3571 = vld [vmem:[%s3570] sm:$0xf]
      %v3572 = vld [vmem:[%s3570 + $0x4] sm:$0xf]
      %v3573 = vld [vmem:[%s3570 + $0x8] sm:$0xf]
      %v3574 = vld [vmem:[%s3570 + $0xc] sm:$0xf]
      %v3575 = vld [vmem:[%s3570 + $0x10] sm:$0xf]
      %v3576 = vld [vmem:[%s3570 + $0x14] sm:$0xf]
      %v3577 = vld [vmem:[%s3570 + $0x18] sm:$0xf]
      %v3578 = vld [vmem:[%s3570 + $0x1c] sm:$0xf]
      %v3579 = vld [vmem:[%s3570 + $0x20] sm:$0xf]
      %v3580 = vld [vmem:[%s3570 + $0x24] sm:$0xf]
      %v3581 = vld [vmem:[%s3570 + $0x28] sm:$0xf]
      %v3582 = vld [vmem:[%s3570 + $0x2c] sm:$0xf]
      %v3583 = vld [vmem:[%s3570 + $0x30] sm:$0xf]
      %v3584 = vld [vmem:[%s3570 + $0x34] sm:$0xf]
      %v3585 = vld [vmem:[%s3570 + $0x38] sm:$0xf]
      %v3586 = vld [vmem:[%s3570 + $0x3c] sm:$0xf]
      %v3587 = vunpack.c.l.b16 %v3173
      %v3588 = vunpack.c.l.b16 %v3176
      %v3589 = vpack.c.b16 %v3588, %v3587
      %v3607 = vunpack.c.l.b16 %v3571
      %v3608 = vunpack.c.l.b16 %v3572
      %v3609 = vunpack.c.l.b16 %v3573
      %v3610 = vunpack.c.l.b16 %v3574
      %v3611 = vunpack.c.l.b16 %v3575
      %v3612 = vunpack.c.l.b16 %v3576
      %v3613 = vunpack.c.l.b16 %v3577
      %v3614 = vunpack.c.l.b16 %v3578
      %v3615 = vunpack.c.l.b16 %v3579
      %v3616 = vunpack.c.l.b16 %v3580
      %v3617 = vunpack.c.l.b16 %v3581
      %v3618 = vunpack.c.l.b16 %v3582
      %v3619 = vunpack.c.l.b16 %v3583
      %v3620 = vunpack.c.l.b16 %v3584
      %v3621 = vunpack.c.l.b16 %v3585
      %v3622 = vunpack.c.l.b16 %v3586
      %v3623 = vpack.c.b16 %v3608, %v3607
      %v3624 = vpack.c.b16 %v3610, %v3609
      %v3625 = vpack.c.b16 %v3612, %v3611
      %v3626 = vpack.c.b16 %v3614, %v3613
      %v3627 = vpack.c.b16 %v3616, %v3615
      %v3628 = vpack.c.b16 %v3618, %v3617
      %v3629 = vpack.c.b16 %v3620, %v3619
      %v3630 = vpack.c.b16 %v3622, %v3621
      %3639 = vmatprep.subr.bf16.mxu0 0
      %3640 = vmatpush1.bf16.msra.mxu0 %v3630
      %3641 = vmatprep.subr.bf16.mxu0 0
      %3642 = vmatpush1.bf16.msra.mxu0 %v3629
      %3643 = vmatprep.subr.bf16.mxu0 0
      %3644 = vmatpush1.bf16.msra.mxu0 %v3628
      %3645 = vmatprep.subr.bf16.mxu0 0
      %3646 = vmatpush1.bf16.msra.mxu0 %v3627
      %3647 = vmatprep.subr.bf16.mxu0 0
      %3648 = vmatpush1.bf16.msra.mxu0 %v3626
      %3649 = vmatprep.subr.bf16.mxu0 0
      %3650 = vmatpush1.bf16.msra.mxu0 %v3625
      %3651 = vmatprep.subr.bf16.mxu0 0
      %3652 = vmatpush1.bf16.msra.mxu0 %v3624
      %3653 = vmatprep.subr.bf16.mxu0 0
      %3654 = vmatpush1.bf16.msra.mxu0 %v3623
      %3655 = vmatprep.subr.bf16.mxu0 0
      %3656 = vmatpush2.bf16.msra.mxu0 0
      %3657 = vmatprep.subr.bf16.mxu0 0
      %3658 = vmatpush2.bf16.msra.mxu0 0
      %3659 = vmatprep.subr.bf16.mxu0 0
      %3660 = vmatpush2.bf16.msra.mxu0 0
      %3661 = vmatprep.subr.bf16.mxu0 0
      %3662 = vmatpush2.bf16.msra.mxu0 0
      %3663 = vmatprep.subr.bf16.mxu0 0
      %3664 = vmatpush2.bf16.msra.mxu0 0
      %3665 = vmatprep.subr.bf16.mxu0 0
      %3666 = vmatpush2.bf16.msra.mxu0 0
      %3667 = vmatprep.subr.bf16.mxu0 0
      %3668 = vmatpush2.bf16.msra.mxu0 0
      %3669 = vmatprep.subr.bf16.mxu0 0
      %3670 = vmatpush2.bf16.msra.mxu0 0
      %3671 = vmatprep.mubr.bf16.mxu0 0
      %3672 = vmatmul.mubr.bf16.gmra.mxu0 %v3234
      %v3673 = vpop.f32.mrf.mxu0
      %v3674 = vadd.f32 0.0, %v3673
      %v3675 = vpop.f32.mrf.mxu0
      %v3676 = vpop.f32.mrf.mxu0
      %v3677 = vadd.f32 0.0, %v3676
      %v3678 = vpop.f32.mrf.mxu0
      %3679 = vmatprep.mubr.bf16.mxu0 0
      %3680 = vmatmul.mubr.bf16.gmra.mxu0 %v3235
      %v3681 = vpop.f32.mrf.mxu0
      %v3682 = vadd.f32 0.0, %v3681
      %v3683 = vpop.f32.mrf.mxu0
      %v3684 = vpop.f32.mrf.mxu0
      %v3685 = vadd.f32 0.0, %v3684
      %v3686 = vpop.f32.mrf.mxu0
      %3687 = vmatprep.mubr.bf16.mxu0 0
      %3688 = vmatmul.mubr.bf16.gmra.mxu0 %v3236
      %v3689 = vpop.f32.mrf.mxu0
      %v3690 = vadd.f32 0.0, %v3689
      %v3691 = vpop.f32.mrf.mxu0
      %v3692 = vpop.f32.mrf.mxu0
      %v3693 = vadd.f32 0.0, %v3692
      %v3694 = vpop.f32.mrf.mxu0
      %3695 = vmatprep.mubr.bf16.mxu0 0
      %3696 = vmatmul.mubr.bf16.gmra.mxu0 %v3237
      %v3697 = vpop.f32.mrf.mxu0
      %v3698 = vadd.f32 0.0, %v3697
      %v3699 = vpop.f32.mrf.mxu0
      %v3700 = vpop.f32.mrf.mxu0
      %v3701 = vadd.f32 0.0, %v3700
      %v3702 = vpop.f32.mrf.mxu0
      %3703 = vmatprep.mubr.bf16.mxu0 0
      %3704 = vmatmul.mubr.bf16.gmra.mxu0 %v3238
      %v3705 = vpop.f32.mrf.mxu0
      %v3706 = vadd.f32 0.0, %v3705
      %v3707 = vpop.f32.mrf.mxu0
      %v3708 = vpop.f32.mrf.mxu0
      %v3709 = vadd.f32 0.0, %v3708
      %v3710 = vpop.f32.mrf.mxu0
      %3711 = vmatprep.mubr.bf16.mxu0 0
      %3712 = vmatmul.mubr.bf16.gmra.mxu0 %v3239
      %v3713 = vpop.f32.mrf.mxu0
      %v3714 = vadd.f32 0.0, %v3713
      %v3715 = vpop.f32.mrf.mxu0
      %v3716 = vpop.f32.mrf.mxu0
      %v3717 = vadd.f32 0.0, %v3716
      %v3718 = vpop.f32.mrf.mxu0
      %3719 = vmatprep.mubr.bf16.mxu0 0
      %3720 = vmatmul.mubr.bf16.gmra.mxu0 %v3240
      %v3721 = vpop.f32.mrf.mxu0
      %v3722 = vadd.f32 0.0, %v3721
      %v3723 = vpop.f32.mrf.mxu0
      %v3724 = vpop.f32.mrf.mxu0
      %v3725 = vadd.f32 0.0, %v3724
      %v3726 = vpop.f32.mrf.mxu0
      %3727 = vmatprep.mubr.bf16.mxu0 0
      %3728 = vmatmul.mubr.bf16.gmra.mxu0 %v3241
      %v3729 = vpop.f32.mrf.mxu0
      %v3730 = vadd.f32 0.0, %v3729
      %v3731 = vpop.f32.mrf.mxu0
      %v3732 = vpop.f32.mrf.mxu0
      %v3733 = vadd.f32 0.0, %v3732
      %v3734 = vpop.f32.mrf.mxu0
      %3735 = vmatprep.mubr.bf16.mxu0 0
      %3736 = vmatmul.mubr.bf16.gmra.mxu0 %v3242
      %v3737 = vpop.f32.mrf.mxu0
      %v3738 = vadd.f32 0.0, %v3737
      %v3739 = vpop.f32.mrf.mxu0
      %v3740 = vpop.f32.mrf.mxu0
      %v3741 = vadd.f32 0.0, %v3740
      %v3742 = vpop.f32.mrf.mxu0
      %3743 = vmatprep.mubr.bf16.mxu0 0
      %3744 = vmatmul.mubr.bf16.gmra.mxu0 %v3243
      %v3745 = vpop.f32.mrf.mxu0
      %v3746 = vadd.f32 0.0, %v3745
      %v3747 = vpop.f32.mrf.mxu0
      %v3748 = vpop.f32.mrf.mxu0
      %v3749 = vadd.f32 0.0, %v3748
      %v3750 = vpop.f32.mrf.mxu0
      %3751 = vmatprep.mubr.bf16.mxu0 0
      %3752 = vmatmul.mubr.bf16.gmra.mxu0 %v3244
      %v3753 = vpop.f32.mrf.mxu0
      %v3754 = vadd.f32 0.0, %v3753
      %v3755 = vpop.f32.mrf.mxu0
      %v3756 = vpop.f32.mrf.mxu0
      %v3757 = vadd.f32 0.0, %v3756
      %v3758 = vpop.f32.mrf.mxu0
      %3759 = vmatprep.mubr.bf16.mxu0 0
      %3760 = vmatmul.mubr.bf16.gmra.mxu0 %v3245
      %v3761 = vpop.f32.mrf.mxu0
      %v3762 = vadd.f32 0.0, %v3761
      %v3763 = vpop.f32.mrf.mxu0
      %v3764 = vpop.f32.mrf.mxu0
      %v3765 = vadd.f32 0.0, %v3764
      %v3766 = vpop.f32.mrf.mxu0
      %3767 = vmatprep.mubr.bf16.mxu0 0
      %3768 = vmatmul.mubr.bf16.gmra.mxu0 %v3246
      %v3769 = vpop.f32.mrf.mxu0
      %v3770 = vadd.f32 0.0, %v3769
      %v3771 = vpop.f32.mrf.mxu0
      %v3772 = vpop.f32.mrf.mxu0
      %v3773 = vadd.f32 0.0, %v3772
      %v3774 = vpop.f32.mrf.mxu0
      %3775 = vmatprep.mubr.bf16.mxu0 0
      %3776 = vmatmul.mubr.bf16.gmra.mxu0 %v3247
      %v3777 = vpop.f32.mrf.mxu0
      %v3778 = vadd.f32 0.0, %v3777
      %v3779 = vpop.f32.mrf.mxu0
      %v3780 = vpop.f32.mrf.mxu0
      %v3781 = vadd.f32 0.0, %v3780
      %v3782 = vpop.f32.mrf.mxu0
      %3783 = vmatprep.mubr.bf16.mxu0 0
      %3784 = vmatmul.mubr.bf16.gmra.mxu0 %v3248
      %v3785 = vpop.f32.mrf.mxu0
      %v3786 = vadd.f32 0.0, %v3785
      %v3787 = vpop.f32.mrf.mxu0
      %v3788 = vpop.f32.mrf.mxu0
      %v3789 = vadd.f32 0.0, %v3788
      %v3790 = vpop.f32.mrf.mxu0
      %3791 = vmatprep.mubr.bf16.mxu0 0
      %3792 = vmatmul.mubr.bf16.gmra.mxu0 %v3589
      %v3793 = vpop.f32.mrf.mxu0
      %v3794 = vadd.f32 0.0, %v3793
      %v3795 = vpop.f32.mrf.mxu0
      %v3796 = vpop.f32.mrf.mxu0
      %v3797 = vadd.f32 0.0, %v3796
      %v3798 = vpop.f32.mrf.mxu0
      %3799 = vdwg.mxu0
      %v3800 = vld [vmem:[#allocation3] sm:$0xff]
      %v3801 = vld [vmem:[#allocation3 + $0x8] sm:$0xff]
      %v3802 = vld [vmem:[#allocation3 + $0x10] sm:$0xff]
      %v3803 = vld [vmem:[#allocation3 + $0x18] sm:$0xff]
      %v3804 = vld [vmem:[#allocation3 + $0x20] sm:$0xff]
      %v3805 = vld [vmem:[#allocation3 + $0x28] sm:$0xff]
      %v3806 = vld [vmem:[#allocation3 + $0x30] sm:$0xff]
      %v3807 = vld [vmem:[#allocation3 + $0x38] sm:$0xff]
      %v3808 = vld [vmem:[#allocation3 + $0x40] sm:$0xff]
      %v3809 = vld [vmem:[#allocation3 + $0x48] sm:$0xff]
      %v3810 = vld [vmem:[#allocation3 + $0x50] sm:$0xff]
      %v3811 = vld [vmem:[#allocation3 + $0x58] sm:$0xff]
      %v3812 = vld [vmem:[#allocation3 + $0x60] sm:$0xff]
      %v3813 = vld [vmem:[#allocation3 + $0x68] sm:$0xff]
      %v3814 = vld [vmem:[#allocation3 + $0x70] sm:$0xff]
      %v3815 = vld [vmem:[#allocation3 + $0x78] sm:$0xff]
      %v3816 = vld [vmem:[#allocation3 + $0x80] sm:$0xff]
      %v3817 = vld [vmem:[#allocation3 + $0x88] sm:$0xff]
      %v3818 = vld [vmem:[#allocation3 + $0x90] sm:$0xff]
      %v3819 = vld [vmem:[#allocation3 + $0x98] sm:$0xff]
      %v3820 = vld [vmem:[#allocation3 + $0xa0] sm:$0xff]
      %v3821 = vld [vmem:[#allocation3 + $0xa8] sm:$0xff]
      %v3822 = vld [vmem:[#allocation3 + $0xb0] sm:$0xff]
      %v3823 = vld [vmem:[#allocation3 + $0xb8] sm:$0xff]
      %v3824 = vld [vmem:[#allocation3 + $0xc0] sm:$0xff]
      %v3825 = vld [vmem:[#allocation3 + $0xc8] sm:$0xff]
      %v3826 = vld [vmem:[#allocation3 + $0xd0] sm:$0xff]
      %v3827 = vld [vmem:[#allocation3 + $0xd8] sm:$0xff]
      %v3828 = vld [vmem:[#allocation3 + $0xe0] sm:$0xff]
      %v3829 = vld [vmem:[#allocation3 + $0xe8] sm:$0xff]
      %v3830 = vld [vmem:[#allocation3 + $0xf0] sm:$0xff]
      %v3831 = vld [vmem:[#allocation3 + $0xf8] sm:$0xff]
      %v3832 = vadd.f32 %v3800, %v3674
      %v3833 = vadd.f32 %v3801, %v3677
      %v3834 = vadd.f32 %v3802, %v3682
      %v3835 = vadd.f32 %v3803, %v3685
      %v3836 = vadd.f32 %v3804, %v3690
      %v3837 = vadd.f32 %v3805, %v3693
      %v3838 = vadd.f32 %v3806, %v3698
      %v3839 = vadd.f32 %v3807, %v3701
      %v3840 = vadd.f32 %v3808, %v3706
      %v3841 = vadd.f32 %v3809, %v3709
      %v3842 = vadd.f32 %v3810, %v3714
      %v3843 = vadd.f32 %v3811, %v3717
      %v3844 = vadd.f32 %v3812, %v3722
      %v3845 = vadd.f32 %v3813, %v3725
      %v3846 = vadd.f32 %v3814, %v3730
      %v3847 = vadd.f32 %v3815, %v3733
      %v3848 = vadd.f32 %v3816, %v3738
      %v3849 = vadd.f32 %v3817, %v3741
      %v3850 = vadd.f32 %v3818, %v3746
      %v3851 = vadd.f32 %v3819, %v3749
      %v3852 = vadd.f32 %v3820, %v3754
      %v3853 = vadd.f32 %v3821, %v3757
      %v3854 = vadd.f32 %v3822, %v3762
      %v3855 = vadd.f32 %v3823, %v3765
      %v3856 = vadd.f32 %v3824, %v3770
      %v3857 = vadd.f32 %v3825, %v3773
      %v3858 = vadd.f32 %v3826, %v3778
      %v3859 = vadd.f32 %v3827, %v3781
      %v3860 = vadd.f32 %v3828, %v3786
      %v3861 = vadd.f32 %v3829, %v3789
      %v3862 = vadd.f32 %v3830, %v3794
      %v3863 = vadd.f32 %v3831, %v3797
      %3864 = vst [vmem:[#allocation3] sm:$0xff] %v3832
      %3865 = vst [vmem:[#allocation3 + $0x8] sm:$0xff] %v3833
      %3866 = vst [vmem:[#allocation3 + $0x10] sm:$0xff] %v3834
      %3867 = vst [vmem:[#allocation3 + $0x18] sm:$0xff] %v3835
      %3868 = vst [vmem:[#allocation3 + $0x20] sm:$0xff] %v3836
      %3869 = vst [vmem:[#allocation3 + $0x28] sm:$0xff] %v3837
      %3870 = vst [vmem:[#allocation3 + $0x30] sm:$0xff] %v3838
      %3871 = vst [vmem:[#allocation3 + $0x38] sm:$0xff] %v3839
      %3872 = vst [vmem:[#allocation3 + $0x40] sm:$0xff] %v3840
      %3873 = vst [vmem:[#allocation3 + $0x48] sm:$0xff] %v3841
      %3874 = vst [vmem:[#allocation3 + $0x50] sm:$0xff] %v3842
      %3875 = vst [vmem:[#allocation3 + $0x58] sm:$0xff] %v3843
      %3876 = vst [vmem:[#allocation3 + $0x60] sm:$0xff] %v3844
      %3877 = vst [vmem:[#allocation3 + $0x68] sm:$0xff] %v3845
      %3878 = vst [vmem:[#allocation3 + $0x70] sm:$0xff] %v3846
      %3879 = vst [vmem:[#allocation3 + $0x78] sm:$0xff] %v3847
      %3880 = vst [vmem:[#allocation3 + $0x80] sm:$0xff] %v3848
      %3881 = vst [vmem:[#allocation3 + $0x88] sm:$0xff] %v3849
      %3882 = vst [vmem:[#allocation3 + $0x90] sm:$0xff] %v3850
      %3883 = vst [vmem:[#allocation3 + $0x98] sm:$0xff] %v3851
      %3884 = vst [vmem:[#allocation3 + $0xa0] sm:$0xff] %v3852
      %3885 = vst [vmem:[#allocation3 + $0xa8] sm:$0xff] %v3853
      %3886 = vst [vmem:[#allocation3 + $0xb0] sm:$0xff] %v3854
      %3887 = vst [vmem:[#allocation3 + $0xb8] sm:$0xff] %v3855
      %3888 = vst [vmem:[#allocation3 + $0xc0] sm:$0xff] %v3856
      %3889 = vst [vmem:[#allocation3 + $0xc8] sm:$0xff] %v3857
      %3890 = vst [vmem:[#allocation3 + $0xd0] sm:$0xff] %v3858
      %3891 = vst [vmem:[#allocation3 + $0xd8] sm:$0xff] %v3859
      %3892 = vst [vmem:[#allocation3 + $0xe0] sm:$0xff] %v3860
      %3893 = vst [vmem:[#allocation3 + $0xe8] sm:$0xff] %v3861
      %3894 = vst [vmem:[#allocation3 + $0xf0] sm:$0xff] %v3862
      %3895 = vst [vmem:[#allocation3 + $0xf8] sm:$0xff] %v3863
      %s3896 = scalar_lea.vmem %s2, 512
      %v3897 = vld [vmem:[%s3896] sm:$0xf]
      %v3898 = vld [vmem:[%s3896 + $0x4] sm:$0xf]
      %v3899 = vld [vmem:[%s3896 + $0x8] sm:$0xf]
      %v3900 = vld [vmem:[%s3896 + $0xc] sm:$0xf]
      %v3901 = vld [vmem:[%s3896 + $0x10] sm:$0xf]
      %v3902 = vld [vmem:[%s3896 + $0x14] sm:$0xf]
      %v3903 = vld [vmem:[%s3896 + $0x18] sm:$0xf]
      %v3904 = vld [vmem:[%s3896 + $0x1c] sm:$0xf]
      %v3905 = vld [vmem:[%s3896 + $0x20] sm:$0xf]
      %v3906 = vld [vmem:[%s3896 + $0x24] sm:$0xf]
      %v3907 = vld [vmem:[%s3896 + $0x28] sm:$0xf]
      %v3908 = vld [vmem:[%s3896 + $0x2c] sm:$0xf]
      %v3909 = vld [vmem:[%s3896 + $0x30] sm:$0xf]
      %v3910 = vld [vmem:[%s3896 + $0x34] sm:$0xf]
      %v3911 = vld [vmem:[%s3896 + $0x38] sm:$0xf]
      %v3912 = vld [vmem:[%s3896 + $0x3c] sm:$0xf]
      %v3913 = vunpack.c.l.b16 %v3180
      %v3914 = vunpack.c.l.b16 %v3183
      %v3915 = vpack.c.b16 %v3914, %v3913
      %v3933 = vunpack.c.l.b16 %v3897
      %v3934 = vunpack.c.l.b16 %v3898
      %v3935 = vunpack.c.l.b16 %v3899
      %v3936 = vunpack.c.l.b16 %v3900
      %v3937 = vunpack.c.l.b16 %v3901
      %v3938 = vunpack.c.l.b16 %v3902
      %v3939 = vunpack.c.l.b16 %v3903
      %v3940 = vunpack.c.l.b16 %v3904
      %v3941 = vunpack.c.l.b16 %v3905
      %v3942 = vunpack.c.l.b16 %v3906
      %v3943 = vunpack.c.l.b16 %v3907
      %v3944 = vunpack.c.l.b16 %v3908
      %v3945 = vunpack.c.l.b16 %v3909
      %v3946 = vunpack.c.l.b16 %v3910
      %v3947 = vunpack.c.l.b16 %v3911
      %v3948 = vunpack.c.l.b16 %v3912
      %v3949 = vpack.c.b16 %v3934, %v3933
      %v3950 = vpack.c.b16 %v3936, %v3935
      %v3951 = vpack.c.b16 %v3938, %v3937
      %v3952 = vpack.c.b16 %v3940, %v3939
      %v3953 = vpack.c.b16 %v3942, %v3941
      %v3954 = vpack.c.b16 %v3944, %v3943
      %v3955 = vpack.c.b16 %v3946, %v3945
      %v3956 = vpack.c.b16 %v3948, %v3947
      %3965 = vmatprep.subr.bf16.mxu0 0
      %3966 = vmatpush1.bf16.msra.mxu0 %v3956
      %3967 = vmatprep.subr.bf16.mxu0 0
      %3968 = vmatpush1.bf16.msra.mxu0 %v3955
      %3969 = vmatprep.subr.bf16.mxu0 0
      %3970 = vmatpush1.bf16.msra.mxu0 %v3954
      %3971 = vmatprep.subr.bf16.mxu0 0
      %3972 = vmatpush1.bf16.msra.mxu0 %v3953
      %3973 = vmatprep.subr.bf16.mxu0 0
      %3974 = vmatpush1.bf16.msra.mxu0 %v3952
      %3975 = vmatprep.subr.bf16.mxu0 0
      %3976 = vmatpush1.bf16.msra.mxu0 %v3951
      %3977 = vmatprep.subr.bf16.mxu0 0
      %3978 = vmatpush1.bf16.msra.mxu0 %v3950
      %3979 = vmatprep.subr.bf16.mxu0 0
      %3980 = vmatpush1.bf16.msra.mxu0 %v3949
      %3981 = vmatprep.subr.bf16.mxu0 0
      %3982 = vmatpush2.bf16.msra.mxu0 0
      %3983 = vmatprep.subr.bf16.mxu0 0
      %3984 = vmatpush2.bf16.msra.mxu0 0
      %3985 = vmatprep.subr.bf16.mxu0 0
      %3986 = vmatpush2.bf16.msra.mxu0 0
      %3987 = vmatprep.subr.bf16.mxu0 0
      %3988 = vmatpush2.bf16.msra.mxu0 0
      %3989 = vmatprep.subr.bf16.mxu0 0
      %3990 = vmatpush2.bf16.msra.mxu0 0
      %3991 = vmatprep.subr.bf16.mxu0 0
      %3992 = vmatpush2.bf16.msra.mxu0 0
      %3993 = vmatprep.subr.bf16.mxu0 0
      %3994 = vmatpush2.bf16.msra.mxu0 0
      %3995 = vmatprep.subr.bf16.mxu0 0
      %3996 = vmatpush2.bf16.msra.mxu0 0
      %3997 = vmatprep.mubr.bf16.mxu0 0
      %3998 = vmatmul.mubr.bf16.gmra.mxu0 %v3235
      %v3999 = vpop.f32.mrf.mxu0
      %v4000 = vadd.f32 0.0, %v3999
      %v4001 = vpop.f32.mrf.mxu0
      %v4002 = vpop.f32.mrf.mxu0
      %v4003 = vadd.f32 0.0, %v4002
      %v4004 = vpop.f32.mrf.mxu0
      %4005 = vmatprep.mubr.bf16.mxu0 0
      %4006 = vmatmul.mubr.bf16.gmra.mxu0 %v3236
      %v4007 = vpop.f32.mrf.mxu0
      %v4008 = vadd.f32 0.0, %v4007
      %v4009 = vpop.f32.mrf.mxu0
      %v4010 = vpop.f32.mrf.mxu0
      %v4011 = vadd.f32 0.0, %v4010
      %v4012 = vpop.f32.mrf.mxu0
      %4013 = vmatprep.mubr.bf16.mxu0 0
      %4014 = vmatmul.mubr.bf16.gmra.mxu0 %v3237
      %v4015 = vpop.f32.mrf.mxu0
      %v4016 = vadd.f32 0.0, %v4015
      %v4017 = vpop.f32.mrf.mxu0
      %v4018 = vpop.f32.mrf.mxu0
      %v4019 = vadd.f32 0.0, %v4018
      %v4020 = vpop.f32.mrf.mxu0
      %4021 = vmatprep.mubr.bf16.mxu0 0
      %4022 = vmatmul.mubr.bf16.gmra.mxu0 %v3238
      %v4023 = vpop.f32.mrf.mxu0
      %v4024 = vadd.f32 0.0, %v4023
      %v4025 = vpop.f32.mrf.mxu0
      %v4026 = vpop.f32.mrf.mxu0
      %v4027 = vadd.f32 0.0, %v4026
      %v4028 = vpop.f32.mrf.mxu0
      %4029 = vmatprep.mubr.bf16.mxu0 0
      %4030 = vmatmul.mubr.bf16.gmra.mxu0 %v3239
      %v4031 = vpop.f32.mrf.mxu0
      %v4032 = vadd.f32 0.0, %v4031
      %v4033 = vpop.f32.mrf.mxu0
      %v4034 = vpop.f32.mrf.mxu0
      %v4035 = vadd.f32 0.0, %v4034
      %v4036 = vpop.f32.mrf.mxu0
      %4037 = vmatprep.mubr.bf16.mxu0 0
      %4038 = vmatmul.mubr.bf16.gmra.mxu0 %v3240
      %v4039 = vpop.f32.mrf.mxu0
      %v4040 = vadd.f32 0.0, %v4039
      %v4041 = vpop.f32.mrf.mxu0
      %v4042 = vpop.f32.mrf.mxu0
      %v4043 = vadd.f32 0.0, %v4042
      %v4044 = vpop.f32.mrf.mxu0
      %4045 = vmatprep.mubr.bf16.mxu0 0
      %4046 = vmatmul.mubr.bf16.gmra.mxu0 %v3241
      %v4047 = vpop.f32.mrf.mxu0
      %v4048 = vadd.f32 0.0, %v4047
      %v4049 = vpop.f32.mrf.mxu0
      %v4050 = vpop.f32.mrf.mxu0
      %v4051 = vadd.f32 0.0, %v4050
      %v4052 = vpop.f32.mrf.mxu0
      %4053 = vmatprep.mubr.bf16.mxu0 0
      %4054 = vmatmul.mubr.bf16.gmra.mxu0 %v3242
      %v4055 = vpop.f32.mrf.mxu0
      %v4056 = vadd.f32 0.0, %v4055
      %v4057 = vpop.f32.mrf.mxu0
      %v4058 = vpop.f32.mrf.mxu0
      %v4059 = vadd.f32 0.0, %v4058
      %v4060 = vpop.f32.mrf.mxu0
      %4061 = vmatprep.mubr.bf16.mxu0 0
      %4062 = vmatmul.mubr.bf16.gmra.mxu0 %v3243
      %v4063 = vpop.f32.mrf.mxu0
      %v4064 = vadd.f32 0.0, %v4063
      %v4065 = vpop.f32.mrf.mxu0
      %v4066 = vpop.f32.mrf.mxu0
      %v4067 = vadd.f32 0.0, %v4066
      %v4068 = vpop.f32.mrf.mxu0
      %4069 = vmatprep.mubr.bf16.mxu0 0
      %4070 = vmatmul.mubr.bf16.gmra.mxu0 %v3244
      %v4071 = vpop.f32.mrf.mxu0
      %v4072 = vadd.f32 0.0, %v4071
      %v4073 = vpop.f32.mrf.mxu0
      %v4074 = vpop.f32.mrf.mxu0
      %v4075 = vadd.f32 0.0, %v4074
      %v4076 = vpop.f32.mrf.mxu0
      %4077 = vmatprep.mubr.bf16.mxu0 0
      %4078 = vmatmul.mubr.bf16.gmra.mxu0 %v3245
      %v4079 = vpop.f32.mrf.mxu0
      %v4080 = vadd.f32 0.0, %v4079
      %v4081 = vpop.f32.mrf.mxu0
      %v4082 = vpop.f32.mrf.mxu0
      %v4083 = vadd.f32 0.0, %v4082
      %v4084 = vpop.f32.mrf.mxu0
      %4085 = vmatprep.mubr.bf16.mxu0 0
      %4086 = vmatmul.mubr.bf16.gmra.mxu0 %v3246
      %v4087 = vpop.f32.mrf.mxu0
      %v4088 = vadd.f32 0.0, %v4087
      %v4089 = vpop.f32.mrf.mxu0
      %v4090 = vpop.f32.mrf.mxu0
      %v4091 = vadd.f32 0.0, %v4090
      %v4092 = vpop.f32.mrf.mxu0
      %4093 = vmatprep.mubr.bf16.mxu0 0
      %4094 = vmatmul.mubr.bf16.gmra.mxu0 %v3247
      %v4095 = vpop.f32.mrf.mxu0
      %v4096 = vadd.f32 0.0, %v4095
      %v4097 = vpop.f32.mrf.mxu0
      %v4098 = vpop.f32.mrf.mxu0
      %v4099 = vadd.f32 0.0, %v4098
      %v4100 = vpop.f32.mrf.mxu0
      %4101 = vmatprep.mubr.bf16.mxu0 0
      %4102 = vmatmul.mubr.bf16.gmra.mxu0 %v3248
      %v4103 = vpop.f32.mrf.mxu0
      %v4104 = vadd.f32 0.0, %v4103
      %v4105 = vpop.f32.mrf.mxu0
      %v4106 = vpop.f32.mrf.mxu0
      %v4107 = vadd.f32 0.0, %v4106
      %v4108 = vpop.f32.mrf.mxu0
      %4109 = vmatprep.mubr.bf16.mxu0 0
      %4110 = vmatmul.mubr.bf16.gmra.mxu0 %v3589
      %v4111 = vpop.f32.mrf.mxu0
      %v4112 = vadd.f32 0.0, %v4111
      %v4113 = vpop.f32.mrf.mxu0
      %v4114 = vpop.f32.mrf.mxu0
      %v4115 = vadd.f32 0.0, %v4114
      %v4116 = vpop.f32.mrf.mxu0
      %4117 = vmatprep.mubr.bf16.mxu0 0
      %4118 = vmatmul.mubr.bf16.gmra.mxu0 %v3915
      %v4119 = vpop.f32.mrf.mxu0
      %v4120 = vadd.f32 0.0, %v4119
      %v4121 = vpop.f32.mrf.mxu0
      %v4122 = vpop.f32.mrf.mxu0
      %v4123 = vadd.f32 0.0, %v4122
      %v4124 = vpop.f32.mrf.mxu0
      %4125 = vdwg.mxu0
      %v4126 = vld [vmem:[#allocation3] sm:$0xff]
      %v4127 = vld [vmem:[#allocation3 + $0x8] sm:$0xff]
      %v4128 = vld [vmem:[#allocation3 + $0x10] sm:$0xff]
      %v4129 = vld [vmem:[#allocation3 + $0x18] sm:$0xff]
      %v4130 = vld [vmem:[#allocation3 + $0x20] sm:$0xff]
      %v4131 = vld [vmem:[#allocation3 + $0x28] sm:$0xff]
      %v4132 = vld [vmem:[#allocation3 + $0x30] sm:$0xff]
      %v4133 = vld [vmem:[#allocation3 + $0x38] sm:$0xff]
      %v4134 = vld [vmem:[#allocation3 + $0x40] sm:$0xff]
      %v4135 = vld [vmem:[#allocation3 + $0x48] sm:$0xff]
      %v4136 = vld [vmem:[#allocation3 + $0x50] sm:$0xff]
      %v4137 = vld [vmem:[#allocation3 + $0x58] sm:$0xff]
      %v4138 = vld [vmem:[#allocation3 + $0x60] sm:$0xff]
      %v4139 = vld [vmem:[#allocation3 + $0x68] sm:$0xff]
      %v4140 = vld [vmem:[#allocation3 + $0x70] sm:$0xff]
      %v4141 = vld [vmem:[#allocation3 + $0x78] sm:$0xff]
      %v4142 = vld [vmem:[#allocation3 + $0x80] sm:$0xff]
      %v4143 = vld [vmem:[#allocation3 + $0x88] sm:$0xff]
      %v4144 = vld [vmem:[#allocation3 + $0x90] sm:$0xff]
      %v4145 = vld [vmem:[#allocation3 + $0x98] sm:$0xff]
      %v4146 = vld [vmem:[#allocation3 + $0xa0] sm:$0xff]
      %v4147 = vld [vmem:[#allocation3 + $0xa8] sm:$0xff]
      %v4148 = vld [vmem:[#allocation3 + $0xb0] sm:$0xff]
      %v4149 = vld [vmem:[#allocation3 + $0xb8] sm:$0xff]
      %v4150 = vld [vmem:[#allocation3 + $0xc0] sm:$0xff]
      %v4151 = vld [vmem:[#allocation3 + $0xc8] sm:$0xff]
      %v4152 = vld [vmem:[#allocation3 + $0xd0] sm:$0xff]
      %v4153 = vld [vmem:[#allocation3 + $0xd8] sm:$0xff]
      %v4154 = vld [vmem:[#allocation3 + $0xe0] sm:$0xff]
      %v4155 = vld [vmem:[#allocation3 + $0xe8] sm:$0xff]
      %v4156 = vld [vmem:[#allocation3 + $0xf0] sm:$0xff]
      %v4157 = vld [vmem:[#allocation3 + $0xf8] sm:$0xff]
      %v4158 = vadd.f32 %v4126, %v4000
      %v4159 = vadd.f32 %v4127, %v4003
      %v4160 = vadd.f32 %v4128, %v4008
      %v4161 = vadd.f32 %v4129, %v4011
      %v4162 = vadd.f32 %v4130, %v4016
      %v4163 = vadd.f32 %v4131, %v4019
      %v4164 = vadd.f32 %v4132, %v4024
      %v4165 = vadd.f32 %v4133, %v4027
      %v4166 = vadd.f32 %v4134, %v4032
      %v4167 = vadd.f32 %v4135, %v4035
      %v4168 = vadd.f32 %v4136, %v4040
      %v4169 = vadd.f32 %v4137, %v4043
      %v4170 = vadd.f32 %v4138, %v4048
      %v4171 = vadd.f32 %v4139, %v4051
      %v4172 = vadd.f32 %v4140, %v4056
      %v4173 = vadd.f32 %v4141, %v4059
      %v4174 = vadd.f32 %v4142, %v4064
      %v4175 = vadd.f32 %v4143, %v4067
      %v4176 = vadd.f32 %v4144, %v4072
      %v4177 = vadd.f32 %v4145, %v4075
      %v4178 = vadd.f32 %v4146, %v4080
      %v4179 = vadd.f32 %v4147, %v4083
      %v4180 = vadd.f32 %v4148, %v4088
      %v4181 = vadd.f32 %v4149, %v4091
      %v4182 = vadd.f32 %v4150, %v4096
      %v4183 = vadd.f32 %v4151, %v4099
      %v4184 = vadd.f32 %v4152, %v4104
      %v4185 = vadd.f32 %v4153, %v4107
      %v4186 = vadd.f32 %v4154, %v4112
      %v4187 = vadd.f32 %v4155, %v4115
      %v4188 = vadd.f32 %v4156, %v4120
      %v4189 = vadd.f32 %v4157, %v4123
      %4190 = vst [vmem:[#allocation3] sm:$0xff] %v4158
      %4191 = vst [vmem:[#allocation3 + $0x8] sm:$0xff] %v4159
      %4192 = vst [vmem:[#allocation3 + $0x10] sm:$0xff] %v4160
      %4193 = vst [vmem:[#allocation3 + $0x18] sm:$0xff] %v4161
      %4194 = vst [vmem:[#allocation3 + $0x20] sm:$0xff] %v4162
      %4195 = vst [vmem:[#allocation3 + $0x28] sm:$0xff] %v4163
      %4196 = vst [vmem:[#allocation3 + $0x30] sm:$0xff] %v4164
      %4197 = vst [vmem:[#allocation3 + $0x38] sm:$0xff] %v4165
      %4198 = vst [vmem:[#allocation3 + $0x40] sm:$0xff] %v4166
      %4199 = vst [vmem:[#allocation3 + $0x48] sm:$0xff] %v4167
      %4200 = vst [vmem:[#allocation3 + $0x50] sm:$0xff] %v4168
      %4201 = vst [vmem:[#allocation3 + $0x58] sm:$0xff] %v4169
      %4202 = vst [vmem:[#allocation3 + $0x60] sm:$0xff] %v4170
      %4203 = vst [vmem:[#allocation3 + $0x68] sm:$0xff] %v4171
      %4204 = vst [vmem:[#allocation3 + $0x70] sm:$0xff] %v4172
      %4205 = vst [vmem:[#allocation3 + $0x78] sm:$0xff] %v4173
      %4206 = vst [vmem:[#allocation3 + $0x80] sm:$0xff] %v4174
      %4207 = vst [vmem:[#allocation3 + $0x88] sm:$0xff] %v4175
      %4208 = vst [vmem:[#allocation3 + $0x90] sm:$0xff] %v4176
      %4209 = vst [vmem:[#allocation3 + $0x98] sm:$0xff] %v4177
      %4210 = vst [vmem:[#allocation3 + $0xa0] sm:$0xff] %v4178
      %4211 = vst [vmem:[#allocation3 + $0xa8] sm:$0xff] %v4179
      %4212 = vst [vmem:[#allocation3 + $0xb0] sm:$0xff] %v4180
      %4213 = vst [vmem:[#allocation3 + $0xb8] sm:$0xff] %v4181
      %4214 = vst [vmem:[#allocation3 + $0xc0] sm:$0xff] %v4182
      %4215 = vst [vmem:[#allocation3 + $0xc8] sm:$0xff] %v4183
      %4216 = vst [vmem:[#allocation3 + $0xd0] sm:$0xff] %v4184
      %4217 = vst [vmem:[#allocation3 + $0xd8] sm:$0xff] %v4185
      %4218 = vst [vmem:[#allocation3 + $0xe0] sm:$0xff] %v4186
      %4219 = vst [vmem:[#allocation3 + $0xe8] sm:$0xff] %v4187
      %4220 = vst [vmem:[#allocation3 + $0xf0] sm:$0xff] %v4188
      %4221 = vst [vmem:[#allocation3 + $0xf8] sm:$0xff] %v4189
      %v4222 = vld [vmem:[%s3] sm:$0x1]
      %v4223 = vld [vmem:[%s4] sm:$0x1]
      %v4224 = vld [vmem:[%s5] sm:$0x1]
      %v4225 = vld [vmem:[#allocation3] sm:$0xff]
      %v4226 = vld [vmem:[#allocation3 + $0x8] sm:$0xff]
      %v4227 = vld [vmem:[#allocation3 + $0x10] sm:$0xff]
      %v4228 = vld [vmem:[#allocation3 + $0x18] sm:$0xff]
      %v4229 = vld [vmem:[#allocation3 + $0x20] sm:$0xff]
      %v4230 = vld [vmem:[#allocation3 + $0x28] sm:$0xff]
      %v4231 = vld [vmem:[#allocation3 + $0x30] sm:$0xff]
      %v4232 = vld [vmem:[#allocation3 + $0x38] sm:$0xff]
      %v4233 = vld [vmem:[#allocation3 + $0x40] sm:$0xff]
      %v4234 = vld [vmem:[#allocation3 + $0x48] sm:$0xff]
      %v4235 = vld [vmem:[#allocation3 + $0x50] sm:$0xff]
      %v4236 = vld [vmem:[#allocation3 + $0x58] sm:$0xff]
      %v4237 = vld [vmem:[#allocation3 + $0x60] sm:$0xff]
      %v4238 = vld [vmem:[#allocation3 + $0x68] sm:$0xff]
      %v4239 = vld [vmem:[#allocation3 + $0x70] sm:$0xff]
      %v4240 = vld [vmem:[#allocation3 + $0x78] sm:$0xff]
      %v4241 = vld [vmem:[#allocation3 + $0x80] sm:$0xff]
      %v4242 = vld [vmem:[#allocation3 + $0x88] sm:$0xff]
      %v4243 = vld [vmem:[#allocation3 + $0x90] sm:$0xff]
      %v4244 = vld [vmem:[#allocation3 + $0x98] sm:$0xff]
      %v4245 = vld [vmem:[#allocation3 + $0xa0] sm:$0xff]
      %v4246 = vld [vmem:[#allocation3 + $0xa8] sm:$0xff]
      %v4247 = vld [vmem:[#allocation3 + $0xb0] sm:$0xff]
      %v4248 = vld [vmem:[#allocation3 + $0xb8] sm:$0xff]
      %v4249 = vld [vmem:[#allocation3 + $0xc0] sm:$0xff]
      %v4250 = vld [vmem:[#allocation3 + $0xc8] sm:$0xff]
      %v4251 = vld [vmem:[#allocation3 + $0xd0] sm:$0xff]
      %v4252 = vld [vmem:[#allocation3 + $0xd8] sm:$0xff]
      %v4253 = vld [vmem:[#allocation3 + $0xe0] sm:$0xff]
      %v4254 = vld [vmem:[#allocation3 + $0xe8] sm:$0xff]
      %v4255 = vld [vmem:[#allocation3 + $0xf0] sm:$0xff]
      %v4256 = vld [vmem:[#allocation3 + $0xf8] sm:$0xff]
      %v4257 = vadd.f32 %v4225, %v4226
      %v4258 = vadd.f32 %v4257, %v4227
      %v4259 = vadd.f32 %v4258, %v4228
      %v4260 = vadd.f32 %v4259, %v4229
      %v4261 = vadd.f32 %v4260, %v4230
      %v4262 = vadd.f32 %v4261, %v4231
      %v4263 = vadd.f32 %v4262, %v4232
      %v4264 = vadd.f32 %v4263, %v4233
      %v4265 = vadd.f32 %v4264, %v4234
      %v4266 = vadd.f32 %v4265, %v4235
      %v4267 = vadd.f32 %v4266, %v4236
      %v4268 = vadd.f32 %v4267, %v4237
      %v4269 = vadd.f32 %v4268, %v4238
      %v4270 = vadd.f32 %v4269, %v4239
      %v4271 = vadd.f32 %v4270, %v4240
      %v4272 = vadd.f32 %v4271, %v4241
      %v4273 = vadd.f32 %v4272, %v4242
      %v4274 = vadd.f32 %v4273, %v4243
      %v4275 = vadd.f32 %v4274, %v4244
      %v4276 = vadd.f32 %v4275, %v4245
      %v4277 = vadd.f32 %v4276, %v4246
      %v4278 = vadd.f32 %v4277, %v4247
      %v4279 = vadd.f32 %v4278, %v4248
      %v4280 = vadd.f32 %v4279, %v4249
      %v4281 = vadd.f32 %v4280, %v4250
      %v4282 = vadd.f32 %v4281, %v4251
      %v4283 = vadd.f32 %v4282, %v4252
      %v4284 = vadd.f32 %v4283, %v4253
      %v4285 = vadd.f32 %v4284, %v4254
      %v4286 = vadd.f32 %v4285, %v4255
      %v4287 = vadd.f32 %v4286, %v4256
      %v4288 = vrot.slane %v4287, 4
      %v4289 = vadd.f32 %v4287, %v4288
      %v4290 = vrot.slane %v4289, 2
      %v4291 = vadd.f32 %v4289, %v4290
      %v4292 = vrot.slane %v4291, 1
      %v4293 = vadd.f32 %v4291, %v4292
      %v4294 = vmul.f32 %v4225, %v4225
      %v4295 = vmul.f32 %v4226, %v4226
      %v4296 = vmul.f32 %v4227, %v4227
      %v4297 = vmul.f32 %v4228, %v4228
      %v4298 = vmul.f32 %v4229, %v4229
      %v4299 = vmul.f32 %v4230, %v4230
      %v4300 = vmul.f32 %v4231, %v4231
      %v4301 = vmul.f32 %v4232, %v4232
      %v4302 = vmul.f32 %v4233, %v4233
      %v4303 = vmul.f32 %v4234, %v4234
      %v4304 = vmul.f32 %v4235, %v4235
      %v4305 = vmul.f32 %v4236, %v4236
      %v4306 = vmul.f32 %v4237, %v4237
      %v4307 = vmul.f32 %v4238, %v4238
      %v4308 = vmul.f32 %v4239, %v4239
      %v4309 = vmul.f32 %v4240, %v4240
      %v4310 = vmul.f32 %v4241, %v4241
      %v4311 = vmul.f32 %v4242, %v4242
      %v4312 = vmul.f32 %v4243, %v4243
      %v4313 = vmul.f32 %v4244, %v4244
      %v4314 = vmul.f32 %v4245, %v4245
      %v4315 = vmul.f32 %v4246, %v4246
      %v4316 = vmul.f32 %v4247, %v4247
      %v4317 = vmul.f32 %v4248, %v4248
      %v4318 = vmul.f32 %v4249, %v4249
      %v4319 = vmul.f32 %v4250, %v4250
      %v4320 = vmul.f32 %v4251, %v4251
      %v4321 = vmul.f32 %v4252, %v4252
      %v4322 = vmul.f32 %v4253, %v4253
      %v4323 = vmul.f32 %v4254, %v4254
      %v4324 = vmul.f32 %v4255, %v4255
      %v4325 = vmul.f32 %v4256, %v4256
      %v4326 = vadd.f32 %v4294, %v4295
      %v4327 = vadd.f32 %v4326, %v4296
      %v4328 = vadd.f32 %v4327, %v4297
      %v4329 = vadd.f32 %v4328, %v4298
      %v4330 = vadd.f32 %v4329, %v4299
      %v4331 = vadd.f32 %v4330, %v4300
      %v4332 = vadd.f32 %v4331, %v4301
      %v4333 = vadd.f32 %v4332, %v4302
      %v4334 = vadd.f32 %v4333, %v4303
      %v4335 = vadd.f32 %v4334, %v4304
      %v4336 = vadd.f32 %v4335, %v4305
      %v4337 = vadd.f32 %v4336, %v4306
      %v4338 = vadd.f32 %v4337, %v4307
      %v4339 = vadd.f32 %v4338, %v4308
      %v4340 = vadd.f32 %v4339, %v4309
      %v4341 = vadd.f32 %v4340, %v4310
      %v4342 = vadd.f32 %v4341, %v4311
      %v4343 = vadd.f32 %v4342, %v4312
      %v4344 = vadd.f32 %v4343, %v4313
      %v4345 = vadd.f32 %v4344, %v4314
      %v4346 = vadd.f32 %v4345, %v4315
      %v4347 = vadd.f32 %v4346, %v4316
      %v4348 = vadd.f32 %v4347, %v4317
      %v4349 = vadd.f32 %v4348, %v4318
      %v4350 = vadd.f32 %v4349, %v4319
      %v4351 = vadd.f32 %v4350, %v4320
      %v4352 = vadd.f32 %v4351, %v4321
      %v4353 = vadd.f32 %v4352, %v4322
      %v4354 = vadd.f32 %v4353, %v4323
      %v4355 = vadd.f32 %v4354, %v4324
      %v4356 = vadd.f32 %v4355, %v4325
      %v4357 = vrot.slane %v4356, 4
      %v4358 = vadd.f32 %v4356, %v4357
      %v4359 = vrot.slane %v4358, 2
      %v4360 = vadd.f32 %v4358, %v4359
      %v4361 = vrot.slane %v4360, 1
      %v4362 = vadd.f32 %v4360, %v4361
      %v4363 = vmul.f32 %v4222, 256.0
      %v4364 = vadd.f32 %v4293, %v4363
      %v4365 = vmul.f32 %v4222, 2.0
      %v4366 = vmul.f32 %v4365, %v4293
      %v4367 = vadd.f32 %v4362, %v4366
      %v4368 = vmul.f32 %v4363, %v4222
      %v4369 = vadd.f32 %v4367, %v4368
      %vm4370 = vcmask 1040384
      %v4371 = vsel %vm4370, %v4364, 0.0
      %4372 = vadd.xlane.f32.xlu0 %v4371
      %v4373 = vpop.xlane.xlu0 %4372
      %v4374 = vmul.f32 %v4373, 0.00048828125
      %v4375 = vsel %vm4370, %v4369, 0.0
      %4376 = vadd.xlane.f32.xlu0 %v4375
      %v4377 = vpop.xlane.xlu0 %4376
      %v4378 = vmul.f32 %v4377, 0.00048828125
      %v4379 = vmul.f32 %v4374, %v4374
      %v4380 = vsub.f32 %v4378, %v4379
      %v4381 = vmax.f32 %v4380, 0.0
      %v4382 = vadd.f32 %v4381, 1e-05
      %v4383 = vrsqrt.pop %v4382
      %v4384 = vmul.f32 %v4223, %v4383
      %v4385 = vsub.f32 %v4222, %v4374
      %v4386 = vmul.f32 %v4385, %v4384
      %v4387 = vadd.f32 %v4386, %v4224
      %v4389 = vlaneseq
      %v4390 = vshrl.u32 %v4389, 7
      %v4391 = vsub.s32 0, %v4390
      %v4392 = vrot.slane %v4384, %v4391
      %v4394 = vmul.f32 %v4225, %v4392
      %v4395 = vmul.f32 %v4226, %v4392
      %v4396 = vmul.f32 %v4227, %v4392
      %v4397 = vmul.f32 %v4228, %v4392
      %v4398 = vmul.f32 %v4229, %v4392
      %v4399 = vmul.f32 %v4230, %v4392
      %v4400 = vmul.f32 %v4231, %v4392
      %v4401 = vmul.f32 %v4232, %v4392
      %v4402 = vmul.f32 %v4233, %v4392
      %v4403 = vmul.f32 %v4234, %v4392
      %v4404 = vmul.f32 %v4235, %v4392
      %v4405 = vmul.f32 %v4236, %v4392
      %v4406 = vmul.f32 %v4237, %v4392
      %v4407 = vmul.f32 %v4238, %v4392
      %v4408 = vmul.f32 %v4239, %v4392
      %v4409 = vmul.f32 %v4240, %v4392
      %v4410 = vmul.f32 %v4241, %v4392
      %v4411 = vmul.f32 %v4242, %v4392
      %v4412 = vmul.f32 %v4243, %v4392
      %v4413 = vmul.f32 %v4244, %v4392
      %v4414 = vmul.f32 %v4245, %v4392
      %v4415 = vmul.f32 %v4246, %v4392
      %v4416 = vmul.f32 %v4247, %v4392
      %v4417 = vmul.f32 %v4248, %v4392
      %v4418 = vmul.f32 %v4249, %v4392
      %v4419 = vmul.f32 %v4250, %v4392
      %v4420 = vmul.f32 %v4251, %v4392
      %v4421 = vmul.f32 %v4252, %v4392
      %v4422 = vmul.f32 %v4253, %v4392
      %v4423 = vmul.f32 %v4254, %v4392
      %v4424 = vmul.f32 %v4255, %v4392
      %v4425 = vmul.f32 %v4256, %v4392
      %v4427 = vlaneseq
      %v4428 = vshrl.u32 %v4427, 7
      %v4429 = vsub.s32 0, %v4428
      %v4430 = vrot.slane %v4387, %v4429
      %v4432 = vadd.f32 %v4394, %v4430
      %v4433 = vadd.f32 %v4395, %v4430
      %v4434 = vadd.f32 %v4396, %v4430
      %v4435 = vadd.f32 %v4397, %v4430
      %v4436 = vadd.f32 %v4398, %v4430
      %v4437 = vadd.f32 %v4399, %v4430
      %v4438 = vadd.f32 %v4400, %v4430
      %v4439 = vadd.f32 %v4401, %v4430
      %v4440 = vadd.f32 %v4402, %v4430
      %v4441 = vadd.f32 %v4403, %v4430
      %v4442 = vadd.f32 %v4404, %v4430
      %v4443 = vadd.f32 %v4405, %v4430
      %v4444 = vadd.f32 %v4406, %v4430
      %v4445 = vadd.f32 %v4407, %v4430
      %v4446 = vadd.f32 %v4408, %v4430
      %v4447 = vadd.f32 %v4409, %v4430
      %v4448 = vadd.f32 %v4410, %v4430
      %v4449 = vadd.f32 %v4411, %v4430
      %v4450 = vadd.f32 %v4412, %v4430
      %v4451 = vadd.f32 %v4413, %v4430
      %v4452 = vadd.f32 %v4414, %v4430
      %v4453 = vadd.f32 %v4415, %v4430
      %v4454 = vadd.f32 %v4416, %v4430
      %v4455 = vadd.f32 %v4417, %v4430
      %v4456 = vadd.f32 %v4418, %v4430
      %v4457 = vadd.f32 %v4419, %v4430
      %v4458 = vadd.f32 %v4420, %v4430
      %v4459 = vadd.f32 %v4421, %v4430
      %v4460 = vadd.f32 %v4422, %v4430
      %v4461 = vadd.f32 %v4423, %v4430
      %v4462 = vadd.f32 %v4424, %v4430
      %v4463 = vadd.f32 %v4425, %v4430
      %v4464 = vmax.f32 %v4432, 0.0
      %v4465 = vmax.f32 %v4433, 0.0
      %v4466 = vmax.f32 %v4434, 0.0
      %v4467 = vmax.f32 %v4435, 0.0
      %v4468 = vmax.f32 %v4436, 0.0
      %v4469 = vmax.f32 %v4437, 0.0
      %v4470 = vmax.f32 %v4438, 0.0
      %v4471 = vmax.f32 %v4439, 0.0
      %v4472 = vmax.f32 %v4440, 0.0
      %v4473 = vmax.f32 %v4441, 0.0
      %v4474 = vmax.f32 %v4442, 0.0
      %v4475 = vmax.f32 %v4443, 0.0
      %v4476 = vmax.f32 %v4444, 0.0
      %v4477 = vmax.f32 %v4445, 0.0
      %v4478 = vmax.f32 %v4446, 0.0
      %v4479 = vmax.f32 %v4447, 0.0
      %v4480 = vmax.f32 %v4448, 0.0
      %v4481 = vmax.f32 %v4449, 0.0
      %v4482 = vmax.f32 %v4450, 0.0
      %v4483 = vmax.f32 %v4451, 0.0
      %v4484 = vmax.f32 %v4452, 0.0
      %v4485 = vmax.f32 %v4453, 0.0
      %v4486 = vmax.f32 %v4454, 0.0
      %v4487 = vmax.f32 %v4455, 0.0
      %v4488 = vmax.f32 %v4456, 0.0
      %v4489 = vmax.f32 %v4457, 0.0
      %v4490 = vmax.f32 %v4458, 0.0
      %v4491 = vmax.f32 %v4459, 0.0
      %v4492 = vmax.f32 %v4460, 0.0
      %v4493 = vmax.f32 %v4461, 0.0
      %v4494 = vmax.f32 %v4462, 0.0
      %v4495 = vmax.f32 %v4463, 0.0
      %4496 = vst [vmem:[#allocation2] sm:$0xf] 0
      %4497 = vst [vmem:[#allocation2 + $0x4] sm:$0xf] 0
      %4498 = vst [vmem:[#allocation2 + $0x8] sm:$0xf] 0
      %4499 = vst [vmem:[#allocation2 + $0xc] sm:$0xf] 0
      %s4500 = scalar_lea.vmem [#allocation2], 272
      %4501 = vst [vmem:[%s4500] sm:$0xf] 0
      %4502 = vst [vmem:[%s4500 + $0x4] sm:$0xf] 0
      %4503 = vst [vmem:[%s4500 + $0x8] sm:$0xf] 0
      %4504 = vst [vmem:[%s4500 + $0xc] sm:$0xf] 0
      %vm4505 = vcmask 1043459
      %vm4506 = vsmask.f32 7950
      %vm4507 = vmand %vm4505, %vm4506
      %v4508 = vld [vmem:[#allocation2] sm:$0x8]
      %v4509 = vsel %vm4507, 0, %v4508
      %4510 = vst [vmem:[#allocation2] sm:$0x8] %v4509
      %v4511 = vld [vmem:[#allocation2 + $0x10] sm:$0x8]
      %v4512 = vsel %vm4507, 0, %v4511
      %4513 = vst [vmem:[#allocation2 + $0x10] sm:$0x8] %v4512
      %v4514 = vld [vmem:[#allocation2 + $0x20] sm:$0x8]
      %v4515 = vsel %vm4507, 0, %v4514
      %4516 = vst [vmem:[#allocation2 + $0x20] sm:$0x8] %v4515
      %v4517 = vld [vmem:[#allocation2 + $0x30] sm:$0x8]
      %v4518 = vsel %vm4507, 0, %v4517
      %4519 = vst [vmem:[#allocation2 + $0x30] sm:$0x8] %v4518
      %v4520 = vld [vmem:[#allocation2 + $0x40] sm:$0x8]
      %v4521 = vsel %vm4507, 0, %v4520
      %4522 = vst [vmem:[#allocation2 + $0x40] sm:$0x8] %v4521
      %v4523 = vld [vmem:[#allocation2 + $0x50] sm:$0x8]
      %v4524 = vsel %vm4507, 0, %v4523
      %4525 = vst [vmem:[#allocation2 + $0x50] sm:$0x8] %v4524
      %v4526 = vld [vmem:[#allocation2 + $0x60] sm:$0x8]
      %v4527 = vsel %vm4507, 0, %v4526
      %4528 = vst [vmem:[#allocation2 + $0x60] sm:$0x8] %v4527
      %v4529 = vld [vmem:[#allocation2 + $0x70] sm:$0x8]
      %v4530 = vsel %vm4507, 0, %v4529
      %4531 = vst [vmem:[#allocation2 + $0x70] sm:$0x8] %v4530
      %v4532 = vld [vmem:[#allocation2 + $0x80] sm:$0x8]
      %v4533 = vsel %vm4507, 0, %v4532
      %4534 = vst [vmem:[#allocation2 + $0x80] sm:$0x8] %v4533
      %v4535 = vld [vmem:[#allocation2 + $0x90] sm:$0x8]
      %v4536 = vsel %vm4507, 0, %v4535
      %4537 = vst [vmem:[#allocation2 + $0x90] sm:$0x8] %v4536
      %v4538 = vld [vmem:[#allocation2 + $0xa0] sm:$0x8]
      %v4539 = vsel %vm4507, 0, %v4538
      %4540 = vst [vmem:[#allocation2 + $0xa0] sm:$0x8] %v4539
      %v4541 = vld [vmem:[#allocation2 + $0xb0] sm:$0x8]
      %v4542 = vsel %vm4507, 0, %v4541
      %4543 = vst [vmem:[#allocation2 + $0xb0] sm:$0x8] %v4542
      %v4544 = vld [vmem:[#allocation2 + $0xc0] sm:$0x8]
      %v4545 = vsel %vm4507, 0, %v4544
      %4546 = vst [vmem:[#allocation2 + $0xc0] sm:$0x8] %v4545
      %v4547 = vld [vmem:[#allocation2 + $0xd0] sm:$0x8]
      %v4548 = vsel %vm4507, 0, %v4547
      %4549 = vst [vmem:[#allocation2 + $0xd0] sm:$0x8] %v4548
      %v4550 = vld [vmem:[#allocation2 + $0xe0] sm:$0x8]
      %v4551 = vsel %vm4507, 0, %v4550
      %4552 = vst [vmem:[#allocation2 + $0xe0] sm:$0x8] %v4551
      %v4553 = vld [vmem:[#allocation2 + $0xf0] sm:$0x8]
      %v4554 = vsel %vm4507, 0, %v4553
      %4555 = vst [vmem:[#allocation2 + $0xf0] sm:$0x8] %v4554
      %v4556 = vld [vmem:[#allocation2 + $0x100] sm:$0x8]
      %v4557 = vsel %vm4507, 0, %v4556
      %4558 = vst [vmem:[#allocation2 + $0x100] sm:$0x8] %v4557
      %v4559 = vld [vmem:[#allocation2 + $0x110] sm:$0x8]
      %v4560 = vsel %vm4507, 0, %v4559
      %4561 = vst [vmem:[#allocation2 + $0x110] sm:$0x8] %v4560
      %vm4562 = vcmask 1040384
      %vm4563 = vsmask.f32 256
      %vm4564 = vmand %vm4562, %vm4563
      %v4565 = vld [vmem:[#allocation2 + $0xc] sm:$0x1]
      %v4566 = vsel %vm4564, 0, %v4565
      %4567 = vst [vmem:[#allocation2 + $0xc] sm:$0x1] %v4566
      %v4568 = vld [vmem:[#allocation2 + $0x1c] sm:$0x1]
      %v4569 = vsel %vm4564, 0, %v4568
      %4570 = vst [vmem:[#allocation2 + $0x1c] sm:$0x1] %v4569
      %v4571 = vld [vmem:[#allocation2 + $0x2c] sm:$0x1]
      %v4572 = vsel %vm4564, 0, %v4571
      %4573 = vst [vmem:[#allocation2 + $0x2c] sm:$0x1] %v4572
      %v4574 = vld [vmem:[#allocation2 + $0x3c] sm:$0x1]
      %v4575 = vsel %vm4564, 0, %v4574
      %4576 = vst [vmem:[#allocation2 + $0x3c] sm:$0x1] %v4575
      %v4577 = vld [vmem:[#allocation2 + $0x4c] sm:$0x1]
      %v4578 = vsel %vm4564, 0, %v4577
      %4579 = vst [vmem:[#allocation2 + $0x4c] sm:$0x1] %v4578
      %v4580 = vld [vmem:[#allocation2 + $0x5c] sm:$0x1]
      %v4581 = vsel %vm4564, 0, %v4580
      %4582 = vst [vmem:[#allocation2 + $0x5c] sm:$0x1] %v4581
      %v4583 = vld [vmem:[#allocation2 + $0x6c] sm:$0x1]
      %v4584 = vsel %vm4564, 0, %v4583
      %4585 = vst [vmem:[#allocation2 + $0x6c] sm:$0x1] %v4584
      %v4586 = vld [vmem:[#allocation2 + $0x7c] sm:$0x1]
      %v4587 = vsel %vm4564, 0, %v4586
      %4588 = vst [vmem:[#allocation2 + $0x7c] sm:$0x1] %v4587
      %v4589 = vld [vmem:[#allocation2 + $0x8c] sm:$0x1]
      %v4590 = vsel %vm4564, 0, %v4589
      %4591 = vst [vmem:[#allocation2 + $0x8c] sm:$0x1] %v4590
      %v4592 = vld [vmem:[#allocation2 + $0x9c] sm:$0x1]
      %v4593 = vsel %vm4564, 0, %v4592
      %4594 = vst [vmem:[#allocation2 + $0x9c] sm:$0x1] %v4593
      %v4595 = vld [vmem:[#allocation2 + $0xac] sm:$0x1]
      %v4596 = vsel %vm4564, 0, %v4595
      %4597 = vst [vmem:[#allocation2 + $0xac] sm:$0x1] %v4596
      %v4598 = vld [vmem:[#allocation2 + $0xbc] sm:$0x1]
      %v4599 = vsel %vm4564, 0, %v4598
      %4600 = vst [vmem:[#allocation2 + $0xbc] sm:$0x1] %v4599
      %v4601 = vld [vmem:[#allocation2 + $0xcc] sm:$0x1]
      %v4602 = vsel %vm4564, 0, %v4601
      %4603 = vst [vmem:[#allocation2 + $0xcc] sm:$0x1] %v4602
      %v4604 = vld [vmem:[#allocation2 + $0xdc] sm:$0x1]
      %v4605 = vsel %vm4564, 0, %v4604
      %4606 = vst [vmem:[#allocation2 + $0xdc] sm:$0x1] %v4605
      %v4607 = vld [vmem:[#allocation2 + $0xec] sm:$0x1]
      %v4608 = vsel %vm4564, 0, %v4607
      %4609 = vst [vmem:[#allocation2 + $0xec] sm:$0x1] %v4608
      %v4610 = vld [vmem:[#allocation2 + $0xfc] sm:$0x1]
      %v4611 = vsel %vm4564, 0, %v4610
      %4612 = vst [vmem:[#allocation2 + $0xfc] sm:$0x1] %v4611
      %v4613 = vld [vmem:[#allocation2 + $0x10c] sm:$0x1]
      %v4614 = vsel %vm4564, 0, %v4613
      %4615 = vst [vmem:[#allocation2 + $0x10c] sm:$0x1] %v4614
      %v4616 = vld [vmem:[#allocation2 + $0x11c] sm:$0x1]
      %v4617 = vsel %vm4564, 0, %v4616
      %4618 = vst [vmem:[#allocation2 + $0x11c] sm:$0x1] %v4617
      %v4619 = vpack.c.bf16 %v4465, %v4464
      %v4620 = vpack.c.bf16 %v4467, %v4466
      %v4621 = vpack.c.bf16 %v4469, %v4468
      %v4622 = vpack.c.bf16 %v4471, %v4470
      %v4623 = vpack.c.bf16 %v4473, %v4472
      %v4624 = vpack.c.bf16 %v4475, %v4474
      %v4625 = vpack.c.bf16 %v4477, %v4476
      %v4626 = vpack.c.bf16 %v4479, %v4478
      %v4627 = vpack.c.bf16 %v4481, %v4480
      %v4628 = vpack.c.bf16 %v4483, %v4482
      %v4629 = vpack.c.bf16 %v4485, %v4484
      %v4630 = vpack.c.bf16 %v4487, %v4486
      %v4631 = vpack.c.bf16 %v4489, %v4488
      %v4632 = vpack.c.bf16 %v4491, %v4490
      %v4633 = vpack.c.bf16 %v4493, %v4492
      %v4634 = vpack.c.bf16 %v4495, %v4494
      %v4651 = vunpack.c.l.b16 %v4619
      %v4652 = vunpack.c.h.b16 %v4619
      %v4653 = vunpack.c.l.b16 %v4620
      %v4654 = vunpack.c.h.b16 %v4620
      %v4655 = vunpack.c.l.b16 %v4621
      %v4656 = vunpack.c.h.b16 %v4621
      %v4657 = vunpack.c.l.b16 %v4622
      %v4658 = vunpack.c.h.b16 %v4622
      %v4659 = vunpack.c.l.b16 %v4623
      %v4660 = vunpack.c.h.b16 %v4623
      %v4661 = vunpack.c.l.b16 %v4624
      %v4662 = vunpack.c.h.b16 %v4624
      %v4663 = vunpack.c.l.b16 %v4625
      %v4664 = vunpack.c.h.b16 %v4625
      %v4665 = vunpack.c.l.b16 %v4626
      %v4666 = vunpack.c.h.b16 %v4626
      %v4667 = vunpack.c.l.b16 %v4627
      %v4668 = vunpack.c.h.b16 %v4627
      %v4669 = vunpack.c.l.b16 %v4628
      %v4670 = vunpack.c.h.b16 %v4628
      %v4671 = vunpack.c.l.b16 %v4629
      %v4672 = vunpack.c.h.b16 %v4629
      %v4673 = vunpack.c.l.b16 %v4630
      %v4674 = vunpack.c.h.b16 %v4630
      %v4675 = vunpack.c.l.b16 %v4631
      %v4676 = vunpack.c.h.b16 %v4631
      %v4677 = vunpack.c.l.b16 %v4632
      %v4678 = vunpack.c.h.b16 %v4632
      %v4679 = vunpack.c.l.b16 %v4633
      %v4680 = vunpack.c.h.b16 %v4633
      %v4681 = vunpack.c.l.b16 %v4634
      %v4682 = vunpack.c.h.b16 %v4634
      %v4683 = vpack.c.b16 %v4651, %v4651
      %v4684 = vpack.c.b16 %v4652, %v4652
      %v4685 = vpack.c.b16 %v4653, %v4653
      %v4686 = vpack.c.b16 %v4654, %v4654
      %v4687 = vpack.c.b16 %v4655, %v4655
      %v4688 = vpack.c.b16 %v4656, %v4656
      %v4689 = vpack.c.b16 %v4657, %v4657
      %v4690 = vpack.c.b16 %v4658, %v4658
      %v4691 = vpack.c.b16 %v4659, %v4659
      %v4692 = vpack.c.b16 %v4660, %v4660
      %v4693 = vpack.c.b16 %v4661, %v4661
      %v4694 = vpack.c.b16 %v4662, %v4662
      %v4695 = vpack.c.b16 %v4663, %v4663
      %v4696 = vpack.c.b16 %v4664, %v4664
      %v4697 = vpack.c.b16 %v4665, %v4665
      %v4698 = vpack.c.b16 %v4666, %v4666
      %v4699 = vpack.c.b16 %v4667, %v4667
      %v4700 = vpack.c.b16 %v4668, %v4668
      %v4701 = vpack.c.b16 %v4669, %v4669
      %v4702 = vpack.c.b16 %v4670, %v4670
      %v4703 = vpack.c.b16 %v4671, %v4671
      %v4704 = vpack.c.b16 %v4672, %v4672
      %v4705 = vpack.c.b16 %v4673, %v4673
      %v4706 = vpack.c.b16 %v4674, %v4674
      %v4707 = vpack.c.b16 %v4675, %v4675
      %v4708 = vpack.c.b16 %v4676, %v4676
      %v4709 = vpack.c.b16 %v4677, %v4677
      %v4710 = vpack.c.b16 %v4678, %v4678
      %v4711 = vpack.c.b16 %v4679, %v4679
      %v4712 = vpack.c.b16 %v4680, %v4680
      %v4713 = vpack.c.b16 %v4681, %v4681
      %v4714 = vpack.c.b16 %v4682, %v4682
      %s4747 = scalar_lea.vmem [#allocation2], 16
      %4748 = vst [vmem:[%s4747 + $0x4] sm:$0xf] %v4683
      %4749 = vst [vmem:[%s4747 + $0x8] sm:$0xf] %v4684
      %4750 = vst [vmem:[%s4747 + $0x14] sm:$0xf] %v4685
      %4751 = vst [vmem:[%s4747 + $0x18] sm:$0xf] %v4686
      %4752 = vst [vmem:[%s4747 + $0x24] sm:$0xf] %v4687
      %4753 = vst [vmem:[%s4747 + $0x28] sm:$0xf] %v4688
      %4754 = vst [vmem:[%s4747 + $0x34] sm:$0xf] %v4689
      %4755 = vst [vmem:[%s4747 + $0x38] sm:$0xf] %v4690
      %4756 = vst [vmem:[%s4747 + $0x44] sm:$0xf] %v4691
      %4757 = vst [vmem:[%s4747 + $0x48] sm:$0xf] %v4692
      %4758 = vst [vmem:[%s4747 + $0x54] sm:$0xf] %v4693
      %4759 = vst [vmem:[%s4747 + $0x58] sm:$0xf] %v4694
      %4760 = vst [vmem:[%s4747 + $0x64] sm:$0xf] %v4695
      %4761 = vst [vmem:[%s4747 + $0x68] sm:$0xf] %v4696
      %4762 = vst [vmem:[%s4747 + $0x74] sm:$0xf] %v4697
      %4763 = vst [vmem:[%s4747 + $0x78] sm:$0xf] %v4698
      %4764 = vst [vmem:[%s4747 + $0x84] sm:$0xf] %v4699
      %4765 = vst [vmem:[%s4747 + $0x88] sm:$0xf] %v4700
      %4766 = vst [vmem:[%s4747 + $0x94] sm:$0xf] %v4701
      %4767 = vst [vmem:[%s4747 + $0x98] sm:$0xf] %v4702
      %4768 = vst [vmem:[%s4747 + $0xa4] sm:$0xf] %v4703
      %4769 = vst [vmem:[%s4747 + $0xa8] sm:$0xf] %v4704
      %4770 = vst [vmem:[%s4747 + $0xb4] sm:$0xf] %v4705
      %4771 = vst [vmem:[%s4747 + $0xb8] sm:$0xf] %v4706
      %4772 = vst [vmem:[%s4747 + $0xc4] sm:$0xf] %v4707
      %4773 = vst [vmem:[%s4747 + $0xc8] sm:$0xf] %v4708
      %4774 = vst [vmem:[%s4747 + $0xd4] sm:$0xf] %v4709
      %4775 = vst [vmem:[%s4747 + $0xd8] sm:$0xf] %v4710
      %4776 = vst [vmem:[%s4747 + $0xe4] sm:$0xf] %v4711
      %4777 = vst [vmem:[%s4747 + $0xe8] sm:$0xf] %v4712
      %4778 = vst [vmem:[%s4747 + $0xf4] sm:$0xf] %v4713
      %4779 = vst [vmem:[%s4747 + $0xf8] sm:$0xf] %v4714
      %v4780 = vld [vmem:[#allocation2] sm:$0x8]
      %v4781 = vld [vmem:[#allocation2 + $0x4] sm:$0xf]
      %v4782 = vld [vmem:[#allocation2 + $0x8] sm:$0xf]
      %v4783 = vld [vmem:[#allocation2 + $0x10] sm:$0x8]
      %v4784 = vld [vmem:[#allocation2 + $0x14] sm:$0xf]
      %v4785 = vld [vmem:[#allocation2 + $0x18] sm:$0xf]
      %v4786 = vld [vmem:[#allocation2 + $0x20] sm:$0x8]
      %v4787 = vld [vmem:[#allocation2 + $0x24] sm:$0xf]
      %v4788 = vld [vmem:[#allocation2 + $0x28] sm:$0xf]
      %v4789 = vld [vmem:[#allocation2 + $0x30] sm:$0x8]
      %v4790 = vld [vmem:[#allocation2 + $0x34] sm:$0xf]
      %v4791 = vld [vmem:[#allocation2 + $0x38] sm:$0xf]
      %v4792 = vld [vmem:[#allocation2 + $0x40] sm:$0x8]
      %v4793 = vld [vmem:[#allocation2 + $0x44] sm:$0xf]
      %v4794 = vld [vmem:[#allocation2 + $0x48] sm:$0xf]
      %v4795 = vld [vmem:[#allocation2 + $0x50] sm:$0x8]
      %v4796 = vld [vmem:[#allocation2 + $0x54] sm:$0xf]
      %v4797 = vld [vmem:[#allocation2 + $0x58] sm:$0xf]
      %v4798 = vld [vmem:[#allocation2 + $0x60] sm:$0x8]
      %v4799 = vld [vmem:[#allocation2 + $0x64] sm:$0xf]
      %v4800 = vld [vmem:[#allocation2 + $0x68] sm:$0xf]
      %v4801 = vld [vmem:[#allocation2 + $0x70] sm:$0x8]
      %v4802 = vld [vmem:[#allocation2 + $0x74] sm:$0xf]
      %v4803 = vld [vmem:[#allocation2 + $0x78] sm:$0xf]
      %v4804 = vld [vmem:[#allocation2 + $0x80] sm:$0x8]
      %v4805 = vld [vmem:[#allocation2 + $0x84] sm:$0xf]
      %v4806 = vld [vmem:[#allocation2 + $0x88] sm:$0xf]
      %v4807 = vld [vmem:[#allocation2 + $0x90] sm:$0x8]
      %v4808 = vld [vmem:[#allocation2 + $0x94] sm:$0xf]
      %v4809 = vld [vmem:[#allocation2 + $0x98] sm:$0xf]
      %v4810 = vld [vmem:[#allocation2 + $0xa0] sm:$0x8]
      %v4811 = vld [vmem:[#allocation2 + $0xa4] sm:$0xf]
      %v4812 = vld [vmem:[#allocation2 + $0xa8] sm:$0xf]
      %v4813 = vld [vmem:[#allocation2 + $0xb0] sm:$0x8]
      %v4814 = vld [vmem:[#allocation2 + $0xb4] sm:$0xf]
      %v4815 = vld [vmem:[#allocation2 + $0xb8] sm:$0xf]
      %v4816 = vld [vmem:[#allocation2 + $0xc0] sm:$0x8]
      %v4817 = vld [vmem:[#allocation2 + $0xc4] sm:$0xf]
      %v4818 = vld [vmem:[#allocation2 + $0xc8] sm:$0xf]
      %v4819 = vld [vmem:[#allocation2 + $0xd0] sm:$0x8]
      %v4820 = vld [vmem:[#allocation2 + $0xd4] sm:$0xf]
      %v4821 = vld [vmem:[#allocation2 + $0xd8] sm:$0xf]
      %v4822 = vld [vmem:[#allocation2 + $0xe0] sm:$0x8]
      %v4823 = vld [vmem:[#allocation2 + $0xe4] sm:$0xf]
      %v4824 = vld [vmem:[#allocation2 + $0xe8] sm:$0xf]
      %v4825 = vld [vmem:[#allocation2 + $0xf0] sm:$0x8]
      %v4826 = vld [vmem:[#allocation2 + $0xf4] sm:$0xf]
      %v4827 = vld [vmem:[#allocation2 + $0xf8] sm:$0xf]
      %v4828 = vld [vmem:[#allocation2 + $0x100] sm:$0x8]
      %v4829 = vld [vmem:[#allocation2 + $0x104] sm:$0xf]
      %v4830 = vld [vmem:[#allocation2 + $0x108] sm:$0xf]
      %v4831 = vld [vmem:[#allocation2 + $0x110] sm:$0x8]
      %v4832 = vld [vmem:[#allocation2 + $0x114] sm:$0xf]
      %v4833 = vld [vmem:[#allocation2 + $0x118] sm:$0xf]
      %vm4834 = vsmask.f32 4368
      %vm4835 = vmor %vm4563, %vm4834
      %v4837 = vshrl.u32 %v4780, 16
      %v4839 = vrot.slane %v4837, 7
      %v4840 = vrot.slane %v4839, 4
      %v4842 = vshrl.u32 %v4781, 16
      %v4844 = vrot.slane %v4842, 7
      %v4845 = vshll.u32 %v4781, 16
      %v4847 = vor.u32 %v4844, %v4845
      %v4848 = vsel %vm4835, %v4840, %v4847
      %v4849 = vrot.slane %v4844, 4
      %v4851 = vshrl.u32 %v4782, 16
      %v4853 = vrot.slane %v4851, 7
      %v4854 = vshll.u32 %v4782, 16
      %v4856 = vor.u32 %v4853, %v4854
      %v4857 = vsel %vm4835, %v4849, %v4856
      %v4859 = vshrl.u32 %v4783, 16
      %v4861 = vrot.slane %v4859, 7
      %v4862 = vrot.slane %v4861, 4
      %v4864 = vshrl.u32 %v4784, 16
      %v4866 = vrot.slane %v4864, 7
      %v4867 = vshll.u32 %v4784, 16
      %v4869 = vor.u32 %v4866, %v4867
      %v4870 = vsel %vm4835, %v4862, %v4869
      %v4871 = vrot.slane %v4866, 4
      %v4873 = vshrl.u32 %v4785, 16
      %v4875 = vrot.slane %v4873, 7
      %v4876 = vshll.u32 %v4785, 16
      %v4878 = vor.u32 %v4875, %v4876
      %v4879 = vsel %vm4835, %v4871, %v4878
      %v4881 = vshrl.u32 %v4786, 16
      %v4883 = vrot.slane %v4881, 7
      %v4884 = vrot.slane %v4883, 4
      %v4886 = vshrl.u32 %v4787, 16
      %v4888 = vrot.slane %v4886, 7
      %v4889 = vshll.u32 %v4787, 16
      %v4891 = vor.u32 %v4888, %v4889
      %v4892 = vsel %vm4835, %v4884, %v4891
      %v4893 = vrot.slane %v4888, 4
      %v4895 = vshrl.u32 %v4788, 16
      %v4897 = vrot.slane %v4895, 7
      %v4898 = vshll.u32 %v4788, 16
      %v4900 = vor.u32 %v4897, %v4898
      %v4901 = vsel %vm4835, %v4893, %v4900
      %v4903 = vshrl.u32 %v4789, 16
      %v4905 = vrot.slane %v4903, 7
      %v4906 = vrot.slane %v4905, 4
      %v4908 = vshrl.u32 %v4790, 16
      %v4910 = vrot.slane %v4908, 7
      %v4911 = vshll.u32 %v4790, 16
      %v4913 = vor.u32 %v4910, %v4911
      %v4914 = vsel %vm4835, %v4906, %v4913
      %v4915 = vrot.slane %v4910, 4
      %v4917 = vshrl.u32 %v4791, 16
      %v4919 = vrot.slane %v4917, 7
      %v4920 = vshll.u32 %v4791, 16
      %v4922 = vor.u32 %v4919, %v4920
      %v4923 = vsel %vm4835, %v4915, %v4922
      %v4925 = vshrl.u32 %v4792, 16
      %v4927 = vrot.slane %v4925, 7
      %v4928 = vrot.slane %v4927, 4
      %v4930 = vshrl.u32 %v4793, 16
      %v4932 = vrot.slane %v4930, 7
      %v4933 = vshll.u32 %v4793, 16
      %v4935 = vor.u32 %v4932, %v4933
      %v4936 = vsel %vm4835, %v4928, %v4935
      %v4937 = vrot.slane %v4932, 4
      %v4939 = vshrl.u32 %v4794, 16
      %v4941 = vrot.slane %v4939, 7
      %v4942 = vshll.u32 %v4794, 16
      %v4944 = vor.u32 %v4941, %v4942
      %v4945 = vsel %vm4835, %v4937, %v4944
      %v4947 = vshrl.u32 %v4795, 16
      %v4949 = vrot.slane %v4947, 7
      %v4950 = vrot.slane %v4949, 4
      %v4952 = vshrl.u32 %v4796, 16
      %v4954 = vrot.slane %v4952, 7
      %v4955 = vshll.u32 %v4796, 16
      %v4957 = vor.u32 %v4954, %v4955
      %v4958 = vsel %vm4835, %v4950, %v4957
      %v4959 = vrot.slane %v4954, 4
      %v4961 = vshrl.u32 %v4797, 16
      %v4963 = vrot.slane %v4961, 7
      %v4964 = vshll.u32 %v4797, 16
      %v4966 = vor.u32 %v4963, %v4964
      %v4967 = vsel %vm4835, %v4959, %v4966
      %v4969 = vshrl.u32 %v4798, 16
      %v4971 = vrot.slane %v4969, 7
      %v4972 = vrot.slane %v4971, 4
      %v4974 = vshrl.u32 %v4799, 16
      %v4976 = vrot.slane %v4974, 7
      %v4977 = vshll.u32 %v4799, 16
      %v4979 = vor.u32 %v4976, %v4977
      %v4980 = vsel %vm4835, %v4972, %v4979
      %v4981 = vrot.slane %v4976, 4
      %v4983 = vshrl.u32 %v4800, 16
      %v4985 = vrot.slane %v4983, 7
      %v4986 = vshll.u32 %v4800, 16
      %v4988 = vor.u32 %v4985, %v4986
      %v4989 = vsel %vm4835, %v4981, %v4988
      %v4991 = vshrl.u32 %v4801, 16
      %v4993 = vrot.slane %v4991, 7
      %v4994 = vrot.slane %v4993, 4
      %v4996 = vshrl.u32 %v4802, 16
      %v4998 = vrot.slane %v4996, 7
      %v4999 = vshll.u32 %v4802, 16
      %v5001 = vor.u32 %v4998, %v4999
      %v5002 = vsel %vm4835, %v4994, %v5001
      %v5003 = vrot.slane %v4998, 4
      %v5005 = vshrl.u32 %v4803, 16
      %v5007 = vrot.slane %v5005, 7
      %v5008 = vshll.u32 %v4803, 16
      %v5010 = vor.u32 %v5007, %v5008
      %v5011 = vsel %vm4835, %v5003, %v5010
      %v5013 = vshrl.u32 %v4804, 16
      %v5015 = vrot.slane %v5013, 7
      %v5016 = vrot.slane %v5015, 4
      %v5018 = vshrl.u32 %v4805, 16
      %v5020 = vrot.slane %v5018, 7
      %v5021 = vshll.u32 %v4805, 16
      %v5023 = vor.u32 %v5020, %v5021
      %v5024 = vsel %vm4835, %v5016, %v5023
      %v5025 = vrot.slane %v5020, 4
      %v5027 = vshrl.u32 %v4806, 16
      %v5029 = vrot.slane %v5027, 7
      %v5030 = vshll.u32 %v4806, 16
      %v5032 = vor.u32 %v5029, %v5030
      %v5033 = vsel %vm4835, %v5025, %v5032
      %v5035 = vshrl.u32 %v4807, 16
      %v5037 = vrot.slane %v5035, 7
      %v5038 = vrot.slane %v5037, 4
      %v5040 = vshrl.u32 %v4808, 16
      %v5042 = vrot.slane %v5040, 7
      %v5043 = vshll.u32 %v4808, 16
      %v5045 = vor.u32 %v5042, %v5043
      %v5046 = vsel %vm4835, %v5038, %v5045
      %v5047 = vrot.slane %v5042, 4
      %v5049 = vshrl.u32 %v4809, 16
      %v5051 = vrot.slane %v5049, 7
      %v5052 = vshll.u32 %v4809, 16
      %v5054 = vor.u32 %v5051, %v5052
      %v5055 = vsel %vm4835, %v5047, %v5054
      %v5057 = vshrl.u32 %v4810, 16
      %v5059 = vrot.slane %v5057, 7
      %v5060 = vrot.slane %v5059, 4
      %v5062 = vshrl.u32 %v4811, 16
      %v5064 = vrot.slane %v5062, 7
      %v5065 = vshll.u32 %v4811, 16
      %v5067 = vor.u32 %v5064, %v5065
      %v5068 = vsel %vm4835, %v5060, %v5067
      %v5069 = vrot.slane %v5064, 4
      %v5071 = vshrl.u32 %v4812, 16
      %v5073 = vrot.slane %v5071, 7
      %v5074 = vshll.u32 %v4812, 16
      %v5076 = vor.u32 %v5073, %v5074
      %v5077 = vsel %vm4835, %v5069, %v5076
      %v5079 = vshrl.u32 %v4813, 16
      %v5081 = vrot.slane %v5079, 7
      %v5082 = vrot.slane %v5081, 4
      %v5084 = vshrl.u32 %v4814, 16
      %v5086 = vrot.slane %v5084, 7
      %v5087 = vshll.u32 %v4814, 16
      %v5089 = vor.u32 %v5086, %v5087
      %v5090 = vsel %vm4835, %v5082, %v5089
      %v5091 = vrot.slane %v5086, 4
      %v5093 = vshrl.u32 %v4815, 16
      %v5095 = vrot.slane %v5093, 7
      %v5096 = vshll.u32 %v4815, 16
      %v5098 = vor.u32 %v5095, %v5096
      %v5099 = vsel %vm4835, %v5091, %v5098
      %v5101 = vshrl.u32 %v4816, 16
      %v5103 = vrot.slane %v5101, 7
      %v5104 = vrot.slane %v5103, 4
      %v5106 = vshrl.u32 %v4817, 16
      %v5108 = vrot.slane %v5106, 7
      %v5109 = vshll.u32 %v4817, 16
      %v5111 = vor.u32 %v5108, %v5109
      %v5112 = vsel %vm4835, %v5104, %v5111
      %v5113 = vrot.slane %v5108, 4
      %v5115 = vshrl.u32 %v4818, 16
      %v5117 = vrot.slane %v5115, 7
      %v5118 = vshll.u32 %v4818, 16
      %v5120 = vor.u32 %v5117, %v5118
      %v5121 = vsel %vm4835, %v5113, %v5120
      %v5123 = vshrl.u32 %v4819, 16
      %v5125 = vrot.slane %v5123, 7
      %v5126 = vrot.slane %v5125, 4
      %v5128 = vshrl.u32 %v4820, 16
      %v5130 = vrot.slane %v5128, 7
      %v5131 = vshll.u32 %v4820, 16
      %v5133 = vor.u32 %v5130, %v5131
      %v5134 = vsel %vm4835, %v5126, %v5133
      %v5135 = vrot.slane %v5130, 4
      %v5137 = vshrl.u32 %v4821, 16
      %v5139 = vrot.slane %v5137, 7
      %v5140 = vshll.u32 %v4821, 16
      %v5142 = vor.u32 %v5139, %v5140
      %v5143 = vsel %vm4835, %v5135, %v5142
      %v5145 = vshrl.u32 %v4822, 16
      %v5147 = vrot.slane %v5145, 7
      %v5148 = vrot.slane %v5147, 4
      %v5150 = vshrl.u32 %v4823, 16
      %v5152 = vrot.slane %v5150, 7
      %v5153 = vshll.u32 %v4823, 16
      %v5155 = vor.u32 %v5152, %v5153
      %v5156 = vsel %vm4835, %v5148, %v5155
      %v5157 = vrot.slane %v5152, 4
      %v5159 = vshrl.u32 %v4824, 16
      %v5161 = vrot.slane %v5159, 7
      %v5162 = vshll.u32 %v4824, 16
      %v5164 = vor.u32 %v5161, %v5162
      %v5165 = vsel %vm4835, %v5157, %v5164
      %v5167 = vshrl.u32 %v4825, 16
      %v5169 = vrot.slane %v5167, 7
      %v5170 = vrot.slane %v5169, 4
      %v5172 = vshrl.u32 %v4826, 16
      %v5174 = vrot.slane %v5172, 7
      %v5175 = vshll.u32 %v4826, 16
      %v5177 = vor.u32 %v5174, %v5175
      %v5178 = vsel %vm4835, %v5170, %v5177
      %v5179 = vrot.slane %v5174, 4
      %v5181 = vshrl.u32 %v4827, 16
      %v5183 = vrot.slane %v5181, 7
      %v5184 = vshll.u32 %v4827, 16
      %v5186 = vor.u32 %v5183, %v5184
      %v5187 = vsel %vm4835, %v5179, %v5186
      %v5189 = vshrl.u32 %v4828, 16
      %v5191 = vrot.slane %v5189, 7
      %v5192 = vrot.slane %v5191, 4
      %v5194 = vshrl.u32 %v4829, 16
      %v5196 = vrot.slane %v5194, 7
      %v5197 = vshll.u32 %v4829, 16
      %v5199 = vor.u32 %v5196, %v5197
      %v5200 = vsel %vm4835, %v5192, %v5199
      %v5201 = vrot.slane %v5196, 4
      %v5203 = vshrl.u32 %v4830, 16
      %v5205 = vrot.slane %v5203, 7
      %v5206 = vshll.u32 %v4830, 16
      %v5208 = vor.u32 %v5205, %v5206
      %v5209 = vsel %vm4835, %v5201, %v5208
      %v5211 = vshrl.u32 %v4831, 16
      %v5213 = vrot.slane %v5211, 7
      %v5214 = vrot.slane %v5213, 4
      %v5216 = vshrl.u32 %v4832, 16
      %v5218 = vrot.slane %v5216, 7
      %v5219 = vshll.u32 %v4832, 16
      %v5221 = vor.u32 %v5218, %v5219
      %v5222 = vsel %vm4835, %v5214, %v5221
      %v5223 = vrot.slane %v5218, 4
      %v5225 = vshrl.u32 %v4833, 16
      %v5227 = vrot.slane %v5225, 7
      %v5228 = vshll.u32 %v4833, 16
      %v5230 = vor.u32 %v5227, %v5228
      %v5231 = vsel %vm4835, %v5223, %v5230
      %v5232 = vld [vmem:[%s6] sm:$0xf]
      %v5233 = vld [vmem:[%s6 + $0x4] sm:$0xf]
      %v5234 = vld [vmem:[%s6 + $0x8] sm:$0xf]
      %v5235 = vld [vmem:[%s6 + $0xc] sm:$0xf]
      %v5236 = vld [vmem:[%s6 + $0x10] sm:$0xf]
      %v5237 = vld [vmem:[%s6 + $0x14] sm:$0xf]
      %v5238 = vld [vmem:[%s6 + $0x18] sm:$0xf]
      %v5239 = vld [vmem:[%s6 + $0x1c] sm:$0xf]
      %v5240 = vld [vmem:[%s6 + $0x20] sm:$0xf]
      %v5241 = vld [vmem:[%s6 + $0x24] sm:$0xf]
      %v5242 = vld [vmem:[%s6 + $0x28] sm:$0xf]
      %v5243 = vld [vmem:[%s6 + $0x2c] sm:$0xf]
      %v5244 = vld [vmem:[%s6 + $0x30] sm:$0xf]
      %v5245 = vld [vmem:[%s6 + $0x34] sm:$0xf]
      %v5246 = vld [vmem:[%s6 + $0x38] sm:$0xf]
      %v5247 = vld [vmem:[%s6 + $0x3c] sm:$0xf]
      %v5248 = vunpack.c.l.b16 %v4848
      %v5249 = vunpack.c.l.b16 %v4857
      %v5250 = vunpack.c.l.b16 %v4870
      %v5251 = vunpack.c.l.b16 %v4879
      %v5252 = vunpack.c.l.b16 %v4892
      %v5253 = vunpack.c.l.b16 %v4901
      %v5254 = vunpack.c.l.b16 %v4914
      %v5255 = vunpack.c.l.b16 %v4923
      %v5256 = vunpack.c.l.b16 %v4936
      %v5257 = vunpack.c.l.b16 %v4945
      %v5258 = vunpack.c.l.b16 %v4958
      %v5259 = vunpack.c.l.b16 %v4967
      %v5260 = vunpack.c.l.b16 %v4980
      %v5261 = vunpack.c.l.b16 %v4989
      %v5262 = vunpack.c.l.b16 %v5002
      %v5263 = vunpack.c.l.b16 %v5011
      %v5264 = vunpack.c.l.b16 %v5024
      %v5265 = vunpack.c.l.b16 %v5033
      %v5266 = vunpack.c.l.b16 %v5046
      %v5267 = vunpack.c.l.b16 %v5055
      %v5268 = vunpack.c.l.b16 %v5068
      %v5269 = vunpack.c.l.b16 %v5077
      %v5270 = vunpack.c.l.b16 %v5090
      %v5271 = vunpack.c.l.b16 %v5099
      %v5272 = vunpack.c.l.b16 %v5112
      %v5273 = vunpack.c.l.b16 %v5121
      %v5274 = vunpack.c.l.b16 %v5134
      %v5275 = vunpack.c.l.b16 %v5143
      %v5276 = vunpack.c.l.b16 %v5156
      %v5277 = vunpack.c.l.b16 %v5165
      %v5278 = vunpack.c.l.b16 %v5178
      %v5279 = vunpack.c.l.b16 %v5187
      %v5280 = vpack.c.b16 %v5249, %v5248
      %v5281 = vpack.c.b16 %v5251, %v5250
      %v5282 = vpack.c.b16 %v5253, %v5252
      %v5283 = vpack.c.b16 %v5255, %v5254
      %v5284 = vpack.c.b16 %v5257, %v5256
      %v5285 = vpack.c.b16 %v5259, %v5258
      %v5286 = vpack.c.b16 %v5261, %v5260
      %v5287 = vpack.c.b16 %v5263, %v5262
      %v5288 = vpack.c.b16 %v5265, %v5264
      %v5289 = vpack.c.b16 %v5267, %v5266
      %v5290 = vpack.c.b16 %v5269, %v5268
      %v5291 = vpack.c.b16 %v5271, %v5270
      %v5292 = vpack.c.b16 %v5273, %v5272
      %v5293 = vpack.c.b16 %v5275, %v5274
      %v5294 = vpack.c.b16 %v5277, %v5276
      %v5295 = vpack.c.b16 %v5279, %v5278
      %v5328 = vunpack.c.l.b16 %v5232
      %v5329 = vunpack.c.l.b16 %v5233
      %v5330 = vunpack.c.l.b16 %v5234
      %v5331 = vunpack.c.l.b16 %v5235
      %v5332 = vunpack.c.l.b16 %v5236
      %v5333 = vunpack.c.l.b16 %v5237
      %v5334 = vunpack.c.l.b16 %v5238
      %v5335 = vunpack.c.l.b16 %v5239
      %v5336 = vunpack.c.l.b16 %v5240
      %v5337 = vunpack.c.l.b16 %v5241
      %v5338 = vunpack.c.l.b16 %v5242
      %v5339 = vunpack.c.l.b16 %v5243
      %v5340 = vunpack.c.l.b16 %v5244
      %v5341 = vunpack.c.l.b16 %v5245
      %v5342 = vunpack.c.l.b16 %v5246
      %v5343 = vunpack.c.l.b16 %v5247
      %v5344 = vpack.c.b16 %v5329, %v5328
      %v5345 = vpack.c.b16 %v5331, %v5330
      %v5346 = vpack.c.b16 %v5333, %v5332
      %v5347 = vpack.c.b16 %v5335, %v5334
      %v5348 = vpack.c.b16 %v5337, %v5336
      %v5349 = vpack.c.b16 %v5339, %v5338
      %v5350 = vpack.c.b16 %v5341, %v5340
      %v5351 = vpack.c.b16 %v5343, %v5342
      %5360 = vmatprep.subr.bf16.mxu0 0
      %5361 = vmatpush1.bf16.msra.mxu0 %v5351
      %5362 = vmatprep.subr.bf16.mxu0 0
      %5363 = vmatpush1.bf16.msra.mxu0 %v5350
      %5364 = vmatprep.subr.bf16.mxu0 0
      %5365 = vmatpush1.bf16.msra.mxu0 %v5349
      %5366 = vmatprep.subr.bf16.mxu0 0
      %5367 = vmatpush1.bf16.msra.mxu0 %v5348
      %5368 = vmatprep.subr.bf16.mxu0 0
      %5369 = vmatpush1.bf16.msra.mxu0 %v5347
      %5370 = vmatprep.subr.bf16.mxu0 0
      %5371 = vmatpush1.bf16.msra.mxu0 %v5346
      %5372 = vmatprep.subr.bf16.mxu0 0
      %5373 = vmatpush1.bf16.msra.mxu0 %v5345
      %5374 = vmatprep.subr.bf16.mxu0 0
      %5375 = vmatpush1.bf16.msra.mxu0 %v5344
      %5376 = vmatprep.subr.bf16.mxu0 0
      %5377 = vmatpush2.bf16.msra.mxu0 0
      %5378 = vmatprep.subr.bf16.mxu0 0
      %5379 = vmatpush2.bf16.msra.mxu0 0
      %5380 = vmatprep.subr.bf16.mxu0 0
      %5381 = vmatpush2.bf16.msra.mxu0 0
      %5382 = vmatprep.subr.bf16.mxu0 0
      %5383 = vmatpush2.bf16.msra.mxu0 0
      %5384 = vmatprep.subr.bf16.mxu0 0
      %5385 = vmatpush2.bf16.msra.mxu0 0
      %5386 = vmatprep.subr.bf16.mxu0 0
      %5387 = vmatpush2.bf16.msra.mxu0 0
      %5388 = vmatprep.subr.bf16.mxu0 0
      %5389 = vmatpush2.bf16.msra.mxu0 0
      %5390 = vmatprep.subr.bf16.mxu0 0
      %5391 = vmatpush2.bf16.msra.mxu0 0
      %5392 = vmatprep.mubr.bf16.mxu0 0
      %5393 = vmatmul.mubr.bf16.gmra.mxu0 %v5280
      %v5394 = vpop.f32.mrf.mxu0
      %v5395 = vadd.f32 0.0, %v5394
      %v5396 = vpop.f32.mrf.mxu0
      %v5397 = vpop.f32.mrf.mxu0
      %v5398 = vadd.f32 0.0, %v5397
      %v5399 = vpop.f32.mrf.mxu0
      %5400 = vmatprep.mubr.bf16.mxu0 0
      %5401 = vmatmul.mubr.bf16.gmra.mxu0 %v5281
      %v5402 = vpop.f32.mrf.mxu0
      %v5403 = vadd.f32 0.0, %v5402
      %v5404 = vpop.f32.mrf.mxu0
      %v5405 = vpop.f32.mrf.mxu0
      %v5406 = vadd.f32 0.0, %v5405
      %v5407 = vpop.f32.mrf.mxu0
      %5408 = vmatprep.mubr.bf16.mxu0 0
      %5409 = vmatmul.mubr.bf16.gmra.mxu0 %v5282
      %v5410 = vpop.f32.mrf.mxu0
      %v5411 = vadd.f32 0.0, %v5410
      %v5412 = vpop.f32.mrf.mxu0
      %v5413 = vpop.f32.mrf.mxu0
      %v5414 = vadd.f32 0.0, %v5413
      %v5415 = vpop.f32.mrf.mxu0
      %5416 = vmatprep.mubr.bf16.mxu0 0
      %5417 = vmatmul.mubr.bf16.gmra.mxu0 %v5283
      %v5418 = vpop.f32.mrf.mxu0
      %v5419 = vadd.f32 0.0, %v5418
      %v5420 = vpop.f32.mrf.mxu0
      %v5421 = vpop.f32.mrf.mxu0
      %v5422 = vadd.f32 0.0, %v5421
      %v5423 = vpop.f32.mrf.mxu0
      %5424 = vmatprep.mubr.bf16.mxu0 0
      %5425 = vmatmul.mubr.bf16.gmra.mxu0 %v5284
      %v5426 = vpop.f32.mrf.mxu0
      %v5427 = vadd.f32 0.0, %v5426
      %v5428 = vpop.f32.mrf.mxu0
      %v5429 = vpop.f32.mrf.mxu0
      %v5430 = vadd.f32 0.0, %v5429
      %v5431 = vpop.f32.mrf.mxu0
      %5432 = vmatprep.mubr.bf16.mxu0 0
      %5433 = vmatmul.mubr.bf16.gmra.mxu0 %v5285
      %v5434 = vpop.f32.mrf.mxu0
      %v5435 = vadd.f32 0.0, %v5434
      %v5436 = vpop.f32.mrf.mxu0
      %v5437 = vpop.f32.mrf.mxu0
      %v5438 = vadd.f32 0.0, %v5437
      %v5439 = vpop.f32.mrf.mxu0
      %5440 = vmatprep.mubr.bf16.mxu0 0
      %5441 = vmatmul.mubr.bf16.gmra.mxu0 %v5286
      %v5442 = vpop.f32.mrf.mxu0
      %v5443 = vadd.f32 0.0, %v5442
      %v5444 = vpop.f32.mrf.mxu0
      %v5445 = vpop.f32.mrf.mxu0
      %v5446 = vadd.f32 0.0, %v5445
      %v5447 = vpop.f32.mrf.mxu0
      %5448 = vmatprep.mubr.bf16.mxu0 0
      %5449 = vmatmul.mubr.bf16.gmra.mxu0 %v5287
      %v5450 = vpop.f32.mrf.mxu0
      %v5451 = vadd.f32 0.0, %v5450
      %v5452 = vpop.f32.mrf.mxu0
      %v5453 = vpop.f32.mrf.mxu0
      %v5454 = vadd.f32 0.0, %v5453
      %v5455 = vpop.f32.mrf.mxu0
      %5456 = vmatprep.mubr.bf16.mxu0 0
      %5457 = vmatmul.mubr.bf16.gmra.mxu0 %v5288
      %v5458 = vpop.f32.mrf.mxu0
      %v5459 = vadd.f32 0.0, %v5458
      %v5460 = vpop.f32.mrf.mxu0
      %v5461 = vpop.f32.mrf.mxu0
      %v5462 = vadd.f32 0.0, %v5461
      %v5463 = vpop.f32.mrf.mxu0
      %5464 = vmatprep.mubr.bf16.mxu0 0
      %5465 = vmatmul.mubr.bf16.gmra.mxu0 %v5289
      %v5466 = vpop.f32.mrf.mxu0
      %v5467 = vadd.f32 0.0, %v5466
      %v5468 = vpop.f32.mrf.mxu0
      %v5469 = vpop.f32.mrf.mxu0
      %v5470 = vadd.f32 0.0, %v5469
      %v5471 = vpop.f32.mrf.mxu0
      %5472 = vmatprep.mubr.bf16.mxu0 0
      %5473 = vmatmul.mubr.bf16.gmra.mxu0 %v5290
      %v5474 = vpop.f32.mrf.mxu0
      %v5475 = vadd.f32 0.0, %v5474
      %v5476 = vpop.f32.mrf.mxu0
      %v5477 = vpop.f32.mrf.mxu0
      %v5478 = vadd.f32 0.0, %v5477
      %v5479 = vpop.f32.mrf.mxu0
      %5480 = vmatprep.mubr.bf16.mxu0 0
      %5481 = vmatmul.mubr.bf16.gmra.mxu0 %v5291
      %v5482 = vpop.f32.mrf.mxu0
      %v5483 = vadd.f32 0.0, %v5482
      %v5484 = vpop.f32.mrf.mxu0
      %v5485 = vpop.f32.mrf.mxu0
      %v5486 = vadd.f32 0.0, %v5485
      %v5487 = vpop.f32.mrf.mxu0
      %5488 = vmatprep.mubr.bf16.mxu0 0
      %5489 = vmatmul.mubr.bf16.gmra.mxu0 %v5292
      %v5490 = vpop.f32.mrf.mxu0
      %v5491 = vadd.f32 0.0, %v5490
      %v5492 = vpop.f32.mrf.mxu0
      %v5493 = vpop.f32.mrf.mxu0
      %v5494 = vadd.f32 0.0, %v5493
      %v5495 = vpop.f32.mrf.mxu0
      %5496 = vmatprep.mubr.bf16.mxu0 0
      %5497 = vmatmul.mubr.bf16.gmra.mxu0 %v5293
      %v5498 = vpop.f32.mrf.mxu0
      %v5499 = vadd.f32 0.0, %v5498
      %v5500 = vpop.f32.mrf.mxu0
      %v5501 = vpop.f32.mrf.mxu0
      %v5502 = vadd.f32 0.0, %v5501
      %v5503 = vpop.f32.mrf.mxu0
      %5504 = vmatprep.mubr.bf16.mxu0 0
      %5505 = vmatmul.mubr.bf16.gmra.mxu0 %v5294
      %v5506 = vpop.f32.mrf.mxu0
      %v5507 = vadd.f32 0.0, %v5506
      %v5508 = vpop.f32.mrf.mxu0
      %v5509 = vpop.f32.mrf.mxu0
      %v5510 = vadd.f32 0.0, %v5509
      %v5511 = vpop.f32.mrf.mxu0
      %5512 = vmatprep.mubr.bf16.mxu0 0
      %5513 = vmatmul.mubr.bf16.gmra.mxu0 %v5295
      %v5514 = vpop.f32.mrf.mxu0
      %v5515 = vadd.f32 0.0, %v5514
      %v5516 = vpop.f32.mrf.mxu0
      %v5517 = vpop.f32.mrf.mxu0
      %v5518 = vadd.f32 0.0, %v5517
      %v5519 = vpop.f32.mrf.mxu0
      %5520 = vdwg.mxu0
      %5521 = vst [vmem:[#allocation3] sm:$0xff] %v5395
      %5522 = vst [vmem:[#allocation3 + $0x8] sm:$0xff] %v5398
      %5523 = vst [vmem:[#allocation3 + $0x10] sm:$0xff] %v5403
      %5524 = vst [vmem:[#allocation3 + $0x18] sm:$0xff] %v5406
      %5525 = vst [vmem:[#allocation3 + $0x20] sm:$0xff] %v5411
      %5526 = vst [vmem:[#allocation3 + $0x28] sm:$0xff] %v5414
      %5527 = vst [vmem:[#allocation3 + $0x30] sm:$0xff] %v5419
      %5528 = vst [vmem:[#allocation3 + $0x38] sm:$0xff] %v5422
      %5529 = vst [vmem:[#allocation3 + $0x40] sm:$0xff] %v5427
      %5530 = vst [vmem:[#allocation3 + $0x48] sm:$0xff] %v5430
      %5531 = vst [vmem:[#allocation3 + $0x50] sm:$0xff] %v5435
      %5532 = vst [vmem:[#allocation3 + $0x58] sm:$0xff] %v5438
      %5533 = vst [vmem:[#allocation3 + $0x60] sm:$0xff] %v5443
      %5534 = vst [vmem:[#allocation3 + $0x68] sm:$0xff] %v5446
      %5535 = vst [vmem:[#allocation3 + $0x70] sm:$0xff] %v5451
      %5536 = vst [vmem:[#allocation3 + $0x78] sm:$0xff] %v5454
      %5537 = vst [vmem:[#allocation3 + $0x80] sm:$0xff] %v5459
      %5538 = vst [vmem:[#allocation3 + $0x88] sm:$0xff] %v5462
      %5539 = vst [vmem:[#allocation3 + $0x90] sm:$0xff] %v5467
      %5540 = vst [vmem:[#allocation3 + $0x98] sm:$0xff] %v5470
      %5541 = vst [vmem:[#allocation3 + $0xa0] sm:$0xff] %v5475
      %5542 = vst [vmem:[#allocation3 + $0xa8] sm:$0xff] %v5478
      %5543 = vst [vmem:[#allocation3 + $0xb0] sm:$0xff] %v5483
      %5544 = vst [vmem:[#allocation3 + $0xb8] sm:$0xff] %v5486
      %5545 = vst [vmem:[#allocation3 + $0xc0] sm:$0xff] %v5491
      %5546 = vst [vmem:[#allocation3 + $0xc8] sm:$0xff] %v5494
      %5547 = vst [vmem:[#allocation3 + $0xd0] sm:$0xff] %v5499
      %5548 = vst [vmem:[#allocation3 + $0xd8] sm:$0xff] %v5502
      %5549 = vst [vmem:[#allocation3 + $0xe0] sm:$0xff] %v5507
      %5550 = vst [vmem:[#allocation3 + $0xe8] sm:$0xff] %v5510
      %5551 = vst [vmem:[#allocation3 + $0xf0] sm:$0xff] %v5515
      %5552 = vst [vmem:[#allocation3 + $0xf8] sm:$0xff] %v5518
      %s5553 = scalar_lea.vmem %s6, 192
      %v5554 = vld [vmem:[%s5553] sm:$0xf]
      %v5555 = vld [vmem:[%s5553 + $0x4] sm:$0xf]
      %v5556 = vld [vmem:[%s5553 + $0x8] sm:$0xf]
      %v5557 = vld [vmem:[%s5553 + $0xc] sm:$0xf]
      %v5558 = vld [vmem:[%s5553 + $0x10] sm:$0xf]
      %v5559 = vld [vmem:[%s5553 + $0x14] sm:$0xf]
      %v5560 = vld [vmem:[%s5553 + $0x18] sm:$0xf]
      %v5561 = vld [vmem:[%s5553 + $0x1c] sm:$0xf]
      %v5562 = vld [vmem:[%s5553 + $0x20] sm:$0xf]
      %v5563 = vld [vmem:[%s5553 + $0x24] sm:$0xf]
      %v5564 = vld [vmem:[%s5553 + $0x28] sm:$0xf]
      %v5565 = vld [vmem:[%s5553 + $0x2c] sm:$0xf]
      %v5566 = vld [vmem:[%s5553 + $0x30] sm:$0xf]
      %v5567 = vld [vmem:[%s5553 + $0x34] sm:$0xf]
      %v5568 = vld [vmem:[%s5553 + $0x38] sm:$0xf]
      %v5569 = vld [vmem:[%s5553 + $0x3c] sm:$0xf]
      %v5570 = vunpack.c.l.b16 %v5200
      %v5571 = vunpack.c.l.b16 %v5209
      %v5572 = vpack.c.b16 %v5571, %v5570
      %v5590 = vunpack.c.l.b16 %v5554
      %v5591 = vunpack.c.l.b16 %v5555
      %v5592 = vunpack.c.l.b16 %v5556
      %v5593 = vunpack.c.l.b16 %v5557
      %v5594 = vunpack.c.l.b16 %v5558
      %v5595 = vunpack.c.l.b16 %v5559
      %v5596 = vunpack.c.l.b16 %v5560
      %v5597 = vunpack.c.l.b16 %v5561
      %v5598 = vunpack.c.l.b16 %v5562
      %v5599 = vunpack.c.l.b16 %v5563
      %v5600 = vunpack.c.l.b16 %v5564
      %v5601 = vunpack.c.l.b16 %v5565
      %v5602 = vunpack.c.l.b16 %v5566
      %v5603 = vunpack.c.l.b16 %v5567
      %v5604 = vunpack.c.l.b16 %v5568
      %v5605 = vunpack.c.l.b16 %v5569
      %v5606 = vpack.c.b16 %v5591, %v5590
      %v5607 = vpack.c.b16 %v5593, %v5592
      %v5608 = vpack.c.b16 %v5595, %v5594
      %v5609 = vpack.c.b16 %v5597, %v5596
      %v5610 = vpack.c.b16 %v5599, %v5598
      %v5611 = vpack.c.b16 %v5601, %v5600
      %v5612 = vpack.c.b16 %v5603, %v5602
      %v5613 = vpack.c.b16 %v5605, %v5604
      %5622 = vmatprep.subr.bf16.mxu0 0
      %5623 = vmatpush1.bf16.msra.mxu0 %v5613
      %5624 = vmatprep.subr.bf16.mxu0 0
      %5625 = vmatpush1.bf16.msra.mxu0 %v5612
      %5626 = vmatprep.subr.bf16.mxu0 0
      %5627 = vmatpush1.bf16.msra.mxu0 %v5611
      %5628 = vmatprep.subr.bf16.mxu0 0
      %5629 = vmatpush1.bf16.msra.mxu0 %v5610
      %5630 = vmatprep.subr.bf16.mxu0 0
      %5631 = vmatpush1.bf16.msra.mxu0 %v5609
      %5632 = vmatprep.subr.bf16.mxu0 0
      %5633 = vmatpush1.bf16.msra.mxu0 %v5608
      %5634 = vmatprep.subr.bf16.mxu0 0
      %5635 = vmatpush1.bf16.msra.mxu0 %v5607
      %5636 = vmatprep.subr.bf16.mxu0 0
      %5637 = vmatpush1.bf16.msra.mxu0 %v5606
      %5638 = vmatprep.subr.bf16.mxu0 0
      %5639 = vmatpush2.bf16.msra.mxu0 0
      %5640 = vmatprep.subr.bf16.mxu0 0
      %5641 = vmatpush2.bf16.msra.mxu0 0
      %5642 = vmatprep.subr.bf16.mxu0 0
      %5643 = vmatpush2.bf16.msra.mxu0 0
      %5644 = vmatprep.subr.bf16.mxu0 0
      %5645 = vmatpush2.bf16.msra.mxu0 0
      %5646 = vmatprep.subr.bf16.mxu0 0
      %5647 = vmatpush2.bf16.msra.mxu0 0
      %5648 = vmatprep.subr.bf16.mxu0 0
      %5649 = vmatpush2.bf16.msra.mxu0 0
      %5650 = vmatprep.subr.bf16.mxu0 0
      %5651 = vmatpush2.bf16.msra.mxu0 0
      %5652 = vmatprep.subr.bf16.mxu0 0
      %5653 = vmatpush2.bf16.msra.mxu0 0
      %5654 = vmatprep.mubr.bf16.mxu0 0
      %5655 = vmatmul.mubr.bf16.gmra.mxu0 %v5281
      %v5656 = vpop.f32.mrf.mxu0
      %v5657 = vadd.f32 0.0, %v5656
      %v5658 = vpop.f32.mrf.mxu0
      %v5659 = vpop.f32.mrf.mxu0
      %v5660 = vadd.f32 0.0, %v5659
      %v5661 = vpop.f32.mrf.mxu0
      %5662 = vmatprep.mubr.bf16.mxu0 0
      %5663 = vmatmul.mubr.bf16.gmra.mxu0 %v5282
      %v5664 = vpop.f32.mrf.mxu0
      %v5665 = vadd.f32 0.0, %v5664
      %v5666 = vpop.f32.mrf.mxu0
      %v5667 = vpop.f32.mrf.mxu0
      %v5668 = vadd.f32 0.0, %v5667
      %v5669 = vpop.f32.mrf.mxu0
      %5670 = vmatprep.mubr.bf16.mxu0 0
      %5671 = vmatmul.mubr.bf16.gmra.mxu0 %v5283
      %v5672 = vpop.f32.mrf.mxu0
      %v5673 = vadd.f32 0.0, %v5672
      %v5674 = vpop.f32.mrf.mxu0
      %v5675 = vpop.f32.mrf.mxu0
      %v5676 = vadd.f32 0.0, %v5675
      %v5677 = vpop.f32.mrf.mxu0
      %5678 = vmatprep.mubr.bf16.mxu0 0
      %5679 = vmatmul.mubr.bf16.gmra.mxu0 %v5284
      %v5680 = vpop.f32.mrf.mxu0
      %v5681 = vadd.f32 0.0, %v5680
      %v5682 = vpop.f32.mrf.mxu0
      %v5683 = vpop.f32.mrf.mxu0
      %v5684 = vadd.f32 0.0, %v5683
      %v5685 = vpop.f32.mrf.mxu0
      %5686 = vmatprep.mubr.bf16.mxu0 0
      %5687 = vmatmul.mubr.bf16.gmra.mxu0 %v5285
      %v5688 = vpop.f32.mrf.mxu0
      %v5689 = vadd.f32 0.0, %v5688
      %v5690 = vpop.f32.mrf.mxu0
      %v5691 = vpop.f32.mrf.mxu0
      %v5692 = vadd.f32 0.0, %v5691
      %v5693 = vpop.f32.mrf.mxu0
      %5694 = vmatprep.mubr.bf16.mxu0 0
      %5695 = vmatmul.mubr.bf16.gmra.mxu0 %v5286
      %v5696 = vpop.f32.mrf.mxu0
      %v5697 = vadd.f32 0.0, %v5696
      %v5698 = vpop.f32.mrf.mxu0
      %v5699 = vpop.f32.mrf.mxu0
      %v5700 = vadd.f32 0.0, %v5699
      %v5701 = vpop.f32.mrf.mxu0
      %5702 = vmatprep.mubr.bf16.mxu0 0
      %5703 = vmatmul.mubr.bf16.gmra.mxu0 %v5287
      %v5704 = vpop.f32.mrf.mxu0
      %v5705 = vadd.f32 0.0, %v5704
      %v5706 = vpop.f32.mrf.mxu0
      %v5707 = vpop.f32.mrf.mxu0
      %v5708 = vadd.f32 0.0, %v5707
      %v5709 = vpop.f32.mrf.mxu0
      %5710 = vmatprep.mubr.bf16.mxu0 0
      %5711 = vmatmul.mubr.bf16.gmra.mxu0 %v5288
      %v5712 = vpop.f32.mrf.mxu0
      %v5713 = vadd.f32 0.0, %v5712
      %v5714 = vpop.f32.mrf.mxu0
      %v5715 = vpop.f32.mrf.mxu0
      %v5716 = vadd.f32 0.0, %v5715
      %v5717 = vpop.f32.mrf.mxu0
      %5718 = vmatprep.mubr.bf16.mxu0 0
      %5719 = vmatmul.mubr.bf16.gmra.mxu0 %v5289
      %v5720 = vpop.f32.mrf.mxu0
      %v5721 = vadd.f32 0.0, %v5720
      %v5722 = vpop.f32.mrf.mxu0
      %v5723 = vpop.f32.mrf.mxu0
      %v5724 = vadd.f32 0.0, %v5723
      %v5725 = vpop.f32.mrf.mxu0
      %5726 = vmatprep.mubr.bf16.mxu0 0
      %5727 = vmatmul.mubr.bf16.gmra.mxu0 %v5290
      %v5728 = vpop.f32.mrf.mxu0
      %v5729 = vadd.f32 0.0, %v5728
      %v5730 = vpop.f32.mrf.mxu0
      %v5731 = vpop.f32.mrf.mxu0
      %v5732 = vadd.f32 0.0, %v5731
      %v5733 = vpop.f32.mrf.mxu0
      %5734 = vmatprep.mubr.bf16.mxu0 0
      %5735 = vmatmul.mubr.bf16.gmra.mxu0 %v5291
      %v5736 = vpop.f32.mrf.mxu0
      %v5737 = vadd.f32 0.0, %v5736
      %v5738 = vpop.f32.mrf.mxu0
      %v5739 = vpop.f32.mrf.mxu0
      %v5740 = vadd.f32 0.0, %v5739
      %v5741 = vpop.f32.mrf.mxu0
      %5742 = vmatprep.mubr.bf16.mxu0 0
      %5743 = vmatmul.mubr.bf16.gmra.mxu0 %v5292
      %v5744 = vpop.f32.mrf.mxu0
      %v5745 = vadd.f32 0.0, %v5744
      %v5746 = vpop.f32.mrf.mxu0
      %v5747 = vpop.f32.mrf.mxu0
      %v5748 = vadd.f32 0.0, %v5747
      %v5749 = vpop.f32.mrf.mxu0
      %5750 = vmatprep.mubr.bf16.mxu0 0
      %5751 = vmatmul.mubr.bf16.gmra.mxu0 %v5293
      %v5752 = vpop.f32.mrf.mxu0
      %v5753 = vadd.f32 0.0, %v5752
      %v5754 = vpop.f32.mrf.mxu0
      %v5755 = vpop.f32.mrf.mxu0
      %v5756 = vadd.f32 0.0, %v5755
      %v5757 = vpop.f32.mrf.mxu0
      %5758 = vmatprep.mubr.bf16.mxu0 0
      %5759 = vmatmul.mubr.bf16.gmra.mxu0 %v5294
      %v5760 = vpop.f32.mrf.mxu0
      %v5761 = vadd.f32 0.0, %v5760
      %v5762 = vpop.f32.mrf.mxu0
      %v5763 = vpop.f32.mrf.mxu0
      %v5764 = vadd.f32 0.0, %v5763
      %v5765 = vpop.f32.mrf.mxu0
      %5766 = vmatprep.mubr.bf16.mxu0 0
      %5767 = vmatmul.mubr.bf16.gmra.mxu0 %v5295
      %v5768 = vpop.f32.mrf.mxu0
      %v5769 = vadd.f32 0.0, %v5768
      %v5770 = vpop.f32.mrf.mxu0
      %v5771 = vpop.f32.mrf.mxu0
      %v5772 = vadd.f32 0.0, %v5771
      %v5773 = vpop.f32.mrf.mxu0
      %5774 = vmatprep.mubr.bf16.mxu0 0
      %5775 = vmatmul.mubr.bf16.gmra.mxu0 %v5572
      %v5776 = vpop.f32.mrf.mxu0
      %v5777 = vadd.f32 0.0, %v5776
      %v5778 = vpop.f32.mrf.mxu0
      %v5779 = vpop.f32.mrf.mxu0
      %v5780 = vadd.f32 0.0, %v5779
      %v5781 = vpop.f32.mrf.mxu0
      %5782 = vdwg.mxu0
      %v5783 = vld [vmem:[#allocation3] sm:$0xff]
      %v5784 = vld [vmem:[#allocation3 + $0x8] sm:$0xff]
      %v5785 = vld [vmem:[#allocation3 + $0x10] sm:$0xff]
      %v5786 = vld [vmem:[#allocation3 + $0x18] sm:$0xff]
      %v5787 = vld [vmem:[#allocation3 + $0x20] sm:$0xff]
      %v5788 = vld [vmem:[#allocation3 + $0x28] sm:$0xff]
      %v5789 = vld [vmem:[#allocation3 + $0x30] sm:$0xff]
      %v5790 = vld [vmem:[#allocation3 + $0x38] sm:$0xff]
      %v5791 = vld [vmem:[#allocation3 + $0x40] sm:$0xff]
      %v5792 = vld [vmem:[#allocation3 + $0x48] sm:$0xff]
      %v5793 = vld [vmem:[#allocation3 + $0x50] sm:$0xff]
      %v5794 = vld [vmem:[#allocation3 + $0x58] sm:$0xff]
      %v5795 = vld [vmem:[#allocation3 + $0x60] sm:$0xff]
      %v5796 = vld [vmem:[#allocation3 + $0x68] sm:$0xff]
      %v5797 = vld [vmem:[#allocation3 + $0x70] sm:$0xff]
      %v5798 = vld [vmem:[#allocation3 + $0x78] sm:$0xff]
      %v5799 = vld [vmem:[#allocation3 + $0x80] sm:$0xff]
      %v5800 = vld [vmem:[#allocation3 + $0x88] sm:$0xff]
      %v5801 = vld [vmem:[#allocation3 + $0x90] sm:$0xff]
      %v5802 = vld [vmem:[#allocation3 + $0x98] sm:$0xff]
      %v5803 = vld [vmem:[#allocation3 + $0xa0] sm:$0xff]
      %v5804 = vld [vmem:[#allocation3 + $0xa8] sm:$0xff]
      %v5805 = vld [vmem:[#allocation3 + $0xb0] sm:$0xff]
      %v5806 = vld [vmem:[#allocation3 + $0xb8] sm:$0xff]
      %v5807 = vld [vmem:[#allocation3 + $0xc0] sm:$0xff]
      %v5808 = vld [vmem:[#allocation3 + $0xc8] sm:$0xff]
      %v5809 = vld [vmem:[#allocation3 + $0xd0] sm:$0xff]
      %v5810 = vld [vmem:[#allocation3 + $0xd8] sm:$0xff]
      %v5811 = vld [vmem:[#allocation3 + $0xe0] sm:$0xff]
      %v5812 = vld [vmem:[#allocation3 + $0xe8] sm:$0xff]
      %v5813 = vld [vmem:[#allocation3 + $0xf0] sm:$0xff]
      %v5814 = vld [vmem:[#allocation3 + $0xf8] sm:$0xff]
      %v5815 = vadd.f32 %v5783, %v5657
      %v5816 = vadd.f32 %v5784, %v5660
      %v5817 = vadd.f32 %v5785, %v5665
      %v5818 = vadd.f32 %v5786, %v5668
      %v5819 = vadd.f32 %v5787, %v5673
      %v5820 = vadd.f32 %v5788, %v5676
      %v5821 = vadd.f32 %v5789, %v5681
      %v5822 = vadd.f32 %v5790, %v5684
      %v5823 = vadd.f32 %v5791, %v5689
      %v5824 = vadd.f32 %v5792, %v5692
      %v5825 = vadd.f32 %v5793, %v5697
      %v5826 = vadd.f32 %v5794, %v5700
      %v5827 = vadd.f32 %v5795, %v5705
      %v5828 = vadd.f32 %v5796, %v5708
      %v5829 = vadd.f32 %v5797, %v5713
      %v5830 = vadd.f32 %v5798, %v5716
      %v5831 = vadd.f32 %v5799, %v5721
      %v5832 = vadd.f32 %v5800, %v5724
      %v5833 = vadd.f32 %v5801, %v5729
      %v5834 = vadd.f32 %v5802, %v5732
      %v5835 = vadd.f32 %v5803, %v5737
      %v5836 = vadd.f32 %v5804, %v5740
      %v5837 = vadd.f32 %v5805, %v5745
      %v5838 = vadd.f32 %v5806, %v5748
      %v5839 = vadd.f32 %v5807, %v5753
      %v5840 = vadd.f32 %v5808, %v5756
      %v5841 = vadd.f32 %v5809, %v5761
      %v5842 = vadd.f32 %v5810, %v5764
      %v5843 = vadd.f32 %v5811, %v5769
      %v5844 = vadd.f32 %v5812, %v5772
      %v5845 = vadd.f32 %v5813, %v5777
      %v5846 = vadd.f32 %v5814, %v5780
      %5847 = vst [vmem:[#allocation3] sm:$0xff] %v5815
      %5848 = vst [vmem:[#allocation3 + $0x8] sm:$0xff] %v5816
      %5849 = vst [vmem:[#allocation3 + $0x10] sm:$0xff] %v5817
      %5850 = vst [vmem:[#allocation3 + $0x18] sm:$0xff] %v5818
      %5851 = vst [vmem:[#allocation3 + $0x20] sm:$0xff] %v5819
      %5852 = vst [vmem:[#allocation3 + $0x28] sm:$0xff] %v5820
      %5853 = vst [vmem:[#allocation3 + $0x30] sm:$0xff] %v5821
      %5854 = vst [vmem:[#allocation3 + $0x38] sm:$0xff] %v5822
      %5855 = vst [vmem:[#allocation3 + $0x40] sm:$0xff] %v5823
      %5856 = vst [vmem:[#allocation3 + $0x48] sm:$0xff] %v5824
      %5857 = vst [vmem:[#allocation3 + $0x50] sm:$0xff] %v5825
      %5858 = vst [vmem:[#allocation3 + $0x58] sm:$0xff] %v5826
      %5859 = vst [vmem:[#allocation3 + $0x60] sm:$0xff] %v5827
      %5860 = vst [vmem:[#allocation3 + $0x68] sm:$0xff] %v5828
      %5861 = vst [vmem:[#allocation3 + $0x70] sm:$0xff] %v5829
      %5862 = vst [vmem:[#allocation3 + $0x78] sm:$0xff] %v5830
      %5863 = vst [vmem:[#allocation3 + $0x80] sm:$0xff] %v5831
      %5864 = vst [vmem:[#allocation3 + $0x88] sm:$0xff] %v5832
      %5865 = vst [vmem:[#allocation3 + $0x90] sm:$0xff] %v5833
      %5866 = vst [vmem:[#allocation3 + $0x98] sm:$0xff] %v5834
      %5867 = vst [vmem:[#allocation3 + $0xa0] sm:$0xff] %v5835
      %5868 = vst [vmem:[#allocation3 + $0xa8] sm:$0xff] %v5836
      %5869 = vst [vmem:[#allocation3 + $0xb0] sm:$0xff] %v5837
      %5870 = vst [vmem:[#allocation3 + $0xb8] sm:$0xff] %v5838
      %5871 = vst [vmem:[#allocation3 + $0xc0] sm:$0xff] %v5839
      %5872 = vst [vmem:[#allocation3 + $0xc8] sm:$0xff] %v5840
      %5873 = vst [vmem:[#allocation3 + $0xd0] sm:$0xff] %v5841
      %5874 = vst [vmem:[#allocation3 + $0xd8] sm:$0xff] %v5842
      %5875 = vst [vmem:[#allocation3 + $0xe0] sm:$0xff] %v5843
      %5876 = vst [vmem:[#allocation3 + $0xe8] sm:$0xff] %v5844
      %5877 = vst [vmem:[#allocation3 + $0xf0] sm:$0xff] %v5845
      %5878 = vst [vmem:[#allocation3 + $0xf8] sm:$0xff] %v5846
      %s5879 = scalar_lea.vmem %s6, 384
      %v5880 = vld [vmem:[%s5879] sm:$0xf]
      %v5881 = vld [vmem:[%s5879 + $0x4] sm:$0xf]
      %v5882 = vld [vmem:[%s5879 + $0x8] sm:$0xf]
      %v5883 = vld [vmem:[%s5879 + $0xc] sm:$0xf]
      %v5884 = vld [vmem:[%s5879 + $0x10] sm:$0xf]
      %v5885 = vld [vmem:[%s5879 + $0x14] sm:$0xf]
      %v5886 = vld [vmem:[%s5879 + $0x18] sm:$0xf]
      %v5887 = vld [vmem:[%s5879 + $0x1c] sm:$0xf]
      %v5888 = vld [vmem:[%s5879 + $0x20] sm:$0xf]
      %v5889 = vld [vmem:[%s5879 + $0x24] sm:$0xf]
      %v5890 = vld [vmem:[%s5879 + $0x28] sm:$0xf]
      %v5891 = vld [vmem:[%s5879 + $0x2c] sm:$0xf]
      %v5892 = vld [vmem:[%s5879 + $0x30] sm:$0xf]
      %v5893 = vld [vmem:[%s5879 + $0x34] sm:$0xf]
      %v5894 = vld [vmem:[%s5879 + $0x38] sm:$0xf]
      %v5895 = vld [vmem:[%s5879 + $0x3c] sm:$0xf]
      %v5896 = vunpack.c.l.b16 %v5222
      %v5897 = vunpack.c.l.b16 %v5231
      %v5898 = vpack.c.b16 %v5897, %v5896
      %v5916 = vunpack.c.l.b16 %v5880
      %v5917 = vunpack.c.l.b16 %v5881
      %v5918 = vunpack.c.l.b16 %v5882
      %v5919 = vunpack.c.l.b16 %v5883
      %v5920 = vunpack.c.l.b16 %v5884
      %v5921 = vunpack.c.l.b16 %v5885
      %v5922 = vunpack.c.l.b16 %v5886
      %v5923 = vunpack.c.l.b16 %v5887
      %v5924 = vunpack.c.l.b16 %v5888
      %v5925 = vunpack.c.l.b16 %v5889
      %v5926 = vunpack.c.l.b16 %v5890
      %v5927 = vunpack.c.l.b16 %v5891
      %v5928 = vunpack.c.l.b16 %v5892
      %v5929 = vunpack.c.l.b16 %v5893
      %v5930 = vunpack.c.l.b16 %v5894
      %v5931 = vunpack.c.l.b16 %v5895
      %v5932 = vpack.c.b16 %v5917, %v5916
      %v5933 = vpack.c.b16 %v5919, %v5918
      %v5934 = vpack.c.b16 %v5921, %v5920
      %v5935 = vpack.c.b16 %v5923, %v5922
      %v5936 = vpack.c.b16 %v5925, %v5924
      %v5937 = vpack.c.b16 %v5927, %v5926
      %v5938 = vpack.c.b16 %v5929, %v5928
      %v5939 = vpack.c.b16 %v5931, %v5930
      %5948 = vmatprep.subr.bf16.mxu0 0
      %5949 = vmatpush1.bf16.msra.mxu0 %v5939
      %5950 = vmatprep.subr.bf16.mxu0 0
      %5951 = vmatpush1.bf16.msra.mxu0 %v5938
      %5952 = vmatprep.subr.bf16.mxu0 0
      %5953 = vmatpush1.bf16.msra.mxu0 %v5937
      %5954 = vmatprep.subr.bf16.mxu0 0
      %5955 = vmatpush1.bf16.msra.mxu0 %v5936
      %5956 = vmatprep.subr.bf16.mxu0 0
      %5957 = vmatpush1.bf16.msra.mxu0 %v5935
      %5958 = vmatprep.subr.bf16.mxu0 0
      %5959 = vmatpush1.bf16.msra.mxu0 %v5934
      %5960 = vmatprep.subr.bf16.mxu0 0
      %5961 = vmatpush1.bf16.msra.mxu0 %v5933
      %5962 = vmatprep.subr.bf16.mxu0 0
      %5963 = vmatpush1.bf16.msra.mxu0 %v5932
      %5964 = vmatprep.subr.bf16.mxu0 0
      %5965 = vmatpush2.bf16.msra.mxu0 0
      %5966 = vmatprep.subr.bf16.mxu0 0
      %5967 = vmatpush2.bf16.msra.mxu0 0
      %5968 = vmatprep.subr.bf16.mxu0 0
      %5969 = vmatpush2.bf16.msra.mxu0 0
      %5970 = vmatprep.subr.bf16.mxu0 0
      %5971 = vmatpush2.bf16.msra.mxu0 0
      %5972 = vmatprep.subr.bf16.mxu0 0
      %5973 = vmatpush2.bf16.msra.mxu0 0
      %5974 = vmatprep.subr.bf16.mxu0 0
      %5975 = vmatpush2.bf16.msra.mxu0 0
      %5976 = vmatprep.subr.bf16.mxu0 0
      %5977 = vmatpush2.bf16.msra.mxu0 0
      %5978 = vmatprep.subr.bf16.mxu0 0
      %5979 = vmatpush2.bf16.msra.mxu0 0
      %5980 = vmatprep.mubr.bf16.mxu0 0
      %5981 = vmatmul.mubr.bf16.gmra.mxu0 %v5282
      %v5982 = vpop.f32.mrf.mxu0
      %v5983 = vadd.f32 0.0, %v5982
      %v5984 = vpop.f32.mrf.mxu0
      %v5985 = vpop.f32.mrf.mxu0
      %v5986 = vadd.f32 0.0, %v5985
      %v5987 = vpop.f32.mrf.mxu0
      %5988 = vmatprep.mubr.bf16.mxu0 0
      %5989 = vmatmul.mubr.bf16.gmra.mxu0 %v5283
      %v5990 = vpop.f32.mrf.mxu0
      %v5991 = vadd.f32 0.0, %v5990
      %v5992 = vpop.f32.mrf.mxu0
      %v5993 = vpop.f32.mrf.mxu0
      %v5994 = vadd.f32 0.0, %v5993
      %v5995 = vpop.f32.mrf.mxu0
      %5996 = vmatprep.mubr.bf16.mxu0 0
      %5997 = vmatmul.mubr.bf16.gmra.mxu0 %v5284
      %v5998 = vpop.f32.mrf.mxu0
      %v5999 = vadd.f32 0.0, %v5998
      %v6000 = vpop.f32.mrf.mxu0
      %v6001 = vpop.f32.mrf.mxu0
      %v6002 = vadd.f32 0.0, %v6001
      %v6003 = vpop.f32.mrf.mxu0
      %6004 = vmatprep.mubr.bf16.mxu0 0
      %6005 = vmatmul.mubr.bf16.gmra.mxu0 %v5285
      %v6006 = vpop.f32.mrf.mxu0
      %v6007 = vadd.f32 0.0, %v6006
      %v6008 = vpop.f32.mrf.mxu0
      %v6009 = vpop.f32.mrf.mxu0
      %v6010 = vadd.f32 0.0, %v6009
      %v6011 = vpop.f32.mrf.mxu0
      %6012 = vmatprep.mubr.bf16.mxu0 0
      %6013 = vmatmul.mubr.bf16.gmra.mxu0 %v5286
      %v6014 = vpop.f32.mrf.mxu0
      %v6015 = vadd.f32 0.0, %v6014
      %v6016 = vpop.f32.mrf.mxu0
      %v6017 = vpop.f32.mrf.mxu0
      %v6018 = vadd.f32 0.0, %v6017
      %v6019 = vpop.f32.mrf.mxu0
      %6020 = vmatprep.mubr.bf16.mxu0 0
      %6021 = vmatmul.mubr.bf16.gmra.mxu0 %v5287
      %v6022 = vpop.f32.mrf.mxu0
      %v6023 = vadd.f32 0.0, %v6022
      %v6024 = vpop.f32.mrf.mxu0
      %v6025 = vpop.f32.mrf.mxu0
      %v6026 = vadd.f32 0.0, %v6025
      %v6027 = vpop.f32.mrf.mxu0
      %6028 = vmatprep.mubr.bf16.mxu0 0
      %6029 = vmatmul.mubr.bf16.gmra.mxu0 %v5288
      %v6030 = vpop.f32.mrf.mxu0
      %v6031 = vadd.f32 0.0, %v6030
      %v6032 = vpop.f32.mrf.mxu0
      %v6033 = vpop.f32.mrf.mxu0
      %v6034 = vadd.f32 0.0, %v6033
      %v6035 = vpop.f32.mrf.mxu0
      %6036 = vmatprep.mubr.bf16.mxu0 0
      %6037 = vmatmul.mubr.bf16.gmra.mxu0 %v5289
      %v6038 = vpop.f32.mrf.mxu0
      %v6039 = vadd.f32 0.0, %v6038
      %v6040 = vpop.f32.mrf.mxu0
      %v6041 = vpop.f32.mrf.mxu0
      %v6042 = vadd.f32 0.0, %v6041
      %v6043 = vpop.f32.mrf.mxu0
      %6044 = vmatprep.mubr.bf16.mxu0 0
      %6045 = vmatmul.mubr.bf16.gmra.mxu0 %v5290
      %v6046 = vpop.f32.mrf.mxu0
      %v6047 = vadd.f32 0.0, %v6046
      %v6048 = vpop.f32.mrf.mxu0
      %v6049 = vpop.f32.mrf.mxu0
      %v6050 = vadd.f32 0.0, %v6049
      %v6051 = vpop.f32.mrf.mxu0
      %6052 = vmatprep.mubr.bf16.mxu0 0
      %6053 = vmatmul.mubr.bf16.gmra.mxu0 %v5291
      %v6054 = vpop.f32.mrf.mxu0
      %v6055 = vadd.f32 0.0, %v6054
      %v6056 = vpop.f32.mrf.mxu0
      %v6057 = vpop.f32.mrf.mxu0
      %v6058 = vadd.f32 0.0, %v6057
      %v6059 = vpop.f32.mrf.mxu0
      %6060 = vmatprep.mubr.bf16.mxu0 0
      %6061 = vmatmul.mubr.bf16.gmra.mxu0 %v5292
      %v6062 = vpop.f32.mrf.mxu0
      %v6063 = vadd.f32 0.0, %v6062
      %v6064 = vpop.f32.mrf.mxu0
      %v6065 = vpop.f32.mrf.mxu0
      %v6066 = vadd.f32 0.0, %v6065
      %v6067 = vpop.f32.mrf.mxu0
      %6068 = vmatprep.mubr.bf16.mxu0 0
      %6069 = vmatmul.mubr.bf16.gmra.mxu0 %v5293
      %v6070 = vpop.f32.mrf.mxu0
      %v6071 = vadd.f32 0.0, %v6070
      %v6072 = vpop.f32.mrf.mxu0
      %v6073 = vpop.f32.mrf.mxu0
      %v6074 = vadd.f32 0.0, %v6073
      %v6075 = vpop.f32.mrf.mxu0
      %6076 = vmatprep.mubr.bf16.mxu0 0
      %6077 = vmatmul.mubr.bf16.gmra.mxu0 %v5294
      %v6078 = vpop.f32.mrf.mxu0
      %v6079 = vadd.f32 0.0, %v6078
      %v6080 = vpop.f32.mrf.mxu0
      %v6081 = vpop.f32.mrf.mxu0
      %v6082 = vadd.f32 0.0, %v6081
      %v6083 = vpop.f32.mrf.mxu0
      %6084 = vmatprep.mubr.bf16.mxu0 0
      %6085 = vmatmul.mubr.bf16.gmra.mxu0 %v5295
      %v6086 = vpop.f32.mrf.mxu0
      %v6087 = vadd.f32 0.0, %v6086
      %v6088 = vpop.f32.mrf.mxu0
      %v6089 = vpop.f32.mrf.mxu0
      %v6090 = vadd.f32 0.0, %v6089
      %v6091 = vpop.f32.mrf.mxu0
      %6092 = vmatprep.mubr.bf16.mxu0 0
      %6093 = vmatmul.mubr.bf16.gmra.mxu0 %v5572
      %v6094 = vpop.f32.mrf.mxu0
      %v6095 = vadd.f32 0.0, %v6094
      %v6096 = vpop.f32.mrf.mxu0
      %v6097 = vpop.f32.mrf.mxu0
      %v6098 = vadd.f32 0.0, %v6097
      %v6099 = vpop.f32.mrf.mxu0
      %6100 = vmatprep.mubr.bf16.mxu0 0
      %6101 = vmatmul.mubr.bf16.gmra.mxu0 %v5898
      %v6102 = vpop.f32.mrf.mxu0
      %v6103 = vadd.f32 0.0, %v6102
      %v6104 = vpop.f32.mrf.mxu0
      %v6105 = vpop.f32.mrf.mxu0
      %v6106 = vadd.f32 0.0, %v6105
      %v6107 = vpop.f32.mrf.mxu0
      %6108 = vdwg.mxu0
      %v6109 = vld [vmem:[#allocation3] sm:$0xff]
      %v6110 = vld [vmem:[#allocation3 + $0x8] sm:$0xff]
      %v6111 = vld [vmem:[#allocation3 + $0x10] sm:$0xff]
      %v6112 = vld [vmem:[#allocation3 + $0x18] sm:$0xff]
      %v6113 = vld [vmem:[#allocation3 + $0x20] sm:$0xff]
      %v6114 = vld [vmem:[#allocation3 + $0x28] sm:$0xff]
      %v6115 = vld [vmem:[#allocation3 + $0x30] sm:$0xff]
      %v6116 = vld [vmem:[#allocation3 + $0x38] sm:$0xff]
      %v6117 = vld [vmem:[#allocation3 + $0x40] sm:$0xff]
      %v6118 = vld [vmem:[#allocation3 + $0x48] sm:$0xff]
      %v6119 = vld [vmem:[#allocation3 + $0x50] sm:$0xff]
      %v6120 = vld [vmem:[#allocation3 + $0x58] sm:$0xff]
      %v6121 = vld [vmem:[#allocation3 + $0x60] sm:$0xff]
      %v6122 = vld [vmem:[#allocation3 + $0x68] sm:$0xff]
      %v6123 = vld [vmem:[#allocation3 + $0x70] sm:$0xff]
      %v6124 = vld [vmem:[#allocation3 + $0x78] sm:$0xff]
      %v6125 = vld [vmem:[#allocation3 + $0x80] sm:$0xff]
      %v6126 = vld [vmem:[#allocation3 + $0x88] sm:$0xff]
      %v6127 = vld [vmem:[#allocation3 + $0x90] sm:$0xff]
      %v6128 = vld [vmem:[#allocation3 + $0x98] sm:$0xff]
      %v6129 = vld [vmem:[#allocation3 + $0xa0] sm:$0xff]
      %v6130 = vld [vmem:[#allocation3 + $0xa8] sm:$0xff]
      %v6131 = vld [vmem:[#allocation3 + $0xb0] sm:$0xff]
      %v6132 = vld [vmem:[#allocation3 + $0xb8] sm:$0xff]
      %v6133 = vld [vmem:[#allocation3 + $0xc0] sm:$0xff]
      %v6134 = vld [vmem:[#allocation3 + $0xc8] sm:$0xff]
      %v6135 = vld [vmem:[#allocation3 + $0xd0] sm:$0xff]
      %v6136 = vld [vmem:[#allocation3 + $0xd8] sm:$0xff]
      %v6137 = vld [vmem:[#allocation3 + $0xe0] sm:$0xff]
      %v6138 = vld [vmem:[#allocation3 + $0xe8] sm:$0xff]
      %v6139 = vld [vmem:[#allocation3 + $0xf0] sm:$0xff]
      %v6140 = vld [vmem:[#allocation3 + $0xf8] sm:$0xff]
      %v6141 = vadd.f32 %v6109, %v5983
      %v6142 = vadd.f32 %v6110, %v5986
      %v6143 = vadd.f32 %v6111, %v5991
      %v6144 = vadd.f32 %v6112, %v5994
      %v6145 = vadd.f32 %v6113, %v5999
      %v6146 = vadd.f32 %v6114, %v6002
      %v6147 = vadd.f32 %v6115, %v6007
      %v6148 = vadd.f32 %v6116, %v6010
      %v6149 = vadd.f32 %v6117, %v6015
      %v6150 = vadd.f32 %v6118, %v6018
      %v6151 = vadd.f32 %v6119, %v6023
      %v6152 = vadd.f32 %v6120, %v6026
      %v6153 = vadd.f32 %v6121, %v6031
      %v6154 = vadd.f32 %v6122, %v6034
      %v6155 = vadd.f32 %v6123, %v6039
      %v6156 = vadd.f32 %v6124, %v6042
      %v6157 = vadd.f32 %v6125, %v6047
      %v6158 = vadd.f32 %v6126, %v6050
      %v6159 = vadd.f32 %v6127, %v6055
      %v6160 = vadd.f32 %v6128, %v6058
      %v6161 = vadd.f32 %v6129, %v6063
      %v6162 = vadd.f32 %v6130, %v6066
      %v6163 = vadd.f32 %v6131, %v6071
      %v6164 = vadd.f32 %v6132, %v6074
      %v6165 = vadd.f32 %v6133, %v6079
      %v6166 = vadd.f32 %v6134, %v6082
      %v6167 = vadd.f32 %v6135, %v6087
      %v6168 = vadd.f32 %v6136, %v6090
      %v6169 = vadd.f32 %v6137, %v6095
      %v6170 = vadd.f32 %v6138, %v6098
      %v6171 = vadd.f32 %v6139, %v6103
      %v6172 = vadd.f32 %v6140, %v6106
      %6173 = vst [vmem:[#allocation3] sm:$0xff] %v6141
      %6174 = vst [vmem:[#allocation3 + $0x8] sm:$0xff] %v6142
      %6175 = vst [vmem:[#allocation3 + $0x10] sm:$0xff] %v6143
      %6176 = vst [vmem:[#allocation3 + $0x18] sm:$0xff] %v6144
      %6177 = vst [vmem:[#allocation3 + $0x20] sm:$0xff] %v6145
      %6178 = vst [vmem:[#allocation3 + $0x28] sm:$0xff] %v6146
      %6179 = vst [vmem:[#allocation3 + $0x30] sm:$0xff] %v6147
      %6180 = vst [vmem:[#allocation3 + $0x38] sm:$0xff] %v6148
      %6181 = vst [vmem:[#allocation3 + $0x40] sm:$0xff] %v6149
      %6182 = vst [vmem:[#allocation3 + $0x48] sm:$0xff] %v6150
      %6183 = vst [vmem:[#allocation3 + $0x50] sm:$0xff] %v6151
      %6184 = vst [vmem:[#allocation3 + $0x58] sm:$0xff] %v6152
      %6185 = vst [vmem:[#allocation3 + $0x60] sm:$0xff] %v6153
      %6186 = vst [vmem:[#allocation3 + $0x68] sm:$0xff] %v6154
      %6187 = vst [vmem:[#allocation3 + $0x70] sm:$0xff] %v6155
      %6188 = vst [vmem:[#allocation3 + $0x78] sm:$0xff] %v6156
      %6189 = vst [vmem:[#allocation3 + $0x80] sm:$0xff] %v6157
      %6190 = vst [vmem:[#allocation3 + $0x88] sm:$0xff] %v6158
      %6191 = vst [vmem:[#allocation3 + $0x90] sm:$0xff] %v6159
      %6192 = vst [vmem:[#allocation3 + $0x98] sm:$0xff] %v6160
      %6193 = vst [vmem:[#allocation3 + $0xa0] sm:$0xff] %v6161
      %6194 = vst [vmem:[#allocation3 + $0xa8] sm:$0xff] %v6162
      %6195 = vst [vmem:[#allocation3 + $0xb0] sm:$0xff] %v6163
      %6196 = vst [vmem:[#allocation3 + $0xb8] sm:$0xff] %v6164
      %6197 = vst [vmem:[#allocation3 + $0xc0] sm:$0xff] %v6165
      %6198 = vst [vmem:[#allocation3 + $0xc8] sm:$0xff] %v6166
      %6199 = vst [vmem:[#allocation3 + $0xd0] sm:$0xff] %v6167
      %6200 = vst [vmem:[#allocation3 + $0xd8] sm:$0xff] %v6168
      %6201 = vst [vmem:[#allocation3 + $0xe0] sm:$0xff] %v6169
      %6202 = vst [vmem:[#allocation3 + $0xe8] sm:$0xff] %v6170
      %6203 = vst [vmem:[#allocation3 + $0xf0] sm:$0xff] %v6171
      %6204 = vst [vmem:[#allocation3 + $0xf8] sm:$0xff] %v6172
      %v6205 = vld [vmem:[#allocation2 + $0x4] sm:$0xf]
      %v6206 = vld [vmem:[#allocation2 + $0x8] sm:$0xf]
      %v6207 = vld [vmem:[#allocation2 + $0x14] sm:$0xf]
      %v6208 = vld [vmem:[#allocation2 + $0x18] sm:$0xf]
      %v6209 = vld [vmem:[#allocation2 + $0x24] sm:$0xf]
      %v6210 = vld [vmem:[#allocation2 + $0x28] sm:$0xf]
      %v6211 = vld [vmem:[#allocation2 + $0x34] sm:$0xf]
      %v6212 = vld [vmem:[#allocation2 + $0x38] sm:$0xf]
      %v6213 = vld [vmem:[#allocation2 + $0x44] sm:$0xf]
      %v6214 = vld [vmem:[#allocation2 + $0x48] sm:$0xf]
      %v6215 = vld [vmem:[#allocation2 + $0x54] sm:$0xf]
      %v6216 = vld [vmem:[#allocation2 + $0x58] sm:$0xf]
      %v6217 = vld [vmem:[#allocation2 + $0x64] sm:$0xf]
      %v6218 = vld [vmem:[#allocation2 + $0x68] sm:$0xf]
      %v6219 = vld [vmem:[#allocation2 + $0x74] sm:$0xf]
      %v6220 = vld [vmem:[#allocation2 + $0x78] sm:$0xf]
      %v6221 = vld [vmem:[#allocation2 + $0x84] sm:$0xf]
      %v6222 = vld [vmem:[#allocation2 + $0x88] sm:$0xf]
      %v6223 = vld [vmem:[#allocation2 + $0x94] sm:$0xf]
      %v6224 = vld [vmem:[#allocation2 + $0x98] sm:$0xf]
      %v6225 = vld [vmem:[#allocation2 + $0xa4] sm:$0xf]
      %v6226 = vld [vmem:[#allocation2 + $0xa8] sm:$0xf]
      %v6227 = vld [vmem:[#allocation2 + $0xb4] sm:$0xf]
      %v6228 = vld [vmem:[#allocation2 + $0xb8] sm:$0xf]
      %v6229 = vld [vmem:[#allocation2 + $0xc4] sm:$0xf]
      %v6230 = vld [vmem:[#allocation2 + $0xc8] sm:$0xf]
      %v6231 = vld [vmem:[#allocation2 + $0xd4] sm:$0xf]
      %v6232 = vld [vmem:[#allocation2 + $0xd8] sm:$0xf]
      %v6233 = vld [vmem:[#allocation2 + $0xe4] sm:$0xf]
      %v6234 = vld [vmem:[#allocation2 + $0xe8] sm:$0xf]
      %v6235 = vld [vmem:[#allocation2 + $0xf4] sm:$0xf]
      %v6236 = vld [vmem:[#allocation2 + $0xf8] sm:$0xf]
      %v6237 = vld [vmem:[#allocation2 + $0x104] sm:$0xf]
      %v6238 = vld [vmem:[#allocation2 + $0x108] sm:$0xf]
      %v6239 = vld [vmem:[#allocation2 + $0x114] sm:$0xf]
      %v6240 = vld [vmem:[#allocation2 + $0x118] sm:$0xf]
      %s6241 = scalar_lea.vmem %s6, 64
      %v6242 = vld [vmem:[%s6241] sm:$0xf]
      %v6243 = vld [vmem:[%s6241 + $0x4] sm:$0xf]
      %v6244 = vld [vmem:[%s6241 + $0x8] sm:$0xf]
      %v6245 = vld [vmem:[%s6241 + $0xc] sm:$0xf]
      %v6246 = vld [vmem:[%s6241 + $0x10] sm:$0xf]
      %v6247 = vld [vmem:[%s6241 + $0x14] sm:$0xf]
      %v6248 = vld [vmem:[%s6241 + $0x18] sm:$0xf]
      %v6249 = vld [vmem:[%s6241 + $0x1c] sm:$0xf]
      %v6250 = vld [vmem:[%s6241 + $0x20] sm:$0xf]
      %v6251 = vld [vmem:[%s6241 + $0x24] sm:$0xf]
      %v6252 = vld [vmem:[%s6241 + $0x28] sm:$0xf]
      %v6253 = vld [vmem:[%s6241 + $0x2c] sm:$0xf]
      %v6254 = vld [vmem:[%s6241 + $0x30] sm:$0xf]
      %v6255 = vld [vmem:[%s6241 + $0x34] sm:$0xf]
      %v6256 = vld [vmem:[%s6241 + $0x38] sm:$0xf]
      %v6257 = vld [vmem:[%s6241 + $0x3c] sm:$0xf]
      %v6290 = vunpack.c.l.b16 %v6205
      %v6291 = vunpack.c.l.b16 %v6206
      %v6292 = vunpack.c.l.b16 %v6207
      %v6293 = vunpack.c.l.b16 %v6208
      %v6294 = vunpack.c.l.b16 %v6209
      %v6295 = vunpack.c.l.b16 %v6210
      %v6296 = vunpack.c.l.b16 %v6211
      %v6297 = vunpack.c.l.b16 %v6212
      %v6298 = vunpack.c.l.b16 %v6213
      %v6299 = vunpack.c.l.b16 %v6214
      %v6300 = vunpack.c.l.b16 %v6215
      %v6301 = vunpack.c.l.b16 %v6216
      %v6302 = vunpack.c.l.b16 %v6217
      %v6303 = vunpack.c.l.b16 %v6218
      %v6304 = vunpack.c.l.b16 %v6219
      %v6305 = vunpack.c.l.b16 %v6220
      %v6306 = vunpack.c.l.b16 %v6221
      %v6307 = vunpack.c.l.b16 %v6222
      %v6308 = vunpack.c.l.b16 %v6223
      %v6309 = vunpack.c.l.b16 %v6224
      %v6310 = vunpack.c.l.b16 %v6225
      %v6311 = vunpack.c.l.b16 %v6226
      %v6312 = vunpack.c.l.b16 %v6227
      %v6313 = vunpack.c.l.b16 %v6228
      %v6314 = vunpack.c.l.b16 %v6229
      %v6315 = vunpack.c.l.b16 %v6230
      %v6316 = vunpack.c.l.b16 %v6231
      %v6317 = vunpack.c.l.b16 %v6232
      %v6318 = vunpack.c.l.b16 %v6233
      %v6319 = vunpack.c.l.b16 %v6234
      %v6320 = vunpack.c.l.b16 %v6235
      %v6321 = vunpack.c.l.b16 %v6236
      %v6322 = vpack.c.b16 %v6291, %v6290
      %v6323 = vpack.c.b16 %v6293, %v6292
      %v6324 = vpack.c.b16 %v6295, %v6294
      %v6325 = vpack.c.b16 %v6297, %v6296
      %v6326 = vpack.c.b16 %v6299, %v6298
      %v6327 = vpack.c.b16 %v6301, %v6300
      %v6328 = vpack.c.b16 %v6303, %v6302
      %v6329 = vpack.c.b16 %v6305, %v6304
      %v6330 = vpack.c.b16 %v6307, %v6306
      %v6331 = vpack.c.b16 %v6309, %v6308
      %v6332 = vpack.c.b16 %v6311, %v6310
      %v6333 = vpack.c.b16 %v6313, %v6312
      %v6334 = vpack.c.b16 %v6315, %v6314
      %v6335 = vpack.c.b16 %v6317, %v6316
      %v6336 = vpack.c.b16 %v6319, %v6318
      %v6337 = vpack.c.b16 %v6321, %v6320
      %v6370 = vunpack.c.l.b16 %v6242
      %v6371 = vunpack.c.l.b16 %v6243
      %v6372 = vunpack.c.l.b16 %v6244
      %v6373 = vunpack.c.l.b16 %v6245
      %v6374 = vunpack.c.l.b16 %v6246
      %v6375 = vunpack.c.l.b16 %v6247
      %v6376 = vunpack.c.l.b16 %v6248
      %v6377 = vunpack.c.l.b16 %v6249
      %v6378 = vunpack.c.l.b16 %v6250
      %v6379 = vunpack.c.l.b16 %v6251
      %v6380 = vunpack.c.l.b16 %v6252
      %v6381 = vunpack.c.l.b16 %v6253
      %v6382 = vunpack.c.l.b16 %v6254
      %v6383 = vunpack.c.l.b16 %v6255
      %v6384 = vunpack.c.l.b16 %v6256
      %v6385 = vunpack.c.l.b16 %v6257
      %v6386 = vpack.c.b16 %v6371, %v6370
      %v6387 = vpack.c.b16 %v6373, %v6372
      %v6388 = vpack.c.b16 %v6375, %v6374
      %v6389 = vpack.c.b16 %v6377, %v6376
      %v6390 = vpack.c.b16 %v6379, %v6378
      %v6391 = vpack.c.b16 %v6381, %v6380
      %v6392 = vpack.c.b16 %v6383, %v6382
      %v6393 = vpack.c.b16 %v6385, %v6384
      %6402 = vmatprep.subr.bf16.mxu0 0
      %6403 = vmatpush1.bf16.msra.mxu0 %v6393
      %6404 = vmatprep.subr.bf16.mxu0 0
      %6405 = vmatpush1.bf16.msra.mxu0 %v6392
      %6406 = vmatprep.subr.bf16.mxu0 0
      %6407 = vmatpush1.bf16.msra.mxu0 %v6391
      %6408 = vmatprep.subr.bf16.mxu0 0
      %6409 = vmatpush1.bf16.msra.mxu0 %v6390
      %6410 = vmatprep.subr.bf16.mxu0 0
      %6411 = vmatpush1.bf16.msra.mxu0 %v6389
      %6412 = vmatprep.subr.bf16.mxu0 0
      %6413 = vmatpush1.bf16.msra.mxu0 %v6388
      %6414 = vmatprep.subr.bf16.mxu0 0
      %6415 = vmatpush1.bf16.msra.mxu0 %v6387
      %6416 = vmatprep.subr.bf16.mxu0 0
      %6417 = vmatpush1.bf16.msra.mxu0 %v6386
      %6418 = vmatprep.subr.bf16.mxu0 0
      %6419 = vmatpush2.bf16.msra.mxu0 0
      %6420 = vmatprep.subr.bf16.mxu0 0
      %6421 = vmatpush2.bf16.msra.mxu0 0
      %6422 = vmatprep.subr.bf16.mxu0 0
      %6423 = vmatpush2.bf16.msra.mxu0 0
      %6424 = vmatprep.subr.bf16.mxu0 0
      %6425 = vmatpush2.bf16.msra.mxu0 0
      %6426 = vmatprep.subr.bf16.mxu0 0
      %6427 = vmatpush2.bf16.msra.mxu0 0
      %6428 = vmatprep.subr.bf16.mxu0 0
      %6429 = vmatpush2.bf16.msra.mxu0 0
      %6430 = vmatprep.subr.bf16.mxu0 0
      %6431 = vmatpush2.bf16.msra.mxu0 0
      %6432 = vmatprep.subr.bf16.mxu0 0
      %6433 = vmatpush2.bf16.msra.mxu0 0
      %6434 = vmatprep.mubr.bf16.mxu0 0
      %6435 = vmatmul.mubr.bf16.gmra.mxu0 %v6322
      %v6436 = vpop.f32.mrf.mxu0
      %v6437 = vadd.f32 0.0, %v6436
      %v6438 = vpop.f32.mrf.mxu0
      %v6439 = vpop.f32.mrf.mxu0
      %v6440 = vadd.f32 0.0, %v6439
      %v6441 = vpop.f32.mrf.mxu0
      %6442 = vmatprep.mubr.bf16.mxu0 0
      %6443 = vmatmul.mubr.bf16.gmra.mxu0 %v6323
      %v6444 = vpop.f32.mrf.mxu0
      %v6445 = vadd.f32 0.0, %v6444
      %v6446 = vpop.f32.mrf.mxu0
      %v6447 = vpop.f32.mrf.mxu0
      %v6448 = vadd.f32 0.0, %v6447
      %v6449 = vpop.f32.mrf.mxu0
      %6450 = vmatprep.mubr.bf16.mxu0 0
      %6451 = vmatmul.mubr.bf16.gmra.mxu0 %v6324
      %v6452 = vpop.f32.mrf.mxu0
      %v6453 = vadd.f32 0.0, %v6452
      %v6454 = vpop.f32.mrf.mxu0
      %v6455 = vpop.f32.mrf.mxu0
      %v6456 = vadd.f32 0.0, %v6455
      %v6457 = vpop.f32.mrf.mxu0
      %6458 = vmatprep.mubr.bf16.mxu0 0
      %6459 = vmatmul.mubr.bf16.gmra.mxu0 %v6325
      %v6460 = vpop.f32.mrf.mxu0
      %v6461 = vadd.f32 0.0, %v6460
      %v6462 = vpop.f32.mrf.mxu0
      %v6463 = vpop.f32.mrf.mxu0
      %v6464 = vadd.f32 0.0, %v6463
      %v6465 = vpop.f32.mrf.mxu0
      %6466 = vmatprep.mubr.bf16.mxu0 0
      %6467 = vmatmul.mubr.bf16.gmra.mxu0 %v6326
      %v6468 = vpop.f32.mrf.mxu0
      %v6469 = vadd.f32 0.0, %v6468
      %v6470 = vpop.f32.mrf.mxu0
      %v6471 = vpop.f32.mrf.mxu0
      %v6472 = vadd.f32 0.0, %v6471
      %v6473 = vpop.f32.mrf.mxu0
      %6474 = vmatprep.mubr.bf16.mxu0 0
      %6475 = vmatmul.mubr.bf16.gmra.mxu0 %v6327
      %v6476 = vpop.f32.mrf.mxu0
      %v6477 = vadd.f32 0.0, %v6476
      %v6478 = vpop.f32.mrf.mxu0
      %v6479 = vpop.f32.mrf.mxu0
      %v6480 = vadd.f32 0.0, %v6479
      %v6481 = vpop.f32.mrf.mxu0
      %6482 = vmatprep.mubr.bf16.mxu0 0
      %6483 = vmatmul.mubr.bf16.gmra.mxu0 %v6328
      %v6484 = vpop.f32.mrf.mxu0
      %v6485 = vadd.f32 0.0, %v6484
      %v6486 = vpop.f32.mrf.mxu0
      %v6487 = vpop.f32.mrf.mxu0
      %v6488 = vadd.f32 0.0, %v6487
      %v6489 = vpop.f32.mrf.mxu0
      %6490 = vmatprep.mubr.bf16.mxu0 0
      %6491 = vmatmul.mubr.bf16.gmra.mxu0 %v6329
      %v6492 = vpop.f32.mrf.mxu0
      %v6493 = vadd.f32 0.0, %v6492
      %v6494 = vpop.f32.mrf.mxu0
      %v6495 = vpop.f32.mrf.mxu0
      %v6496 = vadd.f32 0.0, %v6495
      %v6497 = vpop.f32.mrf.mxu0
      %6498 = vmatprep.mubr.bf16.mxu0 0
      %6499 = vmatmul.mubr.bf16.gmra.mxu0 %v6330
      %v6500 = vpop.f32.mrf.mxu0
      %v6501 = vadd.f32 0.0, %v6500
      %v6502 = vpop.f32.mrf.mxu0
      %v6503 = vpop.f32.mrf.mxu0
      %v6504 = vadd.f32 0.0, %v6503
      %v6505 = vpop.f32.mrf.mxu0
      %6506 = vmatprep.mubr.bf16.mxu0 0
      %6507 = vmatmul.mubr.bf16.gmra.mxu0 %v6331
      %v6508 = vpop.f32.mrf.mxu0
      %v6509 = vadd.f32 0.0, %v6508
      %v6510 = vpop.f32.mrf.mxu0
      %v6511 = vpop.f32.mrf.mxu0
      %v6512 = vadd.f32 0.0, %v6511
      %v6513 = vpop.f32.mrf.mxu0
      %6514 = vmatprep.mubr.bf16.mxu0 0
      %6515 = vmatmul.mubr.bf16.gmra.mxu0 %v6332
      %v6516 = vpop.f32.mrf.mxu0
      %v6517 = vadd.f32 0.0, %v6516
      %v6518 = vpop.f32.mrf.mxu0
      %v6519 = vpop.f32.mrf.mxu0
      %v6520 = vadd.f32 0.0, %v6519
      %v6521 = vpop.f32.mrf.mxu0
      %6522 = vmatprep.mubr.bf16.mxu0 0
      %6523 = vmatmul.mubr.bf16.gmra.mxu0 %v6333
      %v6524 = vpop.f32.mrf.mxu0
      %v6525 = vadd.f32 0.0, %v6524
      %v6526 = vpop.f32.mrf.mxu0
      %v6527 = vpop.f32.mrf.mxu0
      %v6528 = vadd.f32 0.0, %v6527
      %v6529 = vpop.f32.mrf.mxu0
      %6530 = vmatprep.mubr.bf16.mxu0 0
      %6531 = vmatmul.mubr.bf16.gmra.mxu0 %v6334
      %v6532 = vpop.f32.mrf.mxu0
      %v6533 = vadd.f32 0.0, %v6532
      %v6534 = vpop.f32.mrf.mxu0
      %v6535 = vpop.f32.mrf.mxu0
      %v6536 = vadd.f32 0.0, %v6535
      %v6537 = vpop.f32.mrf.mxu0
      %6538 = vmatprep.mubr.bf16.mxu0 0
      %6539 = vmatmul.mubr.bf16.gmra.mxu0 %v6335
      %v6540 = vpop.f32.mrf.mxu0
      %v6541 = vadd.f32 0.0, %v6540
      %v6542 = vpop.f32.mrf.mxu0
      %v6543 = vpop.f32.mrf.mxu0
      %v6544 = vadd.f32 0.0, %v6543
      %v6545 = vpop.f32.mrf.mxu0
      %6546 = vmatprep.mubr.bf16.mxu0 0
      %6547 = vmatmul.mubr.bf16.gmra.mxu0 %v6336
      %v6548 = vpop.f32.mrf.mxu0
      %v6549 = vadd.f32 0.0, %v6548
      %v6550 = vpop.f32.mrf.mxu0
      %v6551 = vpop.f32.mrf.mxu0
      %v6552 = vadd.f32 0.0, %v6551
      %v6553 = vpop.f32.mrf.mxu0
      %6554 = vmatprep.mubr.bf16.mxu0 0
      %6555 = vmatmul.mubr.bf16.gmra.mxu0 %v6337
      %v6556 = vpop.f32.mrf.mxu0
      %v6557 = vadd.f32 0.0, %v6556
      %v6558 = vpop.f32.mrf.mxu0
      %v6559 = vpop.f32.mrf.mxu0
      %v6560 = vadd.f32 0.0, %v6559
      %v6561 = vpop.f32.mrf.mxu0
      %6562 = vdwg.mxu0
      %v6563 = vld [vmem:[#allocation3] sm:$0xff]
      %v6564 = vld [vmem:[#allocation3 + $0x8] sm:$0xff]
      %v6565 = vld [vmem:[#allocation3 + $0x10] sm:$0xff]
      %v6566 = vld [vmem:[#allocation3 + $0x18] sm:$0xff]
      %v6567 = vld [vmem:[#allocation3 + $0x20] sm:$0xff]
      %v6568 = vld [vmem:[#allocation3 + $0x28] sm:$0xff]
      %v6569 = vld [vmem:[#allocation3 + $0x30] sm:$0xff]
      %v6570 = vld [vmem:[#allocation3 + $0x38] sm:$0xff]
      %v6571 = vld [vmem:[#allocation3 + $0x40] sm:$0xff]
      %v6572 = vld [vmem:[#allocation3 + $0x48] sm:$0xff]
      %v6573 = vld [vmem:[#allocation3 + $0x50] sm:$0xff]
      %v6574 = vld [vmem:[#allocation3 + $0x58] sm:$0xff]
      %v6575 = vld [vmem:[#allocation3 + $0x60] sm:$0xff]
      %v6576 = vld [vmem:[#allocation3 + $0x68] sm:$0xff]
      %v6577 = vld [vmem:[#allocation3 + $0x70] sm:$0xff]
      %v6578 = vld [vmem:[#allocation3 + $0x78] sm:$0xff]
      %v6579 = vld [vmem:[#allocation3 + $0x80] sm:$0xff]
      %v6580 = vld [vmem:[#allocation3 + $0x88] sm:$0xff]
      %v6581 = vld [vmem:[#allocation3 + $0x90] sm:$0xff]
      %v6582 = vld [vmem:[#allocation3 + $0x98] sm:$0xff]
      %v6583 = vld [vmem:[#allocation3 + $0xa0] sm:$0xff]
      %v6584 = vld [vmem:[#allocation3 + $0xa8] sm:$0xff]
      %v6585 = vld [vmem:[#allocation3 + $0xb0] sm:$0xff]
      %v6586 = vld [vmem:[#allocation3 + $0xb8] sm:$0xff]
      %v6587 = vld [vmem:[#allocation3 + $0xc0] sm:$0xff]
      %v6588 = vld [vmem:[#allocation3 + $0xc8] sm:$0xff]
      %v6589 = vld [vmem:[#allocation3 + $0xd0] sm:$0xff]
      %v6590 = vld [vmem:[#allocation3 + $0xd8] sm:$0xff]
      %v6591 = vld [vmem:[#allocation3 + $0xe0] sm:$0xff]
      %v6592 = vld [vmem:[#allocation3 + $0xe8] sm:$0xff]
      %v6593 = vld [vmem:[#allocation3 + $0xf0] sm:$0xff]
      %v6594 = vld [vmem:[#allocation3 + $0xf8] sm:$0xff]
      %v6595 = vadd.f32 %v6563, %v6437
      %v6596 = vadd.f32 %v6564, %v6440
      %v6597 = vadd.f32 %v6565, %v6445
      %v6598 = vadd.f32 %v6566, %v6448
      %v6599 = vadd.f32 %v6567, %v6453
      %v6600 = vadd.f32 %v6568, %v6456
      %v6601 = vadd.f32 %v6569, %v6461
      %v6602 = vadd.f32 %v6570, %v6464
      %v6603 = vadd.f32 %v6571, %v6469
      %v6604 = vadd.f32 %v6572, %v6472
      %v6605 = vadd.f32 %v6573, %v6477
      %v6606 = vadd.f32 %v6574, %v6480
      %v6607 = vadd.f32 %v6575, %v6485
      %v6608 = vadd.f32 %v6576, %v6488
      %v6609 = vadd.f32 %v6577, %v6493
      %v6610 = vadd.f32 %v6578, %v6496
      %v6611 = vadd.f32 %v6579, %v6501
      %v6612 = vadd.f32 %v6580, %v6504
      %v6613 = vadd.f32 %v6581, %v6509
      %v6614 = vadd.f32 %v6582, %v6512
      %v6615 = vadd.f32 %v6583, %v6517
      %v6616 = vadd.f32 %v6584, %v6520
      %v6617 = vadd.f32 %v6585, %v6525
      %v6618 = vadd.f32 %v6586, %v6528
      %v6619 = vadd.f32 %v6587, %v6533
      %v6620 = vadd.f32 %v6588, %v6536
      %v6621 = vadd.f32 %v6589, %v6541
      %v6622 = vadd.f32 %v6590, %v6544
      %v6623 = vadd.f32 %v6591, %v6549
      %v6624 = vadd.f32 %v6592, %v6552
      %v6625 = vadd.f32 %v6593, %v6557
      %v6626 = vadd.f32 %v6594, %v6560
      %6627 = vst [vmem:[#allocation3] sm:$0xff] %v6595
      %6628 = vst [vmem:[#allocation3 + $0x8] sm:$0xff] %v6596
      %6629 = vst [vmem:[#allocation3 + $0x10] sm:$0xff] %v6597
      %6630 = vst [vmem:[#allocation3 + $0x18] sm:$0xff] %v6598
      %6631 = vst [vmem:[#allocation3 + $0x20] sm:$0xff] %v6599
      %6632 = vst [vmem:[#allocation3 + $0x28] sm:$0xff] %v6600
      %6633 = vst [vmem:[#allocation3 + $0x30] sm:$0xff] %v6601
      %6634 = vst [vmem:[#allocation3 + $0x38] sm:$0xff] %v6602
      %6635 = vst [vmem:[#allocation3 + $0x40] sm:$0xff] %v6603
      %6636 = vst [vmem:[#allocation3 + $0x48] sm:$0xff] %v6604
      %6637 = vst [vmem:[#allocation3 + $0x50] sm:$0xff] %v6605
      %6638 = vst [vmem:[#allocation3 + $0x58] sm:$0xff] %v6606
      %6639 = vst [vmem:[#allocation3 + $0x60] sm:$0xff] %v6607
      %6640 = vst [vmem:[#allocation3 + $0x68] sm:$0xff] %v6608
      %6641 = vst [vmem:[#allocation3 + $0x70] sm:$0xff] %v6609
      %6642 = vst [vmem:[#allocation3 + $0x78] sm:$0xff] %v6610
      %6643 = vst [vmem:[#allocation3 + $0x80] sm:$0xff] %v6611
      %6644 = vst [vmem:[#allocation3 + $0x88] sm:$0xff] %v6612
      %6645 = vst [vmem:[#allocation3 + $0x90] sm:$0xff] %v6613
      %6646 = vst [vmem:[#allocation3 + $0x98] sm:$0xff] %v6614
      %6647 = vst [vmem:[#allocation3 + $0xa0] sm:$0xff] %v6615
      %6648 = vst [vmem:[#allocation3 + $0xa8] sm:$0xff] %v6616
      %6649 = vst [vmem:[#allocation3 + $0xb0] sm:$0xff] %v6617
      %6650 = vst [vmem:[#allocation3 + $0xb8] sm:$0xff] %v6618
      %6651 = vst [vmem:[#allocation3 + $0xc0] sm:$0xff] %v6619
      %6652 = vst [vmem:[#allocation3 + $0xc8] sm:$0xff] %v6620
      %6653 = vst [vmem:[#allocation3 + $0xd0] sm:$0xff] %v6621
      %6654 = vst [vmem:[#allocation3 + $0xd8] sm:$0xff] %v6622
      %6655 = vst [vmem:[#allocation3 + $0xe0] sm:$0xff] %v6623
      %6656 = vst [vmem:[#allocation3 + $0xe8] sm:$0xff] %v6624
      %6657 = vst [vmem:[#allocation3 + $0xf0] sm:$0xff] %v6625
      %6658 = vst [vmem:[#allocation3 + $0xf8] sm:$0xff] %v6626
      %s6659 = scalar_lea.vmem %s6, 256
      %v6660 = vld [vmem:[%s6659] sm:$0xf]
      %v6661 = vld [vmem:[%s6659 + $0x4] sm:$0xf]
      %v6662 = vld [vmem:[%s6659 + $0x8] sm:$0xf]
      %v6663 = vld [vmem:[%s6659 + $0xc] sm:$0xf]
      %v6664 = vld [vmem:[%s6659 + $0x10] sm:$0xf]
      %v6665 = vld [vmem:[%s6659 + $0x14] sm:$0xf]
      %v6666 = vld [vmem:[%s6659 + $0x18] sm:$0xf]
      %v6667 = vld [vmem:[%s6659 + $0x1c] sm:$0xf]
      %v6668 = vld [vmem:[%s6659 + $0x20] sm:$0xf]
      %v6669 = vld [vmem:[%s6659 + $0x24] sm:$0xf]
      %v6670 = vld [vmem:[%s6659 + $0x28] sm:$0xf]
      %v6671 = vld [vmem:[%s6659 + $0x2c] sm:$0xf]
      %v6672 = vld [vmem:[%s6659 + $0x30] sm:$0xf]
      %v6673 = vld [vmem:[%s6659 + $0x34] sm:$0xf]
      %v6674 = vld [vmem:[%s6659 + $0x38] sm:$0xf]
      %v6675 = vld [vmem:[%s6659 + $0x3c] sm:$0xf]
      %v6678 = vunpack.c.l.b16 %v6237
      %v6679 = vunpack.c.l.b16 %v6238
      %v6680 = vpack.c.b16 %v6679, %v6678
      %v6698 = vunpack.c.l.b16 %v6660
      %v6699 = vunpack.c.l.b16 %v6661
      %v6700 = vunpack.c.l.b16 %v6662
      %v6701 = vunpack.c.l.b16 %v6663
      %v6702 = vunpack.c.l.b16 %v6664
      %v6703 = vunpack.c.l.b16 %v6665
      %v6704 = vunpack.c.l.b16 %v6666
      %v6705 = vunpack.c.l.b16 %v6667
      %v6706 = vunpack.c.l.b16 %v6668
      %v6707 = vunpack.c.l.b16 %v6669
      %v6708 = vunpack.c.l.b16 %v6670
      %v6709 = vunpack.c.l.b16 %v6671
      %v6710 = vunpack.c.l.b16 %v6672
      %v6711 = vunpack.c.l.b16 %v6673
      %v6712 = vunpack.c.l.b16 %v6674
      %v6713 = vunpack.c.l.b16 %v6675
      %v6714 = vpack.c.b16 %v6699, %v6698
      %v6715 = vpack.c.b16 %v6701, %v6700
      %v6716 = vpack.c.b16 %v6703, %v6702
      %v6717 = vpack.c.b16 %v6705, %v6704
      %v6718 = vpack.c.b16 %v6707, %v6706
      %v6719 = vpack.c.b16 %v6709, %v6708
      %v6720 = vpack.c.b16 %v6711, %v6710
      %v6721 = vpack.c.b16 %v6713, %v6712
      %6730 = vmatprep.subr.bf16.mxu0 0
      %6731 = vmatpush1.bf16.msra.mxu0 %v6721
      %6732 = vmatprep.subr.bf16.mxu0 0
      %6733 = vmatpush1.bf16.msra.mxu0 %v6720
      %6734 = vmatprep.subr.bf16.mxu0 0
      %6735 = vmatpush1.bf16.msra.mxu0 %v6719
      %6736 = vmatprep.subr.bf16.mxu0 0
      %6737 = vmatpush1.bf16.msra.mxu0 %v6718
      %6738 = vmatprep.subr.bf16.mxu0 0
      %6739 = vmatpush1.bf16.msra.mxu0 %v6717
      %6740 = vmatprep.subr.bf16.mxu0 0
      %6741 = vmatpush1.bf16.msra.mxu0 %v6716
      %6742 = vmatprep.subr.bf16.mxu0 0
      %6743 = vmatpush1.bf16.msra.mxu0 %v6715
      %6744 = vmatprep.subr.bf16.mxu0 0
      %6745 = vmatpush1.bf16.msra.mxu0 %v6714
      %6746 = vmatprep.subr.bf16.mxu0 0
      %6747 = vmatpush2.bf16.msra.mxu0 0
      %6748 = vmatprep.subr.bf16.mxu0 0
      %6749 = vmatpush2.bf16.msra.mxu0 0
      %6750 = vmatprep.subr.bf16.mxu0 0
      %6751 = vmatpush2.bf16.msra.mxu0 0
      %6752 = vmatprep.subr.bf16.mxu0 0
      %6753 = vmatpush2.bf16.msra.mxu0 0
      %6754 = vmatprep.subr.bf16.mxu0 0
      %6755 = vmatpush2.bf16.msra.mxu0 0
      %6756 = vmatprep.subr.bf16.mxu0 0
      %6757 = vmatpush2.bf16.msra.mxu0 0
      %6758 = vmatprep.subr.bf16.mxu0 0
      %6759 = vmatpush2.bf16.msra.mxu0 0
      %6760 = vmatprep.subr.bf16.mxu0 0
      %6761 = vmatpush2.bf16.msra.mxu0 0
      %6762 = vmatprep.mubr.bf16.mxu0 0
      %6763 = vmatmul.mubr.bf16.gmra.mxu0 %v6323
      %v6764 = vpop.f32.mrf.mxu0
      %v6765 = vadd.f32 0.0, %v6764
      %v6766 = vpop.f32.mrf.mxu0
      %v6767 = vpop.f32.mrf.mxu0
      %v6768 = vadd.f32 0.0, %v6767
      %v6769 = vpop.f32.mrf.mxu0
      %6770 = vmatprep.mubr.bf16.mxu0 0
      %6771 = vmatmul.mubr.bf16.gmra.mxu0 %v6324
      %v6772 = vpop.f32.mrf.mxu0
      %v6773 = vadd.f32 0.0, %v6772
      %v6774 = vpop.f32.mrf.mxu0
      %v6775 = vpop.f32.mrf.mxu0
      %v6776 = vadd.f32 0.0, %v6775
      %v6777 = vpop.f32.mrf.mxu0
      %6778 = vmatprep.mubr.bf16.mxu0 0
      %6779 = vmatmul.mubr.bf16.gmra.mxu0 %v6325
      %v6780 = vpop.f32.mrf.mxu0
      %v6781 = vadd.f32 0.0, %v6780
      %v6782 = vpop.f32.mrf.mxu0
      %v6783 = vpop.f32.mrf.mxu0
      %v6784 = vadd.f32 0.0, %v6783
      %v6785 = vpop.f32.mrf.mxu0
      %6786 = vmatprep.mubr.bf16.mxu0 0
      %6787 = vmatmul.mubr.bf16.gmra.mxu0 %v6326
      %v6788 = vpop.f32.mrf.mxu0
      %v6789 = vadd.f32 0.0, %v6788
      %v6790 = vpop.f32.mrf.mxu0
      %v6791 = vpop.f32.mrf.mxu0
      %v6792 = vadd.f32 0.0, %v6791
      %v6793 = vpop.f32.mrf.mxu0
      %6794 = vmatprep.mubr.bf16.mxu0 0
      %6795 = vmatmul.mubr.bf16.gmra.mxu0 %v6327
      %v6796 = vpop.f32.mrf.mxu0
      %v6797 = vadd.f32 0.0, %v6796
      %v6798 = vpop.f32.mrf.mxu0
      %v6799 = vpop.f32.mrf.mxu0
      %v6800 = vadd.f32 0.0, %v6799
      %v6801 = vpop.f32.mrf.mxu0
      %6802 = vmatprep.mubr.bf16.mxu0 0
      %6803 = vmatmul.mubr.bf16.gmra.mxu0 %v6328
      %v6804 = vpop.f32.mrf.mxu0
      %v6805 = vadd.f32 0.0, %v6804
      %v6806 = vpop.f32.mrf.mxu0
      %v6807 = vpop.f32.mrf.mxu0
      %v6808 = vadd.f32 0.0, %v6807
      %v6809 = vpop.f32.mrf.mxu0
      %6810 = vmatprep.mubr.bf16.mxu0 0
      %6811 = vmatmul.mubr.bf16.gmra.mxu0 %v6329
      %v6812 = vpop.f32.mrf.mxu0
      %v6813 = vadd.f32 0.0, %v6812
      %v6814 = vpop.f32.mrf.mxu0
      %v6815 = vpop.f32.mrf.mxu0
      %v6816 = vadd.f32 0.0, %v6815
      %v6817 = vpop.f32.mrf.mxu0
      %6818 = vmatprep.mubr.bf16.mxu0 0
      %6819 = vmatmul.mubr.bf16.gmra.mxu0 %v6330
      %v6820 = vpop.f32.mrf.mxu0
      %v6821 = vadd.f32 0.0, %v6820
      %v6822 = vpop.f32.mrf.mxu0
      %v6823 = vpop.f32.mrf.mxu0
      %v6824 = vadd.f32 0.0, %v6823
      %v6825 = vpop.f32.mrf.mxu0
      %6826 = vmatprep.mubr.bf16.mxu0 0
      %6827 = vmatmul.mubr.bf16.gmra.mxu0 %v6331
      %v6828 = vpop.f32.mrf.mxu0
      %v6829 = vadd.f32 0.0, %v6828
      %v6830 = vpop.f32.mrf.mxu0
      %v6831 = vpop.f32.mrf.mxu0
      %v6832 = vadd.f32 0.0, %v6831
      %v6833 = vpop.f32.mrf.mxu0
      %6834 = vmatprep.mubr.bf16.mxu0 0
      %6835 = vmatmul.mubr.bf16.gmra.mxu0 %v6332
      %v6836 = vpop.f32.mrf.mxu0
      %v6837 = vadd.f32 0.0, %v6836
      %v6838 = vpop.f32.mrf.mxu0
      %v6839 = vpop.f32.mrf.mxu0
      %v6840 = vadd.f32 0.0, %v6839
      %v6841 = vpop.f32.mrf.mxu0
      %6842 = vmatprep.mubr.bf16.mxu0 0
      %6843 = vmatmul.mubr.bf16.gmra.mxu0 %v6333
      %v6844 = vpop.f32.mrf.mxu0
      %v6845 = vadd.f32 0.0, %v6844
      %v6846 = vpop.f32.mrf.mxu0
      %v6847 = vpop.f32.mrf.mxu0
      %v6848 = vadd.f32 0.0, %v6847
      %v6849 = vpop.f32.mrf.mxu0
      %6850 = vmatprep.mubr.bf16.mxu0 0
      %6851 = vmatmul.mubr.bf16.gmra.mxu0 %v6334
      %v6852 = vpop.f32.mrf.mxu0
      %v6853 = vadd.f32 0.0, %v6852
      %v6854 = vpop.f32.mrf.mxu0
      %v6855 = vpop.f32.mrf.mxu0
      %v6856 = vadd.f32 0.0, %v6855
      %v6857 = vpop.f32.mrf.mxu0
      %6858 = vmatprep.mubr.bf16.mxu0 0
      %6859 = vmatmul.mubr.bf16.gmra.mxu0 %v6335
      %v6860 = vpop.f32.mrf.mxu0
      %v6861 = vadd.f32 0.0, %v6860
      %v6862 = vpop.f32.mrf.mxu0
      %v6863 = vpop.f32.mrf.mxu0
      %v6864 = vadd.f32 0.0, %v6863
      %v6865 = vpop.f32.mrf.mxu0
      %6866 = vmatprep.mubr.bf16.mxu0 0
      %6867 = vmatmul.mubr.bf16.gmra.mxu0 %v6336
      %v6868 = vpop.f32.mrf.mxu0
      %v6869 = vadd.f32 0.0, %v6868
      %v6870 = vpop.f32.mrf.mxu0
      %v6871 = vpop.f32.mrf.mxu0
      %v6872 = vadd.f32 0.0, %v6871
      %v6873 = vpop.f32.mrf.mxu0
      %6874 = vmatprep.mubr.bf16.mxu0 0
      %6875 = vmatmul.mubr.bf16.gmra.mxu0 %v6337
      %v6876 = vpop.f32.mrf.mxu0
      %v6877 = vadd.f32 0.0, %v6876
      %v6878 = vpop.f32.mrf.mxu0
      %v6879 = vpop.f32.mrf.mxu0
      %v6880 = vadd.f32 0.0, %v6879
      %v6881 = vpop.f32.mrf.mxu0
      %6882 = vmatprep.mubr.bf16.mxu0 0
      %6883 = vmatmul.mubr.bf16.gmra.mxu0 %v6680
      %v6884 = vpop.f32.mrf.mxu0
      %v6885 = vadd.f32 0.0, %v6884
      %v6886 = vpop.f32.mrf.mxu0
      %v6887 = vpop.f32.mrf.mxu0
      %v6888 = vadd.f32 0.0, %v6887
      %v6889 = vpop.f32.mrf.mxu0
      %6890 = vdwg.mxu0
      %v6891 = vld [vmem:[#allocation3] sm:$0xff]
      %v6892 = vld [vmem:[#allocation3 + $0x8] sm:$0xff]
      %v6893 = vld [vmem:[#allocation3 + $0x10] sm:$0xff]
      %v6894 = vld [vmem:[#allocation3 + $0x18] sm:$0xff]
      %v6895 = vld [vmem:[#allocation3 + $0x20] sm:$0xff]
      %v6896 = vld [vmem:[#allocation3 + $0x28] sm:$0xff]
      %v6897 = vld [vmem:[#allocation3 + $0x30] sm:$0xff]
      %v6898 = vld [vmem:[#allocation3 + $0x38] sm:$0xff]
      %v6899 = vld [vmem:[#allocation3 + $0x40] sm:$0xff]
      %v6900 = vld [vmem:[#allocation3 + $0x48] sm:$0xff]
      %v6901 = vld [vmem:[#allocation3 + $0x50] sm:$0xff]
      %v6902 = vld [vmem:[#allocation3 + $0x58] sm:$0xff]
      %v6903 = vld [vmem:[#allocation3 + $0x60] sm:$0xff]
      %v6904 = vld [vmem:[#allocation3 + $0x68] sm:$0xff]
      %v6905 = vld [vmem:[#allocation3 + $0x70] sm:$0xff]
      %v6906 = vld [vmem:[#allocation3 + $0x78] sm:$0xff]
      %v6907 = vld [vmem:[#allocation3 + $0x80] sm:$0xff]
      %v6908 = vld [vmem:[#allocation3 + $0x88] sm:$0xff]
      %v6909 = vld [vmem:[#allocation3 + $0x90] sm:$0xff]
      %v6910 = vld [vmem:[#allocation3 + $0x98] sm:$0xff]
      %v6911 = vld [vmem:[#allocation3 + $0xa0] sm:$0xff]
      %v6912 = vld [vmem:[#allocation3 + $0xa8] sm:$0xff]
      %v6913 = vld [vmem:[#allocation3 + $0xb0] sm:$0xff]
      %v6914 = vld [vmem:[#allocation3 + $0xb8] sm:$0xff]
      %v6915 = vld [vmem:[#allocation3 + $0xc0] sm:$0xff]
      %v6916 = vld [vmem:[#allocation3 + $0xc8] sm:$0xff]
      %v6917 = vld [vmem:[#allocation3 + $0xd0] sm:$0xff]
      %v6918 = vld [vmem:[#allocation3 + $0xd8] sm:$0xff]
      %v6919 = vld [vmem:[#allocation3 + $0xe0] sm:$0xff]
      %v6920 = vld [vmem:[#allocation3 + $0xe8] sm:$0xff]
      %v6921 = vld [vmem:[#allocation3 + $0xf0] sm:$0xff]
      %v6922 = vld [vmem:[#allocation3 + $0xf8] sm:$0xff]
      %v6923 = vadd.f32 %v6891, %v6765
      %v6924 = vadd.f32 %v6892, %v6768
      %v6925 = vadd.f32 %v6893, %v6773
      %v6926 = vadd.f32 %v6894, %v6776
      %v6927 = vadd.f32 %v6895, %v6781
      %v6928 = vadd.f32 %v6896, %v6784
      %v6929 = vadd.f32 %v6897, %v6789
      %v6930 = vadd.f32 %v6898, %v6792
      %v6931 = vadd.f32 %v6899, %v6797
      %v6932 = vadd.f32 %v6900, %v6800
      %v6933 = vadd.f32 %v6901, %v6805
      %v6934 = vadd.f32 %v6902, %v6808
      %v6935 = vadd.f32 %v6903, %v6813
      %v6936 = vadd.f32 %v6904, %v6816
      %v6937 = vadd.f32 %v6905, %v6821
      %v6938 = vadd.f32 %v6906, %v6824
      %v6939 = vadd.f32 %v6907, %v6829
      %v6940 = vadd.f32 %v6908, %v6832
      %v6941 = vadd.f32 %v6909, %v6837
      %v6942 = vadd.f32 %v6910, %v6840
      %v6943 = vadd.f32 %v6911, %v6845
      %v6944 = vadd.f32 %v6912, %v6848
      %v6945 = vadd.f32 %v6913, %v6853
      %v6946 = vadd.f32 %v6914, %v6856
      %v6947 = vadd.f32 %v6915, %v6861
      %v6948 = vadd.f32 %v6916, %v6864
      %v6949 = vadd.f32 %v6917, %v6869
      %v6950 = vadd.f32 %v6918, %v6872
      %v6951 = vadd.f32 %v6919, %v6877
      %v6952 = vadd.f32 %v6920, %v6880
      %v6953 = vadd.f32 %v6921, %v6885
      %v6954 = vadd.f32 %v6922, %v6888
      %6955 = vst [vmem:[#allocation3] sm:$0xff] %v6923
      %6956 = vst [vmem:[#allocation3 + $0x8] sm:$0xff] %v6924
      %6957 = vst [vmem:[#allocation3 + $0x10] sm:$0xff] %v6925
      %6958 = vst [vmem:[#allocation3 + $0x18] sm:$0xff] %v6926
      %6959 = vst [vmem:[#allocation3 + $0x20] sm:$0xff] %v6927
      %6960 = vst [vmem:[#allocation3 + $0x28] sm:$0xff] %v6928
      %6961 = vst [vmem:[#allocation3 + $0x30] sm:$0xff] %v6929
      %6962 = vst [vmem:[#allocation3 + $0x38] sm:$0xff] %v6930
      %6963 = vst [vmem:[#allocation3 + $0x40] sm:$0xff] %v6931
      %6964 = vst [vmem:[#allocation3 + $0x48] sm:$0xff] %v6932
      %6965 = vst [vmem:[#allocation3 + $0x50] sm:$0xff] %v6933
      %6966 = vst [vmem:[#allocation3 + $0x58] sm:$0xff] %v6934
      %6967 = vst [vmem:[#allocation3 + $0x60] sm:$0xff] %v6935
      %6968 = vst [vmem:[#allocation3 + $0x68] sm:$0xff] %v6936
      %6969 = vst [vmem:[#allocation3 + $0x70] sm:$0xff] %v6937
      %6970 = vst [vmem:[#allocation3 + $0x78] sm:$0xff] %v6938
      %6971 = vst [vmem:[#allocation3 + $0x80] sm:$0xff] %v6939
      %6972 = vst [vmem:[#allocation3 + $0x88] sm:$0xff] %v6940
      %6973 = vst [vmem:[#allocation3 + $0x90] sm:$0xff] %v6941
      %6974 = vst [vmem:[#allocation3 + $0x98] sm:$0xff] %v6942
      %6975 = vst [vmem:[#allocation3 + $0xa0] sm:$0xff] %v6943
      %6976 = vst [vmem:[#allocation3 + $0xa8] sm:$0xff] %v6944
      %6977 = vst [vmem:[#allocation3 + $0xb0] sm:$0xff] %v6945
      %6978 = vst [vmem:[#allocation3 + $0xb8] sm:$0xff] %v6946
      %6979 = vst [vmem:[#allocation3 + $0xc0] sm:$0xff] %v6947
      %6980 = vst [vmem:[#allocation3 + $0xc8] sm:$0xff] %v6948
      %6981 = vst [vmem:[#allocation3 + $0xd0] sm:$0xff] %v6949
      %6982 = vst [vmem:[#allocation3 + $0xd8] sm:$0xff] %v6950
      %6983 = vst [vmem:[#allocation3 + $0xe0] sm:$0xff] %v6951
      %6984 = vst [vmem:[#allocation3 + $0xe8] sm:$0xff] %v6952
      %6985 = vst [vmem:[#allocation3 + $0xf0] sm:$0xff] %v6953
      %6986 = vst [vmem:[#allocation3 + $0xf8] sm:$0xff] %v6954
      %s6987 = scalar_lea.vmem %s6, 448
      %v6988 = vld [vmem:[%s6987] sm:$0xf]
      %v6989 = vld [vmem:[%s6987 + $0x4] sm:$0xf]
      %v6990 = vld [vmem:[%s6987 + $0x8] sm:$0xf]
      %v6991 = vld [vmem:[%s6987 + $0xc] sm:$0xf]
      %v6992 = vld [vmem:[%s6987 + $0x10] sm:$0xf]
      %v6993 = vld [vmem:[%s6987 + $0x14] sm:$0xf]
      %v6994 = vld [vmem:[%s6987 + $0x18] sm:$0xf]
      %v6995 = vld [vmem:[%s6987 + $0x1c] sm:$0xf]
      %v6996 = vld [vmem:[%s6987 + $0x20] sm:$0xf]
      %v6997 = vld [vmem:[%s6987 + $0x24] sm:$0xf]
      %v6998 = vld [vmem:[%s6987 + $0x28] sm:$0xf]
      %v6999 = vld [vmem:[%s6987 + $0x2c] sm:$0xf]
      %v7000 = vld [vmem:[%s6987 + $0x30] sm:$0xf]
      %v7001 = vld [vmem:[%s6987 + $0x34] sm:$0xf]
      %v7002 = vld [vmem:[%s6987 + $0x38] sm:$0xf]
      %v7003 = vld [vmem:[%s6987 + $0x3c] sm:$0xf]
      %v7006 = vunpack.c.l.b16 %v6239
      %v7007 = vunpack.c.l.b16 %v6240
      %v7008 = vpack.c.b16 %v7007, %v7006
      %v7026 = vunpack.c.l.b16 %v6988
      %v7027 = vunpack.c.l.b16 %v6989
      %v7028 = vunpack.c.l.b16 %v6990
      %v7029 = vunpack.c.l.b16 %v6991
      %v7030 = vunpack.c.l.b16 %v6992
      %v7031 = vunpack.c.l.b16 %v6993
      %v7032 = vunpack.c.l.b16 %v6994
      %v7033 = vunpack.c.l.b16 %v6995
      %v7034 = vunpack.c.l.b16 %v6996
      %v7035 = vunpack.c.l.b16 %v6997
      %v7036 = vunpack.c.l.b16 %v6998
      %v7037 = vunpack.c.l.b16 %v6999
      %v7038 = vunpack.c.l.b16 %v7000
      %v7039 = vunpack.c.l.b16 %v7001
      %v7040 = vunpack.c.l.b16 %v7002
      %v7041 = vunpack.c.l.b16 %v7003
      %v7042 = vpack.c.b16 %v7027, %v7026
      %v7043 = vpack.c.b16 %v7029, %v7028
      %v7044 = vpack.c.b16 %v7031, %v7030
      %v7045 = vpack.c.b16 %v7033, %v7032
      %v7046 = vpack.c.b16 %v7035, %v7034
      %v7047 = vpack.c.b16 %v7037, %v7036
      %v7048 = vpack.c.b16 %v7039, %v7038
      %v7049 = vpack.c.b16 %v7041, %v7040
      %7058 = vmatprep.subr.bf16.mxu0 0
      %7059 = vmatpush1.bf16.msra.mxu0 %v7049
      %7060 = vmatprep.subr.bf16.mxu0 0
      %7061 = vmatpush1.bf16.msra.mxu0 %v7048
      %7062 = vmatprep.subr.bf16.mxu0 0
      %7063 = vmatpush1.bf16.msra.mxu0 %v7047
      %7064 = vmatprep.subr.bf16.mxu0 0
      %7065 = vmatpush1.bf16.msra.mxu0 %v7046
      %7066 = vmatprep.subr.bf16.mxu0 0
      %7067 = vmatpush1.bf16.msra.mxu0 %v7045
      %7068 = vmatprep.subr.bf16.mxu0 0
      %7069 = vmatpush1.bf16.msra.mxu0 %v7044
      %7070 = vmatprep.subr.bf16.mxu0 0
      %7071 = vmatpush1.bf16.msra.mxu0 %v7043
      %7072 = vmatprep.subr.bf16.mxu0 0
      %7073 = vmatpush1.bf16.msra.mxu0 %v7042
      %7074 = vmatprep.subr.bf16.mxu0 0
      %7075 = vmatpush2.bf16.msra.mxu0 0
      %7076 = vmatprep.subr.bf16.mxu0 0
      %7077 = vmatpush2.bf16.msra.mxu0 0
      %7078 = vmatprep.subr.bf16.mxu0 0
      %7079 = vmatpush2.bf16.msra.mxu0 0
      %7080 = vmatprep.subr.bf16.mxu0 0
      %7081 = vmatpush2.bf16.msra.mxu0 0
      %7082 = vmatprep.subr.bf16.mxu0 0
      %7083 = vmatpush2.bf16.msra.mxu0 0
      %7084 = vmatprep.subr.bf16.mxu0 0
      %7085 = vmatpush2.bf16.msra.mxu0 0
      %7086 = vmatprep.subr.bf16.mxu0 0
      %7087 = vmatpush2.bf16.msra.mxu0 0
      %7088 = vmatprep.subr.bf16.mxu0 0
      %7089 = vmatpush2.bf16.msra.mxu0 0
      %7090 = vmatprep.mubr.bf16.mxu0 0
      %7091 = vmatmul.mubr.bf16.gmra.mxu0 %v6324
      %v7092 = vpop.f32.mrf.mxu0
      %v7093 = vadd.f32 0.0, %v7092
      %v7094 = vpop.f32.mrf.mxu0
      %v7095 = vpop.f32.mrf.mxu0
      %v7096 = vadd.f32 0.0, %v7095
      %v7097 = vpop.f32.mrf.mxu0
      %7098 = vmatprep.mubr.bf16.mxu0 0
      %7099 = vmatmul.mubr.bf16.gmra.mxu0 %v6325
      %v7100 = vpop.f32.mrf.mxu0
      %v7101 = vadd.f32 0.0, %v7100
      %v7102 = vpop.f32.mrf.mxu0
      %v7103 = vpop.f32.mrf.mxu0
      %v7104 = vadd.f32 0.0, %v7103
      %v7105 = vpop.f32.mrf.mxu0
      %7106 = vmatprep.mubr.bf16.mxu0 0
      %7107 = vmatmul.mubr.bf16.gmra.mxu0 %v6326
      %v7108 = vpop.f32.mrf.mxu0
      %v7109 = vadd.f32 0.0, %v7108
      %v7110 = vpop.f32.mrf.mxu0
      %v7111 = vpop.f32.mrf.mxu0
      %v7112 = vadd.f32 0.0, %v7111
      %v7113 = vpop.f32.mrf.mxu0
      %7114 = vmatprep.mubr.bf16.mxu0 0
      %7115 = vmatmul.mubr.bf16.gmra.mxu0 %v6327
      %v7116 = vpop.f32.mrf.mxu0
      %v7117 = vadd.f32 0.0, %v7116
      %v7118 = vpop.f32.mrf.mxu0
      %v7119 = vpop.f32.mrf.mxu0
      %v7120 = vadd.f32 0.0, %v7119
      %v7121 = vpop.f32.mrf.mxu0
      %7122 = vmatprep.mubr.bf16.mxu0 0
      %7123 = vmatmul.mubr.bf16.gmra.mxu0 %v6328
      %v7124 = vpop.f32.mrf.mxu0
      %v7125 = vadd.f32 0.0, %v7124
      %v7126 = vpop.f32.mrf.mxu0
      %v7127 = vpop.f32.mrf.mxu0
      %v7128 = vadd.f32 0.0, %v7127
      %v7129 = vpop.f32.mrf.mxu0
      %7130 = vmatprep.mubr.bf16.mxu0 0
      %7131 = vmatmul.mubr.bf16.gmra.mxu0 %v6329
      %v7132 = vpop.f32.mrf.mxu0
      %v7133 = vadd.f32 0.0, %v7132
      %v7134 = vpop.f32.mrf.mxu0
      %v7135 = vpop.f32.mrf.mxu0
      %v7136 = vadd.f32 0.0, %v7135
      %v7137 = vpop.f32.mrf.mxu0
      %7138 = vmatprep.mubr.bf16.mxu0 0
      %7139 = vmatmul.mubr.bf16.gmra.mxu0 %v6330
      %v7140 = vpop.f32.mrf.mxu0
      %v7141 = vadd.f32 0.0, %v7140
      %v7142 = vpop.f32.mrf.mxu0
      %v7143 = vpop.f32.mrf.mxu0
      %v7144 = vadd.f32 0.0, %v7143
      %v7145 = vpop.f32.mrf.mxu0
      %7146 = vmatprep.mubr.bf16.mxu0 0
      %7147 = vmatmul.mubr.bf16.gmra.mxu0 %v6331
      %v7148 = vpop.f32.mrf.mxu0
      %v7149 = vadd.f32 0.0, %v7148
      %v7150 = vpop.f32.mrf.mxu0
      %v7151 = vpop.f32.mrf.mxu0
      %v7152 = vadd.f32 0.0, %v7151
      %v7153 = vpop.f32.mrf.mxu0
      %7154 = vmatprep.mubr.bf16.mxu0 0
      %7155 = vmatmul.mubr.bf16.gmra.mxu0 %v6332
      %v7156 = vpop.f32.mrf.mxu0
      %v7157 = vadd.f32 0.0, %v7156
      %v7158 = vpop.f32.mrf.mxu0
      %v7159 = vpop.f32.mrf.mxu0
      %v7160 = vadd.f32 0.0, %v7159
      %v7161 = vpop.f32.mrf.mxu0
      %7162 = vmatprep.mubr.bf16.mxu0 0
      %7163 = vmatmul.mubr.bf16.gmra.mxu0 %v6333
      %v7164 = vpop.f32.mrf.mxu0
      %v7165 = vadd.f32 0.0, %v7164
      %v7166 = vpop.f32.mrf.mxu0
      %v7167 = vpop.f32.mrf.mxu0
      %v7168 = vadd.f32 0.0, %v7167
      %v7169 = vpop.f32.mrf.mxu0
      %7170 = vmatprep.mubr.bf16.mxu0 0
      %7171 = vmatmul.mubr.bf16.gmra.mxu0 %v6334
      %v7172 = vpop.f32.mrf.mxu0
      %v7173 = vadd.f32 0.0, %v7172
      %v7174 = vpop.f32.mrf.mxu0
      %v7175 = vpop.f32.mrf.mxu0
      %v7176 = vadd.f32 0.0, %v7175
      %v7177 = vpop.f32.mrf.mxu0
      %7178 = vmatprep.mubr.bf16.mxu0 0
      %7179 = vmatmul.mubr.bf16.gmra.mxu0 %v6335
      %v7180 = vpop.f32.mrf.mxu0
      %v7181 = vadd.f32 0.0, %v7180
      %v7182 = vpop.f32.mrf.mxu0
      %v7183 = vpop.f32.mrf.mxu0
      %v7184 = vadd.f32 0.0, %v7183
      %v7185 = vpop.f32.mrf.mxu0
      %7186 = vmatprep.mubr.bf16.mxu0 0
      %7187 = vmatmul.mubr.bf16.gmra.mxu0 %v6336
      %v7188 = vpop.f32.mrf.mxu0
      %v7189 = vadd.f32 0.0, %v7188
      %v7190 = vpop.f32.mrf.mxu0
      %v7191 = vpop.f32.mrf.mxu0
      %v7192 = vadd.f32 0.0, %v7191
      %v7193 = vpop.f32.mrf.mxu0
      %7194 = vmatprep.mubr.bf16.mxu0 0
      %7195 = vmatmul.mubr.bf16.gmra.mxu0 %v6337
      %v7196 = vpop.f32.mrf.mxu0
      %v7197 = vadd.f32 0.0, %v7196
      %v7198 = vpop.f32.mrf.mxu0
      %v7199 = vpop.f32.mrf.mxu0
      %v7200 = vadd.f32 0.0, %v7199
      %v7201 = vpop.f32.mrf.mxu0
      %7202 = vmatprep.mubr.bf16.mxu0 0
      %7203 = vmatmul.mubr.bf16.gmra.mxu0 %v6680
      %v7204 = vpop.f32.mrf.mxu0
      %v7205 = vadd.f32 0.0, %v7204
      %v7206 = vpop.f32.mrf.mxu0
      %v7207 = vpop.f32.mrf.mxu0
      %v7208 = vadd.f32 0.0, %v7207
      %v7209 = vpop.f32.mrf.mxu0
      %7210 = vmatprep.mubr.bf16.mxu0 0
      %7211 = vmatmul.mubr.bf16.gmra.mxu0 %v7008
      %v7212 = vpop.f32.mrf.mxu0
      %v7213 = vadd.f32 0.0, %v7212
      %v7214 = vpop.f32.mrf.mxu0
      %v7215 = vpop.f32.mrf.mxu0
      %v7216 = vadd.f32 0.0, %v7215
      %v7217 = vpop.f32.mrf.mxu0
      %7218 = vdwg.mxu0
      %v7219 = vld [vmem:[#allocation3] sm:$0xff]
      %v7220 = vld [vmem:[#allocation3 + $0x8] sm:$0xff]
      %v7221 = vld [vmem:[#allocation3 + $0x10] sm:$0xff]
      %v7222 = vld [vmem:[#allocation3 + $0x18] sm:$0xff]
      %v7223 = vld [vmem:[#allocation3 + $0x20] sm:$0xff]
      %v7224 = vld [vmem:[#allocation3 + $0x28] sm:$0xff]
      %v7225 = vld [vmem:[#allocation3 + $0x30] sm:$0xff]
      %v7226 = vld [vmem:[#allocation3 + $0x38] sm:$0xff]
      %v7227 = vld [vmem:[#allocation3 + $0x40] sm:$0xff]
      %v7228 = vld [vmem:[#allocation3 + $0x48] sm:$0xff]
      %v7229 = vld [vmem:[#allocation3 + $0x50] sm:$0xff]
      %v7230 = vld [vmem:[#allocation3 + $0x58] sm:$0xff]
      %v7231 = vld [vmem:[#allocation3 + $0x60] sm:$0xff]
      %v7232 = vld [vmem:[#allocation3 + $0x68] sm:$0xff]
      %v7233 = vld [vmem:[#allocation3 + $0x70] sm:$0xff]
      %v7234 = vld [vmem:[#allocation3 + $0x78] sm:$0xff]
      %v7235 = vld [vmem:[#allocation3 + $0x80] sm:$0xff]
      %v7236 = vld [vmem:[#allocation3 + $0x88] sm:$0xff]
      %v7237 = vld [vmem:[#allocation3 + $0x90] sm:$0xff]
      %v7238 = vld [vmem:[#allocation3 + $0x98] sm:$0xff]
      %v7239 = vld [vmem:[#allocation3 + $0xa0] sm:$0xff]
      %v7240 = vld [vmem:[#allocation3 + $0xa8] sm:$0xff]
      %v7241 = vld [vmem:[#allocation3 + $0xb0] sm:$0xff]
      %v7242 = vld [vmem:[#allocation3 + $0xb8] sm:$0xff]
      %v7243 = vld [vmem:[#allocation3 + $0xc0] sm:$0xff]
      %v7244 = vld [vmem:[#allocation3 + $0xc8] sm:$0xff]
      %v7245 = vld [vmem:[#allocation3 + $0xd0] sm:$0xff]
      %v7246 = vld [vmem:[#allocation3 + $0xd8] sm:$0xff]
      %v7247 = vld [vmem:[#allocation3 + $0xe0] sm:$0xff]
      %v7248 = vld [vmem:[#allocation3 + $0xe8] sm:$0xff]
      %v7249 = vld [vmem:[#allocation3 + $0xf0] sm:$0xff]
      %v7250 = vld [vmem:[#allocation3 + $0xf8] sm:$0xff]
      %v7251 = vadd.f32 %v7219, %v7093
      %v7252 = vadd.f32 %v7220, %v7096
      %v7253 = vadd.f32 %v7221, %v7101
      %v7254 = vadd.f32 %v7222, %v7104
      %v7255 = vadd.f32 %v7223, %v7109
      %v7256 = vadd.f32 %v7224, %v7112
      %v7257 = vadd.f32 %v7225, %v7117
      %v7258 = vadd.f32 %v7226, %v7120
      %v7259 = vadd.f32 %v7227, %v7125
      %v7260 = vadd.f32 %v7228, %v7128
      %v7261 = vadd.f32 %v7229, %v7133
      %v7262 = vadd.f32 %v7230, %v7136
      %v7263 = vadd.f32 %v7231, %v7141
      %v7264 = vadd.f32 %v7232, %v7144
      %v7265 = vadd.f32 %v7233, %v7149
      %v7266 = vadd.f32 %v7234, %v7152
      %v7267 = vadd.f32 %v7235, %v7157
      %v7268 = vadd.f32 %v7236, %v7160
      %v7269 = vadd.f32 %v7237, %v7165
      %v7270 = vadd.f32 %v7238, %v7168
      %v7271 = vadd.f32 %v7239, %v7173
      %v7272 = vadd.f32 %v7240, %v7176
      %v7273 = vadd.f32 %v7241, %v7181
      %v7274 = vadd.f32 %v7242, %v7184
      %v7275 = vadd.f32 %v7243, %v7189
      %v7276 = vadd.f32 %v7244, %v7192
      %v7277 = vadd.f32 %v7245, %v7197
      %v7278 = vadd.f32 %v7246, %v7200
      %v7279 = vadd.f32 %v7247, %v7205
      %v7280 = vadd.f32 %v7248, %v7208
      %v7281 = vadd.f32 %v7249, %v7213
      %v7282 = vadd.f32 %v7250, %v7216
      %7283 = vst [vmem:[#allocation3] sm:$0xff] %v7251
      %7284 = vst [vmem:[#allocation3 + $0x8] sm:$0xff] %v7252
      %7285 = vst [vmem:[#allocation3 + $0x10] sm:$0xff] %v7253
      %7286 = vst [vmem:[#allocation3 + $0x18] sm:$0xff] %v7254
      %7287 = vst [vmem:[#allocation3 + $0x20] sm:$0xff] %v7255
      %7288 = vst [vmem:[#allocation3 + $0x28] sm:$0xff] %v7256
      %7289 = vst [vmem:[#allocation3 + $0x30] sm:$0xff] %v7257
      %7290 = vst [vmem:[#allocation3 + $0x38] sm:$0xff] %v7258
      %7291 = vst [vmem:[#allocation3 + $0x40] sm:$0xff] %v7259
      %7292 = vst [vmem:[#allocation3 + $0x48] sm:$0xff] %v7260
      %7293 = vst [vmem:[#allocation3 + $0x50] sm:$0xff] %v7261
      %7294 = vst [vmem:[#allocation3 + $0x58] sm:$0xff] %v7262
      %7295 = vst [vmem:[#allocation3 + $0x60] sm:$0xff] %v7263
      %7296 = vst [vmem:[#allocation3 + $0x68] sm:$0xff] %v7264
      %7297 = vst [vmem:[#allocation3 + $0x70] sm:$0xff] %v7265
      %7298 = vst [vmem:[#allocation3 + $0x78] sm:$0xff] %v7266
      %7299 = vst [vmem:[#allocation3 + $0x80] sm:$0xff] %v7267
      %7300 = vst [vmem:[#allocation3 + $0x88] sm:$0xff] %v7268
      %7301 = vst [vmem:[#allocation3 + $0x90] sm:$0xff] %v7269
      %7302 = vst [vmem:[#allocation3 + $0x98] sm:$0xff] %v7270
      %7303 = vst [vmem:[#allocation3 + $0xa0] sm:$0xff] %v7271
      %7304 = vst [vmem:[#allocation3 + $0xa8] sm:$0xff] %v7272
      %7305 = vst [vmem:[#allocation3 + $0xb0] sm:$0xff] %v7273
      %7306 = vst [vmem:[#allocation3 + $0xb8] sm:$0xff] %v7274
      %7307 = vst [vmem:[#allocation3 + $0xc0] sm:$0xff] %v7275
      %7308 = vst [vmem:[#allocation3 + $0xc8] sm:$0xff] %v7276
      %7309 = vst [vmem:[#allocation3 + $0xd0] sm:$0xff] %v7277
      %7310 = vst [vmem:[#allocation3 + $0xd8] sm:$0xff] %v7278
      %7311 = vst [vmem:[#allocation3 + $0xe0] sm:$0xff] %v7279
      %7312 = vst [vmem:[#allocation3 + $0xe8] sm:$0xff] %v7280
      %7313 = vst [vmem:[#allocation3 + $0xf0] sm:$0xff] %v7281
      %7314 = vst [vmem:[#allocation3 + $0xf8] sm:$0xff] %v7282
      %v7315 = vld [vmem:[#allocation2 + $0x4] sm:$0xf]
      %v7316 = vld [vmem:[#allocation2 + $0x8] sm:$0xf]
      %v7317 = vld [vmem:[#allocation2 + $0xc] sm:$0x1]
      %v7318 = vld [vmem:[#allocation2 + $0x14] sm:$0xf]
      %v7319 = vld [vmem:[#allocation2 + $0x18] sm:$0xf]
      %v7320 = vld [vmem:[#allocation2 + $0x1c] sm:$0x1]
      %v7321 = vld [vmem:[#allocation2 + $0x24] sm:$0xf]
      %v7322 = vld [vmem:[#allocation2 + $0x28] sm:$0xf]
      %v7323 = vld [vmem:[#allocation2 + $0x2c] sm:$0x1]
      %v7324 = vld [vmem:[#allocation2 + $0x34] sm:$0xf]
      %v7325 = vld [vmem:[#allocation2 + $0x38] sm:$0xf]
      %v7326 = vld [vmem:[#allocation2 + $0x3c] sm:$0x1]
      %v7327 = vld [vmem:[#allocation2 + $0x44] sm:$0xf]
      %v7328 = vld [vmem:[#allocation2 + $0x48] sm:$0xf]
      %v7329 = vld [vmem:[#allocation2 + $0x4c] sm:$0x1]
      %v7330 = vld [vmem:[#allocation2 + $0x54] sm:$0xf]
      %v7331 = vld [vmem:[#allocation2 + $0x58] sm:$0xf]
      %v7332 = vld [vmem:[#allocation2 + $0x5c] sm:$0x1]
      %v7333 = vld [vmem:[#allocation2 + $0x64] sm:$0xf]
      %v7334 = vld [vmem:[#allocation2 + $0x68] sm:$0xf]
      %v7335 = vld [vmem:[#allocation2 + $0x6c] sm:$0x1]
      %v7336 = vld [vmem:[#allocation2 + $0x74] sm:$0xf]
      %v7337 = vld [vmem:[#allocation2 + $0x78] sm:$0xf]
      %v7338 = vld [vmem:[#allocation2 + $0x7c] sm:$0x1]
      %v7339 = vld [vmem:[#allocation2 + $0x84] sm:$0xf]
      %v7340 = vld [vmem:[#allocation2 + $0x88] sm:$0xf]
      %v7341 = vld [vmem:[#allocation2 + $0x8c] sm:$0x1]
      %v7342 = vld [vmem:[#allocation2 + $0x94] sm:$0xf]
      %v7343 = vld [vmem:[#allocation2 + $0x98] sm:$0xf]
      %v7344 = vld [vmem:[#allocation2 + $0x9c] sm:$0x1]
      %v7345 = vld [vmem:[#allocation2 + $0xa4] sm:$0xf]
      %v7346 = vld [vmem:[#allocation2 + $0xa8] sm:$0xf]
      %v7347 = vld [vmem:[#allocation2 + $0xac] sm:$0x1]
      %v7348 = vld [vmem:[#allocation2 + $0xb4] sm:$0xf]
      %v7349 = vld [vmem:[#allocation2 + $0xb8] sm:$0xf]
      %v7350 = vld [vmem:[#allocation2 + $0xbc] sm:$0x1]
      %v7351 = vld [vmem:[#allocation2 + $0xc4] sm:$0xf]
      %v7352 = vld [vmem:[#allocation2 + $0xc8] sm:$0xf]
      %v7353 = vld [vmem:[#allocation2 + $0xcc] sm:$0x1]
      %v7354 = vld [vmem:[#allocation2 + $0xd4] sm:$0xf]
      %v7355 = vld [vmem:[#allocation2 + $0xd8] sm:$0xf]
      %v7356 = vld [vmem:[#allocation2 + $0xdc] sm:$0x1]
      %v7357 = vld [vmem:[#allocation2 + $0xe4] sm:$0xf]
      %v7358 = vld [vmem:[#allocation2 + $0xe8] sm:$0xf]
      %v7359 = vld [vmem:[#allocation2 + $0xec] sm:$0x1]
      %v7360 = vld [vmem:[#allocation2 + $0xf4] sm:$0xf]
      %v7361 = vld [vmem:[#allocation2 + $0xf8] sm:$0xf]
      %v7362 = vld [vmem:[#allocation2 + $0xfc] sm:$0x1]
      %v7363 = vld [vmem:[#allocation2 + $0x104] sm:$0xf]
      %v7364 = vld [vmem:[#allocation2 + $0x108] sm:$0xf]
      %v7365 = vld [vmem:[#allocation2 + $0x10c] sm:$0x1]
      %v7366 = vld [vmem:[#allocation2 + $0x114] sm:$0xf]
      %v7367 = vld [vmem:[#allocation2 + $0x118] sm:$0xf]
      %v7368 = vld [vmem:[#allocation2 + $0x11c] sm:$0x1]
      %v7370 = vshrl.u32 %v7315, 16
      %v7372 = vrot.slane %v7370, 4
      %v7373 = vshll.u32 %v7315, 16
      %v7375 = vrot.slane %v7373, 5
      %v7376 = vor.u32 %v7372, %v7375
      %v7377 = vrot.slane %v7376, 4
      %v7379 = vshll.u32 %v7316, 16
      %v7381 = vrot.slane %v7379, 5
      %v7382 = vsel %vm1476, %v7377, %v7381
      %v7383 = vshrl.u32 %v7316, 16
      %v7385 = vrot.slane %v7383, 4
      %v7386 = vor.u32 %v7385, %v7381
      %v7387 = vrot.slane %v7386, 4
      %v7389 = vshll.u32 %v7317, 16
      %v7391 = vrot.slane %v7389, 5
      %v7392 = vsel %vm1476, %v7387, %v7391
      %v7394 = vshrl.u32 %v7318, 16
      %v7396 = vrot.slane %v7394, 4
      %v7397 = vshll.u32 %v7318, 16
      %v7399 = vrot.slane %v7397, 5
      %v7400 = vor.u32 %v7396, %v7399
      %v7401 = vrot.slane %v7400, 4
      %v7403 = vshll.u32 %v7319, 16
      %v7405 = vrot.slane %v7403, 5
      %v7406 = vsel %vm1476, %v7401, %v7405
      %v7407 = vshrl.u32 %v7319, 16
      %v7409 = vrot.slane %v7407, 4
      %v7410 = vor.u32 %v7409, %v7405
      %v7411 = vrot.slane %v7410, 4
      %v7413 = vshll.u32 %v7320, 16
      %v7415 = vrot.slane %v7413, 5
      %v7416 = vsel %vm1476, %v7411, %v7415
      %v7418 = vshrl.u32 %v7321, 16
      %v7420 = vrot.slane %v7418, 4
      %v7421 = vshll.u32 %v7321, 16
      %v7423 = vrot.slane %v7421, 5
      %v7424 = vor.u32 %v7420, %v7423
      %v7425 = vrot.slane %v7424, 4
      %v7427 = vshll.u32 %v7322, 16
      %v7429 = vrot.slane %v7427, 5
      %v7430 = vsel %vm1476, %v7425, %v7429
      %v7431 = vshrl.u32 %v7322, 16
      %v7433 = vrot.slane %v7431, 4
      %v7434 = vor.u32 %v7433, %v7429
      %v7435 = vrot.slane %v7434, 4
      %v7437 = vshll.u32 %v7323, 16
      %v7439 = vrot.slane %v7437, 5
      %v7440 = vsel %vm1476, %v7435, %v7439
      %v7442 = vshrl.u32 %v7324, 16
      %v7444 = vrot.slane %v7442, 4
      %v7445 = vshll.u32 %v7324, 16
      %v7447 = vrot.slane %v7445, 5
      %v7448 = vor.u32 %v7444, %v7447
      %v7449 = vrot.slane %v7448, 4
      %v7451 = vshll.u32 %v7325, 16
      %v7453 = vrot.slane %v7451, 5
      %v7454 = vsel %vm1476, %v7449, %v7453
      %v7455 = vshrl.u32 %v7325, 16
      %v7457 = vrot.slane %v7455, 4
      %v7458 = vor.u32 %v7457, %v7453
      %v7459 = vrot.slane %v7458, 4
      %v7461 = vshll.u32 %v7326, 16
      %v7463 = vrot.slane %v7461, 5
      %v7464 = vsel %vm1476, %v7459, %v7463
      %v7466 = vshrl.u32 %v7327, 16
      %v7468 = vrot.slane %v7466, 4
      %v7469 = vshll.u32 %v7327, 16
      %v7471 = vrot.slane %v7469, 5
      %v7472 = vor.u32 %v7468, %v7471
      %v7473 = vrot.slane %v7472, 4
      %v7475 = vshll.u32 %v7328, 16
      %v7477 = vrot.slane %v7475, 5
      %v7478 = vsel %vm1476, %v7473, %v7477
      %v7479 = vshrl.u32 %v7328, 16
      %v7481 = vrot.slane %v7479, 4
      %v7482 = vor.u32 %v7481, %v7477
      %v7483 = vrot.slane %v7482, 4
      %v7485 = vshll.u32 %v7329, 16
      %v7487 = vrot.slane %v7485, 5
      %v7488 = vsel %vm1476, %v7483, %v7487
      %v7490 = vshrl.u32 %v7330, 16
      %v7492 = vrot.slane %v7490, 4
      %v7493 = vshll.u32 %v7330, 16
      %v7495 = vrot.slane %v7493, 5
      %v7496 = vor.u32 %v7492, %v7495
      %v7497 = vrot.slane %v7496, 4
      %v7499 = vshll.u32 %v7331, 16
      %v7501 = vrot.slane %v7499, 5
      %v7502 = vsel %vm1476, %v7497, %v7501
      %v7503 = vshrl.u32 %v7331, 16
      %v7505 = vrot.slane %v7503, 4
      %v7506 = vor.u32 %v7505, %v7501
      %v7507 = vrot.slane %v7506, 4
      %v7509 = vshll.u32 %v7332, 16
      %v7511 = vrot.slane %v7509, 5
      %v7512 = vsel %vm1476, %v7507, %v7511
      %v7514 = vshrl.u32 %v7333, 16
      %v7516 = vrot.slane %v7514, 4
      %v7517 = vshll.u32 %v7333, 16
      %v7519 = vrot.slane %v7517, 5
      %v7520 = vor.u32 %v7516, %v7519
      %v7521 = vrot.slane %v7520, 4
      %v7523 = vshll.u32 %v7334, 16
      %v7525 = vrot.slane %v7523, 5
      %v7526 = vsel %vm1476, %v7521, %v7525
      %v7527 = vshrl.u32 %v7334, 16
      %v7529 = vrot.slane %v7527, 4
      %v7530 = vor.u32 %v7529, %v7525
      %v7531 = vrot.slane %v7530, 4
      %v7533 = vshll.u32 %v7335, 16
      %v7535 = vrot.slane %v7533, 5
      %v7536 = vsel %vm1476, %v7531, %v7535
      %v7538 = vshrl.u32 %v7336, 16
      %v7540 = vrot.slane %v7538, 4
      %v7541 = vshll.u32 %v7336, 16
      %v7543 = vrot.slane %v7541, 5
      %v7544 = vor.u32 %v7540, %v7543
      %v7545 = vrot.slane %v7544, 4
      %v7547 = vshll.u32 %v7337, 16
      %v7549 = vrot.slane %v7547, 5
      %v7550 = vsel %vm1476, %v7545, %v7549
      %v7551 = vshrl.u32 %v7337, 16
      %v7553 = vrot.slane %v7551, 4
      %v7554 = vor.u32 %v7553, %v7549
      %v7555 = vrot.slane %v7554, 4
      %v7557 = vshll.u32 %v7338, 16
      %v7559 = vrot.slane %v7557, 5
      %v7560 = vsel %vm1476, %v7555, %v7559
      %v7562 = vshrl.u32 %v7339, 16
      %v7564 = vrot.slane %v7562, 4
      %v7565 = vshll.u32 %v7339, 16
      %v7567 = vrot.slane %v7565, 5
      %v7568 = vor.u32 %v7564, %v7567
      %v7569 = vrot.slane %v7568, 4
      %v7571 = vshll.u32 %v7340, 16
      %v7573 = vrot.slane %v7571, 5
      %v7574 = vsel %vm1476, %v7569, %v7573
      %v7575 = vshrl.u32 %v7340, 16
      %v7577 = vrot.slane %v7575, 4
      %v7578 = vor.u32 %v7577, %v7573
      %v7579 = vrot.slane %v7578, 4
      %v7581 = vshll.u32 %v7341, 16
      %v7583 = vrot.slane %v7581, 5
      %v7584 = vsel %vm1476, %v7579, %v7583
      %v7586 = vshrl.u32 %v7342, 16
      %v7588 = vrot.slane %v7586, 4
      %v7589 = vshll.u32 %v7342, 16
      %v7591 = vrot.slane %v7589, 5
      %v7592 = vor.u32 %v7588, %v7591
      %v7593 = vrot.slane %v7592, 4
      %v7595 = vshll.u32 %v7343, 16
      %v7597 = vrot.slane %v7595, 5
      %v7598 = vsel %vm1476, %v7593, %v7597
      %v7599 = vshrl.u32 %v7343, 16
      %v7601 = vrot.slane %v7599, 4
      %v7602 = vor.u32 %v7601, %v7597
      %v7603 = vrot.slane %v7602, 4
      %v7605 = vshll.u32 %v7344, 16
      %v7607 = vrot.slane %v7605, 5
      %v7608 = vsel %vm1476, %v7603, %v7607
      %v7610 = vshrl.u32 %v7345, 16
      %v7612 = vrot.slane %v7610, 4
      %v7613 = vshll.u32 %v7345, 16
      %v7615 = vrot.slane %v7613, 5
      %v7616 = vor.u32 %v7612, %v7615
      %v7617 = vrot.slane %v7616, 4
      %v7619 = vshll.u32 %v7346, 16
      %v7621 = vrot.slane %v7619, 5
      %v7622 = vsel %vm1476, %v7617, %v7621
      %v7623 = vshrl.u32 %v7346, 16
      %v7625 = vrot.slane %v7623, 4
      %v7626 = vor.u32 %v7625, %v7621
      %v7627 = vrot.slane %v7626, 4
      %v7629 = vshll.u32 %v7347, 16
      %v7631 = vrot.slane %v7629, 5
      %v7632 = vsel %vm1476, %v7627, %v7631
      %v7634 = vshrl.u32 %v7348, 16
      %v7636 = vrot.slane %v7634, 4
      %v7637 = vshll.u32 %v7348, 16
      %v7639 = vrot.slane %v7637, 5
      %v7640 = vor.u32 %v7636, %v7639
      %v7641 = vrot.slane %v7640, 4
      %v7643 = vshll.u32 %v7349, 16
      %v7645 = vrot.slane %v7643, 5
      %v7646 = vsel %vm1476, %v7641, %v7645
      %v7647 = vshrl.u32 %v7349, 16
      %v7649 = vrot.slane %v7647, 4
      %v7650 = vor.u32 %v7649, %v7645
      %v7651 = vrot.slane %v7650, 4
      %v7653 = vshll.u32 %v7350, 16
      %v7655 = vrot.slane %v7653, 5
      %v7656 = vsel %vm1476, %v7651, %v7655
      %v7658 = vshrl.u32 %v7351, 16
      %v7660 = vrot.slane %v7658, 4
      %v7661 = vshll.u32 %v7351, 16
      %v7663 = vrot.slane %v7661, 5
      %v7664 = vor.u32 %v7660, %v7663
      %v7665 = vrot.slane %v7664, 4
      %v7667 = vshll.u32 %v7352, 16
      %v7669 = vrot.slane %v7667, 5
      %v7670 = vsel %vm1476, %v7665, %v7669
      %v7671 = vshrl.u32 %v7352, 16
      %v7673 = vrot.slane %v7671, 4
      %v7674 = vor.u32 %v7673, %v7669
      %v7675 = vrot.slane %v7674, 4
      %v7677 = vshll.u32 %v7353, 16
      %v7679 = vrot.slane %v7677, 5
      %v7680 = vsel %vm1476, %v7675, %v7679
      %v7682 = vshrl.u32 %v7354, 16
      %v7684 = vrot.slane %v7682, 4
      %v7685 = vshll.u32 %v7354, 16
      %v7687 = vrot.slane %v7685, 5
      %v7688 = vor.u32 %v7684, %v7687
      %v7689 = vrot.slane %v7688, 4
      %v7691 = vshll.u32 %v7355, 16
      %v7693 = vrot.slane %v7691, 5
      %v7694 = vsel %vm1476, %v7689, %v7693
      %v7695 = vshrl.u32 %v7355, 16
      %v7697 = vrot.slane %v7695, 4
      %v7698 = vor.u32 %v7697, %v7693
      %v7699 = vrot.slane %v7698, 4
      %v7701 = vshll.u32 %v7356, 16
      %v7703 = vrot.slane %v7701, 5
      %v7704 = vsel %vm1476, %v7699, %v7703
      %v7706 = vshrl.u32 %v7357, 16
      %v7708 = vrot.slane %v7706, 4
      %v7709 = vshll.u32 %v7357, 16
      %v7711 = vrot.slane %v7709, 5
      %v7712 = vor.u32 %v7708, %v7711
      %v7713 = vrot.slane %v7712, 4
      %v7715 = vshll.u32 %v7358, 16
      %v7717 = vrot.slane %v7715, 5
      %v7718 = vsel %vm1476, %v7713, %v7717
      %v7719 = vshrl.u32 %v7358, 16
      %v7721 = vrot.slane %v7719, 4
      %v7722 = vor.u32 %v7721, %v7717
      %v7723 = vrot.slane %v7722, 4
      %v7725 = vshll.u32 %v7359, 16
      %v7727 = vrot.slane %v7725, 5
      %v7728 = vsel %vm1476, %v7723, %v7727
      %v7730 = vshrl.u32 %v7360, 16
      %v7732 = vrot.slane %v7730, 4
      %v7733 = vshll.u32 %v7360, 16
      %v7735 = vrot.slane %v7733, 5
      %v7736 = vor.u32 %v7732, %v7735
      %v7737 = vrot.slane %v7736, 4
      %v7739 = vshll.u32 %v7361, 16
      %v7741 = vrot.slane %v7739, 5
      %v7742 = vsel %vm1476, %v7737, %v7741
      %v7743 = vshrl.u32 %v7361, 16
      %v7745 = vrot.slane %v7743, 4
      %v7746 = vor.u32 %v7745, %v7741
      %v7747 = vrot.slane %v7746, 4
      %v7749 = vshll.u32 %v7362, 16
      %v7751 = vrot.slane %v7749, 5
      %v7752 = vsel %vm1476, %v7747, %v7751
      %v7754 = vshrl.u32 %v7363, 16
      %v7756 = vrot.slane %v7754, 4
      %v7757 = vshll.u32 %v7363, 16
      %v7759 = vrot.slane %v7757, 5
      %v7760 = vor.u32 %v7756, %v7759
      %v7761 = vrot.slane %v7760, 4
      %v7763 = vshll.u32 %v7364, 16
      %v7765 = vrot.slane %v7763, 5
      %v7766 = vsel %vm1476, %v7761, %v7765
      %v7767 = vshrl.u32 %v7364, 16
      %v7769 = vrot.slane %v7767, 4
      %v7770 = vor.u32 %v7769, %v7765
      %v7771 = vrot.slane %v7770, 4
      %v7773 = vshll.u32 %v7365, 16
      %v7775 = vrot.slane %v7773, 5
      %v7776 = vsel %vm1476, %v7771, %v7775
      %v7778 = vshrl.u32 %v7366, 16
      %v7780 = vrot.slane %v7778, 4
      %v7781 = vshll.u32 %v7366, 16
      %v7783 = vrot.slane %v7781, 5
      %v7784 = vor.u32 %v7780, %v7783
      %v7785 = vrot.slane %v7784, 4
      %v7787 = vshll.u32 %v7367, 16
      %v7789 = vrot.slane %v7787, 5
      %v7790 = vsel %vm1476, %v7785, %v7789
      %v7791 = vshrl.u32 %v7367, 16
      %v7793 = vrot.slane %v7791, 4
      %v7794 = vor.u32 %v7793, %v7789
      %v7795 = vrot.slane %v7794, 4
      %v7797 = vshll.u32 %v7368, 16
      %v7799 = vrot.slane %v7797, 5
      %v7800 = vsel %vm1476, %v7795, %v7799
      %s7801 = scalar_lea.vmem %s6, 128
      %v7802 = vld [vmem:[%s7801] sm:$0xf]
      %v7803 = vld [vmem:[%s7801 + $0x4] sm:$0xf]
      %v7804 = vld [vmem:[%s7801 + $0x8] sm:$0xf]
      %v7805 = vld [vmem:[%s7801 + $0xc] sm:$0xf]
      %v7806 = vld [vmem:[%s7801 + $0x10] sm:$0xf]
      %v7807 = vld [vmem:[%s7801 + $0x14] sm:$0xf]
      %v7808 = vld [vmem:[%s7801 + $0x18] sm:$0xf]
      %v7809 = vld [vmem:[%s7801 + $0x1c] sm:$0xf]
      %v7810 = vld [vmem:[%s7801 + $0x20] sm:$0xf]
      %v7811 = vld [vmem:[%s7801 + $0x24] sm:$0xf]
      %v7812 = vld [vmem:[%s7801 + $0x28] sm:$0xf]
      %v7813 = vld [vmem:[%s7801 + $0x2c] sm:$0xf]
      %v7814 = vld [vmem:[%s7801 + $0x30] sm:$0xf]
      %v7815 = vld [vmem:[%s7801 + $0x34] sm:$0xf]
      %v7816 = vld [vmem:[%s7801 + $0x38] sm:$0xf]
      %v7817 = vld [vmem:[%s7801 + $0x3c] sm:$0xf]
      %v7818 = vunpack.c.l.b16 %v7382
      %v7819 = vunpack.c.l.b16 %v7392
      %v7820 = vunpack.c.l.b16 %v7406
      %v7821 = vunpack.c.l.b16 %v7416
      %v7822 = vunpack.c.l.b16 %v7430
      %v7823 = vunpack.c.l.b16 %v7440
      %v7824 = vunpack.c.l.b16 %v7454
      %v7825 = vunpack.c.l.b16 %v7464
      %v7826 = vunpack.c.l.b16 %v7478
      %v7827 = vunpack.c.l.b16 %v7488
      %v7828 = vunpack.c.l.b16 %v7502
      %v7829 = vunpack.c.l.b16 %v7512
      %v7830 = vunpack.c.l.b16 %v7526
      %v7831 = vunpack.c.l.b16 %v7536
      %v7832 = vunpack.c.l.b16 %v7550
      %v7833 = vunpack.c.l.b16 %v7560
      %v7834 = vunpack.c.l.b16 %v7574
      %v7835 = vunpack.c.l.b16 %v7584
      %v7836 = vunpack.c.l.b16 %v7598
      %v7837 = vunpack.c.l.b16 %v7608
      %v7838 = vunpack.c.l.b16 %v7622
      %v7839 = vunpack.c.l.b16 %v7632
      %v7840 = vunpack.c.l.b16 %v7646
      %v7841 = vunpack.c.l.b16 %v7656
      %v7842 = vunpack.c.l.b16 %v7670
      %v7843 = vunpack.c.l.b16 %v7680
      %v7844 = vunpack.c.l.b16 %v7694
      %v7845 = vunpack.c.l.b16 %v7704
      %v7846 = vunpack.c.l.b16 %v7718
      %v7847 = vunpack.c.l.b16 %v7728
      %v7848 = vunpack.c.l.b16 %v7742
      %v7849 = vunpack.c.l.b16 %v7752
      %v7850 = vpack.c.b16 %v7819, %v7818
      %v7851 = vpack.c.b16 %v7821, %v7820
      %v7852 = vpack.c.b16 %v7823, %v7822
      %v7853 = vpack.c.b16 %v7825, %v7824
      %v7854 = vpack.c.b16 %v7827, %v7826
      %v7855 = vpack.c.b16 %v7829, %v7828
      %v7856 = vpack.c.b16 %v7831, %v7830
      %v7857 = vpack.c.b16 %v7833, %v7832
      %v7858 = vpack.c.b16 %v7835, %v7834
      %v7859 = vpack.c.b16 %v7837, %v7836
      %v7860 = vpack.c.b16 %v7839, %v7838
      %v7861 = vpack.c.b16 %v7841, %v7840
      %v7862 = vpack.c.b16 %v7843, %v7842
      %v7863 = vpack.c.b16 %v7845, %v7844
      %v7864 = vpack.c.b16 %v7847, %v7846
      %v7865 = vpack.c.b16 %v7849, %v7848
      %v7898 = vunpack.c.l.b16 %v7802
      %v7899 = vunpack.c.l.b16 %v7803
      %v7900 = vunpack.c.l.b16 %v7804
      %v7901 = vunpack.c.l.b16 %v7805
      %v7902 = vunpack.c.l.b16 %v7806
      %v7903 = vunpack.c.l.b16 %v7807
      %v7904 = vunpack.c.l.b16 %v7808
      %v7905 = vunpack.c.l.b16 %v7809
      %v7906 = vunpack.c.l.b16 %v7810
      %v7907 = vunpack.c.l.b16 %v7811
      %v7908 = vunpack.c.l.b16 %v7812
      %v7909 = vunpack.c.l.b16 %v7813
      %v7910 = vunpack.c.l.b16 %v7814
      %v7911 = vunpack.c.l.b16 %v7815
      %v7912 = vunpack.c.l.b16 %v7816
      %v7913 = vunpack.c.l.b16 %v7817
      %v7914 = vpack.c.b16 %v7899, %v7898
      %v7915 = vpack.c.b16 %v7901, %v7900
      %v7916 = vpack.c.b16 %v7903, %v7902
      %v7917 = vpack.c.b16 %v7905, %v7904
      %v7918 = vpack.c.b16 %v7907, %v7906
      %v7919 = vpack.c.b16 %v7909, %v7908
      %v7920 = vpack.c.b16 %v7911, %v7910
      %v7921 = vpack.c.b16 %v7913, %v7912
      %7930 = vmatprep.subr.bf16.mxu0 0
      %7931 = vmatpush1.bf16.msra.mxu0 %v7921
      %7932 = vmatprep.subr.bf16.mxu0 0
      %7933 = vmatpush1.bf16.msra.mxu0 %v7920
      %7934 = vmatprep.subr.bf16.mxu0 0
      %7935 = vmatpush1.bf16.msra.mxu0 %v7919
      %7936 = vmatprep.subr.bf16.mxu0 0
      %7937 = vmatpush1.bf16.msra.mxu0 %v7918
      %7938 = vmatprep.subr.bf16.mxu0 0
      %7939 = vmatpush1.bf16.msra.mxu0 %v7917
      %7940 = vmatprep.subr.bf16.mxu0 0
      %7941 = vmatpush1.bf16.msra.mxu0 %v7916
      %7942 = vmatprep.subr.bf16.mxu0 0
      %7943 = vmatpush1.bf16.msra.mxu0 %v7915
      %7944 = vmatprep.subr.bf16.mxu0 0
      %7945 = vmatpush1.bf16.msra.mxu0 %v7914
      %7946 = vmatprep.subr.bf16.mxu0 0
      %7947 = vmatpush2.bf16.msra.mxu0 0
      %7948 = vmatprep.subr.bf16.mxu0 0
      %7949 = vmatpush2.bf16.msra.mxu0 0
      %7950 = vmatprep.subr.bf16.mxu0 0
      %7951 = vmatpush2.bf16.msra.mxu0 0
      %7952 = vmatprep.subr.bf16.mxu0 0
      %7953 = vmatpush2.bf16.msra.mxu0 0
      %7954 = vmatprep.subr.bf16.mxu0 0
      %7955 = vmatpush2.bf16.msra.mxu0 0
      %7956 = vmatprep.subr.bf16.mxu0 0
      %7957 = vmatpush2.bf16.msra.mxu0 0
      %7958 = vmatprep.subr.bf16.mxu0 0
      %7959 = vmatpush2.bf16.msra.mxu0 0
      %7960 = vmatprep.subr.bf16.mxu0 0
      %7961 = vmatpush2.bf16.msra.mxu0 0
      %7962 = vmatprep.mubr.bf16.mxu0 0
      %7963 = vmatmul.mubr.bf16.gmra.mxu0 %v7850
      %v7964 = vpop.f32.mrf.mxu0
      %v7965 = vadd.f32 0.0, %v7964
      %v7966 = vpop.f32.mrf.mxu0
      %v7967 = vpop.f32.mrf.mxu0
      %v7968 = vadd.f32 0.0, %v7967
      %v7969 = vpop.f32.mrf.mxu0
      %7970 = vmatprep.mubr.bf16.mxu0 0
      %7971 = vmatmul.mubr.bf16.gmra.mxu0 %v7851
      %v7972 = vpop.f32.mrf.mxu0
      %v7973 = vadd.f32 0.0, %v7972
      %v7974 = vpop.f32.mrf.mxu0
      %v7975 = vpop.f32.mrf.mxu0
      %v7976 = vadd.f32 0.0, %v7975
      %v7977 = vpop.f32.mrf.mxu0
      %7978 = vmatprep.mubr.bf16.mxu0 0
      %7979 = vmatmul.mubr.bf16.gmra.mxu0 %v7852
      %v7980 = vpop.f32.mrf.mxu0
      %v7981 = vadd.f32 0.0, %v7980
      %v7982 = vpop.f32.mrf.mxu0
      %v7983 = vpop.f32.mrf.mxu0
      %v7984 = vadd.f32 0.0, %v7983
      %v7985 = vpop.f32.mrf.mxu0
      %7986 = vmatprep.mubr.bf16.mxu0 0
      %7987 = vmatmul.mubr.bf16.gmra.mxu0 %v7853
      %v7988 = vpop.f32.mrf.mxu0
      %v7989 = vadd.f32 0.0, %v7988
      %v7990 = vpop.f32.mrf.mxu0
      %v7991 = vpop.f32.mrf.mxu0
      %v7992 = vadd.f32 0.0, %v7991
      %v7993 = vpop.f32.mrf.mxu0
      %7994 = vmatprep.mubr.bf16.mxu0 0
      %7995 = vmatmul.mubr.bf16.gmra.mxu0 %v7854
      %v7996 = vpop.f32.mrf.mxu0
      %v7997 = vadd.f32 0.0, %v7996
      %v7998 = vpop.f32.mrf.mxu0
      %v7999 = vpop.f32.mrf.mxu0
      %v8000 = vadd.f32 0.0, %v7999
      %v8001 = vpop.f32.mrf.mxu0
      %8002 = vmatprep.mubr.bf16.mxu0 0
      %8003 = vmatmul.mubr.bf16.gmra.mxu0 %v7855
      %v8004 = vpop.f32.mrf.mxu0
      %v8005 = vadd.f32 0.0, %v8004
      %v8006 = vpop.f32.mrf.mxu0
      %v8007 = vpop.f32.mrf.mxu0
      %v8008 = vadd.f32 0.0, %v8007
      %v8009 = vpop.f32.mrf.mxu0
      %8010 = vmatprep.mubr.bf16.mxu0 0
      %8011 = vmatmul.mubr.bf16.gmra.mxu0 %v7856
      %v8012 = vpop.f32.mrf.mxu0
      %v8013 = vadd.f32 0.0, %v8012
      %v8014 = vpop.f32.mrf.mxu0
      %v8015 = vpop.f32.mrf.mxu0
      %v8016 = vadd.f32 0.0, %v8015
      %v8017 = vpop.f32.mrf.mxu0
      %8018 = vmatprep.mubr.bf16.mxu0 0
      %8019 = vmatmul.mubr.bf16.gmra.mxu0 %v7857
      %v8020 = vpop.f32.mrf.mxu0
      %v8021 = vadd.f32 0.0, %v8020
      %v8022 = vpop.f32.mrf.mxu0
      %v8023 = vpop.f32.mrf.mxu0
      %v8024 = vadd.f32 0.0, %v8023
      %v8025 = vpop.f32.mrf.mxu0
      %8026 = vmatprep.mubr.bf16.mxu0 0
      %8027 = vmatmul.mubr.bf16.gmra.mxu0 %v7858
      %v8028 = vpop.f32.mrf.mxu0
      %v8029 = vadd.f32 0.0, %v8028
      %v8030 = vpop.f32.mrf.mxu0
      %v8031 = vpop.f32.mrf.mxu0
      %v8032 = vadd.f32 0.0, %v8031
      %v8033 = vpop.f32.mrf.mxu0
      %8034 = vmatprep.mubr.bf16.mxu0 0
      %8035 = vmatmul.mubr.bf16.gmra.mxu0 %v7859
      %v8036 = vpop.f32.mrf.mxu0
      %v8037 = vadd.f32 0.0, %v8036
      %v8038 = vpop.f32.mrf.mxu0
      %v8039 = vpop.f32.mrf.mxu0
      %v8040 = vadd.f32 0.0, %v8039
      %v8041 = vpop.f32.mrf.mxu0
      %8042 = vmatprep.mubr.bf16.mxu0 0
      %8043 = vmatmul.mubr.bf16.gmra.mxu0 %v7860
      %v8044 = vpop.f32.mrf.mxu0
      %v8045 = vadd.f32 0.0, %v8044
      %v8046 = vpop.f32.mrf.mxu0
      %v8047 = vpop.f32.mrf.mxu0
      %v8048 = vadd.f32 0.0, %v8047
      %v8049 = vpop.f32.mrf.mxu0
      %8050 = vmatprep.mubr.bf16.mxu0 0
      %8051 = vmatmul.mubr.bf16.gmra.mxu0 %v7861
      %v8052 = vpop.f32.mrf.mxu0
      %v8053 = vadd.f32 0.0, %v8052
      %v8054 = vpop.f32.mrf.mxu0
      %v8055 = vpop.f32.mrf.mxu0
      %v8056 = vadd.f32 0.0, %v8055
      %v8057 = vpop.f32.mrf.mxu0
      %8058 = vmatprep.mubr.bf16.mxu0 0
      %8059 = vmatmul.mubr.bf16.gmra.mxu0 %v7862
      %v8060 = vpop.f32.mrf.mxu0
      %v8061 = vadd.f32 0.0, %v8060
      %v8062 = vpop.f32.mrf.mxu0
      %v8063 = vpop.f32.mrf.mxu0
      %v8064 = vadd.f32 0.0, %v8063
      %v8065 = vpop.f32.mrf.mxu0
      %8066 = vmatprep.mubr.bf16.mxu0 0
      %8067 = vmatmul.mubr.bf16.gmra.mxu0 %v7863
      %v8068 = vpop.f32.mrf.mxu0
      %v8069 = vadd.f32 0.0, %v8068
      %v8070 = vpop.f32.mrf.mxu0
      %v8071 = vpop.f32.mrf.mxu0
      %v8072 = vadd.f32 0.0, %v8071
      %v8073 = vpop.f32.mrf.mxu0
      %8074 = vmatprep.mubr.bf16.mxu0 0
      %8075 = vmatmul.mubr.bf16.gmra.mxu0 %v7864
      %v8076 = vpop.f32.mrf.mxu0
      %v8077 = vadd.f32 0.0, %v8076
      %v8078 = vpop.f32.mrf.mxu0
      %v8079 = vpop.f32.mrf.mxu0
      %v8080 = vadd.f32 0.0, %v8079
      %v8081 = vpop.f32.mrf.mxu0
      %8082 = vmatprep.mubr.bf16.mxu0 0
      %8083 = vmatmul.mubr.bf16.gmra.mxu0 %v7865
      %v8084 = vpop.f32.mrf.mxu0
      %v8085 = vadd.f32 0.0, %v8084
      %v8086 = vpop.f32.mrf.mxu0
      %v8087 = vpop.f32.mrf.mxu0
      %v8088 = vadd.f32 0.0, %v8087
      %v8089 = vpop.f32.mrf.mxu0
      %8090 = vdwg.mxu0
      %v8091 = vld [vmem:[#allocation3] sm:$0xff]
      %v8092 = vld [vmem:[#allocation3 + $0x8] sm:$0xff]
      %v8093 = vld [vmem:[#allocation3 + $0x10] sm:$0xff]
      %v8094 = vld [vmem:[#allocation3 + $0x18] sm:$0xff]
      %v8095 = vld [vmem:[#allocation3 + $0x20] sm:$0xff]
      %v8096 = vld [vmem:[#allocation3 + $0x28] sm:$0xff]
      %v8097 = vld [vmem:[#allocation3 + $0x30] sm:$0xff]
      %v8098 = vld [vmem:[#allocation3 + $0x38] sm:$0xff]
      %v8099 = vld [vmem:[#allocation3 + $0x40] sm:$0xff]
      %v8100 = vld [vmem:[#allocation3 + $0x48] sm:$0xff]
      %v8101 = vld [vmem:[#allocation3 + $0x50] sm:$0xff]
      %v8102 = vld [vmem:[#allocation3 + $0x58] sm:$0xff]
      %v8103 = vld [vmem:[#allocation3 + $0x60] sm:$0xff]
      %v8104 = vld [vmem:[#allocation3 + $0x68] sm:$0xff]
      %v8105 = vld [vmem:[#allocation3 + $0x70] sm:$0xff]
      %v8106 = vld [vmem:[#allocation3 + $0x78] sm:$0xff]
      %v8107 = vld [vmem:[#allocation3 + $0x80] sm:$0xff]
      %v8108 = vld [vmem:[#allocation3 + $0x88] sm:$0xff]
      %v8109 = vld [vmem:[#allocation3 + $0x90] sm:$0xff]
      %v8110 = vld [vmem:[#allocation3 + $0x98] sm:$0xff]
      %v8111 = vld [vmem:[#allocation3 + $0xa0] sm:$0xff]
      %v8112 = vld [vmem:[#allocation3 + $0xa8] sm:$0xff]
      %v8113 = vld [vmem:[#allocation3 + $0xb0] sm:$0xff]
      %v8114 = vld [vmem:[#allocation3 + $0xb8] sm:$0xff]
      %v8115 = vld [vmem:[#allocation3 + $0xc0] sm:$0xff]
      %v8116 = vld [vmem:[#allocation3 + $0xc8] sm:$0xff]
      %v8117 = vld [vmem:[#allocation3 + $0xd0] sm:$0xff]
      %v8118 = vld [vmem:[#allocation3 + $0xd8] sm:$0xff]
      %v8119 = vld [vmem:[#allocation3 + $0xe0] sm:$0xff]
      %v8120 = vld [vmem:[#allocation3 + $0xe8] sm:$0xff]
      %v8121 = vld [vmem:[#allocation3 + $0xf0] sm:$0xff]
      %v8122 = vld [vmem:[#allocation3 + $0xf8] sm:$0xff]
      %v8123 = vadd.f32 %v8091, %v7965
      %v8124 = vadd.f32 %v8092, %v7968
      %v8125 = vadd.f32 %v8093, %v7973
      %v8126 = vadd.f32 %v8094, %v7976
      %v8127 = vadd.f32 %v8095, %v7981
      %v8128 = vadd.f32 %v8096, %v7984
      %v8129 = vadd.f32 %v8097, %v7989
      %v8130 = vadd.f32 %v8098, %v7992
      %v8131 = vadd.f32 %v8099, %v7997
      %v8132 = vadd.f32 %v8100, %v8000
      %v8133 = vadd.f32 %v8101, %v8005
      %v8134 = vadd.f32 %v8102, %v8008
      %v8135 = vadd.f32 %v8103, %v8013
      %v8136 = vadd.f32 %v8104, %v8016
      %v8137 = vadd.f32 %v8105, %v8021
      %v8138 = vadd.f32 %v8106, %v8024
      %v8139 = vadd.f32 %v8107, %v8029
      %v8140 = vadd.f32 %v8108, %v8032
      %v8141 = vadd.f32 %v8109, %v8037
      %v8142 = vadd.f32 %v8110, %v8040
      %v8143 = vadd.f32 %v8111, %v8045
      %v8144 = vadd.f32 %v8112, %v8048
      %v8145 = vadd.f32 %v8113, %v8053
      %v8146 = vadd.f32 %v8114, %v8056
      %v8147 = vadd.f32 %v8115, %v8061
      %v8148 = vadd.f32 %v8116, %v8064
      %v8149 = vadd.f32 %v8117, %v8069
      %v8150 = vadd.f32 %v8118, %v8072
      %v8151 = vadd.f32 %v8119, %v8077
      %v8152 = vadd.f32 %v8120, %v8080
      %v8153 = vadd.f32 %v8121, %v8085
      %v8154 = vadd.f32 %v8122, %v8088
      %8155 = vst [vmem:[#allocation3] sm:$0xff] %v8123
      %8156 = vst [vmem:[#allocation3 + $0x8] sm:$0xff] %v8124
      %8157 = vst [vmem:[#allocation3 + $0x10] sm:$0xff] %v8125
      %8158 = vst [vmem:[#allocation3 + $0x18] sm:$0xff] %v8126
      %8159 = vst [vmem:[#allocation3 + $0x20] sm:$0xff] %v8127
      %8160 = vst [vmem:[#allocation3 + $0x28] sm:$0xff] %v8128
      %8161 = vst [vmem:[#allocation3 + $0x30] sm:$0xff] %v8129
      %8162 = vst [vmem:[#allocation3 + $0x38] sm:$0xff] %v8130
      %8163 = vst [vmem:[#allocation3 + $0x40] sm:$0xff] %v8131
      %8164 = vst [vmem:[#allocation3 + $0x48] sm:$0xff] %v8132
      %8165 = vst [vmem:[#allocation3 + $0x50] sm:$0xff] %v8133
      %8166 = vst [vmem:[#allocation3 + $0x58] sm:$0xff] %v8134
      %8167 = vst [vmem:[#allocation3 + $0x60] sm:$0xff] %v8135
      %8168 = vst [vmem:[#allocation3 + $0x68] sm:$0xff] %v8136
      %8169 = vst [vmem:[#allocation3 + $0x70] sm:$0xff] %v8137
      %8170 = vst [vmem:[#allocation3 + $0x78] sm:$0xff] %v8138
      %8171 = vst [vmem:[#allocation3 + $0x80] sm:$0xff] %v8139
      %8172 = vst [vmem:[#allocation3 + $0x88] sm:$0xff] %v8140
      %8173 = vst [vmem:[#allocation3 + $0x90] sm:$0xff] %v8141
      %8174 = vst [vmem:[#allocation3 + $0x98] sm:$0xff] %v8142
      %8175 = vst [vmem:[#allocation3 + $0xa0] sm:$0xff] %v8143
      %8176 = vst [vmem:[#allocation3 + $0xa8] sm:$0xff] %v8144
      %8177 = vst [vmem:[#allocation3 + $0xb0] sm:$0xff] %v8145
      %8178 = vst [vmem:[#allocation3 + $0xb8] sm:$0xff] %v8146
      %8179 = vst [vmem:[#allocation3 + $0xc0] sm:$0xff] %v8147
      %8180 = vst [vmem:[#allocation3 + $0xc8] sm:$0xff] %v8148
      %8181 = vst [vmem:[#allocation3 + $0xd0] sm:$0xff] %v8149
      %8182 = vst [vmem:[#allocation3 + $0xd8] sm:$0xff] %v8150
      %8183 = vst [vmem:[#allocation3 + $0xe0] sm:$0xff] %v8151
      %8184 = vst [vmem:[#allocation3 + $0xe8] sm:$0xff] %v8152
      %8185 = vst [vmem:[#allocation3 + $0xf0] sm:$0xff] %v8153
      %8186 = vst [vmem:[#allocation3 + $0xf8] sm:$0xff] %v8154
      %s8187 = scalar_lea.vmem %s6, 320
      %v8188 = vld [vmem:[%s8187] sm:$0xf]
      %v8189 = vld [vmem:[%s8187 + $0x4] sm:$0xf]
      %v8190 = vld [vmem:[%s8187 + $0x8] sm:$0xf]
      %v8191 = vld [vmem:[%s8187 + $0xc] sm:$0xf]
      %v8192 = vld [vmem:[%s8187 + $0x10] sm:$0xf]
      %v8193 = vld [vmem:[%s8187 + $0x14] sm:$0xf]
      %v8194 = vld [vmem:[%s8187 + $0x18] sm:$0xf]
      %v8195 = vld [vmem:[%s8187 + $0x1c] sm:$0xf]
      %v8196 = vld [vmem:[%s8187 + $0x20] sm:$0xf]
      %v8197 = vld [vmem:[%s8187 + $0x24] sm:$0xf]
      %v8198 = vld [vmem:[%s8187 + $0x28] sm:$0xf]
      %v8199 = vld [vmem:[%s8187 + $0x2c] sm:$0xf]
      %v8200 = vld [vmem:[%s8187 + $0x30] sm:$0xf]
      %v8201 = vld [vmem:[%s8187 + $0x34] sm:$0xf]
      %v8202 = vld [vmem:[%s8187 + $0x38] sm:$0xf]
      %v8203 = vld [vmem:[%s8187 + $0x3c] sm:$0xf]
      %v8204 = vunpack.c.l.b16 %v7766
      %v8205 = vunpack.c.l.b16 %v7776
      %v8206 = vpack.c.b16 %v8205, %v8204
      %v8224 = vunpack.c.l.b16 %v8188
      %v8225 = vunpack.c.l.b16 %v8189
      %v8226 = vunpack.c.l.b16 %v8190
      %v8227 = vunpack.c.l.b16 %v8191
      %v8228 = vunpack.c.l.b16 %v8192
      %v8229 = vunpack.c.l.b16 %v8193
      %v8230 = vunpack.c.l.b16 %v8194
      %v8231 = vunpack.c.l.b16 %v8195
      %v8232 = vunpack.c.l.b16 %v8196
      %v8233 = vunpack.c.l.b16 %v8197
      %v8234 = vunpack.c.l.b16 %v8198
      %v8235 = vunpack.c.l.b16 %v8199
      %v8236 = vunpack.c.l.b16 %v8200
      %v8237 = vunpack.c.l.b16 %v8201
      %v8238 = vunpack.c.l.b16 %v8202
      %v8239 = vunpack.c.l.b16 %v8203
      %v8240 = vpack.c.b16 %v8225, %v8224
      %v8241 = vpack.c.b16 %v8227, %v8226
      %v8242 = vpack.c.b16 %v8229, %v8228
      %v8243 = vpack.c.b16 %v8231, %v8230
      %v8244 = vpack.c.b16 %v8233, %v8232
      %v8245 = vpack.c.b16 %v8235, %v8234
      %v8246 = vpack.c.b16 %v8237, %v8236
      %v8247 = vpack.c.b16 %v8239, %v8238
      %8256 = vmatprep.subr.bf16.mxu0 0
      %8257 = vmatpush1.bf16.msra.mxu0 %v8247
      %8258 = vmatprep.subr.bf16.mxu0 0
      %8259 = vmatpush1.bf16.msra.mxu0 %v8246
      %8260 = vmatprep.subr.bf16.mxu0 0
      %8261 = vmatpush1.bf16.msra.mxu0 %v8245
      %8262 = vmatprep.subr.bf16.mxu0 0
      %8263 = vmatpush1.bf16.msra.mxu0 %v8244
      %8264 = vmatprep.subr.bf16.mxu0 0
      %8265 = vmatpush1.bf16.msra.mxu0 %v8243
      %8266 = vmatprep.subr.bf16.mxu0 0
      %8267 = vmatpush1.bf16.msra.mxu0 %v8242
      %8268 = vmatprep.subr.bf16.mxu0 0
      %8269 = vmatpush1.bf16.msra.mxu0 %v8241
      %8270 = vmatprep.subr.bf16.mxu0 0
      %8271 = vmatpush1.bf16.msra.mxu0 %v8240
      %8272 = vmatprep.subr.bf16.mxu0 0
      %8273 = vmatpush2.bf16.msra.mxu0 0
      %8274 = vmatprep.subr.bf16.mxu0 0
      %8275 = vmatpush2.bf16.msra.mxu0 0
      %8276 = vmatprep.subr.bf16.mxu0 0
      %8277 = vmatpush2.bf16.msra.mxu0 0
      %8278 = vmatprep.subr.bf16.mxu0 0
      %8279 = vmatpush2.bf16.msra.mxu0 0
      %8280 = vmatprep.subr.bf16.mxu0 0
      %8281 = vmatpush2.bf16.msra.mxu0 0
      %8282 = vmatprep.subr.bf16.mxu0 0
      %8283 = vmatpush2.bf16.msra.mxu0 0
      %8284 = vmatprep.subr.bf16.mxu0 0
      %8285 = vmatpush2.bf16.msra.mxu0 0
      %8286 = vmatprep.subr.bf16.mxu0 0
      %8287 = vmatpush2.bf16.msra.mxu0 0
      %8288 = vmatprep.mubr.bf16.mxu0 0
      %8289 = vmatmul.mubr.bf16.gmra.mxu0 %v7851
      %v8290 = vpop.f32.mrf.mxu0
      %v8291 = vadd.f32 0.0, %v8290
      %v8292 = vpop.f32.mrf.mxu0
      %v8293 = vpop.f32.mrf.mxu0
      %v8294 = vadd.f32 0.0, %v8293
      %v8295 = vpop.f32.mrf.mxu0
      %8296 = vmatprep.mubr.bf16.mxu0 0
      %8297 = vmatmul.mubr.bf16.gmra.mxu0 %v7852
      %v8298 = vpop.f32.mrf.mxu0
      %v8299 = vadd.f32 0.0, %v8298
      %v8300 = vpop.f32.mrf.mxu0
      %v8301 = vpop.f32.mrf.mxu0
      %v8302 = vadd.f32 0.0, %v8301
      %v8303 = vpop.f32.mrf.mxu0
      %8304 = vmatprep.mubr.bf16.mxu0 0
      %8305 = vmatmul.mubr.bf16.gmra.mxu0 %v7853
      %v8306 = vpop.f32.mrf.mxu0
      %v8307 = vadd.f32 0.0, %v8306
      %v8308 = vpop.f32.mrf.mxu0
      %v8309 = vpop.f32.mrf.mxu0
      %v8310 = vadd.f32 0.0, %v8309
      %v8311 = vpop.f32.mrf.mxu0
      %8312 = vmatprep.mubr.bf16.mxu0 0
      %8313 = vmatmul.mubr.bf16.gmra.mxu0 %v7854
      %v8314 = vpop.f32.mrf.mxu0
      %v8315 = vadd.f32 0.0, %v8314
      %v8316 = vpop.f32.mrf.mxu0
      %v8317 = vpop.f32.mrf.mxu0
      %v8318 = vadd.f32 0.0, %v8317
      %v8319 = vpop.f32.mrf.mxu0
      %8320 = vmatprep.mubr.bf16.mxu0 0
      %8321 = vmatmul.mubr.bf16.gmra.mxu0 %v7855
      %v8322 = vpop.f32.mrf.mxu0
      %v8323 = vadd.f32 0.0, %v8322
      %v8324 = vpop.f32.mrf.mxu0
      %v8325 = vpop.f32.mrf.mxu0
      %v8326 = vadd.f32 0.0, %v8325
      %v8327 = vpop.f32.mrf.mxu0
      %8328 = vmatprep.mubr.bf16.mxu0 0
      %8329 = vmatmul.mubr.bf16.gmra.mxu0 %v7856
      %v8330 = vpop.f32.mrf.mxu0
      %v8331 = vadd.f32 0.0, %v8330
      %v8332 = vpop.f32.mrf.mxu0
      %v8333 = vpop.f32.mrf.mxu0
      %v8334 = vadd.f32 0.0, %v8333
      %v8335 = vpop.f32.mrf.mxu0
      %8336 = vmatprep.mubr.bf16.mxu0 0
      %8337 = vmatmul.mubr.bf16.gmra.mxu0 %v7857
      %v8338 = vpop.f32.mrf.mxu0
      %v8339 = vadd.f32 0.0, %v8338
      %v8340 = vpop.f32.mrf.mxu0
      %v8341 = vpop.f32.mrf.mxu0
      %v8342 = vadd.f32 0.0, %v8341
      %v8343 = vpop.f32.mrf.mxu0
      %8344 = vmatprep.mubr.bf16.mxu0 0
      %8345 = vmatmul.mubr.bf16.gmra.mxu0 %v7858
      %v8346 = vpop.f32.mrf.mxu0
      %v8347 = vadd.f32 0.0, %v8346
      %v8348 = vpop.f32.mrf.mxu0
      %v8349 = vpop.f32.mrf.mxu0
      %v8350 = vadd.f32 0.0, %v8349
      %v8351 = vpop.f32.mrf.mxu0
      %8352 = vmatprep.mubr.bf16.mxu0 0
      %8353 = vmatmul.mubr.bf16.gmra.mxu0 %v7859
      %v8354 = vpop.f32.mrf.mxu0
      %v8355 = vadd.f32 0.0, %v8354
      %v8356 = vpop.f32.mrf.mxu0
      %v8357 = vpop.f32.mrf.mxu0
      %v8358 = vadd.f32 0.0, %v8357
      %v8359 = vpop.f32.mrf.mxu0
      %8360 = vmatprep.mubr.bf16.mxu0 0
      %8361 = vmatmul.mubr.bf16.gmra.mxu0 %v7860
      %v8362 = vpop.f32.mrf.mxu0
      %v8363 = vadd.f32 0.0, %v8362
      %v8364 = vpop.f32.mrf.mxu0
      %v8365 = vpop.f32.mrf.mxu0
      %v8366 = vadd.f32 0.0, %v8365
      %v8367 = vpop.f32.mrf.mxu0
      %8368 = vmatprep.mubr.bf16.mxu0 0
      %8369 = vmatmul.mubr.bf16.gmra.mxu0 %v7861
      %v8370 = vpop.f32.mrf.mxu0
      %v8371 = vadd.f32 0.0, %v8370
      %v8372 = vpop.f32.mrf.mxu0
      %v8373 = vpop.f32.mrf.mxu0
      %v8374 = vadd.f32 0.0, %v8373
      %v8375 = vpop.f32.mrf.mxu0
      %8376 = vmatprep.mubr.bf16.mxu0 0
      %8377 = vmatmul.mubr.bf16.gmra.mxu0 %v7862
      %v8378 = vpop.f32.mrf.mxu0
      %v8379 = vadd.f32 0.0, %v8378
      %v8380 = vpop.f32.mrf.mxu0
      %v8381 = vpop.f32.mrf.mxu0
      %v8382 = vadd.f32 0.0, %v8381
      %v8383 = vpop.f32.mrf.mxu0
      %8384 = vmatprep.mubr.bf16.mxu0 0
      %8385 = vmatmul.mubr.bf16.gmra.mxu0 %v7863
      %v8386 = vpop.f32.mrf.mxu0
      %v8387 = vadd.f32 0.0, %v8386
      %v8388 = vpop.f32.mrf.mxu0
      %v8389 = vpop.f32.mrf.mxu0
      %v8390 = vadd.f32 0.0, %v8389
      %v8391 = vpop.f32.mrf.mxu0
      %8392 = vmatprep.mubr.bf16.mxu0 0
      %8393 = vmatmul.mubr.bf16.gmra.mxu0 %v7864
      %v8394 = vpop.f32.mrf.mxu0
      %v8395 = vadd.f32 0.0, %v8394
      %v8396 = vpop.f32.mrf.mxu0
      %v8397 = vpop.f32.mrf.mxu0
      %v8398 = vadd.f32 0.0, %v8397
      %v8399 = vpop.f32.mrf.mxu0
      %8400 = vmatprep.mubr.bf16.mxu0 0
      %8401 = vmatmul.mubr.bf16.gmra.mxu0 %v7865
      %v8402 = vpop.f32.mrf.mxu0
      %v8403 = vadd.f32 0.0, %v8402
      %v8404 = vpop.f32.mrf.mxu0
      %v8405 = vpop.f32.mrf.mxu0
      %v8406 = vadd.f32 0.0, %v8405
      %v8407 = vpop.f32.mrf.mxu0
      %8408 = vmatprep.mubr.bf16.mxu0 0
      %8409 = vmatmul.mubr.bf16.gmra.mxu0 %v8206
      %v8410 = vpop.f32.mrf.mxu0
      %v8411 = vadd.f32 0.0, %v8410
      %v8412 = vpop.f32.mrf.mxu0
      %v8413 = vpop.f32.mrf.mxu0
      %v8414 = vadd.f32 0.0, %v8413
      %v8415 = vpop.f32.mrf.mxu0
      %8416 = vdwg.mxu0
      %v8417 = vld [vmem:[#allocation3] sm:$0xff]
      %v8418 = vld [vmem:[#allocation3 + $0x8] sm:$0xff]
      %v8419 = vld [vmem:[#allocation3 + $0x10] sm:$0xff]
      %v8420 = vld [vmem:[#allocation3 + $0x18] sm:$0xff]
      %v8421 = vld [vmem:[#allocation3 + $0x20] sm:$0xff]
      %v8422 = vld [vmem:[#allocation3 + $0x28] sm:$0xff]
      %v8423 = vld [vmem:[#allocation3 + $0x30] sm:$0xff]
      %v8424 = vld [vmem:[#allocation3 + $0x38] sm:$0xff]
      %v8425 = vld [vmem:[#allocation3 + $0x40] sm:$0xff]
      %v8426 = vld [vmem:[#allocation3 + $0x48] sm:$0xff]
      %v8427 = vld [vmem:[#allocation3 + $0x50] sm:$0xff]
      %v8428 = vld [vmem:[#allocation3 + $0x58] sm:$0xff]
      %v8429 = vld [vmem:[#allocation3 + $0x60] sm:$0xff]
      %v8430 = vld [vmem:[#allocation3 + $0x68] sm:$0xff]
      %v8431 = vld [vmem:[#allocation3 + $0x70] sm:$0xff]
      %v8432 = vld [vmem:[#allocation3 + $0x78] sm:$0xff]
      %v8433 = vld [vmem:[#allocation3 + $0x80] sm:$0xff]
      %v8434 = vld [vmem:[#allocation3 + $0x88] sm:$0xff]
      %v8435 = vld [vmem:[#allocation3 + $0x90] sm:$0xff]
      %v8436 = vld [vmem:[#allocation3 + $0x98] sm:$0xff]
      %v8437 = vld [vmem:[#allocation3 + $0xa0] sm:$0xff]
      %v8438 = vld [vmem:[#allocation3 + $0xa8] sm:$0xff]
      %v8439 = vld [vmem:[#allocation3 + $0xb0] sm:$0xff]
      %v8440 = vld [vmem:[#allocation3 + $0xb8] sm:$0xff]
      %v8441 = vld [vmem:[#allocation3 + $0xc0] sm:$0xff]
      %v8442 = vld [vmem:[#allocation3 + $0xc8] sm:$0xff]
      %v8443 = vld [vmem:[#allocation3 + $0xd0] sm:$0xff]
      %v8444 = vld [vmem:[#allocation3 + $0xd8] sm:$0xff]
      %v8445 = vld [vmem:[#allocation3 + $0xe0] sm:$0xff]
      %v8446 = vld [vmem:[#allocation3 + $0xe8] sm:$0xff]
      %v8447 = vld [vmem:[#allocation3 + $0xf0] sm:$0xff]
      %v8448 = vld [vmem:[#allocation3 + $0xf8] sm:$0xff]
      %v8449 = vadd.f32 %v8417, %v8291
      %v8450 = vadd.f32 %v8418, %v8294
      %v8451 = vadd.f32 %v8419, %v8299
      %v8452 = vadd.f32 %v8420, %v8302
      %v8453 = vadd.f32 %v8421, %v8307
      %v8454 = vadd.f32 %v8422, %v8310
      %v8455 = vadd.f32 %v8423, %v8315
      %v8456 = vadd.f32 %v8424, %v8318
      %v8457 = vadd.f32 %v8425, %v8323
      %v8458 = vadd.f32 %v8426, %v8326
      %v8459 = vadd.f32 %v8427, %v8331
      %v8460 = vadd.f32 %v8428, %v8334
      %v8461 = vadd.f32 %v8429, %v8339
      %v8462 = vadd.f32 %v8430, %v8342
      %v8463 = vadd.f32 %v8431, %v8347
      %v8464 = vadd.f32 %v8432, %v8350
      %v8465 = vadd.f32 %v8433, %v8355
      %v8466 = vadd.f32 %v8434, %v8358
      %v8467 = vadd.f32 %v8435, %v8363
      %v8468 = vadd.f32 %v8436, %v8366
      %v8469 = vadd.f32 %v8437, %v8371
      %v8470 = vadd.f32 %v8438, %v8374
      %v8471 = vadd.f32 %v8439, %v8379
      %v8472 = vadd.f32 %v8440, %v8382
      %v8473 = vadd.f32 %v8441, %v8387
      %v8474 = vadd.f32 %v8442, %v8390
      %v8475 = vadd.f32 %v8443, %v8395
      %v8476 = vadd.f32 %v8444, %v8398
      %v8477 = vadd.f32 %v8445, %v8403
      %v8478 = vadd.f32 %v8446, %v8406
      %v8479 = vadd.f32 %v8447, %v8411
      %v8480 = vadd.f32 %v8448, %v8414
      %8481 = vst [vmem:[#allocation3] sm:$0xff] %v8449
      %8482 = vst [vmem:[#allocation3 + $0x8] sm:$0xff] %v8450
      %8483 = vst [vmem:[#allocation3 + $0x10] sm:$0xff] %v8451
      %8484 = vst [vmem:[#allocation3 + $0x18] sm:$0xff] %v8452
      %8485 = vst [vmem:[#allocation3 + $0x20] sm:$0xff] %v8453
      %8486 = vst [vmem:[#allocation3 + $0x28] sm:$0xff] %v8454
      %8487 = vst [vmem:[#allocation3 + $0x30] sm:$0xff] %v8455
      %8488 = vst [vmem:[#allocation3 + $0x38] sm:$0xff] %v8456
      %8489 = vst [vmem:[#allocation3 + $0x40] sm:$0xff] %v8457
      %8490 = vst [vmem:[#allocation3 + $0x48] sm:$0xff] %v8458
      %8491 = vst [vmem:[#allocation3 + $0x50] sm:$0xff] %v8459
      %8492 = vst [vmem:[#allocation3 + $0x58] sm:$0xff] %v8460
      %8493 = vst [vmem:[#allocation3 + $0x60] sm:$0xff] %v8461
      %8494 = vst [vmem:[#allocation3 + $0x68] sm:$0xff] %v8462
      %8495 = vst [vmem:[#allocation3 + $0x70] sm:$0xff] %v8463
      %8496 = vst [vmem:[#allocation3 + $0x78] sm:$0xff] %v8464
      %8497 = vst [vmem:[#allocation3 + $0x80] sm:$0xff] %v8465
      %8498 = vst [vmem:[#allocation3 + $0x88] sm:$0xff] %v8466
      %8499 = vst [vmem:[#allocation3 + $0x90] sm:$0xff] %v8467
      %8500 = vst [vmem:[#allocation3 + $0x98] sm:$0xff] %v8468
      %8501 = vst [vmem:[#allocation3 + $0xa0] sm:$0xff] %v8469
      %8502 = vst [vmem:[#allocation3 + $0xa8] sm:$0xff] %v8470
      %8503 = vst [vmem:[#allocation3 + $0xb0] sm:$0xff] %v8471
      %8504 = vst [vmem:[#allocation3 + $0xb8] sm:$0xff] %v8472
      %8505 = vst [vmem:[#allocation3 + $0xc0] sm:$0xff] %v8473
      %8506 = vst [vmem:[#allocation3 + $0xc8] sm:$0xff] %v8474
      %8507 = vst [vmem:[#allocation3 + $0xd0] sm:$0xff] %v8475
      %8508 = vst [vmem:[#allocation3 + $0xd8] sm:$0xff] %v8476
      %8509 = vst [vmem:[#allocation3 + $0xe0] sm:$0xff] %v8477
      %8510 = vst [vmem:[#allocation3 + $0xe8] sm:$0xff] %v8478
      %8511 = vst [vmem:[#allocation3 + $0xf0] sm:$0xff] %v8479
      %8512 = vst [vmem:[#allocation3 + $0xf8] sm:$0xff] %v8480
      %s8513 = scalar_lea.vmem %s6, 512
      %v8514 = vld [vmem:[%s8513] sm:$0xf]
      %v8515 = vld [vmem:[%s8513 + $0x4] sm:$0xf]
      %v8516 = vld [vmem:[%s8513 + $0x8] sm:$0xf]
      %v8517 = vld [vmem:[%s8513 + $0xc] sm:$0xf]
      %v8518 = vld [vmem:[%s8513 + $0x10] sm:$0xf]
      %v8519 = vld [vmem:[%s8513 + $0x14] sm:$0xf]
      %v8520 = vld [vmem:[%s8513 + $0x18] sm:$0xf]
      %v8521 = vld [vmem:[%s8513 + $0x1c] sm:$0xf]
      %v8522 = vld [vmem:[%s8513 + $0x20] sm:$0xf]
      %v8523 = vld [vmem:[%s8513 + $0x24] sm:$0xf]
      %v8524 = vld [vmem:[%s8513 + $0x28] sm:$0xf]
      %v8525 = vld [vmem:[%s8513 + $0x2c] sm:$0xf]
      %v8526 = vld [vmem:[%s8513 + $0x30] sm:$0xf]
      %v8527 = vld [vmem:[%s8513 + $0x34] sm:$0xf]
      %v8528 = vld [vmem:[%s8513 + $0x38] sm:$0xf]
      %v8529 = vld [vmem:[%s8513 + $0x3c] sm:$0xf]
      %v8530 = vunpack.c.l.b16 %v7790
      %v8531 = vunpack.c.l.b16 %v7800
      %v8532 = vpack.c.b16 %v8531, %v8530
      %v8550 = vunpack.c.l.b16 %v8514
      %v8551 = vunpack.c.l.b16 %v8515
      %v8552 = vunpack.c.l.b16 %v8516
      %v8553 = vunpack.c.l.b16 %v8517
      %v8554 = vunpack.c.l.b16 %v8518
      %v8555 = vunpack.c.l.b16 %v8519
      %v8556 = vunpack.c.l.b16 %v8520
      %v8557 = vunpack.c.l.b16 %v8521
      %v8558 = vunpack.c.l.b16 %v8522
      %v8559 = vunpack.c.l.b16 %v8523
      %v8560 = vunpack.c.l.b16 %v8524
      %v8561 = vunpack.c.l.b16 %v8525
      %v8562 = vunpack.c.l.b16 %v8526
      %v8563 = vunpack.c.l.b16 %v8527
      %v8564 = vunpack.c.l.b16 %v8528
      %v8565 = vunpack.c.l.b16 %v8529
      %v8566 = vpack.c.b16 %v8551, %v8550
      %v8567 = vpack.c.b16 %v8553, %v8552
      %v8568 = vpack.c.b16 %v8555, %v8554
      %v8569 = vpack.c.b16 %v8557, %v8556
      %v8570 = vpack.c.b16 %v8559, %v8558
      %v8571 = vpack.c.b16 %v8561, %v8560
      %v8572 = vpack.c.b16 %v8563, %v8562
      %v8573 = vpack.c.b16 %v8565, %v8564
      %8582 = vmatprep.subr.bf16.mxu0 0
      %8583 = vmatpush1.bf16.msra.mxu0 %v8573
      %8584 = vmatprep.subr.bf16.mxu0 0
      %8585 = vmatpush1.bf16.msra.mxu0 %v8572
      %8586 = vmatprep.subr.bf16.mxu0 0
      %8587 = vmatpush1.bf16.msra.mxu0 %v8571
      %8588 = vmatprep.subr.bf16.mxu0 0
      %8589 = vmatpush1.bf16.msra.mxu0 %v8570
      %8590 = vmatprep.subr.bf16.mxu0 0
      %8591 = vmatpush1.bf16.msra.mxu0 %v8569
      %8592 = vmatprep.subr.bf16.mxu0 0
      %8593 = vmatpush1.bf16.msra.mxu0 %v8568
      %8594 = vmatprep.subr.bf16.mxu0 0
      %8595 = vmatpush1.bf16.msra.mxu0 %v8567
      %8596 = vmatprep.subr.bf16.mxu0 0
      %8597 = vmatpush1.bf16.msra.mxu0 %v8566
      %8598 = vmatprep.subr.bf16.mxu0 0
      %8599 = vmatpush2.bf16.msra.mxu0 0
      %8600 = vmatprep.subr.bf16.mxu0 0
      %8601 = vmatpush2.bf16.msra.mxu0 0
      %8602 = vmatprep.subr.bf16.mxu0 0
      %8603 = vmatpush2.bf16.msra.mxu0 0
      %8604 = vmatprep.subr.bf16.mxu0 0
      %8605 = vmatpush2.bf16.msra.mxu0 0
      %8606 = vmatprep.subr.bf16.mxu0 0
      %8607 = vmatpush2.bf16.msra.mxu0 0
      %8608 = vmatprep.subr.bf16.mxu0 0
      %8609 = vmatpush2.bf16.msra.mxu0 0
      %8610 = vmatprep.subr.bf16.mxu0 0
      %8611 = vmatpush2.bf16.msra.mxu0 0
      %8612 = vmatprep.subr.bf16.mxu0 0
      %8613 = vmatpush2.bf16.msra.mxu0 0
      %8614 = vmatprep.mubr.bf16.mxu0 0
      %8615 = vmatmul.mubr.bf16.gmra.mxu0 %v7852
      %v8616 = vpop.f32.mrf.mxu0
      %v8617 = vadd.f32 0.0, %v8616
      %v8618 = vpop.f32.mrf.mxu0
      %v8619 = vpop.f32.mrf.mxu0
      %v8620 = vadd.f32 0.0, %v8619
      %v8621 = vpop.f32.mrf.mxu0
      %8622 = vmatprep.mubr.bf16.mxu0 0
      %8623 = vmatmul.mubr.bf16.gmra.mxu0 %v7853
      %v8624 = vpop.f32.mrf.mxu0
      %v8625 = vadd.f32 0.0, %v8624
      %v8626 = vpop.f32.mrf.mxu0
      %v8627 = vpop.f32.mrf.mxu0
      %v8628 = vadd.f32 0.0, %v8627
      %v8629 = vpop.f32.mrf.mxu0
      %8630 = vmatprep.mubr.bf16.mxu0 0
      %8631 = vmatmul.mubr.bf16.gmra.mxu0 %v7854
      %v8632 = vpop.f32.mrf.mxu0
      %v8633 = vadd.f32 0.0, %v8632
      %v8634 = vpop.f32.mrf.mxu0
      %v8635 = vpop.f32.mrf.mxu0
      %v8636 = vadd.f32 0.0, %v8635
      %v8637 = vpop.f32.mrf.mxu0
      %8638 = vmatprep.mubr.bf16.mxu0 0
      %8639 = vmatmul.mubr.bf16.gmra.mxu0 %v7855
      %v8640 = vpop.f32.mrf.mxu0
      %v8641 = vadd.f32 0.0, %v8640
      %v8642 = vpop.f32.mrf.mxu0
      %v8643 = vpop.f32.mrf.mxu0
      %v8644 = vadd.f32 0.0, %v8643
      %v8645 = vpop.f32.mrf.mxu0
      %8646 = vmatprep.mubr.bf16.mxu0 0
      %8647 = vmatmul.mubr.bf16.gmra.mxu0 %v7856
      %v8648 = vpop.f32.mrf.mxu0
      %v8649 = vadd.f32 0.0, %v8648
      %v8650 = vpop.f32.mrf.mxu0
      %v8651 = vpop.f32.mrf.mxu0
      %v8652 = vadd.f32 0.0, %v8651
      %v8653 = vpop.f32.mrf.mxu0
      %8654 = vmatprep.mubr.bf16.mxu0 0
      %8655 = vmatmul.mubr.bf16.gmra.mxu0 %v7857
      %v8656 = vpop.f32.mrf.mxu0
      %v8657 = vadd.f32 0.0, %v8656
      %v8658 = vpop.f32.mrf.mxu0
      %v8659 = vpop.f32.mrf.mxu0
      %v8660 = vadd.f32 0.0, %v8659
      %v8661 = vpop.f32.mrf.mxu0
      %8662 = vmatprep.mubr.bf16.mxu0 0
      %8663 = vmatmul.mubr.bf16.gmra.mxu0 %v7858
      %v8664 = vpop.f32.mrf.mxu0
      %v8665 = vadd.f32 0.0, %v8664
      %v8666 = vpop.f32.mrf.mxu0
      %v8667 = vpop.f32.mrf.mxu0
      %v8668 = vadd.f32 0.0, %v8667
      %v8669 = vpop.f32.mrf.mxu0
      %8670 = vmatprep.mubr.bf16.mxu0 0
      %8671 = vmatmul.mubr.bf16.gmra.mxu0 %v7859
      %v8672 = vpop.f32.mrf.mxu0
      %v8673 = vadd.f32 0.0, %v8672
      %v8674 = vpop.f32.mrf.mxu0
      %v8675 = vpop.f32.mrf.mxu0
      %v8676 = vadd.f32 0.0, %v8675
      %v8677 = vpop.f32.mrf.mxu0
      %8678 = vmatprep.mubr.bf16.mxu0 0
      %8679 = vmatmul.mubr.bf16.gmra.mxu0 %v7860
      %v8680 = vpop.f32.mrf.mxu0
      %v8681 = vadd.f32 0.0, %v8680
      %v8682 = vpop.f32.mrf.mxu0
      %v8683 = vpop.f32.mrf.mxu0
      %v8684 = vadd.f32 0.0, %v8683
      %v8685 = vpop.f32.mrf.mxu0
      %8686 = vmatprep.mubr.bf16.mxu0 0
      %8687 = vmatmul.mubr.bf16.gmra.mxu0 %v7861
      %v8688 = vpop.f32.mrf.mxu0
      %v8689 = vadd.f32 0.0, %v8688
      %v8690 = vpop.f32.mrf.mxu0
      %v8691 = vpop.f32.mrf.mxu0
      %v8692 = vadd.f32 0.0, %v8691
      %v8693 = vpop.f32.mrf.mxu0
      %8694 = vmatprep.mubr.bf16.mxu0 0
      %8695 = vmatmul.mubr.bf16.gmra.mxu0 %v7862
      %v8696 = vpop.f32.mrf.mxu0
      %v8697 = vadd.f32 0.0, %v8696
      %v8698 = vpop.f32.mrf.mxu0
      %v8699 = vpop.f32.mrf.mxu0
      %v8700 = vadd.f32 0.0, %v8699
      %v8701 = vpop.f32.mrf.mxu0
      %8702 = vmatprep.mubr.bf16.mxu0 0
      %8703 = vmatmul.mubr.bf16.gmra.mxu0 %v7863
      %v8704 = vpop.f32.mrf.mxu0
      %v8705 = vadd.f32 0.0, %v8704
      %v8706 = vpop.f32.mrf.mxu0
      %v8707 = vpop.f32.mrf.mxu0
      %v8708 = vadd.f32 0.0, %v8707
      %v8709 = vpop.f32.mrf.mxu0
      %8710 = vmatprep.mubr.bf16.mxu0 0
      %8711 = vmatmul.mubr.bf16.gmra.mxu0 %v7864
      %v8712 = vpop.f32.mrf.mxu0
      %v8713 = vadd.f32 0.0, %v8712
      %v8714 = vpop.f32.mrf.mxu0
      %v8715 = vpop.f32.mrf.mxu0
      %v8716 = vadd.f32 0.0, %v8715
      %v8717 = vpop.f32.mrf.mxu0
      %8718 = vmatprep.mubr.bf16.mxu0 0
      %8719 = vmatmul.mubr.bf16.gmra.mxu0 %v7865
      %v8720 = vpop.f32.mrf.mxu0
      %v8721 = vadd.f32 0.0, %v8720
      %v8722 = vpop.f32.mrf.mxu0
      %v8723 = vpop.f32.mrf.mxu0
      %v8724 = vadd.f32 0.0, %v8723
      %v8725 = vpop.f32.mrf.mxu0
      %8726 = vmatprep.mubr.bf16.mxu0 0
      %8727 = vmatmul.mubr.bf16.gmra.mxu0 %v8206
      %v8728 = vpop.f32.mrf.mxu0
      %v8729 = vadd.f32 0.0, %v8728
      %v8730 = vpop.f32.mrf.mxu0
      %v8731 = vpop.f32.mrf.mxu0
      %v8732 = vadd.f32 0.0, %v8731
      %v8733 = vpop.f32.mrf.mxu0
      %8734 = vmatprep.mubr.bf16.mxu0 0
      %8735 = vmatmul.mubr.bf16.gmra.mxu0 %v8532
      %v8736 = vpop.f32.mrf.mxu0
      %v8737 = vadd.f32 0.0, %v8736
      %v8738 = vpop.f32.mrf.mxu0
      %v8739 = vpop.f32.mrf.mxu0
      %v8740 = vadd.f32 0.0, %v8739
      %v8741 = vpop.f32.mrf.mxu0
      %8742 = vdwg.mxu0
      %v8743 = vld [vmem:[#allocation3] sm:$0xff]
      %v8744 = vld [vmem:[#allocation3 + $0x8] sm:$0xff]
      %v8745 = vld [vmem:[#allocation3 + $0x10] sm:$0xff]
      %v8746 = vld [vmem:[#allocation3 + $0x18] sm:$0xff]
      %v8747 = vld [vmem:[#allocation3 + $0x20] sm:$0xff]
      %v8748 = vld [vmem:[#allocation3 + $0x28] sm:$0xff]
      %v8749 = vld [vmem:[#allocation3 + $0x30] sm:$0xff]
      %v8750 = vld [vmem:[#allocation3 + $0x38] sm:$0xff]
      %v8751 = vld [vmem:[#allocation3 + $0x40] sm:$0xff]
      %v8752 = vld [vmem:[#allocation3 + $0x48] sm:$0xff]
      %v8753 = vld [vmem:[#allocation3 + $0x50] sm:$0xff]
      %v8754 = vld [vmem:[#allocation3 + $0x58] sm:$0xff]
      %v8755 = vld [vmem:[#allocation3 + $0x60] sm:$0xff]
      %v8756 = vld [vmem:[#allocation3 + $0x68] sm:$0xff]
      %v8757 = vld [vmem:[#allocation3 + $0x70] sm:$0xff]
      %v8758 = vld [vmem:[#allocation3 + $0x78] sm:$0xff]
      %v8759 = vld [vmem:[#allocation3 + $0x80] sm:$0xff]
      %v8760 = vld [vmem:[#allocation3 + $0x88] sm:$0xff]
      %v8761 = vld [vmem:[#allocation3 + $0x90] sm:$0xff]
      %v8762 = vld [vmem:[#allocation3 + $0x98] sm:$0xff]
      %v8763 = vld [vmem:[#allocation3 + $0xa0] sm:$0xff]
      %v8764 = vld [vmem:[#allocation3 + $0xa8] sm:$0xff]
      %v8765 = vld [vmem:[#allocation3 + $0xb0] sm:$0xff]
      %v8766 = vld [vmem:[#allocation3 + $0xb8] sm:$0xff]
      %v8767 = vld [vmem:[#allocation3 + $0xc0] sm:$0xff]
      %v8768 = vld [vmem:[#allocation3 + $0xc8] sm:$0xff]
      %v8769 = vld [vmem:[#allocation3 + $0xd0] sm:$0xff]
      %v8770 = vld [vmem:[#allocation3 + $0xd8] sm:$0xff]
      %v8771 = vld [vmem:[#allocation3 + $0xe0] sm:$0xff]
      %v8772 = vld [vmem:[#allocation3 + $0xe8] sm:$0xff]
      %v8773 = vld [vmem:[#allocation3 + $0xf0] sm:$0xff]
      %v8774 = vld [vmem:[#allocation3 + $0xf8] sm:$0xff]
      %v8775 = vadd.f32 %v8743, %v8617
      %v8776 = vadd.f32 %v8744, %v8620
      %v8777 = vadd.f32 %v8745, %v8625
      %v8778 = vadd.f32 %v8746, %v8628
      %v8779 = vadd.f32 %v8747, %v8633
      %v8780 = vadd.f32 %v8748, %v8636
      %v8781 = vadd.f32 %v8749, %v8641
      %v8782 = vadd.f32 %v8750, %v8644
      %v8783 = vadd.f32 %v8751, %v8649
      %v8784 = vadd.f32 %v8752, %v8652
      %v8785 = vadd.f32 %v8753, %v8657
      %v8786 = vadd.f32 %v8754, %v8660
      %v8787 = vadd.f32 %v8755, %v8665
      %v8788 = vadd.f32 %v8756, %v8668
      %v8789 = vadd.f32 %v8757, %v8673
      %v8790 = vadd.f32 %v8758, %v8676
      %v8791 = vadd.f32 %v8759, %v8681
      %v8792 = vadd.f32 %v8760, %v8684
      %v8793 = vadd.f32 %v8761, %v8689
      %v8794 = vadd.f32 %v8762, %v8692
      %v8795 = vadd.f32 %v8763, %v8697
      %v8796 = vadd.f32 %v8764, %v8700
      %v8797 = vadd.f32 %v8765, %v8705
      %v8798 = vadd.f32 %v8766, %v8708
      %v8799 = vadd.f32 %v8767, %v8713
      %v8800 = vadd.f32 %v8768, %v8716
      %v8801 = vadd.f32 %v8769, %v8721
      %v8802 = vadd.f32 %v8770, %v8724
      %v8803 = vadd.f32 %v8771, %v8729
      %v8804 = vadd.f32 %v8772, %v8732
      %v8805 = vadd.f32 %v8773, %v8737
      %v8806 = vadd.f32 %v8774, %v8740
      %8807 = vst [vmem:[#allocation3] sm:$0xff] %v8775
      %8808 = vst [vmem:[#allocation3 + $0x8] sm:$0xff] %v8776
      %8809 = vst [vmem:[#allocation3 + $0x10] sm:$0xff] %v8777
      %8810 = vst [vmem:[#allocation3 + $0x18] sm:$0xff] %v8778
      %8811 = vst [vmem:[#allocation3 + $0x20] sm:$0xff] %v8779
      %8812 = vst [vmem:[#allocation3 + $0x28] sm:$0xff] %v8780
      %8813 = vst [vmem:[#allocation3 + $0x30] sm:$0xff] %v8781
      %8814 = vst [vmem:[#allocation3 + $0x38] sm:$0xff] %v8782
      %8815 = vst [vmem:[#allocation3 + $0x40] sm:$0xff] %v8783
      %8816 = vst [vmem:[#allocation3 + $0x48] sm:$0xff] %v8784
      %8817 = vst [vmem:[#allocation3 + $0x50] sm:$0xff] %v8785
      %8818 = vst [vmem:[#allocation3 + $0x58] sm:$0xff] %v8786
      %8819 = vst [vmem:[#allocation3 + $0x60] sm:$0xff] %v8787
      %8820 = vst [vmem:[#allocation3 + $0x68] sm:$0xff] %v8788
      %8821 = vst [vmem:[#allocation3 + $0x70] sm:$0xff] %v8789
      %8822 = vst [vmem:[#allocation3 + $0x78] sm:$0xff] %v8790
      %8823 = vst [vmem:[#allocation3 + $0x80] sm:$0xff] %v8791
      %8824 = vst [vmem:[#allocation3 + $0x88] sm:$0xff] %v8792
      %8825 = vst [vmem:[#allocation3 + $0x90] sm:$0xff] %v8793
      %8826 = vst [vmem:[#allocation3 + $0x98] sm:$0xff] %v8794
      %8827 = vst [vmem:[#allocation3 + $0xa0] sm:$0xff] %v8795
      %8828 = vst [vmem:[#allocation3 + $0xa8] sm:$0xff] %v8796
      %8829 = vst [vmem:[#allocation3 + $0xb0] sm:$0xff] %v8797
      %8830 = vst [vmem:[#allocation3 + $0xb8] sm:$0xff] %v8798
      %8831 = vst [vmem:[#allocation3 + $0xc0] sm:$0xff] %v8799
      %8832 = vst [vmem:[#allocation3 + $0xc8] sm:$0xff] %v8800
      %8833 = vst [vmem:[#allocation3 + $0xd0] sm:$0xff] %v8801
      %8834 = vst [vmem:[#allocation3 + $0xd8] sm:$0xff] %v8802
      %8835 = vst [vmem:[#allocation3 + $0xe0] sm:$0xff] %v8803
      %8836 = vst [vmem:[#allocation3 + $0xe8] sm:$0xff] %v8804
      %8837 = vst [vmem:[#allocation3 + $0xf0] sm:$0xff] %v8805
      %8838 = vst [vmem:[#allocation3 + $0xf8] sm:$0xff] %v8806
      %v8839 = vld [vmem:[%s7] sm:$0x1]
      %v8840 = vld [vmem:[%s8] sm:$0x1]
      %v8841 = vld [vmem:[%s9] sm:$0x1]
      %v8842 = vld [vmem:[#allocation3] sm:$0xff]
      %v8843 = vld [vmem:[#allocation3 + $0x8] sm:$0xff]
      %v8844 = vld [vmem:[#allocation3 + $0x10] sm:$0xff]
      %v8845 = vld [vmem:[#allocation3 + $0x18] sm:$0xff]
      %v8846 = vld [vmem:[#allocation3 + $0x20] sm:$0xff]
      %v8847 = vld [vmem:[#allocation3 + $0x28] sm:$0xff]
      %v8848 = vld [vmem:[#allocation3 + $0x30] sm:$0xff]
      %v8849 = vld [vmem:[#allocation3 + $0x38] sm:$0xff]
      %v8850 = vld [vmem:[#allocation3 + $0x40] sm:$0xff]
      %v8851 = vld [vmem:[#allocation3 + $0x48] sm:$0xff]
      %v8852 = vld [vmem:[#allocation3 + $0x50] sm:$0xff]
      %v8853 = vld [vmem:[#allocation3 + $0x58] sm:$0xff]
      %v8854 = vld [vmem:[#allocation3 + $0x60] sm:$0xff]
      %v8855 = vld [vmem:[#allocation3 + $0x68] sm:$0xff]
      %v8856 = vld [vmem:[#allocation3 + $0x70] sm:$0xff]
      %v8857 = vld [vmem:[#allocation3 + $0x78] sm:$0xff]
      %v8858 = vld [vmem:[#allocation3 + $0x80] sm:$0xff]
      %v8859 = vld [vmem:[#allocation3 + $0x88] sm:$0xff]
      %v8860 = vld [vmem:[#allocation3 + $0x90] sm:$0xff]
      %v8861 = vld [vmem:[#allocation3 + $0x98] sm:$0xff]
      %v8862 = vld [vmem:[#allocation3 + $0xa0] sm:$0xff]
      %v8863 = vld [vmem:[#allocation3 + $0xa8] sm:$0xff]
      %v8864 = vld [vmem:[#allocation3 + $0xb0] sm:$0xff]
      %v8865 = vld [vmem:[#allocation3 + $0xb8] sm:$0xff]
      %v8866 = vld [vmem:[#allocation3 + $0xc0] sm:$0xff]
      %v8867 = vld [vmem:[#allocation3 + $0xc8] sm:$0xff]
      %v8868 = vld [vmem:[#allocation3 + $0xd0] sm:$0xff]
      %v8869 = vld [vmem:[#allocation3 + $0xd8] sm:$0xff]
      %v8870 = vld [vmem:[#allocation3 + $0xe0] sm:$0xff]
      %v8871 = vld [vmem:[#allocation3 + $0xe8] sm:$0xff]
      %v8872 = vld [vmem:[#allocation3 + $0xf0] sm:$0xff]
      %v8873 = vld [vmem:[#allocation3 + $0xf8] sm:$0xff]
      %v8874 = vadd.f32 %v8842, %v8843
      %v8875 = vadd.f32 %v8874, %v8844
      %v8876 = vadd.f32 %v8875, %v8845
      %v8877 = vadd.f32 %v8876, %v8846
      %v8878 = vadd.f32 %v8877, %v8847
      %v8879 = vadd.f32 %v8878, %v8848
      %v8880 = vadd.f32 %v8879, %v8849
      %v8881 = vadd.f32 %v8880, %v8850
      %v8882 = vadd.f32 %v8881, %v8851
      %v8883 = vadd.f32 %v8882, %v8852
      %v8884 = vadd.f32 %v8883, %v8853
      %v8885 = vadd.f32 %v8884, %v8854
      %v8886 = vadd.f32 %v8885, %v8855
      %v8887 = vadd.f32 %v8886, %v8856
      %v8888 = vadd.f32 %v8887, %v8857
      %v8889 = vadd.f32 %v8888, %v8858
      %v8890 = vadd.f32 %v8889, %v8859
      %v8891 = vadd.f32 %v8890, %v8860
      %v8892 = vadd.f32 %v8891, %v8861
      %v8893 = vadd.f32 %v8892, %v8862
      %v8894 = vadd.f32 %v8893, %v8863
      %v8895 = vadd.f32 %v8894, %v8864
      %v8896 = vadd.f32 %v8895, %v8865
      %v8897 = vadd.f32 %v8896, %v8866
      %v8898 = vadd.f32 %v8897, %v8867
      %v8899 = vadd.f32 %v8898, %v8868
      %v8900 = vadd.f32 %v8899, %v8869
      %v8901 = vadd.f32 %v8900, %v8870
      %v8902 = vadd.f32 %v8901, %v8871
      %v8903 = vadd.f32 %v8902, %v8872
      %v8904 = vadd.f32 %v8903, %v8873
      %v8905 = vrot.slane %v8904, 4
      %v8906 = vadd.f32 %v8904, %v8905
      %v8907 = vrot.slane %v8906, 2
      %v8908 = vadd.f32 %v8906, %v8907
      %v8909 = vrot.slane %v8908, 1
      %v8910 = vadd.f32 %v8908, %v8909
      %v8911 = vmul.f32 %v8842, %v8842
      %v8912 = vmul.f32 %v8843, %v8843
      %v8913 = vmul.f32 %v8844, %v8844
      %v8914 = vmul.f32 %v8845, %v8845
      %v8915 = vmul.f32 %v8846, %v8846
      %v8916 = vmul.f32 %v8847, %v8847
      %v8917 = vmul.f32 %v8848, %v8848
      %v8918 = vmul.f32 %v8849, %v8849
      %v8919 = vmul.f32 %v8850, %v8850
      %v8920 = vmul.f32 %v8851, %v8851
      %v8921 = vmul.f32 %v8852, %v8852
      %v8922 = vmul.f32 %v8853, %v8853
      %v8923 = vmul.f32 %v8854, %v8854
      %v8924 = vmul.f32 %v8855, %v8855
      %v8925 = vmul.f32 %v8856, %v8856
      %v8926 = vmul.f32 %v8857, %v8857
      %v8927 = vmul.f32 %v8858, %v8858
      %v8928 = vmul.f32 %v8859, %v8859
      %v8929 = vmul.f32 %v8860, %v8860
      %v8930 = vmul.f32 %v8861, %v8861
      %v8931 = vmul.f32 %v8862, %v8862
      %v8932 = vmul.f32 %v8863, %v8863
      %v8933 = vmul.f32 %v8864, %v8864
      %v8934 = vmul.f32 %v8865, %v8865
      %v8935 = vmul.f32 %v8866, %v8866
      %v8936 = vmul.f32 %v8867, %v8867
      %v8937 = vmul.f32 %v8868, %v8868
      %v8938 = vmul.f32 %v8869, %v8869
      %v8939 = vmul.f32 %v8870, %v8870
      %v8940 = vmul.f32 %v8871, %v8871
      %v8941 = vmul.f32 %v8872, %v8872
      %v8942 = vmul.f32 %v8873, %v8873
      %v8943 = vadd.f32 %v8911, %v8912
      %v8944 = vadd.f32 %v8943, %v8913
      %v8945 = vadd.f32 %v8944, %v8914
      %v8946 = vadd.f32 %v8945, %v8915
      %v8947 = vadd.f32 %v8946, %v8916
      %v8948 = vadd.f32 %v8947, %v8917
      %v8949 = vadd.f32 %v8948, %v8918
      %v8950 = vadd.f32 %v8949, %v8919
      %v8951 = vadd.f32 %v8950, %v8920
      %v8952 = vadd.f32 %v8951, %v8921
      %v8953 = vadd.f32 %v8952, %v8922
      %v8954 = vadd.f32 %v8953, %v8923
      %v8955 = vadd.f32 %v8954, %v8924
      %v8956 = vadd.f32 %v8955, %v8925
      %v8957 = vadd.f32 %v8956, %v8926
      %v8958 = vadd.f32 %v8957, %v8927
      %v8959 = vadd.f32 %v8958, %v8928
      %v8960 = vadd.f32 %v8959, %v8929
      %v8961 = vadd.f32 %v8960, %v8930
      %v8962 = vadd.f32 %v8961, %v8931
      %v8963 = vadd.f32 %v8962, %v8932
      %v8964 = vadd.f32 %v8963, %v8933
      %v8965 = vadd.f32 %v8964, %v8934
      %v8966 = vadd.f32 %v8965, %v8935
      %v8967 = vadd.f32 %v8966, %v8936
      %v8968 = vadd.f32 %v8967, %v8937
      %v8969 = vadd.f32 %v8968, %v8938
      %v8970 = vadd.f32 %v8969, %v8939
      %v8971 = vadd.f32 %v8970, %v8940
      %v8972 = vadd.f32 %v8971, %v8941
      %v8973 = vadd.f32 %v8972, %v8942
      %v8974 = vrot.slane %v8973, 4
      %v8975 = vadd.f32 %v8973, %v8974
      %v8976 = vrot.slane %v8975, 2
      %v8977 = vadd.f32 %v8975, %v8976
      %v8978 = vrot.slane %v8977, 1
      %v8979 = vadd.f32 %v8977, %v8978
      %v8980 = vmul.f32 %v8839, 256.0
      %v8981 = vadd.f32 %v8910, %v8980
      %v8982 = vmul.f32 %v8839, 2.0
      %v8983 = vmul.f32 %v8982, %v8910
      %v8984 = vadd.f32 %v8979, %v8983
      %v8985 = vmul.f32 %v8980, %v8839
      %v8986 = vadd.f32 %v8984, %v8985
      %v8987 = vsel %vm4370, %v8981, 0.0
      %8988 = vadd.xlane.f32.xlu0 %v8987
      %v8989 = vpop.xlane.xlu0 %8988
      %v8990 = vmul.f32 %v8989, 0.00048828125
      %v8991 = vsel %vm4370, %v8986, 0.0
      %8992 = vadd.xlane.f32.xlu0 %v8991
      %v8993 = vpop.xlane.xlu0 %8992
      %v8994 = vmul.f32 %v8993, 0.00048828125
      %v8995 = vmul.f32 %v8990, %v8990
      %v8996 = vsub.f32 %v8994, %v8995
      %v8997 = vmax.f32 %v8996, 0.0
      %v8998 = vadd.f32 %v8997, 1e-05
      %v8999 = vrsqrt.pop %v8998
      %v9000 = vmul.f32 %v8840, %v8999
      %v9001 = vsub.f32 %v8839, %v8990
      %v9002 = vmul.f32 %v9001, %v9000
      %v9003 = vadd.f32 %v9002, %v8841
      %v9005 = vlaneseq
      %v9006 = vshrl.u32 %v9005, 7
      %v9007 = vsub.s32 0, %v9006
      %v9008 = vrot.slane %v9000, %v9007
      %v9010 = vmul.f32 %v8842, %v9008
      %v9011 = vmul.f32 %v8843, %v9008
      %v9012 = vmul.f32 %v8844, %v9008
      %v9013 = vmul.f32 %v8845, %v9008
      %v9014 = vmul.f32 %v8846, %v9008
      %v9015 = vmul.f32 %v8847, %v9008
      %v9016 = vmul.f32 %v8848, %v9008
      %v9017 = vmul.f32 %v8849, %v9008
      %v9018 = vmul.f32 %v8850, %v9008
      %v9019 = vmul.f32 %v8851, %v9008
      %v9020 = vmul.f32 %v8852, %v9008
      %v9021 = vmul.f32 %v8853, %v9008
      %v9022 = vmul.f32 %v8854, %v9008
      %v9023 = vmul.f32 %v8855, %v9008
      %v9024 = vmul.f32 %v8856, %v9008
      %v9025 = vmul.f32 %v8857, %v9008
      %v9026 = vmul.f32 %v8858, %v9008
      %v9027 = vmul.f32 %v8859, %v9008
      %v9028 = vmul.f32 %v8860, %v9008
      %v9029 = vmul.f32 %v8861, %v9008
      %v9030 = vmul.f32 %v8862, %v9008
      %v9031 = vmul.f32 %v8863, %v9008
      %v9032 = vmul.f32 %v8864, %v9008
      %v9033 = vmul.f32 %v8865, %v9008
      %v9034 = vmul.f32 %v8866, %v9008
      %v9035 = vmul.f32 %v8867, %v9008
      %v9036 = vmul.f32 %v8868, %v9008
      %v9037 = vmul.f32 %v8869, %v9008
      %v9038 = vmul.f32 %v8870, %v9008
      %v9039 = vmul.f32 %v8871, %v9008
      %v9040 = vmul.f32 %v8872, %v9008
      %v9041 = vmul.f32 %v8873, %v9008
      %v9043 = vlaneseq
      %v9044 = vshrl.u32 %v9043, 7
      %v9045 = vsub.s32 0, %v9044
      %v9046 = vrot.slane %v9003, %v9045
      %v9048 = vadd.f32 %v9010, %v9046
      %v9049 = vadd.f32 %v9011, %v9046
      %v9050 = vadd.f32 %v9012, %v9046
      %v9051 = vadd.f32 %v9013, %v9046
      %v9052 = vadd.f32 %v9014, %v9046
      %v9053 = vadd.f32 %v9015, %v9046
      %v9054 = vadd.f32 %v9016, %v9046
      %v9055 = vadd.f32 %v9017, %v9046
      %v9056 = vadd.f32 %v9018, %v9046
      %v9057 = vadd.f32 %v9019, %v9046
      %v9058 = vadd.f32 %v9020, %v9046
      %v9059 = vadd.f32 %v9021, %v9046
      %v9060 = vadd.f32 %v9022, %v9046
      %v9061 = vadd.f32 %v9023, %v9046
      %v9062 = vadd.f32 %v9024, %v9046
      %v9063 = vadd.f32 %v9025, %v9046
      %v9064 = vadd.f32 %v9026, %v9046
      %v9065 = vadd.f32 %v9027, %v9046
      %v9066 = vadd.f32 %v9028, %v9046
      %v9067 = vadd.f32 %v9029, %v9046
      %v9068 = vadd.f32 %v9030, %v9046
      %v9069 = vadd.f32 %v9031, %v9046
      %v9070 = vadd.f32 %v9032, %v9046
      %v9071 = vadd.f32 %v9033, %v9046
      %v9072 = vadd.f32 %v9034, %v9046
      %v9073 = vadd.f32 %v9035, %v9046
      %v9074 = vadd.f32 %v9036, %v9046
      %v9075 = vadd.f32 %v9037, %v9046
      %v9076 = vadd.f32 %v9038, %v9046
      %v9077 = vadd.f32 %v9039, %v9046
      %v9078 = vadd.f32 %v9040, %v9046
      %v9079 = vadd.f32 %v9041, %v9046
      %v9080 = vmax.f32 %v9048, 0.0
      %v9081 = vmax.f32 %v9049, 0.0
      %v9082 = vmax.f32 %v9050, 0.0
      %v9083 = vmax.f32 %v9051, 0.0
      %v9084 = vmax.f32 %v9052, 0.0
      %v9085 = vmax.f32 %v9053, 0.0
      %v9086 = vmax.f32 %v9054, 0.0
      %v9087 = vmax.f32 %v9055, 0.0
      %v9088 = vmax.f32 %v9056, 0.0
      %v9089 = vmax.f32 %v9057, 0.0
      %v9090 = vmax.f32 %v9058, 0.0
      %v9091 = vmax.f32 %v9059, 0.0
      %v9092 = vmax.f32 %v9060, 0.0
      %v9093 = vmax.f32 %v9061, 0.0
      %v9094 = vmax.f32 %v9062, 0.0
      %v9095 = vmax.f32 %v9063, 0.0
      %v9096 = vmax.f32 %v9064, 0.0
      %v9097 = vmax.f32 %v9065, 0.0
      %v9098 = vmax.f32 %v9066, 0.0
      %v9099 = vmax.f32 %v9067, 0.0
      %v9100 = vmax.f32 %v9068, 0.0
      %v9101 = vmax.f32 %v9069, 0.0
      %v9102 = vmax.f32 %v9070, 0.0
      %v9103 = vmax.f32 %v9071, 0.0
      %v9104 = vmax.f32 %v9072, 0.0
      %v9105 = vmax.f32 %v9073, 0.0
      %v9106 = vmax.f32 %v9074, 0.0
      %v9107 = vmax.f32 %v9075, 0.0
      %v9108 = vmax.f32 %v9076, 0.0
      %v9109 = vmax.f32 %v9077, 0.0
      %v9110 = vmax.f32 %v9078, 0.0
      %v9111 = vmax.f32 %v9079, 0.0
      %v9112 = vld [vmem:[%s368] sm:$0x1]
      %v9114 = vlaneseq
      %v9115 = vshrl.u32 %v9114, 7
      %v9116 = vsub.s32 0, %v9115
      %v9117 = vrot.slane %v9112, %v9116
      %v9119 = vadd.f32 %v9080, %v9117
      %v9120 = vadd.f32 %v9081, %v9117
      %v9121 = vadd.f32 %v9082, %v9117
      %v9122 = vadd.f32 %v9083, %v9117
      %v9123 = vadd.f32 %v9084, %v9117
      %v9124 = vadd.f32 %v9085, %v9117
      %v9125 = vadd.f32 %v9086, %v9117
      %v9126 = vadd.f32 %v9087, %v9117
      %v9127 = vadd.f32 %v9088, %v9117
      %v9128 = vadd.f32 %v9089, %v9117
      %v9129 = vadd.f32 %v9090, %v9117
      %v9130 = vadd.f32 %v9091, %v9117
      %v9131 = vadd.f32 %v9092, %v9117
      %v9132 = vadd.f32 %v9093, %v9117
      %v9133 = vadd.f32 %v9094, %v9117
      %v9134 = vadd.f32 %v9095, %v9117
      %v9135 = vadd.f32 %v9096, %v9117
      %v9136 = vadd.f32 %v9097, %v9117
      %v9137 = vadd.f32 %v9098, %v9117
      %v9138 = vadd.f32 %v9099, %v9117
      %v9139 = vadd.f32 %v9100, %v9117
      %v9140 = vadd.f32 %v9101, %v9117
      %v9141 = vadd.f32 %v9102, %v9117
      %v9142 = vadd.f32 %v9103, %v9117
      %v9143 = vadd.f32 %v9104, %v9117
      %v9144 = vadd.f32 %v9105, %v9117
      %v9145 = vadd.f32 %v9106, %v9117
      %v9146 = vadd.f32 %v9107, %v9117
      %v9147 = vadd.f32 %v9108, %v9117
      %v9148 = vadd.f32 %v9109, %v9117
      %v9149 = vadd.f32 %v9110, %v9117
      %v9150 = vadd.f32 %v9111, %v9117
      %9151 = vst [vmem:[%s373] sm:$0xff] %v9119
      %9152 = vst [vmem:[%s373 + $0x8] sm:$0xff] %v9120
      %9153 = vst [vmem:[%s373 + $0x10] sm:$0xff] %v9121
      %9154 = vst [vmem:[%s373 + $0x18] sm:$0xff] %v9122
      %9155 = vst [vmem:[%s373 + $0x20] sm:$0xff] %v9123
      %9156 = vst [vmem:[%s373 + $0x28] sm:$0xff] %v9124
      %9157 = vst [vmem:[%s373 + $0x30] sm:$0xff] %v9125
      %9158 = vst [vmem:[%s373 + $0x38] sm:$0xff] %v9126
      %9159 = vst [vmem:[%s373 + $0x40] sm:$0xff] %v9127
      %9160 = vst [vmem:[%s373 + $0x48] sm:$0xff] %v9128
      %9161 = vst [vmem:[%s373 + $0x50] sm:$0xff] %v9129
      %9162 = vst [vmem:[%s373 + $0x58] sm:$0xff] %v9130
      %9163 = vst [vmem:[%s373 + $0x60] sm:$0xff] %v9131
      %9164 = vst [vmem:[%s373 + $0x68] sm:$0xff] %v9132
      %9165 = vst [vmem:[%s373 + $0x70] sm:$0xff] %v9133
      %9166 = vst [vmem:[%s373 + $0x78] sm:$0xff] %v9134
      %9167 = vst [vmem:[%s373 + $0x80] sm:$0xff] %v9135
      %9168 = vst [vmem:[%s373 + $0x88] sm:$0xff] %v9136
      %9169 = vst [vmem:[%s373 + $0x90] sm:$0xff] %v9137
      %9170 = vst [vmem:[%s373 + $0x98] sm:$0xff] %v9138
      %9171 = vst [vmem:[%s373 + $0xa0] sm:$0xff] %v9139
      %9172 = vst [vmem:[%s373 + $0xa8] sm:$0xff] %v9140
      %9173 = vst [vmem:[%s373 + $0xb0] sm:$0xff] %v9141
      %9174 = vst [vmem:[%s373 + $0xb8] sm:$0xff] %v9142
      %9175 = vst [vmem:[%s373 + $0xc0] sm:$0xff] %v9143
      %9176 = vst [vmem:[%s373 + $0xc8] sm:$0xff] %v9144
      %9177 = vst [vmem:[%s373 + $0xd0] sm:$0xff] %v9145
      %9178 = vst [vmem:[%s373 + $0xd8] sm:$0xff] %v9146
      %9179 = vst [vmem:[%s373 + $0xe0] sm:$0xff] %v9147
      %9180 = vst [vmem:[%s373 + $0xe8] sm:$0xff] %v9148
      %9181 = vst [vmem:[%s373 + $0xf0] sm:$0xff] %v9149
      %9182 = vst [vmem:[%s373 + $0xf8] sm:$0xff] %v9150
      %p9183 = scmp.lt.s32.totalorder %s21, 1
      %s9184 = scalar_select %p9183, %s21, 1
      %s9185 = smul.addr %s9184, 32
      %s9186 = smul.addr %s9185, 8
      %s9187 = scalar_lea.vmem %s10, %s9186
      // Predicated region
      $region61: #{up_forward.1} parent=59 // pred_check
        %p9188 = pneg %p259
      $region62: #{up_forward.1} parent=59 // pred_check_branch
        %9190 = sbr.rel (%p9188) target = $region64
      $region63: #{up_forward.1} parent=59 // pred_region
        _
      $region64: #{up_forward.1} parent=59 // pred_fallthru
        _
    $region60: #{up_forward.1} parent=5 // pred_fallthru
      _
    %p9191 = scmp.le.s32.totalorder 2, %s16
    // Predicated region
    $region65: #{up_forward.1} parent=5 // pred_check
      %p9192 = pneg %p9191
    $region66: #{up_forward.1} parent=5 // pred_check_branch
      %9194 = sbr.rel (%p9192) target = $region68
    $region67: #{up_forward.1} parent=5 // pred_region
      %s9195 = ssub.s32 %s16, 2
      // Predicated region
      $region69: #{up_forward.1} parent=67 // pred_check
        %p9196 = pneg %p265
      $region70: #{up_forward.1} parent=67 // pred_check_branch
        %9198 = sbr.rel (%p9196) target = $region72
      $region71: #{up_forward.1} parent=67 // pred_region
        %p9199 = scmp.lt.s32.totalorder %s22, 1
        %s9200 = scalar_select %p9199, %s22, 1
        %s9201 = smul.addr %s9200, 32
        %s9202 = smul.addr %s9201, 8
        %s9203 = scalar_lea.vmem %s10, %s9202
      $region72: #{up_forward.1} parent=67 // pred_fallthru
        _
    $region68: #{up_forward.1} parent=5 // pred_fallthru
      _
  $region6: #{up_forward.1} parent=0 // loop_footer
    %s20 = sadd.s32 1, %s16
  $region7: #{up_forward.1} parent=0 // loop_footer_branch
    %15 = sbr.rel target = $region3
  $region8: #{up_forward.1} parent=0 // loop_exit
    _

</llo_original>
